<compile_context>
chip_gen: v7x
topology: tpu7x:2x2x1
jax: 0.10.0
libtpu: 0.0.40
codegen_flags: <defaults>
</compile_context>

<pallas_src>
import jax
import jax.numpy as jnp
from jax import lax
from jax.experimental import pallas as pl
from jax.experimental.pallas import tpu as pltpu

# ---- small config consistent with the module structure (scaled-down ViT) ----
B = 2
IN_CH = 3
IMG = 16
PATCH = 4
NUM_PATCHES = (IMG // PATCH) ** 2        # 16
SEQ = NUM_PATCHES + 1                    # 17 (cls token prepended)
SEQ_PAD = 24                             # padded to a multiple of 8 sublanes
PAD_ROWS = SEQ_PAD - SEQ                 # 7
DIM = 32                                 # embed_dim
HEADS = 4
HEAD_DIM = DIM // HEADS
MLP_HIDDEN = DIM * 4                     # mlp_ratio = 4
ADAPTER_BN = 8                           # tuning_config.ffn_num (scaled down)
ADAPTER_SCALE = 0.1                      # tuning_config.ffn_adapter_scalar = '0.1'
DEPTH = 2
NUM_CLASSES = 10
LN_EPS = 1e-6                            # norm_layer = partial(LayerNorm, eps=1e-6)
PATCH_IN = IN_CH * PATCH * PATCH         # 48


# ---------------- in-kernel math helpers (also reused by the pure-JAX reference) -------------
def _layernorm(x, g, b, eps=LN_EPS):
    mu = jnp.mean(x, axis=-1, keepdims=True)
    var = jnp.mean((x - mu) ** 2, axis=-1, keepdims=True)
    return (x - mu) * lax.rsqrt(var + eps) * g + b


def _gelu_exact(x):
    # TODO(synk): nn.GELU default is the exact erf-GELU; lax.erf may not lower in Mosaic,
    # so erf is computed with Abramowitz–Stegun 7.1.26 (|err| < 1.5e-7) using exp only.
    z = x * 0.7071067811865476
    a = jnp.abs(z)
    t = 1.0 / (1.0 + 0.3275911 * a)
    poly = t * (0.254829592 + t * (-0.284496736 + t * (1.421413741
               + t * (-1.453152027 + t * 1.061405429))))
    erf_abs = 1.0 - poly * jnp.exp(-a * a)
    erf = jnp.where(z >= 0.0, erf_abs, -erf_abs)
    return 0.5 * x * (1.0 + erf)


# ---------------------------------- the single fused kernel -----------------------------------
# One grid step == the full forward for ONE batch element (grid=(B,), "parallel").
def net_kernel(patches_ref,
               pw_ref, pb_ref, cls_ref, posp_ref,
               ln1g, ln1b, wq, bq, wk, bk, wv, bv, wo, bo,
               ln2g, ln2b, w1, b1, w2, b2, wdn, bdn, wup, bup,
               ng, nb, fcw, sigma,
               o_ref):
    # ---- patch embed (== Conv2d(C, D, k=ps, stride=ps)) + cls token + pos embed ----
    tok = (jnp.dot(patches_ref[0], pw_ref[...], preferred_element_type=jnp.float32)
           + pb_ref[...] + posp_ref[...])                       # (Np, DIM)
    pad = jnp.zeros((PAD_ROWS, DIM), jnp.float32)               # zero-init padded rows
    x = jnp.concatenate([cls_ref[...], tok, pad], axis=0)       # (SEQ_PAD, DIM), single assembly
    # pos_drop / dropouts / drop_path are identity in eval

    # mask for padded KEY positions (padded query rows are row-wise garbage, never read)
    key_mask = lax.broadcasted_iota(jnp.int32, (1, SEQ_PAD), 1) < SEQ
    scale = HEAD_DIM ** -0.5

    # ---- DEPTH transformer Blocks (weights fully resident; static unroll over depth) ----
    for d in range(DEPTH):
        # attention branch: x = x + attn(norm1(x))
        h = _layernorm(x, ln1g[d], ln1b[d])
        acc = jnp.zeros((SEQ_PAD, DIM), jnp.float32)
        for hh in range(HEADS):                                  # static unroll over heads
            qh = jnp.dot(h, wq[d, hh], preferred_element_type=jnp.float32) + bq[d, hh]
            kh = jnp.dot(h, wk[d, hh], preferred_element_type=jnp.float32) + bk[d, hh]
            vh = jnp.dot(h, wv[d, hh], preferred_element_type=jnp.float32) + bv[d, hh]
            s = lax.dot_general(qh, kh, (((1,), (1,)), ((), ())),
                                preferred_element_type=jnp.float32) * scale
            s = jnp.where(key_mask, s, -1e30)                    # mask padded keys
            s = s - jnp.max(s, axis=-1, keepdims=True)
            e = jnp.exp(s)
            p = e * pl.reciprocal(jnp.sum(e, axis=-1, keepdims=True), approx=True)
            oh = jnp.dot(p, vh, preferred_element_type=jnp.float32)      # (SEQ_PAD, HEAD_DIM)
            # fold the output projection per head (wo pre-split outside the kernel)
            acc = acc + jnp.dot(oh, wo[d, hh], preferred_element_type=jnp.float32)
        x = x + acc + bo[d]

        # parallel adapter (adapter_layernorm_option='none', add_residual=False)
        dwn = jnp.maximum(jnp.dot(x, wdn[d], preferred_element_type=jnp.float32) + bdn[d], 0.0)
        adapt = (jnp.dot(dwn, wup[d], preferred_element_type=jnp.float32)
                 + bup[d]) * ADAPTER_SCALE

        # MLP branch
        h2 = _layernorm(x, ln2g[d], ln2b[d])
        m = _gelu_exact(jnp.dot(h2, w1[d], preferred_element_type=jnp.float32) + b1[d])
        m = jnp.dot(m, w2[d], preferred_element_type=jnp.float32) + b2[d]
        x = x + m + adapt

    # ---- final LayerNorm on the cls token + CosineLinear head ----
    cls_t = _layernorm(x[0:1, :], ng[...], nb[...])              # (1, DIM), aligned slice
    inv = lax.rsqrt(jnp.maximum(jnp.sum(cls_t * cls_t, axis=-1, keepdims=True), 1e-24))
    # fcw is pre-normalized and pre-transposed: (DIM, NUM_CLASSES)
    out = jnp.dot(cls_t * inv, fcw[...], preferred_element_type=jnp.float32)
    o_ref[0] = sigma[0, 0] * out


# ---------------------------------- pallas_call wrapper ----------------------------------------
def _resident_spec(a):
    n = a.ndim
    return pl.BlockSpec(a.shape, lambda b, n=n: (0,) * n)


_RESIDENT_KEYS = ('patch_w', 'patch_b', 'cls_row', 'pos_patch',
                  'ln1g', 'ln1b', 'wq', 'bq', 'wk', 'bk', 'wv', 'bv', 'wo', 'bo',
                  'ln2g', 'ln2b', 'w1', 'b1', 'w2', 'b2', 'wdn', 'bdn', 'wup', 'bup',
                  'norm_g', 'norm_b', 'fc_wn_t', 'sigma')


def ranpac_forward(x_nchw, kp):
    Bn, C, H, W = x_nchw.shape
    # Patchify NCHW -> (B, Np, C*ps*ps) with (c, kh, kw) ordering to match Conv2d weight layout.
    xp = x_nchw.reshape(Bn, C, H // PATCH, PATCH, W // PATCH, PATCH)
    xp = xp.transpose(0, 2, 4, 1, 3, 5).reshape(Bn, NUM_PATCHES, PATCH_IN)

    resident = [kp[k] for k in _RESIDENT_KEYS]
    args = [xp] + resident
    in_specs = ([pl.BlockSpec((1, NUM_PATCHES, PATCH_IN), lambda b: (b, 0, 0))]
                + [_resident_spec(a) for a in resident])

    logits3 = pl.pallas_call(
        net_kernel,
        out_shape=jax.ShapeDtypeStruct((Bn, 1, NUM_CLASSES), jnp.float32),
        grid=(Bn,),
        in_specs=in_specs,
        out_specs=pl.BlockSpec((1, 1, NUM_CLASSES), lambda b: (b, 0, 0)),
        compiler_params=pltpu.CompilerParams(
            dimension_semantics=("parallel",)),   # one batch element per core (v7x: 2 TCs)
    )(*args)
    return {'logits': logits3.reshape(Bn, NUM_CLASSES)}


# ---------------------------------- deterministic params --------------------------------------
def init_params(key):
    keys = iter(jax.random.split(key, 256))

    def nrm(shape, s=0.02):
        return (s * jax.random.normal(next(keys), shape)).astype(jnp.float32)

    params = {
        'patch_w': nrm((IN_CH * PATCH * PATCH, DIM)),   # Conv2d weight reshaped + transposed
        'patch_b': nrm((1, DIM)),
        'cls_token': nrm((1, 1, DIM)),
        'pos_embed': nrm((1, SEQ, DIM)),
        'norm_g': jnp.ones((1, DIM), jnp.float32),
        'norm_b': jnp.zeros((1, DIM), jnp.float32),
        'fc_w': nrm((NUM_CLASSES, DIM), 0.05),          # CosineLinear weight (out, in)
        'sigma': jnp.ones((1, 1), jnp.float32),         # CosineLinear sigma
        'blocks': [],
    }
    for _ in range(DEPTH):
        blk = (
            jnp.ones((1, DIM), jnp.float32), jnp.zeros((1, DIM), jnp.float32),   # norm1 g, b
            nrm((DIM, DIM)), nrm((1, DIM)),              # q_proj  (in, out), bias
            nrm((DIM, DIM)), nrm((1, DIM)),              # k_proj
            nrm((DIM, DIM)), nrm((1, DIM)),              # v_proj
            nrm((DIM, DIM)), nrm((1, DIM)),              # attn out proj
            jnp.ones((1, DIM), jnp.float32), jnp.zeros((1, DIM), jnp.float32),   # norm2 g, b
            nrm((DIM, MLP_HIDDEN)), nrm((1, MLP_HIDDEN)),  # fc1
            nrm((MLP_HIDDEN, DIM)), nrm((1, DIM)),         # fc2
            nrm((DIM, ADAPTER_BN)), nrm((1, ADAPTER_BN)),  # adapter down_proj
            nrm((ADAPTER_BN, DIM)), nrm((1, DIM)),         # adapter up_proj
        )
        params['blocks'].append(blk)
    return params


def prepare_kernel_params(p):
    """Pre-bake the kernel-friendly layout: stack block weights along DEPTH, split Q/K/V and
    the attention output projection per head, fold cls pos-embed, pre-normalize + transpose
    the CosineLinear weight. All done once outside the kernel (static at inference)."""
    blocks = p['blocks']

    def stack(i):
        return jnp.stack([blk[i] for blk in blocks], axis=0)

    def per_head_w(i):   # (DEPTH, DIM, DIM) -> (DEPTH, HEADS, DIM, HEAD_DIM)  [column split]
        return stack(i).reshape(DEPTH, DIM, HEADS, HEAD_DIM).transpose(0, 2, 1, 3)

    def per_head_b(i):   # (DEPTH, 1, DIM) -> (DEPTH, HEADS, 1, HEAD_DIM)
        return stack(i).reshape(DEPTH, 1, HEADS, HEAD_DIM).transpose(0, 2, 1, 3)

    pos = p['pos_embed'].reshape(SEQ, DIM)
    fc_w = p['fc_w']
    fc_wn = fc_w / jnp.maximum(jnp.sqrt(jnp.sum(fc_w * fc_w, axis=-1, keepdims=True)), 1e-12)
    return {
        'patch_w': p['patch_w'], 'patch_b': p['patch_b'],
        'cls_row': p['cls_token'].reshape(1, DIM) + pos[0:1, :],   # cls token + its pos embed
        'pos_patch': pos[1:, :],                                   # (Np, DIM)
        'ln1g': stack(0), 'ln1b': stack(1),
        'wq': per_head_w(2), 'bq': per_head_b(3),
        'wk': per_head_w(4), 'bk': per_head_b(5),
        'wv': per_head_w(6), 'bv': per_head_b(7),
        'wo': stack(8).reshape(DEPTH, HEADS, HEAD_DIM, DIM),       # row split (head-concat dim)
        'bo': stack(9),
        'ln2g': stack(10), 'ln2b': stack(11),
        'w1': stack(12), 'b1': stack(13),
        'w2': stack(14), 'b2': stack(15),
        'wdn': stack(16), 'bdn': stack(17),
        'wup': stack(18), 'bup': stack(19),
        'norm_g': p['norm_g'], 'norm_b': p['norm_b'],
        'fc_wn_t': fc_wn.T,                                        # (DIM, NC), pre-normalized
        'sigma': p['sigma'],
    }


# ---------------------------------- pure-JAX reference ----------------------------------------
def reference_forward(x_nchw, p):
    Bn, C, H, W = x_nchw.shape
    xp = x_nchw.reshape(Bn, C, H // PATCH, PATCH, W // PATCH, PATCH)
    xp = xp.transpose(0, 2, 4, 1, 3, 5).reshape(Bn, NUM_PATCHES, C * PATCH * PATCH)
    tok = xp @ p['patch_w'] + p['patch_b']
    cls = jnp.broadcast_to(p['cls_token'], (Bn, 1, DIM))
    x = jnp.concatenate([cls, tok], axis=1) + p['pos_embed']
    for blk in p['blocks']:
        (ln1g, ln1b, wq, bq, wk, bk, wv, bv, wo, bo,
         ln2g, ln2b, w1, b1, w2, b2, wdn, bdn, wup, bup) = blk
        h = _layernorm(x, ln1g, ln1b)
        q = h @ wq + bq
        k = h @ wk + bk
        v = h @ wv + bv
        qh = q.reshape(Bn, SEQ, HEADS, HEAD_DIM).transpose(0, 2, 1, 3)
        kh = k.reshape(Bn, SEQ, HEADS, HEAD_DIM).transpose(0, 2, 1, 3)
        vh = v.reshape(Bn, SEQ, HEADS, HEAD_DIM).transpose(0, 2, 1, 3)
        a = jnp.einsum('bhnd,bhmd->bhnm', qh, kh) * (HEAD_DIM ** -0.5)
        pw = jax.nn.softmax(a, axis=-1)
        o = jnp.einsum('bhnm,bhmd->bhnd', pw, vh).transpose(0, 2, 1, 3).reshape(Bn, SEQ, DIM)
        x = x + (o @ wo + bo)
        adapt = (jnp.maximum(x @ wdn + bdn, 0.0) @ wup + bup) * ADAPTER_SCALE
        resid = x
        m = _gelu_exact(_layernorm(x, ln2g, ln2b) @ w1 + b1) @ w2 + b2
        x = resid + m + adapt
    cls_t = _layernorm(x[:, 0, :], p['norm_g'], p['norm_b'])
    xn = cls_t / jnp.maximum(jnp.sqrt(jnp.sum(cls_t * cls_t, axis=-1, keepdims=True)), 1e-12)
    w = p['fc_w']
    wn = w / jnp.maximum(jnp.sqrt(jnp.sum(w * w, axis=-1, keepdims=True)), 1e-12)
    return p['sigma'][0, 0] * (xn @ wn.T)


# --------------------------------------- main --------------------------------------------------
if __name__ == "__main__":
    key = jax.random.PRNGKey(0)
    kx, kp_key = jax.random.split(key)
    x = jax.random.normal(kx, (B, IN_CH, IMG, IMG), dtype=jnp.float32)
    params = init_params(kp_key)
    kparams = prepare_kernel_params(params)

    fwd = jax.jit(ranpac_forward)
    out = fwd(x, kparams)
    logits = jax.block_until_ready(out['logits'])

    assert logits.shape == (B, NUM_CLASSES)
    ref = reference_forward(x, params)
    # slightly relaxed tolerance: softmax uses EUP approx reciprocal inside the kernel
    assert jnp.allclose(logits, ref, atol=2e-3, rtol=2e-3), \
        f"max abs err = {float(jnp.max(jnp.abs(logits - ref)))}"
    print("KERNEL_OK")
</pallas_src>

<mosaic_0001>
module attributes {stable_mosaic.version = 11 : i64} {
  func.func @net_kernel(%arg0: i32, %arg1: memref<1x16x48xf32, #tpu.memory_space<vmem>>, %arg2: memref<48x32xf32, #tpu.memory_space<vmem>>, %arg3: memref<1x32xf32, #tpu.memory_space<vmem>>, %arg4: memref<1x32xf32, #tpu.memory_space<vmem>>, %arg5: memref<16x32xf32, #tpu.memory_space<vmem>>, %arg6: memref<2x1x32xf32, #tpu.memory_space<vmem>>, %arg7: memref<2x1x32xf32, #tpu.memory_space<vmem>>, %arg8: memref<2x4x32x8xf32, #tpu.memory_space<vmem>>, %arg9: memref<2x4x1x8xf32, #tpu.memory_space<vmem>>, %arg10: memref<2x4x32x8xf32, #tpu.memory_space<vmem>>, %arg11: memref<2x4x1x8xf32, #tpu.memory_space<vmem>>, %arg12: memref<2x4x32x8xf32, #tpu.memory_space<vmem>>, %arg13: memref<2x4x1x8xf32, #tpu.memory_space<vmem>>, %arg14: memref<2x4x8x32xf32, #tpu.memory_space<vmem>>, %arg15: memref<2x1x32xf32, #tpu.memory_space<vmem>>, %arg16: memref<2x1x32xf32, #tpu.memory_space<vmem>>, %arg17: memref<2x1x32xf32, #tpu.memory_space<vmem>>, %arg18: memref<2x32x128xf32, #tpu.memory_space<vmem>>, %arg19: memref<2x1x128xf32, #tpu.memory_space<vmem>>, %arg20: memref<2x128x32xf32, #tpu.memory_space<vmem>>, %arg21: memref<2x1x32xf32, #tpu.memory_space<vmem>>, %arg22: memref<2x32x8xf32, #tpu.memory_space<vmem>>, %arg23: memref<2x1x8xf32, #tpu.memory_space<vmem>>, %arg24: memref<2x8x32xf32, #tpu.memory_space<vmem>>, %arg25: memref<2x1x32xf32, #tpu.memory_space<vmem>>, %arg26: memref<1x32xf32, #tpu.memory_space<vmem>>, %arg27: memref<1x32xf32, #tpu.memory_space<vmem>>, %arg28: memref<32x10xf32, #tpu.memory_space<vmem>>, %arg29: memref<1x1xf32, #tpu.memory_space<vmem>>, %arg30: memref<1x1x10xf32, #tpu.memory_space<vmem>>) attributes {dimension_semantics = [#tpu.dimension_semantics<parallel>], iteration_bounds = array<i64: 2>, scalar_prefetch = 0 : i64, scratch_operands = 0 : i64, tpu.core_type = #tpu.core_type<tc>, window_params = [{transform_indices = @transform_0, window_bounds = array<i64: 1, 16, 48>}, {pipeline_mode = #tpu.pipeline_mode<synchronous>, transform_indices = @transform_1, window_bounds = array<i64: 48, 32>}, {pipeline_mode = #tpu.pipeline_mode<synchronous>, transform_indices = @transform_2, window_bounds = array<i64: 1, 32>}, {pipeline_mode = #tpu.pipeline_mode<synchronous>, transform_indices = @transform_3, window_bounds = array<i64: 1, 32>}, {pipeline_mode = #tpu.pipeline_mode<synchronous>, transform_indices = @transform_4, window_bounds = array<i64: 16, 32>}, {pipeline_mode = #tpu.pipeline_mode<synchronous>, transform_indices = @transform_5, window_bounds = array<i64: 2, 1, 32>}, {pipeline_mode = #tpu.pipeline_mode<synchronous>, transform_indices = @transform_6, window_bounds = array<i64: 2, 1, 32>}, {pipeline_mode = #tpu.pipeline_mode<synchronous>, transform_indices = @transform_7, window_bounds = array<i64: 2, 4, 32, 8>}, {pipeline_mode = #tpu.pipeline_mode<synchronous>, transform_indices = @transform_8, window_bounds = array<i64: 2, 4, 1, 8>}, {pipeline_mode = #tpu.pipeline_mode<synchronous>, transform_indices = @transform_9, window_bounds = array<i64: 2, 4, 32, 8>}, {pipeline_mode = #tpu.pipeline_mode<synchronous>, transform_indices = @transform_10, window_bounds = array<i64: 2, 4, 1, 8>}, {pipeline_mode = #tpu.pipeline_mode<synchronous>, transform_indices = @transform_11, window_bounds = array<i64: 2, 4, 32, 8>}, {pipeline_mode = #tpu.pipeline_mode<synchronous>, transform_indices = @transform_12, window_bounds = array<i64: 2, 4, 1, 8>}, {pipeline_mode = #tpu.pipeline_mode<synchronous>, transform_indices = @transform_13, window_bounds = array<i64: 2, 4, 8, 32>}, {pipeline_mode = #tpu.pipeline_mode<synchronous>, transform_indices = @transform_14, window_bounds = array<i64: 2, 1, 32>}, {pipeline_mode = #tpu.pipeline_mode<synchronous>, transform_indices = @transform_15, window_bounds = array<i64: 2, 1, 32>}, {pipeline_mode = #tpu.pipeline_mode<synchronous>, transform_indices = @transform_16, window_bounds = array<i64: 2, 1, 32>}, {pipeline_mode = #tpu.pipeline_mode<synchronous>, transform_indices = @transform_17, window_bounds = array<i64: 2, 32, 128>}, {pipeline_mode = #tpu.pipeline_mode<synchronous>, transform_indices = @transform_18, window_bounds = array<i64: 2, 1, 128>}, {pipeline_mode = #tpu.pipeline_mode<synchronous>, transform_indices = @transform_19, window_bounds = array<i64: 2, 128, 32>}, {pipeline_mode = #tpu.pipeline_mode<synchronous>, transform_indices = @transform_20, window_bounds = array<i64: 2, 1, 32>}, {pipeline_mode = #tpu.pipeline_mode<synchronous>, transform_indices = @transform_21, window_bounds = array<i64: 2, 32, 8>}, {pipeline_mode = #tpu.pipeline_mode<synchronous>, transform_indices = @transform_22, window_bounds = array<i64: 2, 1, 8>}, {pipeline_mode = #tpu.pipeline_mode<synchronous>, transform_indices = @transform_23, window_bounds = array<i64: 2, 8, 32>}, {pipeline_mode = #tpu.pipeline_mode<synchronous>, transform_indices = @transform_24, window_bounds = array<i64: 2, 1, 32>}, {pipeline_mode = #tpu.pipeline_mode<synchronous>, transform_indices = @transform_25, window_bounds = array<i64: 1, 32>}, {pipeline_mode = #tpu.pipeline_mode<synchronous>, transform_indices = @transform_26, window_bounds = array<i64: 1, 32>}, {pipeline_mode = #tpu.pipeline_mode<synchronous>, transform_indices = @transform_27, window_bounds = array<i64: 32, 10>}, {pipeline_mode = #tpu.pipeline_mode<synchronous>, transform_indices = @transform_28, window_bounds = array<i64: 1, 1>}, {transform_indices = @transform_29, window_bounds = array<i64: 1, 1, 10>}]} {
    %c0 = arith.constant 0 : index
    %c0_0 = arith.constant 0 : index
    %c0_1 = arith.constant 0 : index
    %0 = vector.load %arg1[%c0, %c0_0, %c0_1] : memref<1x16x48xf32, #tpu.memory_space<vmem>>, vector<1x16x48xf32>
    %1 = vector.shape_cast %0 : vector<1x16x48xf32> to vector<16x48xf32>
    %c0_2 = arith.constant 0 : index
    %c0_3 = arith.constant 0 : index
    %2 = vector.load %arg2[%c0_2, %c0_3] : memref<48x32xf32, #tpu.memory_space<vmem>>, vector<48x32xf32>
    %cst = arith.constant dense<0.000000e+00> : vector<16x32xf32>
    %3 = tpu.matmul %1, %2, %cst {dimension_numbers = #tpu.dot_dimension_numbers<[1], [0], [0], [1], [0, 0, 1, 1], [], []>} : vector<16x48xf32>, vector<48x32xf32>, vector<16x32xf32> -> vector<16x32xf32>
    %c0_4 = arith.constant 0 : index
    %c0_5 = arith.constant 0 : index
    %4 = vector.load %arg3[%c0_4, %c0_5] : memref<1x32xf32, #tpu.memory_space<vmem>>, vector<1x32xf32>
    %5 = vector.broadcast %4 : vector<1x32xf32> to vector<16x32xf32>
    %6 = arith.addf %3, %5 : vector<16x32xf32>
    %c0_6 = arith.constant 0 : index
    %c0_7 = arith.constant 0 : index
    %7 = vector.load %arg5[%c0_6, %c0_7] : memref<16x32xf32, #tpu.memory_space<vmem>>, vector<16x32xf32>
    %8 = arith.addf %6, %7 : vector<16x32xf32>
    %cst_8 = arith.constant 0.000000e+00 : f32
    %9 = vector.broadcast %cst_8 : f32 to vector<7x32xf32>
    %c0_9 = arith.constant 0 : index
    %c0_10 = arith.constant 0 : index
    %10 = vector.load %arg4[%c0_9, %c0_10] : memref<1x32xf32, #tpu.memory_space<vmem>>, vector<1x32xf32>
    %11 = tpu.concatenate %10, %8, %9 in 0 : vector<1x32xf32>, vector<16x32xf32>, vector<7x32xf32> -> vector<24x32xf32>
    %12 = tpu.iota {dimensions = array<i32: 1>} : vector<1x24xi32>
    %c17_i32 = arith.constant 17 : i32
    %13 = vector.broadcast %c17_i32 : i32 to vector<1x24xi32>
    %14 = arith.cmpi slt, %12, %13 : vector<1x24xi32>
    %c0_11 = arith.constant 0 : index
    %c0_12 = arith.constant 0 : index
    %c0_13 = arith.constant 0 : index
    %15 = vector.load %arg6[%c0_11, %c0_12, %c0_13] : memref<2x1x32xf32, #tpu.memory_space<vmem>>, vector<1x1x32xf32>
    %16 = vector.shape_cast %15 : vector<1x1x32xf32> to vector<1x32xf32>
    %c0_14 = arith.constant 0 : index
    %c0_15 = arith.constant 0 : index
    %c0_16 = arith.constant 0 : index
    %17 = vector.load %arg7[%c0_14, %c0_15, %c0_16] : memref<2x1x32xf32, #tpu.memory_space<vmem>>, vector<1x1x32xf32>
    %18 = vector.shape_cast %17 : vector<1x1x32xf32> to vector<1x32xf32>
    %cst_17 = arith.constant dense<0.000000e+00> : vector<24xf32>
    %19 = vector.multi_reduction <add>, %11, %cst_17 [1] : vector<24x32xf32> to vector<24xf32>
    %20 = vector.shape_cast %19 : vector<24xf32> to vector<24x1xf32>
    %cst_18 = arith.constant 3.200000e+01 : f32
    %21 = vector.broadcast %cst_18 : f32 to vector<24x1xf32>
    %22 = arith.divf %20, %21 : vector<24x1xf32>
    %23 = vector.broadcast %22 : vector<24x1xf32> to vector<24x32xf32>
    %24 = arith.subf %11, %23 : vector<24x32xf32>
    %25 = arith.mulf %24, %24 : vector<24x32xf32>
    %cst_19 = arith.constant dense<0.000000e+00> : vector<24xf32>
    %26 = vector.multi_reduction <add>, %25, %cst_19 [1] : vector<24x32xf32> to vector<24xf32>
    %27 = vector.shape_cast %26 : vector<24xf32> to vector<24x1xf32>
    %cst_20 = arith.constant 3.200000e+01 : f32
    %28 = vector.broadcast %cst_20 : f32 to vector<24x1xf32>
    %29 = arith.divf %27, %28 : vector<24x1xf32>
    %30 = vector.broadcast %22 : vector<24x1xf32> to vector<24x32xf32>
    %31 = arith.subf %11, %30 : vector<24x32xf32>
    %cst_21 = arith.constant 9.99999997E-7 : f32
    %32 = vector.broadcast %cst_21 : f32 to vector<24x1xf32>
    %33 = arith.addf %29, %32 : vector<24x1xf32>
    %34 = math.rsqrt %33 : vector<24x1xf32>
    %35 = vector.broadcast %34 : vector<24x1xf32> to vector<24x32xf32>
    %36 = arith.mulf %31, %35 : vector<24x32xf32>
    %37 = vector.broadcast %16 : vector<1x32xf32> to vector<24x32xf32>
    %38 = arith.mulf %36, %37 : vector<24x32xf32>
    %39 = vector.broadcast %18 : vector<1x32xf32> to vector<24x32xf32>
    %40 = arith.addf %38, %39 : vector<24x32xf32>
    %cst_22 = arith.constant 0.000000e+00 : f32
    %41 = vector.broadcast %cst_22 : f32 to vector<24x32xf32>
    %c0_23 = arith.constant 0 : index
    %c0_24 = arith.constant 0 : index
    %c0_25 = arith.constant 0 : index
    %c0_26 = arith.constant 0 : index
    %42 = vector.load %arg8[%c0_23, %c0_24, %c0_25, %c0_26] : memref<2x4x32x8xf32, #tpu.memory_space<vmem>>, vector<1x1x32x8xf32>
    %43 = vector.shape_cast %42 : vector<1x1x32x8xf32> to vector<32x8xf32>
    %cst_27 = arith.constant dense<0.000000e+00> : vector<24x8xf32>
    %44 = tpu.matmul %40, %43, %cst_27 {dimension_numbers = #tpu.dot_dimension_numbers<[1], [0], [0], [1], [0, 0, 1, 1], [], []>} : vector<24x32xf32>, vector<32x8xf32>, vector<24x8xf32> -> vector<24x8xf32>
    %c0_28 = arith.constant 0 : index
    %c0_29 = arith.constant 0 : index
    %c0_30 = arith.constant 0 : index
    %c0_31 = arith.constant 0 : index
    %45 = vector.load %arg9[%c0_28, %c0_29, %c0_30, %c0_31] : memref<2x4x1x8xf32, #tpu.memory_space<vmem>>, vector<1x1x1x8xf32>
    %46 = vector.shape_cast %45 : vector<1x1x1x8xf32> to vector<1x8xf32>
    %47 = vector.broadcast %46 : vector<1x8xf32> to vector<24x8xf32>
    %48 = arith.addf %44, %47 : vector<24x8xf32>
    %c0_32 = arith.constant 0 : index
    %c0_33 = arith.constant 0 : index
    %c0_34 = arith.constant 0 : index
    %c0_35 = arith.constant 0 : index
    %49 = vector.load %arg10[%c0_32, %c0_33, %c0_34, %c0_35] : memref<2x4x32x8xf32, #tpu.memory_space<vmem>>, vector<1x1x32x8xf32>
    %50 = vector.shape_cast %49 : vector<1x1x32x8xf32> to vector<32x8xf32>
    %cst_36 = arith.constant dense<0.000000e+00> : vector<24x8xf32>
    %51 = tpu.matmul %40, %50, %cst_36 {dimension_numbers = #tpu.dot_dimension_numbers<[1], [0], [0], [1], [0, 0, 1, 1], [], []>} : vector<24x32xf32>, vector<32x8xf32>, vector<24x8xf32> -> vector<24x8xf32>
    %c0_37 = arith.constant 0 : index
    %c0_38 = arith.constant 0 : index
    %c0_39 = arith.constant 0 : index
    %c0_40 = arith.constant 0 : index
    %52 = vector.load %arg11[%c0_37, %c0_38, %c0_39, %c0_40] : memref<2x4x1x8xf32, #tpu.memory_space<vmem>>, vector<1x1x1x8xf32>
    %53 = vector.shape_cast %52 : vector<1x1x1x8xf32> to vector<1x8xf32>
    %54 = vector.broadcast %53 : vector<1x8xf32> to vector<24x8xf32>
    %55 = arith.addf %51, %54 : vector<24x8xf32>
    %c0_41 = arith.constant 0 : index
    %c0_42 = arith.constant 0 : index
    %c0_43 = arith.constant 0 : index
    %c0_44 = arith.constant 0 : index
    %56 = vector.load %arg12[%c0_41, %c0_42, %c0_43, %c0_44] : memref<2x4x32x8xf32, #tpu.memory_space<vmem>>, vector<1x1x32x8xf32>
    %57 = vector.shape_cast %56 : vector<1x1x32x8xf32> to vector<32x8xf32>
    %cst_45 = arith.constant dense<0.000000e+00> : vector<24x8xf32>
    %58 = tpu.matmul %40, %57, %cst_45 {dimension_numbers = #tpu.dot_dimension_numbers<[1], [0], [0], [1], [0, 0, 1, 1], [], []>} : vector<24x32xf32>, vector<32x8xf32>, vector<24x8xf32> -> vector<24x8xf32>
    %c0_46 = arith.constant 0 : index
    %c0_47 = arith.constant 0 : index
    %c0_48 = arith.constant 0 : index
    %c0_49 = arith.constant 0 : index
    %59 = vector.load %arg13[%c0_46, %c0_47, %c0_48, %c0_49] : memref<2x4x1x8xf32, #tpu.memory_space<vmem>>, vector<1x1x1x8xf32>
    %60 = vector.shape_cast %59 : vector<1x1x1x8xf32> to vector<1x8xf32>
    %61 = vector.broadcast %60 : vector<1x8xf32> to vector<24x8xf32>
    %62 = arith.addf %58, %61 : vector<24x8xf32>
    %cst_50 = arith.constant dense<0.000000e+00> : vector<24x24xf32>
    %63 = tpu.matmul %48, %55, %cst_50 {dimension_numbers = #tpu.dot_dimension_numbers<[1], [1], [0], [0], [0, 0, 1, 0], [], []>} : vector<24x8xf32>, vector<24x8xf32>, vector<24x24xf32> -> vector<24x24xf32>
    %cst_51 = arith.constant 0.353553385 : f32
    %64 = vector.broadcast %cst_51 : f32 to vector<24x24xf32>
    %65 = arith.mulf %63, %64 : vector<24x24xf32>
    %cst_52 = arith.constant -1.000000e+30 : f32
    %66 = vector.shape_cast %14 : vector<1x24xi1> to vector<1x24xi1>
    %67 = vector.broadcast %66 : vector<1x24xi1> to vector<24x24xi1>
    %68 = vector.broadcast %cst_52 : f32 to vector<24x24xf32>
    %69 = arith.select %67, %65, %68 : vector<24x24xi1>, vector<24x24xf32>
    %cst_53 = arith.constant dense<0xFF800000> : vector<24xf32>
    %70 = vector.multi_reduction <maximumf>, %69, %cst_53 [1] : vector<24x24xf32> to vector<24xf32>
    %71 = vector.shape_cast %70 : vector<24xf32> to vector<24x1xf32>
    %72 = vector.broadcast %71 : vector<24x1xf32> to vector<24x24xf32>
    %73 = arith.subf %69, %72 : vector<24x24xf32>
    %74 = math.exp %73 : vector<24x24xf32>
    %cst_54 = arith.constant dense<0.000000e+00> : vector<24xf32>
    %75 = vector.multi_reduction <add>, %74, %cst_54 [1] : vector<24x24xf32> to vector<24xf32>
    %76 = vector.shape_cast %75 : vector<24xf32> to vector<24x1xf32>
    %77 = tpu.reciprocal %76 {approx = true} : vector<24x1xf32> -> vector<24x1xf32>
    %78 = vector.broadcast %77 : vector<24x1xf32> to vector<24x24xf32>
    %79 = arith.mulf %74, %78 : vector<24x24xf32>
    %cst_55 = arith.constant dense<0.000000e+00> : vector<24x8xf32>
    %80 = tpu.matmul %79, %62, %cst_55 {dimension_numbers = #tpu.dot_dimension_numbers<[1], [0], [0], [1], [0, 0, 1, 1], [], []>} : vector<24x24xf32>, vector<24x8xf32>, vector<24x8xf32> -> vector<24x8xf32>
    %c0_56 = arith.constant 0 : index
    %c0_57 = arith.constant 0 : index
    %c0_58 = arith.constant 0 : index
    %c0_59 = arith.constant 0 : index
    %81 = vector.load %arg14[%c0_56, %c0_57, %c0_58, %c0_59] : memref<2x4x8x32xf32, #tpu.memory_space<vmem>>, vector<1x1x8x32xf32>
    %82 = vector.shape_cast %81 : vector<1x1x8x32xf32> to vector<8x32xf32>
    %cst_60 = arith.constant dense<0.000000e+00> : vector<24x32xf32>
    %83 = tpu.matmul %80, %82, %cst_60 {dimension_numbers = #tpu.dot_dimension_numbers<[1], [0], [0], [1], [0, 0, 1, 1], [], []>} : vector<24x8xf32>, vector<8x32xf32>, vector<24x32xf32> -> vector<24x32xf32>
    %84 = arith.addf %41, %83 : vector<24x32xf32>
    %c0_61 = arith.constant 0 : index
    %c1 = arith.constant 1 : index
    %c0_62 = arith.constant 0 : index
    %c0_63 = arith.constant 0 : index
    %85 = vector.load %arg8[%c0_61, %c1, %c0_62, %c0_63] : memref<2x4x32x8xf32, #tpu.memory_space<vmem>>, vector<1x1x32x8xf32>
    %86 = vector.shape_cast %85 : vector<1x1x32x8xf32> to vector<32x8xf32>
    %cst_64 = arith.constant dense<0.000000e+00> : vector<24x8xf32>
    %87 = tpu.matmul %40, %86, %cst_64 {dimension_numbers = #tpu.dot_dimension_numbers<[1], [0], [0], [1], [0, 0, 1, 1], [], []>} : vector<24x32xf32>, vector<32x8xf32>, vector<24x8xf32> -> vector<24x8xf32>
    %c0_65 = arith.constant 0 : index
    %c1_66 = arith.constant 1 : index
    %c0_67 = arith.constant 0 : index
    %c0_68 = arith.constant 0 : index
    %88 = vector.load %arg9[%c0_65, %c1_66, %c0_67, %c0_68] : memref<2x4x1x8xf32, #tpu.memory_space<vmem>>, vector<1x1x1x8xf32>
    %89 = vector.shape_cast %88 : vector<1x1x1x8xf32> to vector<1x8xf32>
    %90 = vector.broadcast %89 : vector<1x8xf32> to vector<24x8xf32>
    %91 = arith.addf %87, %90 : vector<24x8xf32>
    %c0_69 = arith.constant 0 : index
    %c1_70 = arith.constant 1 : index
    %c0_71 = arith.constant 0 : index
    %c0_72 = arith.constant 0 : index
    %92 = vector.load %arg10[%c0_69, %c1_70, %c0_71, %c0_72] : memref<2x4x32x8xf32, #tpu.memory_space<vmem>>, vector<1x1x32x8xf32>
    %93 = vector.shape_cast %92 : vector<1x1x32x8xf32> to vector<32x8xf32>
    %cst_73 = arith.constant dense<0.000000e+00> : vector<24x8xf32>
    %94 = tpu.matmul %40, %93, %cst_73 {dimension_numbers = #tpu.dot_dimension_numbers<[1], [0], [0], [1], [0, 0, 1, 1], [], []>} : vector<24x32xf32>, vector<32x8xf32>, vector<24x8xf32> -> vector<24x8xf32>
    %c0_74 = arith.constant 0 : index
    %c1_75 = arith.constant 1 : index
    %c0_76 = arith.constant 0 : index
    %c0_77 = arith.constant 0 : index
    %95 = vector.load %arg11[%c0_74, %c1_75, %c0_76, %c0_77] : memref<2x4x1x8xf32, #tpu.memory_space<vmem>>, vector<1x1x1x8xf32>
    %96 = vector.shape_cast %95 : vector<1x1x1x8xf32> to vector<1x8xf32>
    %97 = vector.broadcast %96 : vector<1x8xf32> to vector<24x8xf32>
    %98 = arith.addf %94, %97 : vector<24x8xf32>
    %c0_78 = arith.constant 0 : index
    %c1_79 = arith.constant 1 : index
    %c0_80 = arith.constant 0 : index
    %c0_81 = arith.constant 0 : index
    %99 = vector.load %arg12[%c0_78, %c1_79, %c0_80, %c0_81] : memref<2x4x32x8xf32, #tpu.memory_space<vmem>>, vector<1x1x32x8xf32>
    %100 = vector.shape_cast %99 : vector<1x1x32x8xf32> to vector<32x8xf32>
    %cst_82 = arith.constant dense<0.000000e+00> : vector<24x8xf32>
    %101 = tpu.matmul %40, %100, %cst_82 {dimension_numbers = #tpu.dot_dimension_numbers<[1], [0], [0], [1], [0, 0, 1, 1], [], []>} : vector<24x32xf32>, vector<32x8xf32>, vector<24x8xf32> -> vector<24x8xf32>
    %c0_83 = arith.constant 0 : index
    %c1_84 = arith.constant 1 : index
    %c0_85 = arith.constant 0 : index
    %c0_86 = arith.constant 0 : index
    %102 = vector.load %arg13[%c0_83, %c1_84, %c0_85, %c0_86] : memref<2x4x1x8xf32, #tpu.memory_space<vmem>>, vector<1x1x1x8xf32>
    %103 = vector.shape_cast %102 : vector<1x1x1x8xf32> to vector<1x8xf32>
    %104 = vector.broadcast %103 : vector<1x8xf32> to vector<24x8xf32>
    %105 = arith.addf %101, %104 : vector<24x8xf32>
    %cst_87 = arith.constant dense<0.000000e+00> : vector<24x24xf32>
    %106 = tpu.matmul %91, %98, %cst_87 {dimension_numbers = #tpu.dot_dimension_numbers<[1], [1], [0], [0], [0, 0, 1, 0], [], []>} : vector<24x8xf32>, vector<24x8xf32>, vector<24x24xf32> -> vector<24x24xf32>
    %cst_88 = arith.constant 0.353553385 : f32
    %107 = vector.broadcast %cst_88 : f32 to vector<24x24xf32>
    %108 = arith.mulf %106, %107 : vector<24x24xf32>
    %cst_89 = arith.constant -1.000000e+30 : f32
    %109 = vector.shape_cast %14 : vector<1x24xi1> to vector<1x24xi1>
    %110 = vector.broadcast %109 : vector<1x24xi1> to vector<24x24xi1>
    %111 = vector.broadcast %cst_89 : f32 to vector<24x24xf32>
    %112 = arith.select %110, %108, %111 : vector<24x24xi1>, vector<24x24xf32>
    %cst_90 = arith.constant dense<0xFF800000> : vector<24xf32>
    %113 = vector.multi_reduction <maximumf>, %112, %cst_90 [1] : vector<24x24xf32> to vector<24xf32>
    %114 = vector.shape_cast %113 : vector<24xf32> to vector<24x1xf32>
    %115 = vector.broadcast %114 : vector<24x1xf32> to vector<24x24xf32>
    %116 = arith.subf %112, %115 : vector<24x24xf32>
    %117 = math.exp %116 : vector<24x24xf32>
    %cst_91 = arith.constant dense<0.000000e+00> : vector<24xf32>
    %118 = vector.multi_reduction <add>, %117, %cst_91 [1] : vector<24x24xf32> to vector<24xf32>
    %119 = vector.shape_cast %118 : vector<24xf32> to vector<24x1xf32>
    %120 = tpu.reciprocal %119 {approx = true} : vector<24x1xf32> -> vector<24x1xf32>
    %121 = vector.broadcast %120 : vector<24x1xf32> to vector<24x24xf32>
    %122 = arith.mulf %117, %121 : vector<24x24xf32>
    %cst_92 = arith.constant dense<0.000000e+00> : vector<24x8xf32>
    %123 = tpu.matmul %122, %105, %cst_92 {dimension_numbers = #tpu.dot_dimension_numbers<[1], [0], [0], [1], [0, 0, 1, 1], [], []>} : vector<24x24xf32>, vector<24x8xf32>, vector<24x8xf32> -> vector<24x8xf32>
    %c0_93 = arith.constant 0 : index
    %c1_94 = arith.constant 1 : index
    %c0_95 = arith.constant 0 : index
    %c0_96 = arith.constant 0 : index
    %124 = vector.load %arg14[%c0_93, %c1_94, %c0_95, %c0_96] : memref<2x4x8x32xf32, #tpu.memory_space<vmem>>, vector<1x1x8x32xf32>
    %125 = vector.shape_cast %124 : vector<1x1x8x32xf32> to vector<8x32xf32>
    %cst_97 = arith.constant dense<0.000000e+00> : vector<24x32xf32>
    %126 = tpu.matmul %123, %125, %cst_97 {dimension_numbers = #tpu.dot_dimension_numbers<[1], [0], [0], [1], [0, 0, 1, 1], [], []>} : vector<24x8xf32>, vector<8x32xf32>, vector<24x32xf32> -> vector<24x32xf32>
    %127 = arith.addf %84, %126 : vector<24x32xf32>
    %c0_98 = arith.constant 0 : index
    %c2 = arith.constant 2 : index
    %c0_99 = arith.constant 0 : index
    %c0_100 = arith.constant 0 : index
    %128 = vector.load %arg8[%c0_98, %c2, %c0_99, %c0_100] : memref<2x4x32x8xf32, #tpu.memory_space<vmem>>, vector<1x1x32x8xf32>
    %129 = vector.shape_cast %128 : vector<1x1x32x8xf32> to vector<32x8xf32>
    %cst_101 = arith.constant dense<0.000000e+00> : vector<24x8xf32>
    %130 = tpu.matmul %40, %129, %cst_101 {dimension_numbers = #tpu.dot_dimension_numbers<[1], [0], [0], [1], [0, 0, 1, 1], [], []>} : vector<24x32xf32>, vector<32x8xf32>, vector<24x8xf32> -> vector<24x8xf32>
    %c0_102 = arith.constant 0 : index
    %c2_103 = arith.constant 2 : index
    %c0_104 = arith.constant 0 : index
    %c0_105 = arith.constant 0 : index
    %131 = vector.load %arg9[%c0_102, %c2_103, %c0_104, %c0_105] : memref<2x4x1x8xf32, #tpu.memory_space<vmem>>, vector<1x1x1x8xf32>
    %132 = vector.shape_cast %131 : vector<1x1x1x8xf32> to vector<1x8xf32>
    %133 = vector.broadcast %132 : vector<1x8xf32> to vector<24x8xf32>
    %134 = arith.addf %130, %133 : vector<24x8xf32>
    %c0_106 = arith.constant 0 : index
    %c2_107 = arith.constant 2 : index
    %c0_108 = arith.constant 0 : index
    %c0_109 = arith.constant 0 : index
    %135 = vector.load %arg10[%c0_106, %c2_107, %c0_108, %c0_109] : memref<2x4x32x8xf32, #tpu.memory_space<vmem>>, vector<1x1x32x8xf32>
    %136 = vector.shape_cast %135 : vector<1x1x32x8xf32> to vector<32x8xf32>
    %cst_110 = arith.constant dense<0.000000e+00> : vector<24x8xf32>
    %137 = tpu.matmul %40, %136, %cst_110 {dimension_numbers = #tpu.dot_dimension_numbers<[1], [0], [0], [1], [0, 0, 1, 1], [], []>} : vector<24x32xf32>, vector<32x8xf32>, vector<24x8xf32> -> vector<24x8xf32>
    %c0_111 = arith.constant 0 : index
    %c2_112 = arith.constant 2 : index
    %c0_113 = arith.constant 0 : index
    %c0_114 = arith.constant 0 : index
    %138 = vector.load %arg11[%c0_111, %c2_112, %c0_113, %c0_114] : memref<2x4x1x8xf32, #tpu.memory_space<vmem>>, vector<1x1x1x8xf32>
    %139 = vector.shape_cast %138 : vector<1x1x1x8xf32> to vector<1x8xf32>
    %140 = vector.broadcast %139 : vector<1x8xf32> to vector<24x8xf32>
    %141 = arith.addf %137, %140 : vector<24x8xf32>
    %c0_115 = arith.constant 0 : index
    %c2_116 = arith.constant 2 : index
    %c0_117 = arith.constant 0 : index
    %c0_118 = arith.constant 0 : index
    %142 = vector.load %arg12[%c0_115, %c2_116, %c0_117, %c0_118] : memref<2x4x32x8xf32, #tpu.memory_space<vmem>>, vector<1x1x32x8xf32>
    %143 = vector.shape_cast %142 : vector<1x1x32x8xf32> to vector<32x8xf32>
    %cst_119 = arith.constant dense<0.000000e+00> : vector<24x8xf32>
    %144 = tpu.matmul %40, %143, %cst_119 {dimension_numbers = #tpu.dot_dimension_numbers<[1], [0], [0], [1], [0, 0, 1, 1], [], []>} : vector<24x32xf32>, vector<32x8xf32>, vector<24x8xf32> -> vector<24x8xf32>
    %c0_120 = arith.constant 0 : index
    %c2_121 = arith.constant 2 : index
    %c0_122 = arith.constant 0 : index
    %c0_123 = arith.constant 0 : index
    %145 = vector.load %arg13[%c0_120, %c2_121, %c0_122, %c0_123] : memref<2x4x1x8xf32, #tpu.memory_space<vmem>>, vector<1x1x1x8xf32>
    %146 = vector.shape_cast %145 : vector<1x1x1x8xf32> to vector<1x8xf32>
    %147 = vector.broadcast %146 : vector<1x8xf32> to vector<24x8xf32>
    %148 = arith.addf %144, %147 : vector<24x8xf32>
    %cst_124 = arith.constant dense<0.000000e+00> : vector<24x24xf32>
    %149 = tpu.matmul %134, %141, %cst_124 {dimension_numbers = #tpu.dot_dimension_numbers<[1], [1], [0], [0], [0, 0, 1, 0], [], []>} : vector<24x8xf32>, vector<24x8xf32>, vector<24x24xf32> -> vector<24x24xf32>
    %cst_125 = arith.constant 0.353553385 : f32
    %150 = vector.broadcast %cst_125 : f32 to vector<24x24xf32>
    %151 = arith.mulf %149, %150 : vector<24x24xf32>
    %cst_126 = arith.constant -1.000000e+30 : f32
    %152 = vector.shape_cast %14 : vector<1x24xi1> to vector<1x24xi1>
    %153 = vector.broadcast %152 : vector<1x24xi1> to vector<24x24xi1>
    %154 = vector.broadcast %cst_126 : f32 to vector<24x24xf32>
    %155 = arith.select %153, %151, %154 : vector<24x24xi1>, vector<24x24xf32>
    %cst_127 = arith.constant dense<0xFF800000> : vector<24xf32>
    %156 = vector.multi_reduction <maximumf>, %155, %cst_127 [1] : vector<24x24xf32> to vector<24xf32>
    %157 = vector.shape_cast %156 : vector<24xf32> to vector<24x1xf32>
    %158 = vector.broadcast %157 : vector<24x1xf32> to vector<24x24xf32>
    %159 = arith.subf %155, %158 : vector<24x24xf32>
    %160 = math.exp %159 : vector<24x24xf32>
    %cst_128 = arith.constant dense<0.000000e+00> : vector<24xf32>
    %161 = vector.multi_reduction <add>, %160, %cst_128 [1] : vector<24x24xf32> to vector<24xf32>
    %162 = vector.shape_cast %161 : vector<24xf32> to vector<24x1xf32>
    %163 = tpu.reciprocal %162 {approx = true} : vector<24x1xf32> -> vector<24x1xf32>
    %164 = vector.broadcast %163 : vector<24x1xf32> to vector<24x24xf32>
    %165 = arith.mulf %160, %164 : vector<24x24xf32>
    %cst_129 = arith.constant dense<0.000000e+00> : vector<24x8xf32>
    %166 = tpu.matmul %165, %148, %cst_129 {dimension_numbers = #tpu.dot_dimension_numbers<[1], [0], [0], [1], [0, 0, 1, 1], [], []>} : vector<24x24xf32>, vector<24x8xf32>, vector<24x8xf32> -> vector<24x8xf32>
    %c0_130 = arith.constant 0 : index
    %c2_131 = arith.constant 2 : index
    %c0_132 = arith.constant 0 : index
    %c0_133 = arith.constant 0 : index
    %167 = vector.load %arg14[%c0_130, %c2_131, %c0_132, %c0_133] : memref<2x4x8x32xf32, #tpu.memory_space<vmem>>, vector<1x1x8x32xf32>
    %168 = vector.shape_cast %167 : vector<1x1x8x32xf32> to vector<8x32xf32>
    %cst_134 = arith.constant dense<0.000000e+00> : vector<24x32xf32>
    %169 = tpu.matmul %166, %168, %cst_134 {dimension_numbers = #tpu.dot_dimension_numbers<[1], [0], [0], [1], [0, 0, 1, 1], [], []>} : vector<24x8xf32>, vector<8x32xf32>, vector<24x32xf32> -> vector<24x32xf32>
    %170 = arith.addf %127, %169 : vector<24x32xf32>
    %c0_135 = arith.constant 0 : index
    %c3 = arith.constant 3 : index
    %c0_136 = arith.constant 0 : index
    %c0_137 = arith.constant 0 : index
    %171 = vector.load %arg8[%c0_135, %c3, %c0_136, %c0_137] : memref<2x4x32x8xf32, #tpu.memory_space<vmem>>, vector<1x1x32x8xf32>
    %172 = vector.shape_cast %171 : vector<1x1x32x8xf32> to vector<32x8xf32>
    %cst_138 = arith.constant dense<0.000000e+00> : vector<24x8xf32>
    %173 = tpu.matmul %40, %172, %cst_138 {dimension_numbers = #tpu.dot_dimension_numbers<[1], [0], [0], [1], [0, 0, 1, 1], [], []>} : vector<24x32xf32>, vector<32x8xf32>, vector<24x8xf32> -> vector<24x8xf32>
    %c0_139 = arith.constant 0 : index
    %c3_140 = arith.constant 3 : index
    %c0_141 = arith.constant 0 : index
    %c0_142 = arith.constant 0 : index
    %174 = vector.load %arg9[%c0_139, %c3_140, %c0_141, %c0_142] : memref<2x4x1x8xf32, #tpu.memory_space<vmem>>, vector<1x1x1x8xf32>
    %175 = vector.shape_cast %174 : vector<1x1x1x8xf32> to vector<1x8xf32>
    %176 = vector.broadcast %175 : vector<1x8xf32> to vector<24x8xf32>
    %177 = arith.addf %173, %176 : vector<24x8xf32>
    %c0_143 = arith.constant 0 : index
    %c3_144 = arith.constant 3 : index
    %c0_145 = arith.constant 0 : index
    %c0_146 = arith.constant 0 : index
    %178 = vector.load %arg10[%c0_143, %c3_144, %c0_145, %c0_146] : memref<2x4x32x8xf32, #tpu.memory_space<vmem>>, vector<1x1x32x8xf32>
    %179 = vector.shape_cast %178 : vector<1x1x32x8xf32> to vector<32x8xf32>
    %cst_147 = arith.constant dense<0.000000e+00> : vector<24x8xf32>
    %180 = tpu.matmul %40, %179, %cst_147 {dimension_numbers = #tpu.dot_dimension_numbers<[1], [0], [0], [1], [0, 0, 1, 1], [], []>} : vector<24x32xf32>, vector<32x8xf32>, vector<24x8xf32> -> vector<24x8xf32>
    %c0_148 = arith.constant 0 : index
    %c3_149 = arith.constant 3 : index
    %c0_150 = arith.constant 0 : index
    %c0_151 = arith.constant 0 : index
    %181 = vector.load %arg11[%c0_148, %c3_149, %c0_150, %c0_151] : memref<2x4x1x8xf32, #tpu.memory_space<vmem>>, vector<1x1x1x8xf32>
    %182 = vector.shape_cast %181 : vector<1x1x1x8xf32> to vector<1x8xf32>
    %183 = vector.broadcast %182 : vector<1x8xf32> to vector<24x8xf32>
    %184 = arith.addf %180, %183 : vector<24x8xf32>
    %c0_152 = arith.constant 0 : index
    %c3_153 = arith.constant 3 : index
    %c0_154 = arith.constant 0 : index
    %c0_155 = arith.constant 0 : index
    %185 = vector.load %arg12[%c0_152, %c3_153, %c0_154, %c0_155] : memref<2x4x32x8xf32, #tpu.memory_space<vmem>>, vector<1x1x32x8xf32>
    %186 = vector.shape_cast %185 : vector<1x1x32x8xf32> to vector<32x8xf32>
    %cst_156 = arith.constant dense<0.000000e+00> : vector<24x8xf32>
    %187 = tpu.matmul %40, %186, %cst_156 {dimension_numbers = #tpu.dot_dimension_numbers<[1], [0], [0], [1], [0, 0, 1, 1], [], []>} : vector<24x32xf32>, vector<32x8xf32>, vector<24x8xf32> -> vector<24x8xf32>
    %c0_157 = arith.constant 0 : index
    %c3_158 = arith.constant 3 : index
    %c0_159 = arith.constant 0 : index
    %c0_160 = arith.constant 0 : index
    %188 = vector.load %arg13[%c0_157, %c3_158, %c0_159, %c0_160] : memref<2x4x1x8xf32, #tpu.memory_space<vmem>>, vector<1x1x1x8xf32>
    %189 = vector.shape_cast %188 : vector<1x1x1x8xf32> to vector<1x8xf32>
    %190 = vector.broadcast %189 : vector<1x8xf32> to vector<24x8xf32>
    %191 = arith.addf %187, %190 : vector<24x8xf32>
    %cst_161 = arith.constant dense<0.000000e+00> : vector<24x24xf32>
    %192 = tpu.matmul %177, %184, %cst_161 {dimension_numbers = #tpu.dot_dimension_numbers<[1], [1], [0], [0], [0, 0, 1, 0], [], []>} : vector<24x8xf32>, vector<24x8xf32>, vector<24x24xf32> -> vector<24x24xf32>
    %cst_162 = arith.constant 0.353553385 : f32
    %193 = vector.broadcast %cst_162 : f32 to vector<24x24xf32>
    %194 = arith.mulf %192, %193 : vector<24x24xf32>
    %cst_163 = arith.constant -1.000000e+30 : f32
    %195 = vector.shape_cast %14 : vector<1x24xi1> to vector<1x24xi1>
    %196 = vector.broadcast %195 : vector<1x24xi1> to vector<24x24xi1>
    %197 = vector.broadcast %cst_163 : f32 to vector<24x24xf32>
    %198 = arith.select %196, %194, %197 : vector<24x24xi1>, vector<24x24xf32>
    %cst_164 = arith.constant dense<0xFF800000> : vector<24xf32>
    %199 = vector.multi_reduction <maximumf>, %198, %cst_164 [1] : vector<24x24xf32> to vector<24xf32>
    %200 = vector.shape_cast %199 : vector<24xf32> to vector<24x1xf32>
    %201 = vector.broadcast %200 : vector<24x1xf32> to vector<24x24xf32>
    %202 = arith.subf %198, %201 : vector<24x24xf32>
    %203 = math.exp %202 : vector<24x24xf32>
    %cst_165 = arith.constant dense<0.000000e+00> : vector<24xf32>
    %204 = vector.multi_reduction <add>, %203, %cst_165 [1] : vector<24x24xf32> to vector<24xf32>
    %205 = vector.shape_cast %204 : vector<24xf32> to vector<24x1xf32>
    %206 = tpu.reciprocal %205 {approx = true} : vector<24x1xf32> -> vector<24x1xf32>
    %207 = vector.broadcast %206 : vector<24x1xf32> to vector<24x24xf32>
    %208 = arith.mulf %203, %207 : vector<24x24xf32>
    %cst_166 = arith.constant dense<0.000000e+00> : vector<24x8xf32>
    %209 = tpu.matmul %208, %191, %cst_166 {dimension_numbers = #tpu.dot_dimension_numbers<[1], [0], [0], [1], [0, 0, 1, 1], [], []>} : vector<24x24xf32>, vector<24x8xf32>, vector<24x8xf32> -> vector<24x8xf32>
    %c0_167 = arith.constant 0 : index
    %c3_168 = arith.constant 3 : index
    %c0_169 = arith.constant 0 : index
    %c0_170 = arith.constant 0 : index
    %210 = vector.load %arg14[%c0_167, %c3_168, %c0_169, %c0_170] : memref<2x4x8x32xf32, #tpu.memory_space<vmem>>, vector<1x1x8x32xf32>
    %211 = vector.shape_cast %210 : vector<1x1x8x32xf32> to vector<8x32xf32>
    %cst_171 = arith.constant dense<0.000000e+00> : vector<24x32xf32>
    %212 = tpu.matmul %209, %211, %cst_171 {dimension_numbers = #tpu.dot_dimension_numbers<[1], [0], [0], [1], [0, 0, 1, 1], [], []>} : vector<24x8xf32>, vector<8x32xf32>, vector<24x32xf32> -> vector<24x32xf32>
    %213 = arith.addf %170, %212 : vector<24x32xf32>
    %214 = arith.addf %11, %213 : vector<24x32xf32>
    %c0_172 = arith.constant 0 : index
    %c0_173 = arith.constant 0 : index
    %c0_174 = arith.constant 0 : index
    %215 = vector.load %arg15[%c0_172, %c0_173, %c0_174] : memref<2x1x32xf32, #tpu.memory_space<vmem>>, vector<1x1x32xf32>
    %216 = vector.shape_cast %215 : vector<1x1x32xf32> to vector<1x32xf32>
    %217 = vector.broadcast %216 : vector<1x32xf32> to vector<24x32xf32>
    %218 = arith.addf %214, %217 : vector<24x32xf32>
    %c0_175 = arith.constant 0 : index
    %c0_176 = arith.constant 0 : index
    %c0_177 = arith.constant 0 : index
    %219 = vector.load %arg22[%c0_175, %c0_176, %c0_177] : memref<2x32x8xf32, #tpu.memory_space<vmem>>, vector<1x32x8xf32>
    %220 = vector.shape_cast %219 : vector<1x32x8xf32> to vector<32x8xf32>
    %cst_178 = arith.constant dense<0.000000e+00> : vector<24x8xf32>
    %221 = tpu.matmul %218, %220, %cst_178 {dimension_numbers = #tpu.dot_dimension_numbers<[1], [0], [0], [1], [0, 0, 1, 1], [], []>} : vector<24x32xf32>, vector<32x8xf32>, vector<24x8xf32> -> vector<24x8xf32>
    %c0_179 = arith.constant 0 : index
    %c0_180 = arith.constant 0 : index
    %c0_181 = arith.constant 0 : index
    %222 = vector.load %arg23[%c0_179, %c0_180, %c0_181] : memref<2x1x8xf32, #tpu.memory_space<vmem>>, vector<1x1x8xf32>
    %223 = vector.shape_cast %222 : vector<1x1x8xf32> to vector<1x8xf32>
    %224 = vector.broadcast %223 : vector<1x8xf32> to vector<24x8xf32>
    %225 = arith.addf %221, %224 : vector<24x8xf32>
    %cst_182 = arith.constant 0.000000e+00 : f32
    %226 = vector.broadcast %cst_182 : f32 to vector<24x8xf32>
    %227 = arith.maximumf %225, %226 : vector<24x8xf32>
    %c0_183 = arith.constant 0 : index
    %c0_184 = arith.constant 0 : index
    %c0_185 = arith.constant 0 : index
    %228 = vector.load %arg24[%c0_183, %c0_184, %c0_185] : memref<2x8x32xf32, #tpu.memory_space<vmem>>, vector<1x8x32xf32>
    %229 = vector.shape_cast %228 : vector<1x8x32xf32> to vector<8x32xf32>
    %cst_186 = arith.constant dense<0.000000e+00> : vector<24x32xf32>
    %230 = tpu.matmul %227, %229, %cst_186 {dimension_numbers = #tpu.dot_dimension_numbers<[1], [0], [0], [1], [0, 0, 1, 1], [], []>} : vector<24x8xf32>, vector<8x32xf32>, vector<24x32xf32> -> vector<24x32xf32>
    %c0_187 = arith.constant 0 : index
    %c0_188 = arith.constant 0 : index
    %c0_189 = arith.constant 0 : index
    %231 = vector.load %arg25[%c0_187, %c0_188, %c0_189] : memref<2x1x32xf32, #tpu.memory_space<vmem>>, vector<1x1x32xf32>
    %232 = vector.shape_cast %231 : vector<1x1x32xf32> to vector<1x32xf32>
    %233 = vector.broadcast %232 : vector<1x32xf32> to vector<24x32xf32>
    %234 = arith.addf %230, %233 : vector<24x32xf32>
    %cst_190 = arith.constant 1.000000e-01 : f32
    %235 = vector.broadcast %cst_190 : f32 to vector<24x32xf32>
    %236 = arith.mulf %234, %235 : vector<24x32xf32>
    %c0_191 = arith.constant 0 : index
    %c0_192 = arith.constant 0 : index
    %c0_193 = arith.constant 0 : index
    %237 = vector.load %arg16[%c0_191, %c0_192, %c0_193] : memref<2x1x32xf32, #tpu.memory_space<vmem>>, vector<1x1x32xf32>
    %238 = vector.shape_cast %237 : vector<1x1x32xf32> to vector<1x32xf32>
    %c0_194 = arith.constant 0 : index
    %c0_195 = arith.constant 0 : index
    %c0_196 = arith.constant 0 : index
    %239 = vector.load %arg17[%c0_194, %c0_195, %c0_196] : memref<2x1x32xf32, #tpu.memory_space<vmem>>, vector<1x1x32xf32>
    %240 = vector.shape_cast %239 : vector<1x1x32xf32> to vector<1x32xf32>
    %cst_197 = arith.constant dense<0.000000e+00> : vector<24xf32>
    %241 = vector.multi_reduction <add>, %218, %cst_197 [1] : vector<24x32xf32> to vector<24xf32>
    %242 = vector.shape_cast %241 : vector<24xf32> to vector<24x1xf32>
    %cst_198 = arith.constant 3.200000e+01 : f32
    %243 = vector.broadcast %cst_198 : f32 to vector<24x1xf32>
    %244 = arith.divf %242, %243 : vector<24x1xf32>
    %245 = vector.broadcast %244 : vector<24x1xf32> to vector<24x32xf32>
    %246 = arith.subf %218, %245 : vector<24x32xf32>
    %247 = arith.mulf %246, %246 : vector<24x32xf32>
    %cst_199 = arith.constant dense<0.000000e+00> : vector<24xf32>
    %248 = vector.multi_reduction <add>, %247, %cst_199 [1] : vector<24x32xf32> to vector<24xf32>
    %249 = vector.shape_cast %248 : vector<24xf32> to vector<24x1xf32>
    %cst_200 = arith.constant 3.200000e+01 : f32
    %250 = vector.broadcast %cst_200 : f32 to vector<24x1xf32>
    %251 = arith.divf %249, %250 : vector<24x1xf32>
    %252 = vector.broadcast %244 : vector<24x1xf32> to vector<24x32xf32>
    %253 = arith.subf %218, %252 : vector<24x32xf32>
    %cst_201 = arith.constant 9.99999997E-7 : f32
    %254 = vector.broadcast %cst_201 : f32 to vector<24x1xf32>
    %255 = arith.addf %251, %254 : vector<24x1xf32>
    %256 = math.rsqrt %255 : vector<24x1xf32>
    %257 = vector.broadcast %256 : vector<24x1xf32> to vector<24x32xf32>
    %258 = arith.mulf %253, %257 : vector<24x32xf32>
    %259 = vector.broadcast %238 : vector<1x32xf32> to vector<24x32xf32>
    %260 = arith.mulf %258, %259 : vector<24x32xf32>
    %261 = vector.broadcast %240 : vector<1x32xf32> to vector<24x32xf32>
    %262 = arith.addf %260, %261 : vector<24x32xf32>
    %c0_202 = arith.constant 0 : index
    %c0_203 = arith.constant 0 : index
    %c0_204 = arith.constant 0 : index
    %263 = vector.load %arg18[%c0_202, %c0_203, %c0_204] : memref<2x32x128xf32, #tpu.memory_space<vmem>>, vector<1x32x128xf32>
    %264 = vector.shape_cast %263 : vector<1x32x128xf32> to vector<32x128xf32>
    %cst_205 = arith.constant dense<0.000000e+00> : vector<24x128xf32>
    %265 = tpu.matmul %262, %264, %cst_205 {dimension_numbers = #tpu.dot_dimension_numbers<[1], [0], [0], [1], [0, 0, 1, 1], [], []>} : vector<24x32xf32>, vector<32x128xf32>, vector<24x128xf32> -> vector<24x128xf32>
    %c0_206 = arith.constant 0 : index
    %c0_207 = arith.constant 0 : index
    %c0_208 = arith.constant 0 : index
    %266 = vector.load %arg19[%c0_206, %c0_207, %c0_208] : memref<2x1x128xf32, #tpu.memory_space<vmem>>, vector<1x1x128xf32>
    %267 = vector.shape_cast %266 : vector<1x1x128xf32> to vector<1x128xf32>
    %268 = vector.broadcast %267 : vector<1x128xf32> to vector<24x128xf32>
    %269 = arith.addf %265, %268 : vector<24x128xf32>
    %cst_209 = arith.constant 0.707106769 : f32
    %270 = vector.broadcast %cst_209 : f32 to vector<24x128xf32>
    %271 = arith.mulf %269, %270 : vector<24x128xf32>
    %272 = math.absf %271 : vector<24x128xf32>
    %cst_210 = arith.constant 0.327591091 : f32
    %273 = vector.broadcast %cst_210 : f32 to vector<24x128xf32>
    %274 = arith.mulf %273, %272 : vector<24x128xf32>
    %cst_211 = arith.constant 1.000000e+00 : f32
    %275 = vector.broadcast %cst_211 : f32 to vector<24x128xf32>
    %276 = arith.addf %275, %274 : vector<24x128xf32>
    %cst_212 = arith.constant 1.000000e+00 : f32
    %277 = vector.broadcast %cst_212 : f32 to vector<24x128xf32>
    %278 = arith.divf %277, %276 : vector<24x128xf32>
    %cst_213 = arith.constant 1.06140542 : f32
    %279 = vector.broadcast %cst_213 : f32 to vector<24x128xf32>
    %280 = arith.mulf %278, %279 : vector<24x128xf32>
    %cst_214 = arith.constant -1.45315206 : f32
    %281 = vector.broadcast %cst_214 : f32 to vector<24x128xf32>
    %282 = arith.addf %281, %280 : vector<24x128xf32>
    %283 = arith.mulf %278, %282 : vector<24x128xf32>
    %cst_215 = arith.constant 1.42141378 : f32
    %284 = vector.broadcast %cst_215 : f32 to vector<24x128xf32>
    %285 = arith.addf %284, %283 : vector<24x128xf32>
    %286 = arith.mulf %278, %285 : vector<24x128xf32>
    %cst_216 = arith.constant -0.284496725 : f32
    %287 = vector.broadcast %cst_216 : f32 to vector<24x128xf32>
    %288 = arith.addf %287, %286 : vector<24x128xf32>
    %289 = arith.mulf %278, %288 : vector<24x128xf32>
    %cst_217 = arith.constant 0.254829586 : f32
    %290 = vector.broadcast %cst_217 : f32 to vector<24x128xf32>
    %291 = arith.addf %290, %289 : vector<24x128xf32>
    %292 = arith.mulf %278, %291 : vector<24x128xf32>
    %cst_218 = arith.constant 0.000000e+00 : f32
    %293 = vector.broadcast %cst_218 : f32 to vector<24x128xf32>
    %294 = arith.subf %293, %272 : vector<24x128xf32>
    %295 = arith.mulf %294, %272 : vector<24x128xf32>
    %296 = math.exp %295 : vector<24x128xf32>
    %297 = arith.mulf %292, %296 : vector<24x128xf32>
    %cst_219 = arith.constant 1.000000e+00 : f32
    %298 = vector.broadcast %cst_219 : f32 to vector<24x128xf32>
    %299 = arith.subf %298, %297 : vector<24x128xf32>
    %cst_220 = arith.constant 0.000000e+00 : f32
    %300 = vector.broadcast %cst_220 : f32 to vector<24x128xf32>
    %301 = arith.cmpf oge, %271, %300 : vector<24x128xf32>
    %cst_221 = arith.constant 0.000000e+00 : f32
    %302 = vector.broadcast %cst_221 : f32 to vector<24x128xf32>
    %303 = arith.subf %302, %299 : vector<24x128xf32>
    %304 = arith.select %301, %299, %303 : vector<24x128xi1>, vector<24x128xf32>
    %cst_222 = arith.constant 5.000000e-01 : f32
    %305 = vector.broadcast %cst_222 : f32 to vector<24x128xf32>
    %306 = arith.mulf %305, %269 : vector<24x128xf32>
    %cst_223 = arith.constant 1.000000e+00 : f32
    %307 = vector.broadcast %cst_223 : f32 to vector<24x128xf32>
    %308 = arith.addf %307, %304 : vector<24x128xf32>
    %309 = arith.mulf %306, %308 : vector<24x128xf32>
    %c0_224 = arith.constant 0 : index
    %c0_225 = arith.constant 0 : index
    %c0_226 = arith.constant 0 : index
    %310 = vector.load %arg20[%c0_224, %c0_225, %c0_226] : memref<2x128x32xf32, #tpu.memory_space<vmem>>, vector<1x128x32xf32>
    %311 = vector.shape_cast %310 : vector<1x128x32xf32> to vector<128x32xf32>
    %cst_227 = arith.constant dense<0.000000e+00> : vector<24x32xf32>
    %312 = tpu.matmul %309, %311, %cst_227 {dimension_numbers = #tpu.dot_dimension_numbers<[1], [0], [0], [1], [0, 0, 1, 1], [], []>} : vector<24x128xf32>, vector<128x32xf32>, vector<24x32xf32> -> vector<24x32xf32>
    %c0_228 = arith.constant 0 : index
    %c0_229 = arith.constant 0 : index
    %c0_230 = arith.constant 0 : index
    %313 = vector.load %arg21[%c0_228, %c0_229, %c0_230] : memref<2x1x32xf32, #tpu.memory_space<vmem>>, vector<1x1x32xf32>
    %314 = vector.shape_cast %313 : vector<1x1x32xf32> to vector<1x32xf32>
    %315 = vector.broadcast %314 : vector<1x32xf32> to vector<24x32xf32>
    %316 = arith.addf %312, %315 : vector<24x32xf32>
    %317 = arith.addf %218, %316 : vector<24x32xf32>
    %318 = arith.addf %317, %236 : vector<24x32xf32>
    %c1_231 = arith.constant 1 : index
    %c0_232 = arith.constant 0 : index
    %c0_233 = arith.constant 0 : index
    %319 = vector.load %arg6[%c1_231, %c0_232, %c0_233] : memref<2x1x32xf32, #tpu.memory_space<vmem>>, vector<1x1x32xf32>
    %320 = vector.shape_cast %319 : vector<1x1x32xf32> to vector<1x32xf32>
    %c1_234 = arith.constant 1 : index
    %c0_235 = arith.constant 0 : index
    %c0_236 = arith.constant 0 : index
    %321 = vector.load %arg7[%c1_234, %c0_235, %c0_236] : memref<2x1x32xf32, #tpu.memory_space<vmem>>, vector<1x1x32xf32>
    %322 = vector.shape_cast %321 : vector<1x1x32xf32> to vector<1x32xf32>
    %cst_237 = arith.constant dense<0.000000e+00> : vector<24xf32>
    %323 = vector.multi_reduction <add>, %318, %cst_237 [1] : vector<24x32xf32> to vector<24xf32>
    %324 = vector.shape_cast %323 : vector<24xf32> to vector<24x1xf32>
    %cst_238 = arith.constant 3.200000e+01 : f32
    %325 = vector.broadcast %cst_238 : f32 to vector<24x1xf32>
    %326 = arith.divf %324, %325 : vector<24x1xf32>
    %327 = vector.broadcast %326 : vector<24x1xf32> to vector<24x32xf32>
    %328 = arith.subf %318, %327 : vector<24x32xf32>
    %329 = arith.mulf %328, %328 : vector<24x32xf32>
    %cst_239 = arith.constant dense<0.000000e+00> : vector<24xf32>
    %330 = vector.multi_reduction <add>, %329, %cst_239 [1] : vector<24x32xf32> to vector<24xf32>
    %331 = vector.shape_cast %330 : vector<24xf32> to vector<24x1xf32>
    %cst_240 = arith.constant 3.200000e+01 : f32
    %332 = vector.broadcast %cst_240 : f32 to vector<24x1xf32>
    %333 = arith.divf %331, %332 : vector<24x1xf32>
    %334 = vector.broadcast %326 : vector<24x1xf32> to vector<24x32xf32>
    %335 = arith.subf %318, %334 : vector<24x32xf32>
    %cst_241 = arith.constant 9.99999997E-7 : f32
    %336 = vector.broadcast %cst_241 : f32 to vector<24x1xf32>
    %337 = arith.addf %333, %336 : vector<24x1xf32>
    %338 = math.rsqrt %337 : vector<24x1xf32>
    %339 = vector.broadcast %338 : vector<24x1xf32> to vector<24x32xf32>
    %340 = arith.mulf %335, %339 : vector<24x32xf32>
    %341 = vector.broadcast %320 : vector<1x32xf32> to vector<24x32xf32>
    %342 = arith.mulf %340, %341 : vector<24x32xf32>
    %343 = vector.broadcast %322 : vector<1x32xf32> to vector<24x32xf32>
    %344 = arith.addf %342, %343 : vector<24x32xf32>
    %cst_242 = arith.constant 0.000000e+00 : f32
    %345 = vector.broadcast %cst_242 : f32 to vector<24x32xf32>
    %c1_243 = arith.constant 1 : index
    %c0_244 = arith.constant 0 : index
    %c0_245 = arith.constant 0 : index
    %c0_246 = arith.constant 0 : index
    %346 = vector.load %arg8[%c1_243, %c0_244, %c0_245, %c0_246] : memref<2x4x32x8xf32, #tpu.memory_space<vmem>>, vector<1x1x32x8xf32>
    %347 = vector.shape_cast %346 : vector<1x1x32x8xf32> to vector<32x8xf32>
    %cst_247 = arith.constant dense<0.000000e+00> : vector<24x8xf32>
    %348 = tpu.matmul %344, %347, %cst_247 {dimension_numbers = #tpu.dot_dimension_numbers<[1], [0], [0], [1], [0, 0, 1, 1], [], []>} : vector<24x32xf32>, vector<32x8xf32>, vector<24x8xf32> -> vector<24x8xf32>
    %c1_248 = arith.constant 1 : index
    %c0_249 = arith.constant 0 : index
    %c0_250 = arith.constant 0 : index
    %c0_251 = arith.constant 0 : index
    %349 = vector.load %arg9[%c1_248, %c0_249, %c0_250, %c0_251] : memref<2x4x1x8xf32, #tpu.memory_space<vmem>>, vector<1x1x1x8xf32>
    %350 = vector.shape_cast %349 : vector<1x1x1x8xf32> to vector<1x8xf32>
    %351 = vector.broadcast %350 : vector<1x8xf32> to vector<24x8xf32>
    %352 = arith.addf %348, %351 : vector<24x8xf32>
    %c1_252 = arith.constant 1 : index
    %c0_253 = arith.constant 0 : index
    %c0_254 = arith.constant 0 : index
    %c0_255 = arith.constant 0 : index
    %353 = vector.load %arg10[%c1_252, %c0_253, %c0_254, %c0_255] : memref<2x4x32x8xf32, #tpu.memory_space<vmem>>, vector<1x1x32x8xf32>
    %354 = vector.shape_cast %353 : vector<1x1x32x8xf32> to vector<32x8xf32>
    %cst_256 = arith.constant dense<0.000000e+00> : vector<24x8xf32>
    %355 = tpu.matmul %344, %354, %cst_256 {dimension_numbers = #tpu.dot_dimension_numbers<[1], [0], [0], [1], [0, 0, 1, 1], [], []>} : vector<24x32xf32>, vector<32x8xf32>, vector<24x8xf32> -> vector<24x8xf32>
    %c1_257 = arith.constant 1 : index
    %c0_258 = arith.constant 0 : index
    %c0_259 = arith.constant 0 : index
    %c0_260 = arith.constant 0 : index
    %356 = vector.load %arg11[%c1_257, %c0_258, %c0_259, %c0_260] : memref<2x4x1x8xf32, #tpu.memory_space<vmem>>, vector<1x1x1x8xf32>
    %357 = vector.shape_cast %356 : vector<1x1x1x8xf32> to vector<1x8xf32>
    %358 = vector.broadcast %357 : vector<1x8xf32> to vector<24x8xf32>
    %359 = arith.addf %355, %358 : vector<24x8xf32>
    %c1_261 = arith.constant 1 : index
    %c0_262 = arith.constant 0 : index
    %c0_263 = arith.constant 0 : index
    %c0_264 = arith.constant 0 : index
    %360 = vector.load %arg12[%c1_261, %c0_262, %c0_263, %c0_264] : memref<2x4x32x8xf32, #tpu.memory_space<vmem>>, vector<1x1x32x8xf32>
    %361 = vector.shape_cast %360 : vector<1x1x32x8xf32> to vector<32x8xf32>
    %cst_265 = arith.constant dense<0.000000e+00> : vector<24x8xf32>
    %362 = tpu.matmul %344, %361, %cst_265 {dimension_numbers = #tpu.dot_dimension_numbers<[1], [0], [0], [1], [0, 0, 1, 1], [], []>} : vector<24x32xf32>, vector<32x8xf32>, vector<24x8xf32> -> vector<24x8xf32>
    %c1_266 = arith.constant 1 : index
    %c0_267 = arith.constant 0 : index
    %c0_268 = arith.constant 0 : index
    %c0_269 = arith.constant 0 : index
    %363 = vector.load %arg13[%c1_266, %c0_267, %c0_268, %c0_269] : memref<2x4x1x8xf32, #tpu.memory_space<vmem>>, vector<1x1x1x8xf32>
    %364 = vector.shape_cast %363 : vector<1x1x1x8xf32> to vector<1x8xf32>
    %365 = vector.broadcast %364 : vector<1x8xf32> to vector<24x8xf32>
    %366 = arith.addf %362, %365 : vector<24x8xf32>
    %cst_270 = arith.constant dense<0.000000e+00> : vector<24x24xf32>
    %367 = tpu.matmul %352, %359, %cst_270 {dimension_numbers = #tpu.dot_dimension_numbers<[1], [1], [0], [0], [0, 0, 1, 0], [], []>} : vector<24x8xf32>, vector<24x8xf32>, vector<24x24xf32> -> vector<24x24xf32>
    %cst_271 = arith.constant 0.353553385 : f32
    %368 = vector.broadcast %cst_271 : f32 to vector<24x24xf32>
    %369 = arith.mulf %367, %368 : vector<24x24xf32>
    %cst_272 = arith.constant -1.000000e+30 : f32
    %370 = vector.shape_cast %14 : vector<1x24xi1> to vector<1x24xi1>
    %371 = vector.broadcast %370 : vector<1x24xi1> to vector<24x24xi1>
    %372 = vector.broadcast %cst_272 : f32 to vector<24x24xf32>
    %373 = arith.select %371, %369, %372 : vector<24x24xi1>, vector<24x24xf32>
    %cst_273 = arith.constant dense<0xFF800000> : vector<24xf32>
    %374 = vector.multi_reduction <maximumf>, %373, %cst_273 [1] : vector<24x24xf32> to vector<24xf32>
    %375 = vector.shape_cast %374 : vector<24xf32> to vector<24x1xf32>
    %376 = vector.broadcast %375 : vector<24x1xf32> to vector<24x24xf32>
    %377 = arith.subf %373, %376 : vector<24x24xf32>
    %378 = math.exp %377 : vector<24x24xf32>
    %cst_274 = arith.constant dense<0.000000e+00> : vector<24xf32>
    %379 = vector.multi_reduction <add>, %378, %cst_274 [1] : vector<24x24xf32> to vector<24xf32>
    %380 = vector.shape_cast %379 : vector<24xf32> to vector<24x1xf32>
    %381 = tpu.reciprocal %380 {approx = true} : vector<24x1xf32> -> vector<24x1xf32>
    %382 = vector.broadcast %381 : vector<24x1xf32> to vector<24x24xf32>
    %383 = arith.mulf %378, %382 : vector<24x24xf32>
    %cst_275 = arith.constant dense<0.000000e+00> : vector<24x8xf32>
    %384 = tpu.matmul %383, %366, %cst_275 {dimension_numbers = #tpu.dot_dimension_numbers<[1], [0], [0], [1], [0, 0, 1, 1], [], []>} : vector<24x24xf32>, vector<24x8xf32>, vector<24x8xf32> -> vector<24x8xf32>
    %c1_276 = arith.constant 1 : index
    %c0_277 = arith.constant 0 : index
    %c0_278 = arith.constant 0 : index
    %c0_279 = arith.constant 0 : index
    %385 = vector.load %arg14[%c1_276, %c0_277, %c0_278, %c0_279] : memref<2x4x8x32xf32, #tpu.memory_space<vmem>>, vector<1x1x8x32xf32>
    %386 = vector.shape_cast %385 : vector<1x1x8x32xf32> to vector<8x32xf32>
    %cst_280 = arith.constant dense<0.000000e+00> : vector<24x32xf32>
    %387 = tpu.matmul %384, %386, %cst_280 {dimension_numbers = #tpu.dot_dimension_numbers<[1], [0], [0], [1], [0, 0, 1, 1], [], []>} : vector<24x8xf32>, vector<8x32xf32>, vector<24x32xf32> -> vector<24x32xf32>
    %388 = arith.addf %345, %387 : vector<24x32xf32>
    %c1_281 = arith.constant 1 : index
    %c1_282 = arith.constant 1 : index
    %c0_283 = arith.constant 0 : index
    %c0_284 = arith.constant 0 : index
    %389 = vector.load %arg8[%c1_281, %c1_282, %c0_283, %c0_284] : memref<2x4x32x8xf32, #tpu.memory_space<vmem>>, vector<1x1x32x8xf32>
    %390 = vector.shape_cast %389 : vector<1x1x32x8xf32> to vector<32x8xf32>
    %cst_285 = arith.constant dense<0.000000e+00> : vector<24x8xf32>
    %391 = tpu.matmul %344, %390, %cst_285 {dimension_numbers = #tpu.dot_dimension_numbers<[1], [0], [0], [1], [0, 0, 1, 1], [], []>} : vector<24x32xf32>, vector<32x8xf32>, vector<24x8xf32> -> vector<24x8xf32>
    %c1_286 = arith.constant 1 : index
    %c1_287 = arith.constant 1 : index
    %c0_288 = arith.constant 0 : index
    %c0_289 = arith.constant 0 : index
    %392 = vector.load %arg9[%c1_286, %c1_287, %c0_288, %c0_289] : memref<2x4x1x8xf32, #tpu.memory_space<vmem>>, vector<1x1x1x8xf32>
    %393 = vector.shape_cast %392 : vector<1x1x1x8xf32> to vector<1x8xf32>
    %394 = vector.broadcast %393 : vector<1x8xf32> to vector<24x8xf32>
    %395 = arith.addf %391, %394 : vector<24x8xf32>
    %c1_290 = arith.constant 1 : index
    %c1_291 = arith.constant 1 : index
    %c0_292 = arith.constant 0 : index
    %c0_293 = arith.constant 0 : index
    %396 = vector.load %arg10[%c1_290, %c1_291, %c0_292, %c0_293] : memref<2x4x32x8xf32, #tpu.memory_space<vmem>>, vector<1x1x32x8xf32>
    %397 = vector.shape_cast %396 : vector<1x1x32x8xf32> to vector<32x8xf32>
    %cst_294 = arith.constant dense<0.000000e+00> : vector<24x8xf32>
    %398 = tpu.matmul %344, %397, %cst_294 {dimension_numbers = #tpu.dot_dimension_numbers<[1], [0], [0], [1], [0, 0, 1, 1], [], []>} : vector<24x32xf32>, vector<32x8xf32>, vector<24x8xf32> -> vector<24x8xf32>
    %c1_295 = arith.constant 1 : index
    %c1_296 = arith.constant 1 : index
    %c0_297 = arith.constant 0 : index
    %c0_298 = arith.constant 0 : index
    %399 = vector.load %arg11[%c1_295, %c1_296, %c0_297, %c0_298] : memref<2x4x1x8xf32, #tpu.memory_space<vmem>>, vector<1x1x1x8xf32>
    %400 = vector.shape_cast %399 : vector<1x1x1x8xf32> to vector<1x8xf32>
    %401 = vector.broadcast %400 : vector<1x8xf32> to vector<24x8xf32>
    %402 = arith.addf %398, %401 : vector<24x8xf32>
    %c1_299 = arith.constant 1 : index
    %c1_300 = arith.constant 1 : index
    %c0_301 = arith.constant 0 : index
    %c0_302 = arith.constant 0 : index
    %403 = vector.load %arg12[%c1_299, %c1_300, %c0_301, %c0_302] : memref<2x4x32x8xf32, #tpu.memory_space<vmem>>, vector<1x1x32x8xf32>
    %404 = vector.shape_cast %403 : vector<1x1x32x8xf32> to vector<32x8xf32>
    %cst_303 = arith.constant dense<0.000000e+00> : vector<24x8xf32>
    %405 = tpu.matmul %344, %404, %cst_303 {dimension_numbers = #tpu.dot_dimension_numbers<[1], [0], [0], [1], [0, 0, 1, 1], [], []>} : vector<24x32xf32>, vector<32x8xf32>, vector<24x8xf32> -> vector<24x8xf32>
    %c1_304 = arith.constant 1 : index
    %c1_305 = arith.constant 1 : index
    %c0_306 = arith.constant 0 : index
    %c0_307 = arith.constant 0 : index
    %406 = vector.load %arg13[%c1_304, %c1_305, %c0_306, %c0_307] : memref<2x4x1x8xf32, #tpu.memory_space<vmem>>, vector<1x1x1x8xf32>
    %407 = vector.shape_cast %406 : vector<1x1x1x8xf32> to vector<1x8xf32>
    %408 = vector.broadcast %407 : vector<1x8xf32> to vector<24x8xf32>
    %409 = arith.addf %405, %408 : vector<24x8xf32>
    %cst_308 = arith.constant dense<0.000000e+00> : vector<24x24xf32>
    %410 = tpu.matmul %395, %402, %cst_308 {dimension_numbers = #tpu.dot_dimension_numbers<[1], [1], [0], [0], [0, 0, 1, 0], [], []>} : vector<24x8xf32>, vector<24x8xf32>, vector<24x24xf32> -> vector<24x24xf32>
    %cst_309 = arith.constant 0.353553385 : f32
    %411 = vector.broadcast %cst_309 : f32 to vector<24x24xf32>
    %412 = arith.mulf %410, %411 : vector<24x24xf32>
    %cst_310 = arith.constant -1.000000e+30 : f32
    %413 = vector.shape_cast %14 : vector<1x24xi1> to vector<1x24xi1>
    %414 = vector.broadcast %413 : vector<1x24xi1> to vector<24x24xi1>
    %415 = vector.broadcast %cst_310 : f32 to vector<24x24xf32>
    %416 = arith.select %414, %412, %415 : vector<24x24xi1>, vector<24x24xf32>
    %cst_311 = arith.constant dense<0xFF800000> : vector<24xf32>
    %417 = vector.multi_reduction <maximumf>, %416, %cst_311 [1] : vector<24x24xf32> to vector<24xf32>
    %418 = vector.shape_cast %417 : vector<24xf32> to vector<24x1xf32>
    %419 = vector.broadcast %418 : vector<24x1xf32> to vector<24x24xf32>
    %420 = arith.subf %416, %419 : vector<24x24xf32>
    %421 = math.exp %420 : vector<24x24xf32>
    %cst_312 = arith.constant dense<0.000000e+00> : vector<24xf32>
    %422 = vector.multi_reduction <add>, %421, %cst_312 [1] : vector<24x24xf32> to vector<24xf32>
    %423 = vector.shape_cast %422 : vector<24xf32> to vector<24x1xf32>
    %424 = tpu.reciprocal %423 {approx = true} : vector<24x1xf32> -> vector<24x1xf32>
    %425 = vector.broadcast %424 : vector<24x1xf32> to vector<24x24xf32>
    %426 = arith.mulf %421, %425 : vector<24x24xf32>
    %cst_313 = arith.constant dense<0.000000e+00> : vector<24x8xf32>
    %427 = tpu.matmul %426, %409, %cst_313 {dimension_numbers = #tpu.dot_dimension_numbers<[1], [0], [0], [1], [0, 0, 1, 1], [], []>} : vector<24x24xf32>, vector<24x8xf32>, vector<24x8xf32> -> vector<24x8xf32>
    %c1_314 = arith.constant 1 : index
    %c1_315 = arith.constant 1 : index
    %c0_316 = arith.constant 0 : index
    %c0_317 = arith.constant 0 : index
    %428 = vector.load %arg14[%c1_314, %c1_315, %c0_316, %c0_317] : memref<2x4x8x32xf32, #tpu.memory_space<vmem>>, vector<1x1x8x32xf32>
    %429 = vector.shape_cast %428 : vector<1x1x8x32xf32> to vector<8x32xf32>
    %cst_318 = arith.constant dense<0.000000e+00> : vector<24x32xf32>
    %430 = tpu.matmul %427, %429, %cst_318 {dimension_numbers = #tpu.dot_dimension_numbers<[1], [0], [0], [1], [0, 0, 1, 1], [], []>} : vector<24x8xf32>, vector<8x32xf32>, vector<24x32xf32> -> vector<24x32xf32>
    %431 = arith.addf %388, %430 : vector<24x32xf32>
    %c1_319 = arith.constant 1 : index
    %c2_320 = arith.constant 2 : index
    %c0_321 = arith.constant 0 : index
    %c0_322 = arith.constant 0 : index
    %432 = vector.load %arg8[%c1_319, %c2_320, %c0_321, %c0_322] : memref<2x4x32x8xf32, #tpu.memory_space<vmem>>, vector<1x1x32x8xf32>
    %433 = vector.shape_cast %432 : vector<1x1x32x8xf32> to vector<32x8xf32>
    %cst_323 = arith.constant dense<0.000000e+00> : vector<24x8xf32>
    %434 = tpu.matmul %344, %433, %cst_323 {dimension_numbers = #tpu.dot_dimension_numbers<[1], [0], [0], [1], [0, 0, 1, 1], [], []>} : vector<24x32xf32>, vector<32x8xf32>, vector<24x8xf32> -> vector<24x8xf32>
    %c1_324 = arith.constant 1 : index
    %c2_325 = arith.constant 2 : index
    %c0_326 = arith.constant 0 : index
    %c0_327 = arith.constant 0 : index
    %435 = vector.load %arg9[%c1_324, %c2_325, %c0_326, %c0_327] : memref<2x4x1x8xf32, #tpu.memory_space<vmem>>, vector<1x1x1x8xf32>
    %436 = vector.shape_cast %435 : vector<1x1x1x8xf32> to vector<1x8xf32>
    %437 = vector.broadcast %436 : vector<1x8xf32> to vector<24x8xf32>
    %438 = arith.addf %434, %437 : vector<24x8xf32>
    %c1_328 = arith.constant 1 : index
    %c2_329 = arith.constant 2 : index
    %c0_330 = arith.constant 0 : index
    %c0_331 = arith.constant 0 : index
    %439 = vector.load %arg10[%c1_328, %c2_329, %c0_330, %c0_331] : memref<2x4x32x8xf32, #tpu.memory_space<vmem>>, vector<1x1x32x8xf32>
    %440 = vector.shape_cast %439 : vector<1x1x32x8xf32> to vector<32x8xf32>
    %cst_332 = arith.constant dense<0.000000e+00> : vector<24x8xf32>
    %441 = tpu.matmul %344, %440, %cst_332 {dimension_numbers = #tpu.dot_dimension_numbers<[1], [0], [0], [1], [0, 0, 1, 1], [], []>} : vector<24x32xf32>, vector<32x8xf32>, vector<24x8xf32> -> vector<24x8xf32>
    %c1_333 = arith.constant 1 : index
    %c2_334 = arith.constant 2 : index
    %c0_335 = arith.constant 0 : index
    %c0_336 = arith.constant 0 : index
    %442 = vector.load %arg11[%c1_333, %c2_334, %c0_335, %c0_336] : memref<2x4x1x8xf32, #tpu.memory_space<vmem>>, vector<1x1x1x8xf32>
    %443 = vector.shape_cast %442 : vector<1x1x1x8xf32> to vector<1x8xf32>
    %444 = vector.broadcast %443 : vector<1x8xf32> to vector<24x8xf32>
    %445 = arith.addf %441, %444 : vector<24x8xf32>
    %c1_337 = arith.constant 1 : index
    %c2_338 = arith.constant 2 : index
    %c0_339 = arith.constant 0 : index
    %c0_340 = arith.constant 0 : index
    %446 = vector.load %arg12[%c1_337, %c2_338, %c0_339, %c0_340] : memref<2x4x32x8xf32, #tpu.memory_space<vmem>>, vector<1x1x32x8xf32>
    %447 = vector.shape_cast %446 : vector<1x1x32x8xf32> to vector<32x8xf32>
    %cst_341 = arith.constant dense<0.000000e+00> : vector<24x8xf32>
    %448 = tpu.matmul %344, %447, %cst_341 {dimension_numbers = #tpu.dot_dimension_numbers<[1], [0], [0], [1], [0, 0, 1, 1], [], []>} : vector<24x32xf32>, vector<32x8xf32>, vector<24x8xf32> -> vector<24x8xf32>
    %c1_342 = arith.constant 1 : index
    %c2_343 = arith.constant 2 : index
    %c0_344 = arith.constant 0 : index
    %c0_345 = arith.constant 0 : index
    %449 = vector.load %arg13[%c1_342, %c2_343, %c0_344, %c0_345] : memref<2x4x1x8xf32, #tpu.memory_space<vmem>>, vector<1x1x1x8xf32>
    %450 = vector.shape_cast %449 : vector<1x1x1x8xf32> to vector<1x8xf32>
    %451 = vector.broadcast %450 : vector<1x8xf32> to vector<24x8xf32>
    %452 = arith.addf %448, %451 : vector<24x8xf32>
    %cst_346 = arith.constant dense<0.000000e+00> : vector<24x24xf32>
    %453 = tpu.matmul %438, %445, %cst_346 {dimension_numbers = #tpu.dot_dimension_numbers<[1], [1], [0], [0], [0, 0, 1, 0], [], []>} : vector<24x8xf32>, vector<24x8xf32>, vector<24x24xf32> -> vector<24x24xf32>
    %cst_347 = arith.constant 0.353553385 : f32
    %454 = vector.broadcast %cst_347 : f32 to vector<24x24xf32>
    %455 = arith.mulf %453, %454 : vector<24x24xf32>
    %cst_348 = arith.constant -1.000000e+30 : f32
    %456 = vector.shape_cast %14 : vector<1x24xi1> to vector<1x24xi1>
    %457 = vector.broadcast %456 : vector<1x24xi1> to vector<24x24xi1>
    %458 = vector.broadcast %cst_348 : f32 to vector<24x24xf32>
    %459 = arith.select %457, %455, %458 : vector<24x24xi1>, vector<24x24xf32>
    %cst_349 = arith.constant dense<0xFF800000> : vector<24xf32>
    %460 = vector.multi_reduction <maximumf>, %459, %cst_349 [1] : vector<24x24xf32> to vector<24xf32>
    %461 = vector.shape_cast %460 : vector<24xf32> to vector<24x1xf32>
    %462 = vector.broadcast %461 : vector<24x1xf32> to vector<24x24xf32>
    %463 = arith.subf %459, %462 : vector<24x24xf32>
    %464 = math.exp %463 : vector<24x24xf32>
    %cst_350 = arith.constant dense<0.000000e+00> : vector<24xf32>
    %465 = vector.multi_reduction <add>, %464, %cst_350 [1] : vector<24x24xf32> to vector<24xf32>
    %466 = vector.shape_cast %465 : vector<24xf32> to vector<24x1xf32>
    %467 = tpu.reciprocal %466 {approx = true} : vector<24x1xf32> -> vector<24x1xf32>
    %468 = vector.broadcast %467 : vector<24x1xf32> to vector<24x24xf32>
    %469 = arith.mulf %464, %468 : vector<24x24xf32>
    %cst_351 = arith.constant dense<0.000000e+00> : vector<24x8xf32>
    %470 = tpu.matmul %469, %452, %cst_351 {dimension_numbers = #tpu.dot_dimension_numbers<[1], [0], [0], [1], [0, 0, 1, 1], [], []>} : vector<24x24xf32>, vector<24x8xf32>, vector<24x8xf32> -> vector<24x8xf32>
    %c1_352 = arith.constant 1 : index
    %c2_353 = arith.constant 2 : index
    %c0_354 = arith.constant 0 : index
    %c0_355 = arith.constant 0 : index
    %471 = vector.load %arg14[%c1_352, %c2_353, %c0_354, %c0_355] : memref<2x4x8x32xf32, #tpu.memory_space<vmem>>, vector<1x1x8x32xf32>
    %472 = vector.shape_cast %471 : vector<1x1x8x32xf32> to vector<8x32xf32>
    %cst_356 = arith.constant dense<0.000000e+00> : vector<24x32xf32>
    %473 = tpu.matmul %470, %472, %cst_356 {dimension_numbers = #tpu.dot_dimension_numbers<[1], [0], [0], [1], [0, 0, 1, 1], [], []>} : vector<24x8xf32>, vector<8x32xf32>, vector<24x32xf32> -> vector<24x32xf32>
    %474 = arith.addf %431, %473 : vector<24x32xf32>
    %c1_357 = arith.constant 1 : index
    %c3_358 = arith.constant 3 : index
    %c0_359 = arith.constant 0 : index
    %c0_360 = arith.constant 0 : index
    %475 = vector.load %arg8[%c1_357, %c3_358, %c0_359, %c0_360] : memref<2x4x32x8xf32, #tpu.memory_space<vmem>>, vector<1x1x32x8xf32>
    %476 = vector.shape_cast %475 : vector<1x1x32x8xf32> to vector<32x8xf32>
    %cst_361 = arith.constant dense<0.000000e+00> : vector<24x8xf32>
    %477 = tpu.matmul %344, %476, %cst_361 {dimension_numbers = #tpu.dot_dimension_numbers<[1], [0], [0], [1], [0, 0, 1, 1], [], []>} : vector<24x32xf32>, vector<32x8xf32>, vector<24x8xf32> -> vector<24x8xf32>
    %c1_362 = arith.constant 1 : index
    %c3_363 = arith.constant 3 : index
    %c0_364 = arith.constant 0 : index
    %c0_365 = arith.constant 0 : index
    %478 = vector.load %arg9[%c1_362, %c3_363, %c0_364, %c0_365] : memref<2x4x1x8xf32, #tpu.memory_space<vmem>>, vector<1x1x1x8xf32>
    %479 = vector.shape_cast %478 : vector<1x1x1x8xf32> to vector<1x8xf32>
    %480 = vector.broadcast %479 : vector<1x8xf32> to vector<24x8xf32>
    %481 = arith.addf %477, %480 : vector<24x8xf32>
    %c1_366 = arith.constant 1 : index
    %c3_367 = arith.constant 3 : index
    %c0_368 = arith.constant 0 : index
    %c0_369 = arith.constant 0 : index
    %482 = vector.load %arg10[%c1_366, %c3_367, %c0_368, %c0_369] : memref<2x4x32x8xf32, #tpu.memory_space<vmem>>, vector<1x1x32x8xf32>
    %483 = vector.shape_cast %482 : vector<1x1x32x8xf32> to vector<32x8xf32>
    %cst_370 = arith.constant dense<0.000000e+00> : vector<24x8xf32>
    %484 = tpu.matmul %344, %483, %cst_370 {dimension_numbers = #tpu.dot_dimension_numbers<[1], [0], [0], [1], [0, 0, 1, 1], [], []>} : vector<24x32xf32>, vector<32x8xf32>, vector<24x8xf32> -> vector<24x8xf32>
    %c1_371 = arith.constant 1 : index
    %c3_372 = arith.constant 3 : index
    %c0_373 = arith.constant 0 : index
    %c0_374 = arith.constant 0 : index
    %485 = vector.load %arg11[%c1_371, %c3_372, %c0_373, %c0_374] : memref<2x4x1x8xf32, #tpu.memory_space<vmem>>, vector<1x1x1x8xf32>
    %486 = vector.shape_cast %485 : vector<1x1x1x8xf32> to vector<1x8xf32>
    %487 = vector.broadcast %486 : vector<1x8xf32> to vector<24x8xf32>
    %488 = arith.addf %484, %487 : vector<24x8xf32>
    %c1_375 = arith.constant 1 : index
    %c3_376 = arith.constant 3 : index
    %c0_377 = arith.constant 0 : index
    %c0_378 = arith.constant 0 : index
    %489 = vector.load %arg12[%c1_375, %c3_376, %c0_377, %c0_378] : memref<2x4x32x8xf32, #tpu.memory_space<vmem>>, vector<1x1x32x8xf32>
    %490 = vector.shape_cast %489 : vector<1x1x32x8xf32> to vector<32x8xf32>
    %cst_379 = arith.constant dense<0.000000e+00> : vector<24x8xf32>
    %491 = tpu.matmul %344, %490, %cst_379 {dimension_numbers = #tpu.dot_dimension_numbers<[1], [0], [0], [1], [0, 0, 1, 1], [], []>} : vector<24x32xf32>, vector<32x8xf32>, vector<24x8xf32> -> vector<24x8xf32>
    %c1_380 = arith.constant 1 : index
    %c3_381 = arith.constant 3 : index
    %c0_382 = arith.constant 0 : index
    %c0_383 = arith.constant 0 : index
    %492 = vector.load %arg13[%c1_380, %c3_381, %c0_382, %c0_383] : memref<2x4x1x8xf32, #tpu.memory_space<vmem>>, vector<1x1x1x8xf32>
    %493 = vector.shape_cast %492 : vector<1x1x1x8xf32> to vector<1x8xf32>
    %494 = vector.broadcast %493 : vector<1x8xf32> to vector<24x8xf32>
    %495 = arith.addf %491, %494 : vector<24x8xf32>
    %cst_384 = arith.constant dense<0.000000e+00> : vector<24x24xf32>
    %496 = tpu.matmul %481, %488, %cst_384 {dimension_numbers = #tpu.dot_dimension_numbers<[1], [1], [0], [0], [0, 0, 1, 0], [], []>} : vector<24x8xf32>, vector<24x8xf32>, vector<24x24xf32> -> vector<24x24xf32>
    %cst_385 = arith.constant 0.353553385 : f32
    %497 = vector.broadcast %cst_385 : f32 to vector<24x24xf32>
    %498 = arith.mulf %496, %497 : vector<24x24xf32>
    %cst_386 = arith.constant -1.000000e+30 : f32
    %499 = vector.shape_cast %14 : vector<1x24xi1> to vector<1x24xi1>
    %500 = vector.broadcast %499 : vector<1x24xi1> to vector<24x24xi1>
    %501 = vector.broadcast %cst_386 : f32 to vector<24x24xf32>
    %502 = arith.select %500, %498, %501 : vector<24x24xi1>, vector<24x24xf32>
    %cst_387 = arith.constant dense<0xFF800000> : vector<24xf32>
    %503 = vector.multi_reduction <maximumf>, %502, %cst_387 [1] : vector<24x24xf32> to vector<24xf32>
    %504 = vector.shape_cast %503 : vector<24xf32> to vector<24x1xf32>
    %505 = vector.broadcast %504 : vector<24x1xf32> to vector<24x24xf32>
    %506 = arith.subf %502, %505 : vector<24x24xf32>
    %507 = math.exp %506 : vector<24x24xf32>
    %cst_388 = arith.constant dense<0.000000e+00> : vector<24xf32>
    %508 = vector.multi_reduction <add>, %507, %cst_388 [1] : vector<24x24xf32> to vector<24xf32>
    %509 = vector.shape_cast %508 : vector<24xf32> to vector<24x1xf32>
    %510 = tpu.reciprocal %509 {approx = true} : vector<24x1xf32> -> vector<24x1xf32>
    %511 = vector.broadcast %510 : vector<24x1xf32> to vector<24x24xf32>
    %512 = arith.mulf %507, %511 : vector<24x24xf32>
    %cst_389 = arith.constant dense<0.000000e+00> : vector<24x8xf32>
    %513 = tpu.matmul %512, %495, %cst_389 {dimension_numbers = #tpu.dot_dimension_numbers<[1], [0], [0], [1], [0, 0, 1, 1], [], []>} : vector<24x24xf32>, vector<24x8xf32>, vector<24x8xf32> -> vector<24x8xf32>
    %c1_390 = arith.constant 1 : index
    %c3_391 = arith.constant 3 : index
    %c0_392 = arith.constant 0 : index
    %c0_393 = arith.constant 0 : index
    %514 = vector.load %arg14[%c1_390, %c3_391, %c0_392, %c0_393] : memref<2x4x8x32xf32, #tpu.memory_space<vmem>>, vector<1x1x8x32xf32>
    %515 = vector.shape_cast %514 : vector<1x1x8x32xf32> to vector<8x32xf32>
    %cst_394 = arith.constant dense<0.000000e+00> : vector<24x32xf32>
    %516 = tpu.matmul %513, %515, %cst_394 {dimension_numbers = #tpu.dot_dimension_numbers<[1], [0], [0], [1], [0, 0, 1, 1], [], []>} : vector<24x8xf32>, vector<8x32xf32>, vector<24x32xf32> -> vector<24x32xf32>
    %517 = arith.addf %474, %516 : vector<24x32xf32>
    %518 = arith.addf %318, %517 : vector<24x32xf32>
    %c1_395 = arith.constant 1 : index
    %c0_396 = arith.constant 0 : index
    %c0_397 = arith.constant 0 : index
    %519 = vector.load %arg15[%c1_395, %c0_396, %c0_397] : memref<2x1x32xf32, #tpu.memory_space<vmem>>, vector<1x1x32xf32>
    %520 = vector.shape_cast %519 : vector<1x1x32xf32> to vector<1x32xf32>
    %521 = vector.broadcast %520 : vector<1x32xf32> to vector<24x32xf32>
    %522 = arith.addf %518, %521 : vector<24x32xf32>
    %c1_398 = arith.constant 1 : index
    %c0_399 = arith.constant 0 : index
    %c0_400 = arith.constant 0 : index
    %523 = vector.load %arg22[%c1_398, %c0_399, %c0_400] : memref<2x32x8xf32, #tpu.memory_space<vmem>>, vector<1x32x8xf32>
    %524 = vector.shape_cast %523 : vector<1x32x8xf32> to vector<32x8xf32>
    %cst_401 = arith.constant dense<0.000000e+00> : vector<24x8xf32>
    %525 = tpu.matmul %522, %524, %cst_401 {dimension_numbers = #tpu.dot_dimension_numbers<[1], [0], [0], [1], [0, 0, 1, 1], [], []>} : vector<24x32xf32>, vector<32x8xf32>, vector<24x8xf32> -> vector<24x8xf32>
    %c1_402 = arith.constant 1 : index
    %c0_403 = arith.constant 0 : index
    %c0_404 = arith.constant 0 : index
    %526 = vector.load %arg23[%c1_402, %c0_403, %c0_404] : memref<2x1x8xf32, #tpu.memory_space<vmem>>, vector<1x1x8xf32>
    %527 = vector.shape_cast %526 : vector<1x1x8xf32> to vector<1x8xf32>
    %528 = vector.broadcast %527 : vector<1x8xf32> to vector<24x8xf32>
    %529 = arith.addf %525, %528 : vector<24x8xf32>
    %cst_405 = arith.constant 0.000000e+00 : f32
    %530 = vector.broadcast %cst_405 : f32 to vector<24x8xf32>
    %531 = arith.maximumf %529, %530 : vector<24x8xf32>
    %c1_406 = arith.constant 1 : index
    %c0_407 = arith.constant 0 : index
    %c0_408 = arith.constant 0 : index
    %532 = vector.load %arg24[%c1_406, %c0_407, %c0_408] : memref<2x8x32xf32, #tpu.memory_space<vmem>>, vector<1x8x32xf32>
    %533 = vector.shape_cast %532 : vector<1x8x32xf32> to vector<8x32xf32>
    %cst_409 = arith.constant dense<0.000000e+00> : vector<24x32xf32>
    %534 = tpu.matmul %531, %533, %cst_409 {dimension_numbers = #tpu.dot_dimension_numbers<[1], [0], [0], [1], [0, 0, 1, 1], [], []>} : vector<24x8xf32>, vector<8x32xf32>, vector<24x32xf32> -> vector<24x32xf32>
    %c1_410 = arith.constant 1 : index
    %c0_411 = arith.constant 0 : index
    %c0_412 = arith.constant 0 : index
    %535 = vector.load %arg25[%c1_410, %c0_411, %c0_412] : memref<2x1x32xf32, #tpu.memory_space<vmem>>, vector<1x1x32xf32>
    %536 = vector.shape_cast %535 : vector<1x1x32xf32> to vector<1x32xf32>
    %537 = vector.broadcast %536 : vector<1x32xf32> to vector<24x32xf32>
    %538 = arith.addf %534, %537 : vector<24x32xf32>
    %cst_413 = arith.constant 1.000000e-01 : f32
    %539 = vector.broadcast %cst_413 : f32 to vector<24x32xf32>
    %540 = arith.mulf %538, %539 : vector<24x32xf32>
    %c1_414 = arith.constant 1 : index
    %c0_415 = arith.constant 0 : index
    %c0_416 = arith.constant 0 : index
    %541 = vector.load %arg16[%c1_414, %c0_415, %c0_416] : memref<2x1x32xf32, #tpu.memory_space<vmem>>, vector<1x1x32xf32>
    %542 = vector.shape_cast %541 : vector<1x1x32xf32> to vector<1x32xf32>
    %c1_417 = arith.constant 1 : index
    %c0_418 = arith.constant 0 : index
    %c0_419 = arith.constant 0 : index
    %543 = vector.load %arg17[%c1_417, %c0_418, %c0_419] : memref<2x1x32xf32, #tpu.memory_space<vmem>>, vector<1x1x32xf32>
    %544 = vector.shape_cast %543 : vector<1x1x32xf32> to vector<1x32xf32>
    %cst_420 = arith.constant dense<0.000000e+00> : vector<24xf32>
    %545 = vector.multi_reduction <add>, %522, %cst_420 [1] : vector<24x32xf32> to vector<24xf32>
    %546 = vector.shape_cast %545 : vector<24xf32> to vector<24x1xf32>
    %cst_421 = arith.constant 3.200000e+01 : f32
    %547 = vector.broadcast %cst_421 : f32 to vector<24x1xf32>
    %548 = arith.divf %546, %547 : vector<24x1xf32>
    %549 = vector.broadcast %548 : vector<24x1xf32> to vector<24x32xf32>
    %550 = arith.subf %522, %549 : vector<24x32xf32>
    %551 = arith.mulf %550, %550 : vector<24x32xf32>
    %cst_422 = arith.constant dense<0.000000e+00> : vector<24xf32>
    %552 = vector.multi_reduction <add>, %551, %cst_422 [1] : vector<24x32xf32> to vector<24xf32>
    %553 = vector.shape_cast %552 : vector<24xf32> to vector<24x1xf32>
    %cst_423 = arith.constant 3.200000e+01 : f32
    %554 = vector.broadcast %cst_423 : f32 to vector<24x1xf32>
    %555 = arith.divf %553, %554 : vector<24x1xf32>
    %556 = vector.broadcast %548 : vector<24x1xf32> to vector<24x32xf32>
    %557 = arith.subf %522, %556 : vector<24x32xf32>
    %cst_424 = arith.constant 9.99999997E-7 : f32
    %558 = vector.broadcast %cst_424 : f32 to vector<24x1xf32>
    %559 = arith.addf %555, %558 : vector<24x1xf32>
    %560 = math.rsqrt %559 : vector<24x1xf32>
    %561 = vector.broadcast %560 : vector<24x1xf32> to vector<24x32xf32>
    %562 = arith.mulf %557, %561 : vector<24x32xf32>
    %563 = vector.broadcast %542 : vector<1x32xf32> to vector<24x32xf32>
    %564 = arith.mulf %562, %563 : vector<24x32xf32>
    %565 = vector.broadcast %544 : vector<1x32xf32> to vector<24x32xf32>
    %566 = arith.addf %564, %565 : vector<24x32xf32>
    %c1_425 = arith.constant 1 : index
    %c0_426 = arith.constant 0 : index
    %c0_427 = arith.constant 0 : index
    %567 = vector.load %arg18[%c1_425, %c0_426, %c0_427] : memref<2x32x128xf32, #tpu.memory_space<vmem>>, vector<1x32x128xf32>
    %568 = vector.shape_cast %567 : vector<1x32x128xf32> to vector<32x128xf32>
    %cst_428 = arith.constant dense<0.000000e+00> : vector<24x128xf32>
    %569 = tpu.matmul %566, %568, %cst_428 {dimension_numbers = #tpu.dot_dimension_numbers<[1], [0], [0], [1], [0, 0, 1, 1], [], []>} : vector<24x32xf32>, vector<32x128xf32>, vector<24x128xf32> -> vector<24x128xf32>
    %c1_429 = arith.constant 1 : index
    %c0_430 = arith.constant 0 : index
    %c0_431 = arith.constant 0 : index
    %570 = vector.load %arg19[%c1_429, %c0_430, %c0_431] : memref<2x1x128xf32, #tpu.memory_space<vmem>>, vector<1x1x128xf32>
    %571 = vector.shape_cast %570 : vector<1x1x128xf32> to vector<1x128xf32>
    %572 = vector.broadcast %571 : vector<1x128xf32> to vector<24x128xf32>
    %573 = arith.addf %569, %572 : vector<24x128xf32>
    %cst_432 = arith.constant 0.707106769 : f32
    %574 = vector.broadcast %cst_432 : f32 to vector<24x128xf32>
    %575 = arith.mulf %573, %574 : vector<24x128xf32>
    %576 = math.absf %575 : vector<24x128xf32>
    %cst_433 = arith.constant 0.327591091 : f32
    %577 = vector.broadcast %cst_433 : f32 to vector<24x128xf32>
    %578 = arith.mulf %577, %576 : vector<24x128xf32>
    %cst_434 = arith.constant 1.000000e+00 : f32
    %579 = vector.broadcast %cst_434 : f32 to vector<24x128xf32>
    %580 = arith.addf %579, %578 : vector<24x128xf32>
    %cst_435 = arith.constant 1.000000e+00 : f32
    %581 = vector.broadcast %cst_435 : f32 to vector<24x128xf32>
    %582 = arith.divf %581, %580 : vector<24x128xf32>
    %cst_436 = arith.constant 1.06140542 : f32
    %583 = vector.broadcast %cst_436 : f32 to vector<24x128xf32>
    %584 = arith.mulf %582, %583 : vector<24x128xf32>
    %cst_437 = arith.constant -1.45315206 : f32
    %585 = vector.broadcast %cst_437 : f32 to vector<24x128xf32>
    %586 = arith.addf %585, %584 : vector<24x128xf32>
    %587 = arith.mulf %582, %586 : vector<24x128xf32>
    %cst_438 = arith.constant 1.42141378 : f32
    %588 = vector.broadcast %cst_438 : f32 to vector<24x128xf32>
    %589 = arith.addf %588, %587 : vector<24x128xf32>
    %590 = arith.mulf %582, %589 : vector<24x128xf32>
    %cst_439 = arith.constant -0.284496725 : f32
    %591 = vector.broadcast %cst_439 : f32 to vector<24x128xf32>
    %592 = arith.addf %591, %590 : vector<24x128xf32>
    %593 = arith.mulf %582, %592 : vector<24x128xf32>
    %cst_440 = arith.constant 0.254829586 : f32
    %594 = vector.broadcast %cst_440 : f32 to vector<24x128xf32>
    %595 = arith.addf %594, %593 : vector<24x128xf32>
    %596 = arith.mulf %582, %595 : vector<24x128xf32>
    %cst_441 = arith.constant 0.000000e+00 : f32
    %597 = vector.broadcast %cst_441 : f32 to vector<24x128xf32>
    %598 = arith.subf %597, %576 : vector<24x128xf32>
    %599 = arith.mulf %598, %576 : vector<24x128xf32>
    %600 = math.exp %599 : vector<24x128xf32>
    %601 = arith.mulf %596, %600 : vector<24x128xf32>
    %cst_442 = arith.constant 1.000000e+00 : f32
    %602 = vector.broadcast %cst_442 : f32 to vector<24x128xf32>
    %603 = arith.subf %602, %601 : vector<24x128xf32>
    %cst_443 = arith.constant 0.000000e+00 : f32
    %604 = vector.broadcast %cst_443 : f32 to vector<24x128xf32>
    %605 = arith.cmpf oge, %575, %604 : vector<24x128xf32>
    %cst_444 = arith.constant 0.000000e+00 : f32
    %606 = vector.broadcast %cst_444 : f32 to vector<24x128xf32>
    %607 = arith.subf %606, %603 : vector<24x128xf32>
    %608 = arith.select %605, %603, %607 : vector<24x128xi1>, vector<24x128xf32>
    %cst_445 = arith.constant 5.000000e-01 : f32
    %609 = vector.broadcast %cst_445 : f32 to vector<24x128xf32>
    %610 = arith.mulf %609, %573 : vector<24x128xf32>
    %cst_446 = arith.constant 1.000000e+00 : f32
    %611 = vector.broadcast %cst_446 : f32 to vector<24x128xf32>
    %612 = arith.addf %611, %608 : vector<24x128xf32>
    %613 = arith.mulf %610, %612 : vector<24x128xf32>
    %c1_447 = arith.constant 1 : index
    %c0_448 = arith.constant 0 : index
    %c0_449 = arith.constant 0 : index
    %614 = vector.load %arg20[%c1_447, %c0_448, %c0_449] : memref<2x128x32xf32, #tpu.memory_space<vmem>>, vector<1x128x32xf32>
    %615 = vector.shape_cast %614 : vector<1x128x32xf32> to vector<128x32xf32>
    %cst_450 = arith.constant dense<0.000000e+00> : vector<24x32xf32>
    %616 = tpu.matmul %613, %615, %cst_450 {dimension_numbers = #tpu.dot_dimension_numbers<[1], [0], [0], [1], [0, 0, 1, 1], [], []>} : vector<24x128xf32>, vector<128x32xf32>, vector<24x32xf32> -> vector<24x32xf32>
    %c1_451 = arith.constant 1 : index
    %c0_452 = arith.constant 0 : index
    %c0_453 = arith.constant 0 : index
    %617 = vector.load %arg21[%c1_451, %c0_452, %c0_453] : memref<2x1x32xf32, #tpu.memory_space<vmem>>, vector<1x1x32xf32>
    %618 = vector.shape_cast %617 : vector<1x1x32xf32> to vector<1x32xf32>
    %619 = vector.broadcast %618 : vector<1x32xf32> to vector<24x32xf32>
    %620 = arith.addf %616, %619 : vector<24x32xf32>
    %621 = arith.addf %522, %620 : vector<24x32xf32>
    %622 = arith.addf %621, %540 : vector<24x32xf32>
    %623 = vector.extract_strided_slice %622 {offsets = [0, 0], sizes = [1, 32], strides = [1, 1]} : vector<24x32xf32> to vector<1x32xf32>
    %c0_454 = arith.constant 0 : index
    %c0_455 = arith.constant 0 : index
    %624 = vector.load %arg26[%c0_454, %c0_455] : memref<1x32xf32, #tpu.memory_space<vmem>>, vector<1x32xf32>
    %c0_456 = arith.constant 0 : index
    %c0_457 = arith.constant 0 : index
    %625 = vector.load %arg27[%c0_456, %c0_457] : memref<1x32xf32, #tpu.memory_space<vmem>>, vector<1x32xf32>
    %cst_458 = arith.constant dense<0.000000e+00> : vector<1xf32>
    %626 = vector.multi_reduction <add>, %623, %cst_458 [1] : vector<1x32xf32> to vector<1xf32>
    %627 = vector.shape_cast %626 : vector<1xf32> to vector<1x1xf32>
    %cst_459 = arith.constant 3.200000e+01 : f32
    %628 = vector.broadcast %cst_459 : f32 to vector<1x1xf32>
    %629 = arith.divf %627, %628 : vector<1x1xf32>
    %630 = vector.broadcast %629 : vector<1x1xf32> to vector<1x32xf32>
    %631 = arith.subf %623, %630 : vector<1x32xf32>
    %632 = arith.mulf %631, %631 : vector<1x32xf32>
    %cst_460 = arith.constant dense<0.000000e+00> : vector<1xf32>
    %633 = vector.multi_reduction <add>, %632, %cst_460 [1] : vector<1x32xf32> to vector<1xf32>
    %634 = vector.shape_cast %633 : vector<1xf32> to vector<1x1xf32>
    %cst_461 = arith.constant 3.200000e+01 : f32
    %635 = vector.broadcast %cst_461 : f32 to vector<1x1xf32>
    %636 = arith.divf %634, %635 : vector<1x1xf32>
    %637 = vector.broadcast %629 : vector<1x1xf32> to vector<1x32xf32>
    %638 = arith.subf %623, %637 : vector<1x32xf32>
    %cst_462 = arith.constant 9.99999997E-7 : f32
    %639 = vector.broadcast %cst_462 : f32 to vector<1x1xf32>
    %640 = arith.addf %636, %639 : vector<1x1xf32>
    %641 = math.rsqrt %640 : vector<1x1xf32>
    %642 = vector.broadcast %641 : vector<1x1xf32> to vector<1x32xf32>
    %643 = arith.mulf %638, %642 : vector<1x32xf32>
    %644 = arith.mulf %643, %624 : vector<1x32xf32>
    %645 = arith.addf %644, %625 : vector<1x32xf32>
    %646 = arith.mulf %645, %645 : vector<1x32xf32>
    %cst_463 = arith.constant dense<0.000000e+00> : vector<1xf32>
    %647 = vector.multi_reduction <add>, %646, %cst_463 [1] : vector<1x32xf32> to vector<1xf32>
    %648 = vector.shape_cast %647 : vector<1xf32> to vector<1x1xf32>
    %cst_464 = arith.constant 1.000000e-24 : f32
    %649 = vector.broadcast %cst_464 : f32 to vector<1x1xf32>
    %650 = arith.maximumf %648, %649 : vector<1x1xf32>
    %651 = math.rsqrt %650 : vector<1x1xf32>
    %652 = vector.broadcast %651 : vector<1x1xf32> to vector<1x32xf32>
    %653 = arith.mulf %645, %652 : vector<1x32xf32>
    %c0_465 = arith.constant 0 : index
    %c0_466 = arith.constant 0 : index
    %654 = vector.load %arg28[%c0_465, %c0_466] : memref<32x10xf32, #tpu.memory_space<vmem>>, vector<32x10xf32>
    %cst_467 = arith.constant dense<0.000000e+00> : vector<1x10xf32>
    %655 = tpu.matmul %653, %654, %cst_467 {dimension_numbers = #tpu.dot_dimension_numbers<[1], [0], [0], [1], [0, 0, 1, 1], [], []>} : vector<1x32xf32>, vector<32x10xf32>, vector<1x10xf32> -> vector<1x10xf32>
    %c0_468 = arith.constant 0 : index
    %c0_469 = arith.constant 0 : index
    %656 = vector.load %arg29[%c0_468, %c0_469] : memref<1x1xf32, #tpu.memory_space<vmem>>, vector<1x1xf32>
    %657 = vector.extract %656[0, 0] : f32 from vector<1x1xf32>
    %658 = vector.broadcast %657 : f32 to vector<1x10xf32>
    %659 = arith.mulf %658, %655 : vector<1x10xf32>
    %c0_470 = arith.constant 0 : index
    %c0_471 = arith.constant 0 : index
    %c0_472 = arith.constant 0 : index
    %660 = vector.load %arg30[%c0_470, %c0_471, %c0_472] : memref<1x1x10xf32, #tpu.memory_space<vmem>>, vector<1x1x10xf32>
    %661 = vector.shape_cast %660 : vector<1x1x10xf32> to vector<1x10xf32>
    %662 = vector.shape_cast %659 : vector<1x10xf32> to vector<1x1x10xf32>
    tpu.vector_store %arg30[%c0_470, %c0_471, %c0_472], %662 {strides = array<i32>} : memref<1x1x10xf32, #tpu.memory_space<vmem>>, vector<1x1x10xf32>,
    return
  }
  func.func @transform_0(%arg0: i32) -> (i32, i32, i32) {
    %c0_i32 = arith.constant 0 : i32
    %c0_i32_0 = arith.constant 0 : i32
    %c0_i32_1 = arith.constant 0 : i32
    return %arg0, %c0_i32, %c0_i32_0 : i32, i32, i32
  }
  func.func @transform_1(%arg0: i32) -> (i32, i32) {
    %c0_i32 = arith.constant 0 : i32
    %c0_i32_0 = arith.constant 0 : i32
    %c0_i32_1 = arith.constant 0 : i32
    return %c0_i32, %c0_i32_0 : i32, i32
  }
  func.func @transform_2(%arg0: i32) -> (i32, i32) {
    %c0_i32 = arith.constant 0 : i32
    %c0_i32_0 = arith.constant 0 : i32
    %c0_i32_1 = arith.constant 0 : i32
    return %c0_i32, %c0_i32_0 : i32, i32
  }
  func.func @transform_3(%arg0: i32) -> (i32, i32) {
    %c0_i32 = arith.constant 0 : i32
    %c0_i32_0 = arith.constant 0 : i32
    %c0_i32_1 = arith.constant 0 : i32
    return %c0_i32, %c0_i32_0 : i32, i32
  }
  func.func @transform_4(%arg0: i32) -> (i32, i32) {
    %c0_i32 = arith.constant 0 : i32
    %c0_i32_0 = arith.constant 0 : i32
    %c0_i32_1 = arith.constant 0 : i32
    return %c0_i32, %c0_i32_0 : i32, i32
  }
  func.func @transform_5(%arg0: i32) -> (i32, i32, i32) {
    %c0_i32 = arith.constant 0 : i32
    %c0_i32_0 = arith.constant 0 : i32
    %c0_i32_1 = arith.constant 0 : i32
    %c0_i32_2 = arith.constant 0 : i32
    return %c0_i32, %c0_i32_0, %c0_i32_1 : i32, i32, i32
  }
  func.func @transform_6(%arg0: i32) -> (i32, i32, i32) {
    %c0_i32 = arith.constant 0 : i32
    %c0_i32_0 = arith.constant 0 : i32
    %c0_i32_1 = arith.constant 0 : i32
    %c0_i32_2 = arith.constant 0 : i32
    return %c0_i32, %c0_i32_0, %c0_i32_1 : i32, i32, i32
  }
  func.func @transform_7(%arg0: i32) -> (i32, i32, i32, i32) {
    %c0_i32 = arith.constant 0 : i32
    %c0_i32_0 = arith.constant 0 : i32
    %c0_i32_1 = arith.constant 0 : i32
    %c0_i32_2 = arith.constant 0 : i32
    %c0_i32_3 = arith.constant 0 : i32
    return %c0_i32, %c0_i32_0, %c0_i32_1, %c0_i32_2 : i32, i32, i32, i32
  }
  func.func @transform_8(%arg0: i32) -> (i32, i32, i32, i32) {
    %c0_i32 = arith.constant 0 : i32
    %c0_i32_0 = arith.constant 0 : i32
    %c0_i32_1 = arith.constant 0 : i32
    %c0_i32_2 = arith.constant 0 : i32
    %c0_i32_3 = arith.constant 0 : i32
    return %c0_i32, %c0_i32_0, %c0_i32_1, %c0_i32_2 : i32, i32, i32, i32
  }
  func.func @transform_9(%arg0: i32) -> (i32, i32, i32, i32) {
    %c0_i32 = arith.constant 0 : i32
    %c0_i32_0 = arith.constant 0 : i32
    %c0_i32_1 = arith.constant 0 : i32
    %c0_i32_2 = arith.constant 0 : i32
    %c0_i32_3 = arith.constant 0 : i32
    return %c0_i32, %c0_i32_0, %c0_i32_1, %c0_i32_2 : i32, i32, i32, i32
  }
  func.func @transform_10(%arg0: i32) -> (i32, i32, i32, i32) {
    %c0_i32 = arith.constant 0 : i32
    %c0_i32_0 = arith.constant 0 : i32
    %c0_i32_1 = arith.constant 0 : i32
    %c0_i32_2 = arith.constant 0 : i32
    %c0_i32_3 = arith.constant 0 : i32
    return %c0_i32, %c0_i32_0, %c0_i32_1, %c0_i32_2 : i32, i32, i32, i32
  }
  func.func @transform_11(%arg0: i32) -> (i32, i32, i32, i32) {
    %c0_i32 = arith.constant 0 : i32
    %c0_i32_0 = arith.constant 0 : i32
    %c0_i32_1 = arith.constant 0 : i32
    %c0_i32_2 = arith.constant 0 : i32
    %c0_i32_3 = arith.constant 0 : i32
    return %c0_i32, %c0_i32_0, %c0_i32_1, %c0_i32_2 : i32, i32, i32, i32
  }
  func.func @transform_12(%arg0: i32) -> (i32, i32, i32, i32) {
    %c0_i32 = arith.constant 0 : i32
    %c0_i32_0 = arith.constant 0 : i32
    %c0_i32_1 = arith.constant 0 : i32
    %c0_i32_2 = arith.constant 0 : i32
    %c0_i32_3 = arith.constant 0 : i32
    return %c0_i32, %c0_i32_0, %c0_i32_1, %c0_i32_2 : i32, i32, i32, i32
  }
  func.func @transform_13(%arg0: i32) -> (i32, i32, i32, i32) {
    %c0_i32 = arith.constant 0 : i32
    %c0_i32_0 = arith.constant 0 : i32
    %c0_i32_1 = arith.constant 0 : i32
    %c0_i32_2 = arith.constant 0 : i32
    %c0_i32_3 = arith.constant 0 : i32
    return %c0_i32, %c0_i32_0, %c0_i32_1, %c0_i32_2 : i32, i32, i32, i32
  }
  func.func @transform_14(%arg0: i32) -> (i32, i32, i32) {
    %c0_i32 = arith.constant 0 : i32
    %c0_i32_0 = arith.constant 0 : i32
    %c0_i32_1 = arith.constant 0 : i32
    %c0_i32_2 = arith.constant 0 : i32
    return %c0_i32, %c0_i32_0, %c0_i32_1 : i32, i32, i32
  }
  func.func @transform_15(%arg0: i32) -> (i32, i32, i32) {
    %c0_i32 = arith.constant 0 : i32
    %c0_i32_0 = arith.constant 0 : i32
    %c0_i32_1 = arith.constant 0 : i32
    %c0_i32_2 = arith.constant 0 : i32
    return %c0_i32, %c0_i32_0, %c0_i32_1 : i32, i32, i32
  }
  func.func @transform_16(%arg0: i32) -> (i32, i32, i32) {
    %c0_i32 = arith.constant 0 : i32
    %c0_i32_0 = arith.constant 0 : i32
    %c0_i32_1 = arith.constant 0 : i32
    %c0_i32_2 = arith.constant 0 : i32
    return %c0_i32, %c0_i32_0, %c0_i32_1 : i32, i32, i32
  }
  func.func @transform_17(%arg0: i32) -> (i32, i32, i32) {
    %c0_i32 = arith.constant 0 : i32
    %c0_i32_0 = arith.constant 0 : i32
    %c0_i32_1 = arith.constant 0 : i32
    %c0_i32_2 = arith.constant 0 : i32
    return %c0_i32, %c0_i32_0, %c0_i32_1 : i32, i32, i32
  }
  func.func @transform_18(%arg0: i32) -> (i32, i32, i32) {
    %c0_i32 = arith.constant 0 : i32
    %c0_i32_0 = arith.constant 0 : i32
    %c0_i32_1 = arith.constant 0 : i32
    %c0_i32_2 = arith.constant 0 : i32
    return %c0_i32, %c0_i32_0, %c0_i32_1 : i32, i32, i32
  }
  func.func @transform_19(%arg0: i32) -> (i32, i32, i32) {
    %c0_i32 = arith.constant 0 : i32
    %c0_i32_0 = arith.constant 0 : i32
    %c0_i32_1 = arith.constant 0 : i32
    %c0_i32_2 = arith.constant 0 : i32
    return %c0_i32, %c0_i32_0, %c0_i32_1 : i32, i32, i32
  }
  func.func @transform_20(%arg0: i32) -> (i32, i32, i32) {
    %c0_i32 = arith.constant 0 : i32
    %c0_i32_0 = arith.constant 0 : i32
    %c0_i32_1 = arith.constant 0 : i32
    %c0_i32_2 = arith.constant 0 : i32
    return %c0_i32, %c0_i32_0, %c0_i32_1 : i32, i32, i32
  }
  func.func @transform_21(%arg0: i32) -> (i32, i32, i32) {
    %c0_i32 = arith.constant 0 : i32
    %c0_i32_0 = arith.constant 0 : i32
    %c0_i32_1 = arith.constant 0 : i32
    %c0_i32_2 = arith.constant 0 : i32
    return %c0_i32, %c0_i32_0, %c0_i32_1 : i32, i32, i32
  }
  func.func @transform_22(%arg0: i32) -> (i32, i32, i32) {
    %c0_i32 = arith.constant 0 : i32
    %c0_i32_0 = arith.constant 0 : i32
    %c0_i32_1 = arith.constant 0 : i32
    %c0_i32_2 = arith.constant 0 : i32
    return %c0_i32, %c0_i32_0, %c0_i32_1 : i32, i32, i32
  }
  func.func @transform_23(%arg0: i32) -> (i32, i32, i32) {
    %c0_i32 = arith.constant 0 : i32
    %c0_i32_0 = arith.constant 0 : i32
    %c0_i32_1 = arith.constant 0 : i32
    %c0_i32_2 = arith.constant 0 : i32
    return %c0_i32, %c0_i32_0, %c0_i32_1 : i32, i32, i32
  }
  func.func @transform_24(%arg0: i32) -> (i32, i32, i32) {
    %c0_i32 = arith.constant 0 : i32
    %c0_i32_0 = arith.constant 0 : i32
    %c0_i32_1 = arith.constant 0 : i32
    %c0_i32_2 = arith.constant 0 : i32
    return %c0_i32, %c0_i32_0, %c0_i32_1 : i32, i32, i32
  }
  func.func @transform_25(%arg0: i32) -> (i32, i32) {
    %c0_i32 = arith.constant 0 : i32
    %c0_i32_0 = arith.constant 0 : i32
    %c0_i32_1 = arith.constant 0 : i32
    return %c0_i32, %c0_i32_0 : i32, i32
  }
  func.func @transform_26(%arg0: i32) -> (i32, i32) {
    %c0_i32 = arith.constant 0 : i32
    %c0_i32_0 = arith.constant 0 : i32
    %c0_i32_1 = arith.constant 0 : i32
    return %c0_i32, %c0_i32_0 : i32, i32
  }
  func.func @transform_27(%arg0: i32) -> (i32, i32) {
    %c0_i32 = arith.constant 0 : i32
    %c0_i32_0 = arith.constant 0 : i32
    %c0_i32_1 = arith.constant 0 : i32
    return %c0_i32, %c0_i32_0 : i32, i32
  }
  func.func @transform_28(%arg0: i32) -> (i32, i32) {
    %c0_i32 = arith.constant 0 : i32
    %c0_i32_0 = arith.constant 0 : i32
    %c0_i32_1 = arith.constant 0 : i32
    return %c0_i32, %c0_i32_0 : i32, i32
  }
  func.func @transform_29(%arg0: i32) -> (i32, i32, i32) {
    %c0_i32 = arith.constant 0 : i32
    %c0_i32_0 = arith.constant 0 : i32
    %c0_i32_1 = arith.constant 0 : i32
    return %arg0, %c0_i32, %c0_i32_0 : i32, i32, i32
  }
}

</mosaic_0001>

<llo_original>
// kernel: ranpac_forward.1
$region0: #{ranpac_forward.1}
  #allocation0 [shape = 'u32[]', space=smem, size = 0x4, offset = 0x4, fixed_abs, tag = 'smem constant byte address 0x4 - core index']
  #allocation1 [shape = 'u32[144,128]{1,0:T(1,128)}', space=vmem, size = 0x12000, scoped, tag = 'internal scratch']
  #allocation2 [shape = 'f32[1,1]{1,0:T(1,128)S(1)}', space=vmem, size = 0x200, scoped, tag = 'scoped memory for ranpac_forward.1']
  %s0 = inlined_call_operand.smem [shape: u32[30], index: -1, kind: input, shape index: {}]
  %s1 = sld [smem:[%s0]]
  %s2 = scalar_lea.smem %s0, 1
  %s3 = sld [smem:[%s2]]
  %s4 = scalar_lea.smem %s0, 2
  %s5 = sld [smem:[%s4]]
  %s6 = scalar_lea.smem %s0, 3
  %s7 = sld [smem:[%s6]]
  %s8 = scalar_lea.smem %s0, 4
  %s9 = sld [smem:[%s8]]
  %s10 = scalar_lea.smem %s0, 5
  %s11 = sld [smem:[%s10]]
  %s12 = scalar_lea.smem %s0, 6
  %s13 = sld [smem:[%s12]]
  %s14 = scalar_lea.smem %s0, 7
  %s15 = sld [smem:[%s14]]
  %s16 = scalar_lea.smem %s0, 8
  %s17 = sld [smem:[%s16]]
  %s18 = scalar_lea.smem %s0, 9
  %s19 = sld [smem:[%s18]]
  %s20 = scalar_lea.smem %s0, 10
  %s21 = sld [smem:[%s20]]
  %s22 = scalar_lea.smem %s0, 11
  %s23 = sld [smem:[%s22]]
  %s24 = scalar_lea.smem %s0, 12
  %s25 = sld [smem:[%s24]]
  %s26 = scalar_lea.smem %s0, 13
  %s27 = sld [smem:[%s26]]
  %s28 = scalar_lea.smem %s0, 14
  %s29 = sld [smem:[%s28]]
  %s30 = scalar_lea.smem %s0, 15
  %s31 = sld [smem:[%s30]]
  %s32 = scalar_lea.smem %s0, 16
  %s33 = sld [smem:[%s32]]
  %s34 = scalar_lea.smem %s0, 17
  %s35 = sld [smem:[%s34]]
  %s36 = scalar_lea.smem %s0, 18
  %s37 = sld [smem:[%s36]]
  %s38 = scalar_lea.smem %s0, 19
  %s39 = sld [smem:[%s38]]
  %s40 = scalar_lea.smem %s0, 20
  %s41 = sld [smem:[%s40]]
  %s42 = scalar_lea.smem %s0, 21
  %s43 = sld [smem:[%s42]]
  %s44 = scalar_lea.smem %s0, 22
  %s45 = sld [smem:[%s44]]
  %s46 = scalar_lea.smem %s0, 23
  %s47 = sld [smem:[%s46]]
  %s48 = scalar_lea.smem %s0, 24
  %s49 = sld [smem:[%s48]]
  %s50 = scalar_lea.smem %s0, 25
  %s51 = sld [smem:[%s50]]
  %s52 = scalar_lea.smem %s0, 26
  %s53 = sld [smem:[%s52]]
  %s54 = scalar_lea.smem %s0, 27
  %s55 = sld [smem:[%s54]]
  %s56 = scalar_lea.smem %s0, 28
  %s57 = sld [smem:[%s56]]
  %s58 = scalar_lea.smem %s0, 29
  %s59 = sld [smem:[%s58]]
  %s60 = sld [smem:[#allocation0]]
  $region149: #{ranpac_forward.1} parent=0
    _
  %s62 = ssub.s32 1, %s60
  %s63 = scalar_select 0, %s62, %s60
  %v64 = vstv %s57
  %65 = vst [vmem:[#allocation2] sm:$0x1] %v64
  $region1: #{ranpac_forward.1} parent=0
    #allocation3 [shape = 'u8[1024]{0}', space=vmem, size = 0x400, scoped, tag = 'output window, operand 0']
    #allocation4 [shape = 's32[2]{0}', space=sflag, size = 0x8, scoped, tag = 'scoped memory for ranpac_forward.1']
    %66 = vsyncpa [#allocation4], 0
    %s67 = scalar_lea.sflag [#allocation4], 1
    %68 = vsyncpa %s67, 0
    loop: start=0, step=1, limit=4
    $region2: #{ranpac_forward.1} parent=1 // loop_pre_header
      _
    $region3: #{ranpac_forward.1} parent=1 // loop_header
      %s70 = sphi 0, %s74
      %p71 = scmp.ge.s32.totalorder %s70, 4
      %s80 = sphi 0, %s82
      %s83 = sphi 0, %s80
      %s84 = sphi 0, %s83
      %s100 = sphi 0, %s84
      %s104 = sphi 0, %s104
      %s106 = sphi 0, %s104
      %s107 = sphi 0, %s106
      %s121 = sphi 0, %s107
      %s125 = sphi 0, %s125
      %s127 = sphi 0, %s125
      %s128 = sphi 0, %s127
      %s142 = sphi 0, %s128
      %s146 = sphi 0, %s146
      %s148 = sphi 0, %s146
      %s149 = sphi 0, %s148
      %s163 = sphi 0, %s149
      %s167 = sphi 0, %s167
      %s169 = sphi 0, %s167
      %s170 = sphi 0, %s169
      %s184 = sphi 0, %s170
      %s188 = sphi 0, %s188
      %s190 = sphi 0, %s188
      %s191 = sphi 0, %s190
      %s205 = sphi 0, %s191
      %s209 = sphi 0, %s209
      %s211 = sphi 0, %s209
      %s212 = sphi 0, %s211
      %s226 = sphi 0, %s212
      %s230 = sphi 0, %s230
      %s232 = sphi 0, %s230
      %s233 = sphi 0, %s232
      %s247 = sphi 0, %s233
      %s251 = sphi 0, %s251
      %s253 = sphi 0, %s251
      %s254 = sphi 0, %s253
      %s268 = sphi 0, %s254
      %s272 = sphi 0, %s272
      %s274 = sphi 0, %s272
      %s275 = sphi 0, %s274
      %s289 = sphi 0, %s275
      %s293 = sphi 0, %s293
      %s295 = sphi 0, %s293
      %s296 = sphi 0, %s295
      %s310 = sphi 0, %s296
      %s314 = sphi 0, %s314
      %s316 = sphi 0, %s314
      %s317 = sphi 0, %s316
      %s331 = sphi 0, %s317
      %s335 = sphi 0, %s335
      %s337 = sphi 0, %s335
      %s338 = sphi 0, %s337
      %s352 = sphi 0, %s338
      %s356 = sphi 0, %s356
      %s358 = sphi 0, %s356
      %s359 = sphi 0, %s358
      %s373 = sphi 0, %s359
      %s377 = sphi 0, %s377
      %s379 = sphi 0, %s377
      %s380 = sphi 0, %s379
      %s394 = sphi 0, %s380
      %s398 = sphi 0, %s398
      %s400 = sphi 0, %s398
      %s401 = sphi 0, %s400
      %s415 = sphi 0, %s401
      %s419 = sphi 0, %s419
      %s421 = sphi 0, %s419
      %s422 = sphi 0, %s421
      %s436 = sphi 0, %s422
      %s440 = sphi 0, %s440
      %s442 = sphi 0, %s440
      %s443 = sphi 0, %s442
      %s457 = sphi 0, %s443
      %s461 = sphi 0, %s461
      %s463 = sphi 0, %s461
      %s464 = sphi 0, %s463
      %s478 = sphi 0, %s464
      %s482 = sphi 0, %s482
      %s484 = sphi 0, %s482
      %s485 = sphi 0, %s484
      %s499 = sphi 0, %s485
      %s503 = sphi 0, %s503
      %s505 = sphi 0, %s503
      %s506 = sphi 0, %s505
      %s520 = sphi 0, %s506
      %s524 = sphi 0, %s524
      %s526 = sphi 0, %s524
      %s527 = sphi 0, %s526
      %s541 = sphi 0, %s527
      %s545 = sphi 0, %s545
      %s547 = sphi 0, %s545
      %s548 = sphi 0, %s547
      %s562 = sphi 0, %s548
      %s566 = sphi 0, %s566
      %s568 = sphi 0, %s566
      %s569 = sphi 0, %s568
      %s583 = sphi 0, %s569
      %s587 = sphi 0, %s587
      %s589 = sphi 0, %s587
      %s590 = sphi 0, %s589
      %s604 = sphi 0, %s590
      %s608 = sphi 0, %s608
      %s610 = sphi 0, %s608
      %s611 = sphi 0, %s610
      %s625 = sphi 0, %s611
      %s629 = sphi 0, %s629
      %s631 = sphi 0, %s629
      %s632 = sphi 0, %s631
      %s646 = sphi 0, %s632
      %s650 = sphi 0, %s650
      %s652 = sphi 0, %s650
      %s653 = sphi 0, %s652
      %s667 = sphi 0, %s653
      %s671 = sphi 0, %s671
      %s673 = sphi 0, %s671
      %s674 = sphi 0, %s673
      %s688 = sphi 0, %s674
      %s694 = sphi 0, %s696
      %s697 = sphi 0, %s694
      %s698 = sphi 0, %s697
      %s714 = sphi 0, %s698
    $region4: #{ranpac_forward.1} parent=1 // loop_header_branch
      %73 = sbr.rel (%p71) target = $region8
    $region5: #{ranpac_forward.1} parent=1 // loop_body
      %s75 = ssub.s32 %s70, 1
      %s76 = ssub.s32 %s70, 2
      %s77 = sadd.s32 %s70, 1
      %s78 = ssub.s32 %s70, %s77
      %p79 = scmp.eq.s32.totalorder %s78, 0
      %s81 = sadd.s32 %s80, 1
      %s82 = scalar_select %p79, %s80, %s81
      %p85 = pneg %p79
      %p86 = scmp.eq.s32.totalorder %s70, 1
      %p87 = por %p85, %p86
      %p88 = scmp.ne.s32.totalorder %s80, %s83
      %p89 = scmp.eq.s32.totalorder %s70, 0
      %p90 = por %p88, %p89
      %p91 = scmp.ne.s32.totalorder %s80, %s83
      %p92 = scmp.eq.s32.totalorder %s75, 1
      %p93 = por %p91, %p92
      %p94 = scmp.ne.s32.totalorder %s83, %s84
      %p95 = scmp.eq.s32.totalorder %s75, 0
      %p96 = por %p94, %p95
      %p97 = scmp.ne.s32.totalorder %s83, %s84
      %p98 = scmp.eq.s32.totalorder %s76, 1
      %p99 = por %p97, %p98
      %p101 = scmp.ne.s32.totalorder %s84, %s100
      %p102 = scmp.eq.s32.totalorder %s76, 0
      %p103 = por %p101, %p102
      %s105 = sadd.s32 %s104, 1
      %p108 = scmp.eq.s32.totalorder %s70, 1
      %p109 = scmp.ne.s32.totalorder %s104, %s106
      %p110 = scmp.eq.s32.totalorder %s70, 0
      %p111 = por %p109, %p110
      %p112 = scmp.ne.s32.totalorder %s104, %s106
      %p113 = scmp.eq.s32.totalorder %s75, 1
      %p114 = por %p112, %p113
      %p115 = scmp.ne.s32.totalorder %s106, %s107
      %p116 = scmp.eq.s32.totalorder %s75, 0
      %p117 = por %p115, %p116
      %p118 = scmp.ne.s32.totalorder %s106, %s107
      %p119 = scmp.eq.s32.totalorder %s76, 1
      %p120 = por %p118, %p119
      %p122 = scmp.ne.s32.totalorder %s107, %s121
      %p123 = scmp.eq.s32.totalorder %s76, 0
      %p124 = por %p122, %p123
      %s126 = sadd.s32 %s125, 1
      %p129 = scmp.eq.s32.totalorder %s70, 1
      %p130 = scmp.ne.s32.totalorder %s125, %s127
      %p131 = scmp.eq.s32.totalorder %s70, 0
      %p132 = por %p130, %p131
      %p133 = scmp.ne.s32.totalorder %s125, %s127
      %p134 = scmp.eq.s32.totalorder %s75, 1
      %p135 = por %p133, %p134
      %p136 = scmp.ne.s32.totalorder %s127, %s128
      %p137 = scmp.eq.s32.totalorder %s75, 0
      %p138 = por %p136, %p137
      %p139 = scmp.ne.s32.totalorder %s127, %s128
      %p140 = scmp.eq.s32.totalorder %s76, 1
      %p141 = por %p139, %p140
      %p143 = scmp.ne.s32.totalorder %s128, %s142
      %p144 = scmp.eq.s32.totalorder %s76, 0
      %p145 = por %p143, %p144
      %s147 = sadd.s32 %s146, 1
      %p150 = scmp.eq.s32.totalorder %s70, 1
      %p151 = scmp.ne.s32.totalorder %s146, %s148
      %p152 = scmp.eq.s32.totalorder %s70, 0
      %p153 = por %p151, %p152
      %p154 = scmp.ne.s32.totalorder %s146, %s148
      %p155 = scmp.eq.s32.totalorder %s75, 1
      %p156 = por %p154, %p155
      %p157 = scmp.ne.s32.totalorder %s148, %s149
      %p158 = scmp.eq.s32.totalorder %s75, 0
      %p159 = por %p157, %p158
      %p160 = scmp.ne.s32.totalorder %s148, %s149
      %p161 = scmp.eq.s32.totalorder %s76, 1
      %p162 = por %p160, %p161
      %p164 = scmp.ne.s32.totalorder %s149, %s163
      %p165 = scmp.eq.s32.totalorder %s76, 0
      %p166 = por %p164, %p165
      %s168 = sadd.s32 %s167, 1
      %p171 = scmp.eq.s32.totalorder %s70, 1
      %p172 = scmp.ne.s32.totalorder %s167, %s169
      %p173 = scmp.eq.s32.totalorder %s70, 0
      %p174 = por %p172, %p173
      %p175 = scmp.ne.s32.totalorder %s167, %s169
      %p176 = scmp.eq.s32.totalorder %s75, 1
      %p177 = por %p175, %p176
      %p178 = scmp.ne.s32.totalorder %s169, %s170
      %p179 = scmp.eq.s32.totalorder %s75, 0
      %p180 = por %p178, %p179
      %p181 = scmp.ne.s32.totalorder %s169, %s170
      %p182 = scmp.eq.s32.totalorder %s76, 1
      %p183 = por %p181, %p182
      %p185 = scmp.ne.s32.totalorder %s170, %s184
      %p186 = scmp.eq.s32.totalorder %s76, 0
      %p187 = por %p185, %p186
      %s189 = sadd.s32 %s188, 1
      %p192 = scmp.eq.s32.totalorder %s70, 1
      %p193 = scmp.ne.s32.totalorder %s188, %s190
      %p194 = scmp.eq.s32.totalorder %s70, 0
      %p195 = por %p193, %p194
      %p196 = scmp.ne.s32.totalorder %s188, %s190
      %p197 = scmp.eq.s32.totalorder %s75, 1
      %p198 = por %p196, %p197
      %p199 = scmp.ne.s32.totalorder %s190, %s191
      %p200 = scmp.eq.s32.totalorder %s75, 0
      %p201 = por %p199, %p200
      %p202 = scmp.ne.s32.totalorder %s190, %s191
      %p203 = scmp.eq.s32.totalorder %s76, 1
      %p204 = por %p202, %p203
      %p206 = scmp.ne.s32.totalorder %s191, %s205
      %p207 = scmp.eq.s32.totalorder %s76, 0
      %p208 = por %p206, %p207
      %s210 = sadd.s32 %s209, 1
      %p213 = scmp.eq.s32.totalorder %s70, 1
      %p214 = scmp.ne.s32.totalorder %s209, %s211
      %p215 = scmp.eq.s32.totalorder %s70, 0
      %p216 = por %p214, %p215
      %p217 = scmp.ne.s32.totalorder %s209, %s211
      %p218 = scmp.eq.s32.totalorder %s75, 1
      %p219 = por %p217, %p218
      %p220 = scmp.ne.s32.totalorder %s211, %s212
      %p221 = scmp.eq.s32.totalorder %s75, 0
      %p222 = por %p220, %p221
      %p223 = scmp.ne.s32.totalorder %s211, %s212
      %p224 = scmp.eq.s32.totalorder %s76, 1
      %p225 = por %p223, %p224
      %p227 = scmp.ne.s32.totalorder %s212, %s226
      %p228 = scmp.eq.s32.totalorder %s76, 0
      %p229 = por %p227, %p228
      %s231 = sadd.s32 %s230, 1
      %p234 = scmp.eq.s32.totalorder %s70, 1
      %p235 = scmp.ne.s32.totalorder %s230, %s232
      %p236 = scmp.eq.s32.totalorder %s70, 0
      %p237 = por %p235, %p236
      %p238 = scmp.ne.s32.totalorder %s230, %s232
      %p239 = scmp.eq.s32.totalorder %s75, 1
      %p240 = por %p238, %p239
      %p241 = scmp.ne.s32.totalorder %s232, %s233
      %p242 = scmp.eq.s32.totalorder %s75, 0
      %p243 = por %p241, %p242
      %p244 = scmp.ne.s32.totalorder %s232, %s233
      %p245 = scmp.eq.s32.totalorder %s76, 1
      %p246 = por %p244, %p245
      %p248 = scmp.ne.s32.totalorder %s233, %s247
      %p249 = scmp.eq.s32.totalorder %s76, 0
      %p250 = por %p248, %p249
      %s252 = sadd.s32 %s251, 1
      %p255 = scmp.eq.s32.totalorder %s70, 1
      %p256 = scmp.ne.s32.totalorder %s251, %s253
      %p257 = scmp.eq.s32.totalorder %s70, 0
      %p258 = por %p256, %p257
      %p259 = scmp.ne.s32.totalorder %s251, %s253
      %p260 = scmp.eq.s32.totalorder %s75, 1
      %p261 = por %p259, %p260
      %p262 = scmp.ne.s32.totalorder %s253, %s254
      %p263 = scmp.eq.s32.totalorder %s75, 0
      %p264 = por %p262, %p263
      %p265 = scmp.ne.s32.totalorder %s253, %s254
      %p266 = scmp.eq.s32.totalorder %s76, 1
      %p267 = por %p265, %p266
      %p269 = scmp.ne.s32.totalorder %s254, %s268
      %p270 = scmp.eq.s32.totalorder %s76, 0
      %p271 = por %p269, %p270
      %s273 = sadd.s32 %s272, 1
      %p276 = scmp.eq.s32.totalorder %s70, 1
      %p277 = scmp.ne.s32.totalorder %s272, %s274
      %p278 = scmp.eq.s32.totalorder %s70, 0
      %p279 = por %p277, %p278
      %p280 = scmp.ne.s32.totalorder %s272, %s274
      %p281 = scmp.eq.s32.totalorder %s75, 1
      %p282 = por %p280, %p281
      %p283 = scmp.ne.s32.totalorder %s274, %s275
      %p284 = scmp.eq.s32.totalorder %s75, 0
      %p285 = por %p283, %p284
      %p286 = scmp.ne.s32.totalorder %s274, %s275
      %p287 = scmp.eq.s32.totalorder %s76, 1
      %p288 = por %p286, %p287
      %p290 = scmp.ne.s32.totalorder %s275, %s289
      %p291 = scmp.eq.s32.totalorder %s76, 0
      %p292 = por %p290, %p291
      %s294 = sadd.s32 %s293, 1
      %p297 = scmp.eq.s32.totalorder %s70, 1
      %p298 = scmp.ne.s32.totalorder %s293, %s295
      %p299 = scmp.eq.s32.totalorder %s70, 0
      %p300 = por %p298, %p299
      %p301 = scmp.ne.s32.totalorder %s293, %s295
      %p302 = scmp.eq.s32.totalorder %s75, 1
      %p303 = por %p301, %p302
      %p304 = scmp.ne.s32.totalorder %s295, %s296
      %p305 = scmp.eq.s32.totalorder %s75, 0
      %p306 = por %p304, %p305
      %p307 = scmp.ne.s32.totalorder %s295, %s296
      %p308 = scmp.eq.s32.totalorder %s76, 1
      %p309 = por %p307, %p308
      %p311 = scmp.ne.s32.totalorder %s296, %s310
      %p312 = scmp.eq.s32.totalorder %s76, 0
      %p313 = por %p311, %p312
      %s315 = sadd.s32 %s314, 1
      %p318 = scmp.eq.s32.totalorder %s70, 1
      %p319 = scmp.ne.s32.totalorder %s314, %s316
      %p320 = scmp.eq.s32.totalorder %s70, 0
      %p321 = por %p319, %p320
      %p322 = scmp.ne.s32.totalorder %s314, %s316
      %p323 = scmp.eq.s32.totalorder %s75, 1
      %p324 = por %p322, %p323
      %p325 = scmp.ne.s32.totalorder %s316, %s317
      %p326 = scmp.eq.s32.totalorder %s75, 0
      %p327 = por %p325, %p326
      %p328 = scmp.ne.s32.totalorder %s316, %s317
      %p329 = scmp.eq.s32.totalorder %s76, 1
      %p330 = por %p328, %p329
      %p332 = scmp.ne.s32.totalorder %s317, %s331
      %p333 = scmp.eq.s32.totalorder %s76, 0
      %p334 = por %p332, %p333
      %s336 = sadd.s32 %s335, 1
      %p339 = scmp.eq.s32.totalorder %s70, 1
      %p340 = scmp.ne.s32.totalorder %s335, %s337
      %p341 = scmp.eq.s32.totalorder %s70, 0
      %p342 = por %p340, %p341
      %p343 = scmp.ne.s32.totalorder %s335, %s337
      %p344 = scmp.eq.s32.totalorder %s75, 1
      %p345 = por %p343, %p344
      %p346 = scmp.ne.s32.totalorder %s337, %s338
      %p347 = scmp.eq.s32.totalorder %s75, 0
      %p348 = por %p346, %p347
      %p349 = scmp.ne.s32.totalorder %s337, %s338
      %p350 = scmp.eq.s32.totalorder %s76, 1
      %p351 = por %p349, %p350
      %p353 = scmp.ne.s32.totalorder %s338, %s352
      %p354 = scmp.eq.s32.totalorder %s76, 0
      %p355 = por %p353, %p354
      %s357 = sadd.s32 %s356, 1
      %p360 = scmp.eq.s32.totalorder %s70, 1
      %p361 = scmp.ne.s32.totalorder %s356, %s358
      %p362 = scmp.eq.s32.totalorder %s70, 0
      %p363 = por %p361, %p362
      %p364 = scmp.ne.s32.totalorder %s356, %s358
      %p365 = scmp.eq.s32.totalorder %s75, 1
      %p366 = por %p364, %p365
      %p367 = scmp.ne.s32.totalorder %s358, %s359
      %p368 = scmp.eq.s32.totalorder %s75, 0
      %p369 = por %p367, %p368
      %p370 = scmp.ne.s32.totalorder %s358, %s359
      %p371 = scmp.eq.s32.totalorder %s76, 1
      %p372 = por %p370, %p371
      %p374 = scmp.ne.s32.totalorder %s359, %s373
      %p375 = scmp.eq.s32.totalorder %s76, 0
      %p376 = por %p374, %p375
      %s378 = sadd.s32 %s377, 1
      %p381 = scmp.eq.s32.totalorder %s70, 1
      %p382 = scmp.ne.s32.totalorder %s377, %s379
      %p383 = scmp.eq.s32.totalorder %s70, 0
      %p384 = por %p382, %p383
      %p385 = scmp.ne.s32.totalorder %s377, %s379
      %p386 = scmp.eq.s32.totalorder %s75, 1
      %p387 = por %p385, %p386
      %p388 = scmp.ne.s32.totalorder %s379, %s380
      %p389 = scmp.eq.s32.totalorder %s75, 0
      %p390 = por %p388, %p389
      %p391 = scmp.ne.s32.totalorder %s379, %s380
      %p392 = scmp.eq.s32.totalorder %s76, 1
      %p393 = por %p391, %p392
      %p395 = scmp.ne.s32.totalorder %s380, %s394
      %p396 = scmp.eq.s32.totalorder %s76, 0
      %p397 = por %p395, %p396
      %s399 = sadd.s32 %s398, 1
      %p402 = scmp.eq.s32.totalorder %s70, 1
      %p403 = scmp.ne.s32.totalorder %s398, %s400
      %p404 = scmp.eq.s32.totalorder %s70, 0
      %p405 = por %p403, %p404
      %p406 = scmp.ne.s32.totalorder %s398, %s400
      %p407 = scmp.eq.s32.totalorder %s75, 1
      %p408 = por %p406, %p407
      %p409 = scmp.ne.s32.totalorder %s400, %s401
      %p410 = scmp.eq.s32.totalorder %s75, 0
      %p411 = por %p409, %p410
      %p412 = scmp.ne.s32.totalorder %s400, %s401
      %p413 = scmp.eq.s32.totalorder %s76, 1
      %p414 = por %p412, %p413
      %p416 = scmp.ne.s32.totalorder %s401, %s415
      %p417 = scmp.eq.s32.totalorder %s76, 0
      %p418 = por %p416, %p417
      %s420 = sadd.s32 %s419, 1
      %p423 = scmp.eq.s32.totalorder %s70, 1
      %p424 = scmp.ne.s32.totalorder %s419, %s421
      %p425 = scmp.eq.s32.totalorder %s70, 0
      %p426 = por %p424, %p425
      %p427 = scmp.ne.s32.totalorder %s419, %s421
      %p428 = scmp.eq.s32.totalorder %s75, 1
      %p429 = por %p427, %p428
      %p430 = scmp.ne.s32.totalorder %s421, %s422
      %p431 = scmp.eq.s32.totalorder %s75, 0
      %p432 = por %p430, %p431
      %p433 = scmp.ne.s32.totalorder %s421, %s422
      %p434 = scmp.eq.s32.totalorder %s76, 1
      %p435 = por %p433, %p434
      %p437 = scmp.ne.s32.totalorder %s422, %s436
      %p438 = scmp.eq.s32.totalorder %s76, 0
      %p439 = por %p437, %p438
      %s441 = sadd.s32 %s440, 1
      %p444 = scmp.eq.s32.totalorder %s70, 1
      %p445 = scmp.ne.s32.totalorder %s440, %s442
      %p446 = scmp.eq.s32.totalorder %s70, 0
      %p447 = por %p445, %p446
      %p448 = scmp.ne.s32.totalorder %s440, %s442
      %p449 = scmp.eq.s32.totalorder %s75, 1
      %p450 = por %p448, %p449
      %p451 = scmp.ne.s32.totalorder %s442, %s443
      %p452 = scmp.eq.s32.totalorder %s75, 0
      %p453 = por %p451, %p452
      %p454 = scmp.ne.s32.totalorder %s442, %s443
      %p455 = scmp.eq.s32.totalorder %s76, 1
      %p456 = por %p454, %p455
      %p458 = scmp.ne.s32.totalorder %s443, %s457
      %p459 = scmp.eq.s32.totalorder %s76, 0
      %p460 = por %p458, %p459
      %s462 = sadd.s32 %s461, 1
      %p465 = scmp.eq.s32.totalorder %s70, 1
      %p466 = scmp.ne.s32.totalorder %s461, %s463
      %p467 = scmp.eq.s32.totalorder %s70, 0
      %p468 = por %p466, %p467
      %p469 = scmp.ne.s32.totalorder %s461, %s463
      %p470 = scmp.eq.s32.totalorder %s75, 1
      %p471 = por %p469, %p470
      %p472 = scmp.ne.s32.totalorder %s463, %s464
      %p473 = scmp.eq.s32.totalorder %s75, 0
      %p474 = por %p472, %p473
      %p475 = scmp.ne.s32.totalorder %s463, %s464
      %p476 = scmp.eq.s32.totalorder %s76, 1
      %p477 = por %p475, %p476
      %p479 = scmp.ne.s32.totalorder %s464, %s478
      %p480 = scmp.eq.s32.totalorder %s76, 0
      %p481 = por %p479, %p480
      %s483 = sadd.s32 %s482, 1
      %p486 = scmp.eq.s32.totalorder %s70, 1
      %p487 = scmp.ne.s32.totalorder %s482, %s484
      %p488 = scmp.eq.s32.totalorder %s70, 0
      %p489 = por %p487, %p488
      %p490 = scmp.ne.s32.totalorder %s482, %s484
      %p491 = scmp.eq.s32.totalorder %s75, 1
      %p492 = por %p490, %p491
      %p493 = scmp.ne.s32.totalorder %s484, %s485
      %p494 = scmp.eq.s32.totalorder %s75, 0
      %p495 = por %p493, %p494
      %p496 = scmp.ne.s32.totalorder %s484, %s485
      %p497 = scmp.eq.s32.totalorder %s76, 1
      %p498 = por %p496, %p497
      %p500 = scmp.ne.s32.totalorder %s485, %s499
      %p501 = scmp.eq.s32.totalorder %s76, 0
      %p502 = por %p500, %p501
      %s504 = sadd.s32 %s503, 1
      %p507 = scmp.eq.s32.totalorder %s70, 1
      %p508 = scmp.ne.s32.totalorder %s503, %s505
      %p509 = scmp.eq.s32.totalorder %s70, 0
      %p510 = por %p508, %p509
      %p511 = scmp.ne.s32.totalorder %s503, %s505
      %p512 = scmp.eq.s32.totalorder %s75, 1
      %p513 = por %p511, %p512
      %p514 = scmp.ne.s32.totalorder %s505, %s506
      %p515 = scmp.eq.s32.totalorder %s75, 0
      %p516 = por %p514, %p515
      %p517 = scmp.ne.s32.totalorder %s505, %s506
      %p518 = scmp.eq.s32.totalorder %s76, 1
      %p519 = por %p517, %p518
      %p521 = scmp.ne.s32.totalorder %s506, %s520
      %p522 = scmp.eq.s32.totalorder %s76, 0
      %p523 = por %p521, %p522
      %s525 = sadd.s32 %s524, 1
      %p528 = scmp.eq.s32.totalorder %s70, 1
      %p529 = scmp.ne.s32.totalorder %s524, %s526
      %p530 = scmp.eq.s32.totalorder %s70, 0
      %p531 = por %p529, %p530
      %p532 = scmp.ne.s32.totalorder %s524, %s526
      %p533 = scmp.eq.s32.totalorder %s75, 1
      %p534 = por %p532, %p533
      %p535 = scmp.ne.s32.totalorder %s526, %s527
      %p536 = scmp.eq.s32.totalorder %s75, 0
      %p537 = por %p535, %p536
      %p538 = scmp.ne.s32.totalorder %s526, %s527
      %p539 = scmp.eq.s32.totalorder %s76, 1
      %p540 = por %p538, %p539
      %p542 = scmp.ne.s32.totalorder %s527, %s541
      %p543 = scmp.eq.s32.totalorder %s76, 0
      %p544 = por %p542, %p543
      %s546 = sadd.s32 %s545, 1
      %p549 = scmp.eq.s32.totalorder %s70, 1
      %p550 = scmp.ne.s32.totalorder %s545, %s547
      %p551 = scmp.eq.s32.totalorder %s70, 0
      %p552 = por %p550, %p551
      %p553 = scmp.ne.s32.totalorder %s545, %s547
      %p554 = scmp.eq.s32.totalorder %s75, 1
      %p555 = por %p553, %p554
      %p556 = scmp.ne.s32.totalorder %s547, %s548
      %p557 = scmp.eq.s32.totalorder %s75, 0
      %p558 = por %p556, %p557
      %p559 = scmp.ne.s32.totalorder %s547, %s548
      %p560 = scmp.eq.s32.totalorder %s76, 1
      %p561 = por %p559, %p560
      %p563 = scmp.ne.s32.totalorder %s548, %s562
      %p564 = scmp.eq.s32.totalorder %s76, 0
      %p565 = por %p563, %p564
      %s567 = sadd.s32 %s566, 1
      %p570 = scmp.eq.s32.totalorder %s70, 1
      %p571 = scmp.ne.s32.totalorder %s566, %s568
      %p572 = scmp.eq.s32.totalorder %s70, 0
      %p573 = por %p571, %p572
      %p574 = scmp.ne.s32.totalorder %s566, %s568
      %p575 = scmp.eq.s32.totalorder %s75, 1
      %p576 = por %p574, %p575
      %p577 = scmp.ne.s32.totalorder %s568, %s569
      %p578 = scmp.eq.s32.totalorder %s75, 0
      %p579 = por %p577, %p578
      %p580 = scmp.ne.s32.totalorder %s568, %s569
      %p581 = scmp.eq.s32.totalorder %s76, 1
      %p582 = por %p580, %p581
      %p584 = scmp.ne.s32.totalorder %s569, %s583
      %p585 = scmp.eq.s32.totalorder %s76, 0
      %p586 = por %p584, %p585
      %s588 = sadd.s32 %s587, 1
      %p591 = scmp.eq.s32.totalorder %s70, 1
      %p592 = scmp.ne.s32.totalorder %s587, %s589
      %p593 = scmp.eq.s32.totalorder %s70, 0
      %p594 = por %p592, %p593
      %p595 = scmp.ne.s32.totalorder %s587, %s589
      %p596 = scmp.eq.s32.totalorder %s75, 1
      %p597 = por %p595, %p596
      %p598 = scmp.ne.s32.totalorder %s589, %s590
      %p599 = scmp.eq.s32.totalorder %s75, 0
      %p600 = por %p598, %p599
      %p601 = scmp.ne.s32.totalorder %s589, %s590
      %p602 = scmp.eq.s32.totalorder %s76, 1
      %p603 = por %p601, %p602
      %p605 = scmp.ne.s32.totalorder %s590, %s604
      %p606 = scmp.eq.s32.totalorder %s76, 0
      %p607 = por %p605, %p606
      %s609 = sadd.s32 %s608, 1
      %p612 = scmp.eq.s32.totalorder %s70, 1
      %p613 = scmp.ne.s32.totalorder %s608, %s610
      %p614 = scmp.eq.s32.totalorder %s70, 0
      %p615 = por %p613, %p614
      %p616 = scmp.ne.s32.totalorder %s608, %s610
      %p617 = scmp.eq.s32.totalorder %s75, 1
      %p618 = por %p616, %p617
      %p619 = scmp.ne.s32.totalorder %s610, %s611
      %p620 = scmp.eq.s32.totalorder %s75, 0
      %p621 = por %p619, %p620
      %p622 = scmp.ne.s32.totalorder %s610, %s611
      %p623 = scmp.eq.s32.totalorder %s76, 1
      %p624 = por %p622, %p623
      %p626 = scmp.ne.s32.totalorder %s611, %s625
      %p627 = scmp.eq.s32.totalorder %s76, 0
      %p628 = por %p626, %p627
      %s630 = sadd.s32 %s629, 1
      %p633 = scmp.eq.s32.totalorder %s70, 1
      %p634 = scmp.ne.s32.totalorder %s629, %s631
      %p635 = scmp.eq.s32.totalorder %s70, 0
      %p636 = por %p634, %p635
      %p637 = scmp.ne.s32.totalorder %s629, %s631
      %p638 = scmp.eq.s32.totalorder %s75, 1
      %p639 = por %p637, %p638
      %p640 = scmp.ne.s32.totalorder %s631, %s632
      %p641 = scmp.eq.s32.totalorder %s75, 0
      %p642 = por %p640, %p641
      %p643 = scmp.ne.s32.totalorder %s631, %s632
      %p644 = scmp.eq.s32.totalorder %s76, 1
      %p645 = por %p643, %p644
      %p647 = scmp.ne.s32.totalorder %s632, %s646
      %p648 = scmp.eq.s32.totalorder %s76, 0
      %p649 = por %p647, %p648
      %s651 = sadd.s32 %s650, 1
      %p654 = scmp.eq.s32.totalorder %s70, 1
      %p655 = scmp.ne.s32.totalorder %s650, %s652
      %p656 = scmp.eq.s32.totalorder %s70, 0
      %p657 = por %p655, %p656
      %p658 = scmp.ne.s32.totalorder %s650, %s652
      %p659 = scmp.eq.s32.totalorder %s75, 1
      %p660 = por %p658, %p659
      %p661 = scmp.ne.s32.totalorder %s652, %s653
      %p662 = scmp.eq.s32.totalorder %s75, 0
      %p663 = por %p661, %p662
      %p664 = scmp.ne.s32.totalorder %s652, %s653
      %p665 = scmp.eq.s32.totalorder %s76, 1
      %p666 = por %p664, %p665
      %p668 = scmp.ne.s32.totalorder %s653, %s667
      %p669 = scmp.eq.s32.totalorder %s76, 0
      %p670 = por %p668, %p669
      %s672 = sadd.s32 %s671, 1
      %p675 = scmp.eq.s32.totalorder %s70, 1
      %p676 = scmp.ne.s32.totalorder %s671, %s673
      %p677 = scmp.eq.s32.totalorder %s70, 0
      %p678 = por %p676, %p677
      %p679 = scmp.ne.s32.totalorder %s671, %s673
      %p680 = scmp.eq.s32.totalorder %s75, 1
      %p681 = por %p679, %p680
      %p682 = scmp.ne.s32.totalorder %s673, %s674
      %p683 = scmp.eq.s32.totalorder %s75, 0
      %p684 = por %p682, %p683
      %p685 = scmp.ne.s32.totalorder %s673, %s674
      %p686 = scmp.eq.s32.totalorder %s76, 1
      %p687 = por %p685, %p686
      %p689 = scmp.ne.s32.totalorder %s674, %s688
      %p690 = scmp.eq.s32.totalorder %s76, 0
      %p691 = por %p689, %p690
      %s692 = ssub.s32 %s70, %s77
      %p693 = scmp.eq.s32.totalorder %s692, 0
      %s695 = sadd.s32 %s694, 1
      %s696 = scalar_select %p693, %s694, %s695
      %p699 = pneg %p693
      %p700 = scmp.eq.s32.totalorder %s70, 1
      %p701 = por %p699, %p700
      %p702 = scmp.ne.s32.totalorder %s694, %s697
      %p703 = scmp.eq.s32.totalorder %s70, 0
      %p704 = por %p702, %p703
      %p705 = scmp.ne.s32.totalorder %s694, %s697
      %p706 = scmp.eq.s32.totalorder %s75, 1
      %p707 = por %p705, %p706
      %p708 = scmp.ne.s32.totalorder %s697, %s698
      %p709 = scmp.eq.s32.totalorder %s75, 0
      %p710 = por %p708, %p709
      %p711 = scmp.ne.s32.totalorder %s697, %s698
      %p712 = scmp.eq.s32.totalorder %s76, 1
      %p713 = por %p711, %p712
      %p715 = scmp.ne.s32.totalorder %s698, %s714
      %p716 = scmp.eq.s32.totalorder %s76, 0
      %p717 = por %p715, %p716
      %p718 = scmp.le.s32.totalorder 1, %s70
      %p719 = scmp.lt.s32.totalorder %s70, 3
      %p720 = pnand %p718, %p719
      %p721 = pneg %p720
      // Predicated region
      $region9: #{ranpac_forward.1} parent=5 // pred_check
        _
      $region10: #{ranpac_forward.1} parent=5 // pred_check_branch
        %723 = sbr.rel (%p720) target = $region12
      $region11: #{ranpac_forward.1} parent=5 // pred_region
        %s724 = ssub.s32 %s70, 1
        // Predicated region
        $region13: #{ranpac_forward.1} parent=11 // pred_check
          %p725 = pneg %p117
        $region14: #{ranpac_forward.1} parent=11 // pred_check_branch
          %727 = sbr.rel (%p725) target = $region16
        $region15: #{ranpac_forward.1} parent=11 // pred_region
          _
        $region16: #{ranpac_forward.1} parent=11 // pred_fallthru
          _
        // Predicated region
        $region17: #{ranpac_forward.1} parent=11 // pred_check
          %p728 = pneg %p138
        $region18: #{ranpac_forward.1} parent=11 // pred_check_branch
          %730 = sbr.rel (%p728) target = $region20
        $region19: #{ranpac_forward.1} parent=11 // pred_region
          _
        $region20: #{ranpac_forward.1} parent=11 // pred_fallthru
          _
        // Predicated region
        $region21: #{ranpac_forward.1} parent=11 // pred_check
          %p731 = pneg %p159
        $region22: #{ranpac_forward.1} parent=11 // pred_check_branch
          %733 = sbr.rel (%p731) target = $region24
        $region23: #{ranpac_forward.1} parent=11 // pred_region
          _
        $region24: #{ranpac_forward.1} parent=11 // pred_fallthru
          _
        // Predicated region
        $region25: #{ranpac_forward.1} parent=11 // pred_check
          %p734 = pneg %p180
        $region26: #{ranpac_forward.1} parent=11 // pred_check_branch
          %736 = sbr.rel (%p734) target = $region28
        $region27: #{ranpac_forward.1} parent=11 // pred_region
          _
        $region28: #{ranpac_forward.1} parent=11 // pred_fallthru
          _
        // Predicated region
        $region29: #{ranpac_forward.1} parent=11 // pred_check
          %p737 = pneg %p201
        $region30: #{ranpac_forward.1} parent=11 // pred_check_branch
          %739 = sbr.rel (%p737) target = $region32
        $region31: #{ranpac_forward.1} parent=11 // pred_region
          _
        $region32: #{ranpac_forward.1} parent=11 // pred_fallthru
          _
        // Predicated region
        $region33: #{ranpac_forward.1} parent=11 // pred_check
          %p740 = pneg %p222
        $region34: #{ranpac_forward.1} parent=11 // pred_check_branch
          %742 = sbr.rel (%p740) target = $region36
        $region35: #{ranpac_forward.1} parent=11 // pred_region
          _
        $region36: #{ranpac_forward.1} parent=11 // pred_fallthru
          _
        // Predicated region
        $region37: #{ranpac_forward.1} parent=11 // pred_check
          %p743 = pneg %p243
        $region38: #{ranpac_forward.1} parent=11 // pred_check_branch
          %745 = sbr.rel (%p743) target = $region40
        $region39: #{ranpac_forward.1} parent=11 // pred_region
          _
        $region40: #{ranpac_forward.1} parent=11 // pred_fallthru
          _
        // Predicated region
        $region41: #{ranpac_forward.1} parent=11 // pred_check
          %p746 = pneg %p264
        $region42: #{ranpac_forward.1} parent=11 // pred_check_branch
          %748 = sbr.rel (%p746) target = $region44
        $region43: #{ranpac_forward.1} parent=11 // pred_region
          _
        $region44: #{ranpac_forward.1} parent=11 // pred_fallthru
          _
        // Predicated region
        $region45: #{ranpac_forward.1} parent=11 // pred_check
          %p749 = pneg %p285
        $region46: #{ranpac_forward.1} parent=11 // pred_check_branch
          %751 = sbr.rel (%p749) target = $region48
        $region47: #{ranpac_forward.1} parent=11 // pred_region
          _
        $region48: #{ranpac_forward.1} parent=11 // pred_fallthru
          _
        // Predicated region
        $region49: #{ranpac_forward.1} parent=11 // pred_check
          %p752 = pneg %p306
        $region50: #{ranpac_forward.1} parent=11 // pred_check_branch
          %754 = sbr.rel (%p752) target = $region52
        $region51: #{ranpac_forward.1} parent=11 // pred_region
          _
        $region52: #{ranpac_forward.1} parent=11 // pred_fallthru
          _
        // Predicated region
        $region53: #{ranpac_forward.1} parent=11 // pred_check
          %p755 = pneg %p327
        $region54: #{ranpac_forward.1} parent=11 // pred_check_branch
          %757 = sbr.rel (%p755) target = $region56
        $region55: #{ranpac_forward.1} parent=11 // pred_region
          _
        $region56: #{ranpac_forward.1} parent=11 // pred_fallthru
          _
        // Predicated region
        $region57: #{ranpac_forward.1} parent=11 // pred_check
          %p758 = pneg %p348
        $region58: #{ranpac_forward.1} parent=11 // pred_check_branch
          %760 = sbr.rel (%p758) target = $region60
        $region59: #{ranpac_forward.1} parent=11 // pred_region
          _
        $region60: #{ranpac_forward.1} parent=11 // pred_fallthru
          _
        // Predicated region
        $region61: #{ranpac_forward.1} parent=11 // pred_check
          %p761 = pneg %p369
        $region62: #{ranpac_forward.1} parent=11 // pred_check_branch
          %763 = sbr.rel (%p761) target = $region64
        $region63: #{ranpac_forward.1} parent=11 // pred_region
          _
        $region64: #{ranpac_forward.1} parent=11 // pred_fallthru
          _
        // Predicated region
        $region65: #{ranpac_forward.1} parent=11 // pred_check
          %p764 = pneg %p390
        $region66: #{ranpac_forward.1} parent=11 // pred_check_branch
          %766 = sbr.rel (%p764) target = $region68
        $region67: #{ranpac_forward.1} parent=11 // pred_region
          _
        $region68: #{ranpac_forward.1} parent=11 // pred_fallthru
          _
        // Predicated region
        $region69: #{ranpac_forward.1} parent=11 // pred_check
          %p767 = pneg %p411
        $region70: #{ranpac_forward.1} parent=11 // pred_check_branch
          %769 = sbr.rel (%p767) target = $region72
        $region71: #{ranpac_forward.1} parent=11 // pred_region
          _
        $region72: #{ranpac_forward.1} parent=11 // pred_fallthru
          _
        // Predicated region
        $region73: #{ranpac_forward.1} parent=11 // pred_check
          %p770 = pneg %p432
        $region74: #{ranpac_forward.1} parent=11 // pred_check_branch
          %772 = sbr.rel (%p770) target = $region76
        $region75: #{ranpac_forward.1} parent=11 // pred_region
          _
        $region76: #{ranpac_forward.1} parent=11 // pred_fallthru
          _
        // Predicated region
        $region77: #{ranpac_forward.1} parent=11 // pred_check
          %p773 = pneg %p453
        $region78: #{ranpac_forward.1} parent=11 // pred_check_branch
          %775 = sbr.rel (%p773) target = $region80
        $region79: #{ranpac_forward.1} parent=11 // pred_region
          _
        $region80: #{ranpac_forward.1} parent=11 // pred_fallthru
          _
        // Predicated region
        $region81: #{ranpac_forward.1} parent=11 // pred_check
          %p776 = pneg %p474
        $region82: #{ranpac_forward.1} parent=11 // pred_check_branch
          %778 = sbr.rel (%p776) target = $region84
        $region83: #{ranpac_forward.1} parent=11 // pred_region
          _
        $region84: #{ranpac_forward.1} parent=11 // pred_fallthru
          _
        // Predicated region
        $region85: #{ranpac_forward.1} parent=11 // pred_check
          %p779 = pneg %p495
        $region86: #{ranpac_forward.1} parent=11 // pred_check_branch
          %781 = sbr.rel (%p779) target = $region88
        $region87: #{ranpac_forward.1} parent=11 // pred_region
          _
        $region88: #{ranpac_forward.1} parent=11 // pred_fallthru
          _
        // Predicated region
        $region89: #{ranpac_forward.1} parent=11 // pred_check
          %p782 = pneg %p516
        $region90: #{ranpac_forward.1} parent=11 // pred_check_branch
          %784 = sbr.rel (%p782) target = $region92
        $region91: #{ranpac_forward.1} parent=11 // pred_region
          _
        $region92: #{ranpac_forward.1} parent=11 // pred_fallthru
          _
        // Predicated region
        $region93: #{ranpac_forward.1} parent=11 // pred_check
          %p785 = pneg %p537
        $region94: #{ranpac_forward.1} parent=11 // pred_check_branch
          %787 = sbr.rel (%p785) target = $region96
        $region95: #{ranpac_forward.1} parent=11 // pred_region
          _
        $region96: #{ranpac_forward.1} parent=11 // pred_fallthru
          _
        // Predicated region
        $region97: #{ranpac_forward.1} parent=11 // pred_check
          %p788 = pneg %p558
        $region98: #{ranpac_forward.1} parent=11 // pred_check_branch
          %790 = sbr.rel (%p788) target = $region100
        $region99: #{ranpac_forward.1} parent=11 // pred_region
          _
        $region100: #{ranpac_forward.1} parent=11 // pred_fallthru
          _
        // Predicated region
        $region101: #{ranpac_forward.1} parent=11 // pred_check
          %p791 = pneg %p579
        $region102: #{ranpac_forward.1} parent=11 // pred_check_branch
          %793 = sbr.rel (%p791) target = $region104
        $region103: #{ranpac_forward.1} parent=11 // pred_region
          _
        $region104: #{ranpac_forward.1} parent=11 // pred_fallthru
          _
        // Predicated region
        $region105: #{ranpac_forward.1} parent=11 // pred_check
          %p794 = pneg %p600
        $region106: #{ranpac_forward.1} parent=11 // pred_check_branch
          %796 = sbr.rel (%p794) target = $region108
        $region107: #{ranpac_forward.1} parent=11 // pred_region
          _
        $region108: #{ranpac_forward.1} parent=11 // pred_fallthru
          _
        // Predicated region
        $region109: #{ranpac_forward.1} parent=11 // pred_check
          %p797 = pneg %p621
        $region110: #{ranpac_forward.1} parent=11 // pred_check_branch
          %799 = sbr.rel (%p797) target = $region112
        $region111: #{ranpac_forward.1} parent=11 // pred_region
          _
        $region112: #{ranpac_forward.1} parent=11 // pred_fallthru
          _
        // Predicated region
        $region113: #{ranpac_forward.1} parent=11 // pred_check
          %p800 = pneg %p642
        $region114: #{ranpac_forward.1} parent=11 // pred_check_branch
          %802 = sbr.rel (%p800) target = $region116
        $region115: #{ranpac_forward.1} parent=11 // pred_region
          _
        $region116: #{ranpac_forward.1} parent=11 // pred_fallthru
          _
        // Predicated region
        $region117: #{ranpac_forward.1} parent=11 // pred_check
          %p803 = pneg %p663
        $region118: #{ranpac_forward.1} parent=11 // pred_check_branch
          %805 = sbr.rel (%p803) target = $region120
        $region119: #{ranpac_forward.1} parent=11 // pred_region
          _
        $region120: #{ranpac_forward.1} parent=11 // pred_fallthru
          _
        // Predicated region
        $region121: #{ranpac_forward.1} parent=11 // pred_check
          %p806 = pneg %p684
        $region122: #{ranpac_forward.1} parent=11 // pred_check_branch
          %808 = sbr.rel (%p806) target = $region124
        $region123: #{ranpac_forward.1} parent=11 // pred_region
          _
        $region124: #{ranpac_forward.1} parent=11 // pred_fallthru
          _
      $region12: #{ranpac_forward.1} parent=5 // pred_fallthru
        _
      %p809 = scmp.lt.s32.totalorder %s70, 2
      // Predicated region
      $region125: #{ranpac_forward.1} parent=5 // pred_check
        %p810 = pneg %p809
      $region126: #{ranpac_forward.1} parent=5 // pred_check_branch
        %812 = sbr.rel (%p810) target = $region128
      $region127: #{ranpac_forward.1} parent=5 // pred_region
        // Predicated region
        $region129: #{ranpac_forward.1} parent=127 // pred_check
          %p813 = pneg %p90
        $region130: #{ranpac_forward.1} parent=127 // pred_check_branch
          %815 = sbr.rel (%p813) target = $region132
        $region131: #{ranpac_forward.1} parent=127 // pred_region
          %p816 = scmp.lt.s32.totalorder %s70, 1
          %s817 = scalar_select %p816, %s70, 1
          %s818 = smul.addr %s817, 2
          %s819 = smul.addr %s818, 8
          %s820 = scalar_lea.vmem %s1, %s819
        $region132: #{ranpac_forward.1} parent=127 // pred_fallthru
          _
      $region128: #{ranpac_forward.1} parent=5 // pred_fallthru
        _
      %p821 = scmp.le.s32.totalorder 1, %s70
      %p822 = scmp.lt.s32.totalorder %s70, 3
      %p823 = pnand %p821, %p822
      %p824 = pneg %p823
      // Predicated region
      $region133: #{ranpac_forward.1} parent=5 // pred_check
        _
      $region134: #{ranpac_forward.1} parent=5 // pred_check_branch
        %826 = sbr.rel (%p823) target = $region136
      $region135: #{ranpac_forward.1} parent=5 // pred_region
        %s827 = ssub.s32 %s70, 1
        %p828 = scmp.lt.s32.totalorder %s75, 1
        %s829 = scalar_select %p828, %s75, 1
        %s830 = smul.addr %s829, 2
        %s831 = smul.addr %s830, 8
        %s832 = scalar_lea.vmem %s1, %s831
        %p833 = pneg %p96
        %p834 = pneg %p93
        %p835 = pneg %p117
        %p836 = pneg %p114
        %p837 = pneg %p138
        %p838 = pneg %p135
        %p839 = pneg %p159
        %p840 = pneg %p156
        %p841 = pneg %p180
        %p842 = pneg %p177
        %p843 = pneg %p201
        %p844 = pneg %p198
        %p845 = pneg %p222
        %p846 = pneg %p219
        %p847 = pneg %p243
        %p848 = pneg %p240
        %p849 = pneg %p264
        %p850 = pneg %p261
        %p851 = pneg %p285
        %p852 = pneg %p282
        %p853 = pneg %p306
        %p854 = pneg %p303
        %p855 = pneg %p327
        %p856 = pneg %p324
        %p857 = pneg %p348
        %p858 = pneg %p345
        %p859 = pneg %p369
        %p860 = pneg %p366
        %p861 = pneg %p390
        %p862 = pneg %p387
        %p863 = pneg %p411
        %p864 = pneg %p408
        %p865 = pneg %p432
        %p866 = pneg %p429
        %p867 = pneg %p453
        %p868 = pneg %p450
        %p869 = pneg %p474
        %p870 = pneg %p471
        %p871 = pneg %p495
        %p872 = pneg %p492
        %p873 = pneg %p516
        %p874 = pneg %p513
        %p875 = pneg %p537
        %p876 = pneg %p534
        %p877 = pneg %p558
        %p878 = pneg %p555
        %p879 = pneg %p579
        %p880 = pneg %p576
        %p881 = pneg %p600
        %p882 = pneg %p597
        %p883 = pneg %p621
        %p884 = pneg %p618
        %p885 = pneg %p642
        %p886 = pneg %p639
        %p887 = pneg %p663
        %p888 = pneg %p660
        %p889 = pneg %p684
        %p890 = pneg %p681
        %p891 = pneg %p710
        %p892 = pneg %p707
        %s893 = sand.u32 %s697, 1
        %s894 = scalar_lea.sflag [#allocation4], %s893
        %s895 = sand.u32 %s697, 1
        %s896 = scalar_lea.vmem [#allocation3], %s895
        %p897 = scmp.lt.s32.totalorder %s75, 1
        %s898 = scalar_select %p897, %s75, 1
        %s899 = smul.addr %s898, 2
        %s900 = smul.addr %s899, 8
        %s901 = scalar_lea.vmem %s1, %s900
        %v902 = vld [vmem:[%s901] sm:$0xff]
        %v903 = vld [vmem:[%s901 + $0x8] sm:$0xff]
        %v904 = vld [vmem:[%s3] sm:$0xff]
        %v905 = vld [vmem:[%s3 + $0x8] sm:$0xff]
        %v906 = vld [vmem:[%s3 + $0x10] sm:$0xff]
        %v907 = vld [vmem:[%s3 + $0x18] sm:$0xff]
        %v908 = vld [vmem:[%s3 + $0x20] sm:$0xff]
        %v909 = vld [vmem:[%s3 + $0x28] sm:$0xff]
        %v910 = vld [vmem:[%s5] sm:$0x1]
        %v912 = vlaneseq
        %v913 = vshrl.u32 %v912, 7
        %v914 = vsub.s32 0, %v913
        %v915 = vrot.slane %v910, %v914
        %vm917 = vcmask 392192
        %v919 = vsel %vm917, %v902, 0
        %v922 = vsel %vm917, %v903, 0
        %924 = vmatprep.subr.mxu0 0.0
        %925 = vmatpush1.msra.mxu0 %v904
        %926 = vmatprep.subr.mxu0 0.0
        %927 = vmatpush1.msra.mxu0 %v905
        %928 = vmatprep.subr.mxu0 0.0
        %929 = vmatpush1.msra.mxu0 %v906
        %930 = vmatprep.subr.mxu0 0.0
        %931 = vmatpush1.msra.mxu0 %v907
        %932 = vmatprep.subr.mxu0 0.0
        %933 = vmatpush1.msra.mxu0 %v908
        %934 = vmatprep.subr.mxu0 0.0
        %935 = vmatpush1.msra.mxu0 %v909
        %936 = vmatprep.subr.mxu0 0.0
        %937 = vmatpush1.msra.mxu0 0.0
        %938 = vmatprep.subr.mxu0 0.0
        %939 = vmatpush1.msra.mxu0 0.0
        %940 = vmatprep.subr.mxu0 0.0
        %941 = vmatpush1.msra.mxu0 0.0
        %942 = vmatprep.subr.mxu0 0.0
        %943 = vmatpush1.msra.mxu0 0.0
        %944 = vmatprep.subr.mxu0 0.0
        %945 = vmatpush1.msra.mxu0 0.0
        %946 = vmatprep.subr.mxu0 0.0
        %947 = vmatpush1.msra.mxu0 0.0
        %948 = vmatprep.subr.mxu0 0.0
        %949 = vmatpush1.msra.mxu0 0.0
        %950 = vmatprep.subr.mxu0 0.0
        %951 = vmatpush1.msra.mxu0 0.0
        %952 = vmatprep.subr.mxu0 0.0
        %953 = vmatpush1.msra.mxu0 0.0
        %954 = vmatprep.subr.mxu0 0.0
        %955 = vmatpush1.msra.mxu0 0.0
        %956 = vmatprep.subr.mxu0 0.0
        %957 = vmatpush1.msra.mxu0 0.0
        %958 = vmatprep.subr.mxu0 0.0
        %959 = vmatpush1.msra.mxu0 0.0
        %960 = vmatprep.subr.mxu0 0.0
        %961 = vmatpush1.msra.mxu0 0.0
        %962 = vmatprep.subr.mxu0 0.0
        %963 = vmatpush1.msra.mxu0 0.0
        %964 = vmatprep.subr.mxu0 0.0
        %965 = vmatpush1.msra.mxu0 0.0
        %966 = vmatprep.subr.mxu0 0.0
        %967 = vmatpush1.msra.mxu0 0.0
        %968 = vmatprep.subr.mxu0 0.0
        %969 = vmatpush1.msra.mxu0 0.0
        %970 = vmatprep.subr.mxu0 0.0
        %971 = vmatpush1.msra.mxu0 0.0
        %972 = vmatprep.subr.mxu0 0.0
        %973 = vmatpush1.msra.mxu0 0.0
        %974 = vmatprep.subr.mxu0 0.0
        %975 = vmatpush1.msra.mxu0 0.0
        %976 = vmatprep.subr.mxu0 0.0
        %977 = vmatpush1.msra.mxu0 0.0
        %978 = vmatprep.subr.mxu0 0.0
        %979 = vmatpush1.msra.mxu0 0.0
        %980 = vmatprep.subr.mxu0 0.0
        %981 = vmatpush1.msra.mxu0 0.0
        %982 = vmatprep.subr.mxu0 0.0
        %983 = vmatpush1.msra.mxu0 0.0
        %984 = vmatprep.subr.mxu0 0.0
        %985 = vmatpush1.msra.mxu0 0.0
        %986 = vmatprep.subr.mxu0 0.0
        %987 = vmatpush1.msra.mxu0 0.0
        %988 = vmatprep.mubr.f32.mxu0 0.0
        %989 = vmatmul.mubr.f32.gmra.mrb[0].mxu0 %v919
        %v990 = vpop.f32.mrb[0].mxu0
        %v991 = vadd.f32 %v915, %v990
        %v992 = vpop.f32.mrb[0].mxu0
        %993 = vmatprep.mubr.f32.mxu0 0.0
        %994 = vmatmul.mubr.f32.gmra.mrb[0].mxu0 %v922
        %v995 = vpop.f32.mrb[0].mxu0
        %v996 = vadd.f32 %v915, %v995
        %v997 = vpop.f32.mrb[0].mxu0
        %998 = vdwg.mxu0
        %v999 = vld [vmem:[%s9] sm:$0xff]
        %v1000 = vld [vmem:[%s9 + $0x8] sm:$0xff]
        %v1001 = vadd.f32 %v991, %v999
        %v1002 = vadd.f32 %v996, %v1000
        %v1003 = vld [vmem:[%s7] sm:$0x1]
        %vm1006 = vcmask 1040384
        %v1007 = vrot.slane %v1001, 7
        %v1008 = vrot.slane %v1002, 7
        %v1009 = vsel %vm1006, %v1007, %v1008
        %v1013 = vsel %vm1006, %v1003, %v1007
        %v1014 = vsel %vm1006, %v1008, 0.0
        %v1015 = vlaneseq
        %v1016 = vand.u32 %v1015, 127
        %vm1017 = vcmp.lt.s32.totalorder %v1016, 17
        %v1018 = vld [vmem:[%s11] sm:$0x1]
        %v1019 = vld [vmem:[%s13] sm:$0x1]
        %vm1020 = vcmask 261120
        %v1021 = vsel %vm1020, %v1013, 0.0
        %1022 = vadd.xlane.f32.xlu0 %v1021
        %v1023 = vpop.xlane.xlu0 %1022
        %v1024 = vsel %vm1020, %v1009, 0.0
        %1025 = vadd.xlane.f32.xlu0 %v1024
        %v1026 = vpop.xlane.xlu0 %1025
        %v1027 = vsel %vm1020, %v1014, 0.0
        %1028 = vadd.xlane.f32.xlu0 %v1027
        %v1029 = vpop.xlane.xlu0 %1028
        %v1030 = vrcp.pop 32.0
        %v1031 = vmul.f32 %v1023, %v1030
        %v1032 = vmul.f32 %v1026, %v1030
        %v1033 = vmul.f32 %v1029, %v1030
        %v1034 = vsub.f32 %v1013, %v1031
        %v1035 = vsub.f32 %v1009, %v1032
        %v1036 = vsub.f32 %v1014, %v1033
        %v1037 = vmul.f32 %v1034, %v1034
        %v1038 = vmul.f32 %v1035, %v1035
        %v1039 = vmul.f32 %v1036, %v1036
        %v1040 = vsel %vm1020, %v1037, 0.0
        %1041 = vadd.xlane.f32.xlu0 %v1040
        %v1042 = vpop.xlane.xlu0 %1041
        %v1043 = vsel %vm1020, %v1038, 0.0
        %1044 = vadd.xlane.f32.xlu0 %v1043
        %v1045 = vpop.xlane.xlu0 %1044
        %v1046 = vsel %vm1020, %v1039, 0.0
        %1047 = vadd.xlane.f32.xlu0 %v1046
        %v1048 = vpop.xlane.xlu0 %1047
        %v1049 = vmul.f32 %v1042, %v1030
        %v1050 = vmul.f32 %v1045, %v1030
        %v1051 = vmul.f32 %v1048, %v1030
        %v1052 = vadd.f32 %v1049, 1e-06
        %v1053 = vadd.f32 %v1050, 1e-06
        %v1054 = vadd.f32 %v1051, 1e-06
        %v1055 = vrsqrt.pop %v1052
        %v1056 = vrsqrt.pop %v1053
        %v1057 = vrsqrt.pop %v1054
        %v1058 = vmul.f32 %v1034, %v1055
        %v1059 = vmul.f32 %v1035, %v1056
        %v1060 = vmul.f32 %v1036, %v1057
        %v1062 = vlaneseq
        %v1063 = vshrl.u32 %v1062, 7
        %v1064 = vsub.s32 0, %v1063
        %v1065 = vrot.slane %v1018, %v1064
        %v1067 = vmul.f32 %v1058, %v1065
        %v1068 = vmul.f32 %v1059, %v1065
        %v1069 = vmul.f32 %v1060, %v1065
        %v1071 = vlaneseq
        %v1072 = vshrl.u32 %v1071, 7
        %v1073 = vsub.s32 0, %v1072
        %v1074 = vrot.slane %v1019, %v1073
        %v1076 = vadd.f32 %v1067, %v1074
        %v1077 = vadd.f32 %v1068, %v1074
        %v1078 = vadd.f32 %v1069, %v1074
        %v1079 = vld [vmem:[%s15] sm:$0xff]
        %v1080 = vld [vmem:[%s15 + $0x8] sm:$0xff]
        %v1081 = vld [vmem:[%s15 + $0x10] sm:$0xff]
        %v1082 = vld [vmem:[%s15 + $0x18] sm:$0xff]
        %v1083 = vld [vmem:[%s17] sm:$0x1]
        %v1085 = vlaneseq
        %v1086 = vshrl.u32 %v1085, 7
        %v1087 = vsub.s32 0, %v1086
        %v1088 = vrot.slane %v1083, %v1087
        %v1091 = vsel %vm1020, %v1076, 0
        %v1094 = vsel %vm1020, %v1077, 0
        %v1097 = vsel %vm1020, %v1078, 0
        %1099 = vmatprep.subr.mxu0 0.0
        %1100 = vmatpush1.msra.mxu0 %v1079
        %1101 = vmatprep.subr.mxu0 0.0
        %1102 = vmatpush1.msra.mxu0 %v1080
        %1103 = vmatprep.subr.mxu0 0.0
        %1104 = vmatpush1.msra.mxu0 %v1081
        %1105 = vmatprep.subr.mxu0 0.0
        %1106 = vmatpush1.msra.mxu0 %v1082
        %1107 = vmatprep.subr.mxu0 0.0
        %1108 = vmatpush1.msra.mxu0 0.0
        %1109 = vmatprep.subr.mxu0 0.0
        %1110 = vmatpush1.msra.mxu0 0.0
        %1111 = vmatprep.subr.mxu0 0.0
        %1112 = vmatpush1.msra.mxu0 0.0
        %1113 = vmatprep.subr.mxu0 0.0
        %1114 = vmatpush1.msra.mxu0 0.0
        %1115 = vmatprep.subr.mxu0 0.0
        %1116 = vmatpush1.msra.mxu0 0.0
        %1117 = vmatprep.subr.mxu0 0.0
        %1118 = vmatpush1.msra.mxu0 0.0
        %1119 = vmatprep.subr.mxu0 0.0
        %1120 = vmatpush1.msra.mxu0 0.0
        %1121 = vmatprep.subr.mxu0 0.0
        %1122 = vmatpush1.msra.mxu0 0.0
        %1123 = vmatprep.subr.mxu0 0.0
        %1124 = vmatpush1.msra.mxu0 0.0
        %1125 = vmatprep.subr.mxu0 0.0
        %1126 = vmatpush1.msra.mxu0 0.0
        %1127 = vmatprep.subr.mxu0 0.0
        %1128 = vmatpush1.msra.mxu0 0.0
        %1129 = vmatprep.subr.mxu0 0.0
        %1130 = vmatpush1.msra.mxu0 0.0
        %1131 = vmatprep.subr.mxu0 0.0
        %1132 = vmatpush1.msra.mxu0 0.0
        %1133 = vmatprep.subr.mxu0 0.0
        %1134 = vmatpush1.msra.mxu0 0.0
        %1135 = vmatprep.subr.mxu0 0.0
        %1136 = vmatpush1.msra.mxu0 0.0
        %1137 = vmatprep.subr.mxu0 0.0
        %1138 = vmatpush1.msra.mxu0 0.0
        %1139 = vmatprep.subr.mxu0 0.0
        %1140 = vmatpush1.msra.mxu0 0.0
        %1141 = vmatprep.subr.mxu0 0.0
        %1142 = vmatpush1.msra.mxu0 0.0
        %1143 = vmatprep.subr.mxu0 0.0
        %1144 = vmatpush1.msra.mxu0 0.0
        %1145 = vmatprep.subr.mxu0 0.0
        %1146 = vmatpush1.msra.mxu0 0.0
        %1147 = vmatprep.subr.mxu0 0.0
        %1148 = vmatpush1.msra.mxu0 0.0
        %1149 = vmatprep.subr.mxu0 0.0
        %1150 = vmatpush1.msra.mxu0 0.0
        %1151 = vmatprep.subr.mxu0 0.0
        %1152 = vmatpush1.msra.mxu0 0.0
        %1153 = vmatprep.subr.mxu0 0.0
        %1154 = vmatpush1.msra.mxu0 0.0
        %1155 = vmatprep.subr.mxu0 0.0
        %1156 = vmatpush1.msra.mxu0 0.0
        %1157 = vmatprep.subr.mxu0 0.0
        %1158 = vmatpush1.msra.mxu0 0.0
        %1159 = vmatprep.subr.mxu0 0.0
        %1160 = vmatpush1.msra.mxu0 0.0
        %1161 = vmatprep.subr.mxu0 0.0
        %1162 = vmatpush1.msra.mxu0 0.0
        %1163 = vmatprep.mubr.f32.mxu0 0.0
        %1164 = vmatmul.mubr.f32.gmra.mrb[0].mxu0 %v1091
        %v1165 = vpop.f32.mrb[0].mxu0
        %v1166 = vadd.f32 %v1088, %v1165
        %v1167 = vpop.f32.mrb[0].mxu0
        %1168 = vmatprep.mubr.f32.mxu0 0.0
        %1169 = vmatmul.mubr.f32.gmra.mrb[0].mxu0 %v1094
        %v1170 = vpop.f32.mrb[0].mxu0
        %v1171 = vadd.f32 %v1088, %v1170
        %v1172 = vpop.f32.mrb[0].mxu0
        %1173 = vmatprep.mubr.f32.mxu0 0.0
        %1174 = vmatmul.mubr.f32.gmra.mrb[0].mxu0 %v1097
        %v1175 = vpop.f32.mrb[0].mxu0
        %v1176 = vadd.f32 %v1088, %v1175
        %v1177 = vpop.f32.mrb[0].mxu0
        %1178 = vdwg.mxu0
        %v1179 = vld [vmem:[%s19] sm:$0xff]
        %v1180 = vld [vmem:[%s19 + $0x8] sm:$0xff]
        %v1181 = vld [vmem:[%s19 + $0x10] sm:$0xff]
        %v1182 = vld [vmem:[%s19 + $0x18] sm:$0xff]
        %v1183 = vld [vmem:[%s21] sm:$0x1]
        %v1185 = vlaneseq
        %v1186 = vshrl.u32 %v1185, 7
        %v1187 = vsub.s32 0, %v1186
        %v1188 = vrot.slane %v1183, %v1187
        %1190 = vmatprep.subr.mxu0 0.0
        %1191 = vmatpush1.msra.mxu0 %v1179
        %1192 = vmatprep.subr.mxu0 0.0
        %1193 = vmatpush1.msra.mxu0 %v1180
        %1194 = vmatprep.subr.mxu0 0.0
        %1195 = vmatpush1.msra.mxu0 %v1181
        %1196 = vmatprep.subr.mxu0 0.0
        %1197 = vmatpush1.msra.mxu0 %v1182
        %1198 = vmatprep.subr.mxu0 0.0
        %1199 = vmatpush1.msra.mxu0 0.0
        %1200 = vmatprep.subr.mxu0 0.0
        %1201 = vmatpush1.msra.mxu0 0.0
        %1202 = vmatprep.subr.mxu0 0.0
        %1203 = vmatpush1.msra.mxu0 0.0
        %1204 = vmatprep.subr.mxu0 0.0
        %1205 = vmatpush1.msra.mxu0 0.0
        %1206 = vmatprep.subr.mxu0 0.0
        %1207 = vmatpush1.msra.mxu0 0.0
        %1208 = vmatprep.subr.mxu0 0.0
        %1209 = vmatpush1.msra.mxu0 0.0
        %1210 = vmatprep.subr.mxu0 0.0
        %1211 = vmatpush1.msra.mxu0 0.0
        %1212 = vmatprep.subr.mxu0 0.0
        %1213 = vmatpush1.msra.mxu0 0.0
        %1214 = vmatprep.subr.mxu0 0.0
        %1215 = vmatpush1.msra.mxu0 0.0
        %1216 = vmatprep.subr.mxu0 0.0
        %1217 = vmatpush1.msra.mxu0 0.0
        %1218 = vmatprep.subr.mxu0 0.0
        %1219 = vmatpush1.msra.mxu0 0.0
        %1220 = vmatprep.subr.mxu0 0.0
        %1221 = vmatpush1.msra.mxu0 0.0
        %1222 = vmatprep.subr.mxu0 0.0
        %1223 = vmatpush1.msra.mxu0 0.0
        %1224 = vmatprep.subr.mxu0 0.0
        %1225 = vmatpush1.msra.mxu0 0.0
        %1226 = vmatprep.subr.mxu0 0.0
        %1227 = vmatpush1.msra.mxu0 0.0
        %1228 = vmatprep.subr.mxu0 0.0
        %1229 = vmatpush1.msra.mxu0 0.0
        %1230 = vmatprep.subr.mxu0 0.0
        %1231 = vmatpush1.msra.mxu0 0.0
        %1232 = vmatprep.subr.mxu0 0.0
        %1233 = vmatpush1.msra.mxu0 0.0
        %1234 = vmatprep.subr.mxu0 0.0
        %1235 = vmatpush1.msra.mxu0 0.0
        %1236 = vmatprep.subr.mxu0 0.0
        %1237 = vmatpush1.msra.mxu0 0.0
        %1238 = vmatprep.subr.mxu0 0.0
        %1239 = vmatpush1.msra.mxu0 0.0
        %1240 = vmatprep.subr.mxu0 0.0
        %1241 = vmatpush1.msra.mxu0 0.0
        %1242 = vmatprep.subr.mxu0 0.0
        %1243 = vmatpush1.msra.mxu0 0.0
        %1244 = vmatprep.subr.mxu0 0.0
        %1245 = vmatpush1.msra.mxu0 0.0
        %1246 = vmatprep.subr.mxu0 0.0
        %1247 = vmatpush1.msra.mxu0 0.0
        %1248 = vmatprep.subr.mxu0 0.0
        %1249 = vmatpush1.msra.mxu0 0.0
        %1250 = vmatprep.subr.mxu0 0.0
        %1251 = vmatpush1.msra.mxu0 0.0
        %1252 = vmatprep.subr.mxu0 0.0
        %1253 = vmatpush1.msra.mxu0 0.0
        %1254 = vmatprep.mubr.f32.mxu0 0.0
        %1255 = vmatmul.mubr.f32.gmra.mrb[0].mxu0 %v1091
        %v1256 = vpop.f32.mrb[0].mxu0
        %v1257 = vadd.f32 %v1188, %v1256
        %v1258 = vpop.f32.mrb[0].mxu0
        %1259 = vmatprep.mubr.f32.mxu0 0.0
        %1260 = vmatmul.mubr.f32.gmra.mrb[0].mxu0 %v1094
        %v1261 = vpop.f32.mrb[0].mxu0
        %v1262 = vadd.f32 %v1188, %v1261
        %v1263 = vpop.f32.mrb[0].mxu0
        %1264 = vmatprep.mubr.f32.mxu0 0.0
        %1265 = vmatmul.mubr.f32.gmra.mrb[0].mxu0 %v1097
        %v1266 = vpop.f32.mrb[0].mxu0
        %v1267 = vadd.f32 %v1188, %v1266
        %v1268 = vpop.f32.mrb[0].mxu0
        %1269 = vdwg.mxu0
        %v1270 = vld [vmem:[%s23] sm:$0xff]
        %v1271 = vld [vmem:[%s23 + $0x8] sm:$0xff]
        %v1272 = vld [vmem:[%s23 + $0x10] sm:$0xff]
        %v1273 = vld [vmem:[%s23 + $0x18] sm:$0xff]
        %v1274 = vld [vmem:[%s25] sm:$0x1]
        %v1276 = vlaneseq
        %v1277 = vshrl.u32 %v1276, 7
        %v1278 = vsub.s32 0, %v1277
        %v1279 = vrot.slane %v1274, %v1278
        %1281 = vmatprep.subr.mxu0 0.0
        %1282 = vmatpush1.msra.mxu0 %v1270
        %1283 = vmatprep.subr.mxu0 0.0
        %1284 = vmatpush1.msra.mxu0 %v1271
        %1285 = vmatprep.subr.mxu0 0.0
        %1286 = vmatpush1.msra.mxu0 %v1272
        %1287 = vmatprep.subr.mxu0 0.0
        %1288 = vmatpush1.msra.mxu0 %v1273
        %1289 = vmatprep.subr.mxu0 0.0
        %1290 = vmatpush1.msra.mxu0 0.0
        %1291 = vmatprep.subr.mxu0 0.0
        %1292 = vmatpush1.msra.mxu0 0.0
        %1293 = vmatprep.subr.mxu0 0.0
        %1294 = vmatpush1.msra.mxu0 0.0
        %1295 = vmatprep.subr.mxu0 0.0
        %1296 = vmatpush1.msra.mxu0 0.0
        %1297 = vmatprep.subr.mxu0 0.0
        %1298 = vmatpush1.msra.mxu0 0.0
        %1299 = vmatprep.subr.mxu0 0.0
        %1300 = vmatpush1.msra.mxu0 0.0
        %1301 = vmatprep.subr.mxu0 0.0
        %1302 = vmatpush1.msra.mxu0 0.0
        %1303 = vmatprep.subr.mxu0 0.0
        %1304 = vmatpush1.msra.mxu0 0.0
        %1305 = vmatprep.subr.mxu0 0.0
        %1306 = vmatpush1.msra.mxu0 0.0
        %1307 = vmatprep.subr.mxu0 0.0
        %1308 = vmatpush1.msra.mxu0 0.0
        %1309 = vmatprep.subr.mxu0 0.0
        %1310 = vmatpush1.msra.mxu0 0.0
        %1311 = vmatprep.subr.mxu0 0.0
        %1312 = vmatpush1.msra.mxu0 0.0
        %1313 = vmatprep.subr.mxu0 0.0
        %1314 = vmatpush1.msra.mxu0 0.0
        %1315 = vmatprep.subr.mxu0 0.0
        %1316 = vmatpush1.msra.mxu0 0.0
        %1317 = vmatprep.subr.mxu0 0.0
        %1318 = vmatpush1.msra.mxu0 0.0
        %1319 = vmatprep.subr.mxu0 0.0
        %1320 = vmatpush1.msra.mxu0 0.0
        %1321 = vmatprep.subr.mxu0 0.0
        %1322 = vmatpush1.msra.mxu0 0.0
        %1323 = vmatprep.subr.mxu0 0.0
        %1324 = vmatpush1.msra.mxu0 0.0
        %1325 = vmatprep.subr.mxu0 0.0
        %1326 = vmatpush1.msra.mxu0 0.0
        %1327 = vmatprep.subr.mxu0 0.0
        %1328 = vmatpush1.msra.mxu0 0.0
        %1329 = vmatprep.subr.mxu0 0.0
        %1330 = vmatpush1.msra.mxu0 0.0
        %1331 = vmatprep.subr.mxu0 0.0
        %1332 = vmatpush1.msra.mxu0 0.0
        %1333 = vmatprep.subr.mxu0 0.0
        %1334 = vmatpush1.msra.mxu0 0.0
        %1335 = vmatprep.subr.mxu0 0.0
        %1336 = vmatpush1.msra.mxu0 0.0
        %1337 = vmatprep.subr.mxu0 0.0
        %1338 = vmatpush1.msra.mxu0 0.0
        %1339 = vmatprep.subr.mxu0 0.0
        %1340 = vmatpush1.msra.mxu0 0.0
        %1341 = vmatprep.subr.mxu0 0.0
        %1342 = vmatpush1.msra.mxu0 0.0
        %1343 = vmatprep.subr.mxu0 0.0
        %1344 = vmatpush1.msra.mxu0 0.0
        %1345 = vmatprep.mubr.f32.mxu0 0.0
        %1346 = vmatmul.mubr.f32.gmra.mrb[0].mxu0 %v1091
        %v1347 = vpop.f32.mrb[0].mxu0
        %v1348 = vadd.f32 %v1279, %v1347
        %v1349 = vpop.f32.mrb[0].mxu0
        %1350 = vmatprep.mubr.f32.mxu0 0.0
        %1351 = vmatmul.mubr.f32.gmra.mrb[0].mxu0 %v1094
        %v1352 = vpop.f32.mrb[0].mxu0
        %v1353 = vadd.f32 %v1279, %v1352
        %v1354 = vpop.f32.mrb[0].mxu0
        %1355 = vmatprep.mubr.f32.mxu0 0.0
        %1356 = vmatmul.mubr.f32.gmra.mrb[0].mxu0 %v1097
        %v1357 = vpop.f32.mrb[0].mxu0
        %v1358 = vadd.f32 %v1279, %v1357
        %v1359 = vpop.f32.mrb[0].mxu0
        %1360 = vdwg.mxu0
        %vm1361 = vcmask 64512
        %v1363 = vsel %vm1361, %v1166, 0
        %v1366 = vsel %vm1361, %v1171, 0
        %v1369 = vsel %vm1361, %v1176, 0
        %v1372 = vsel %vm1361, %v1257, 0
        %v1375 = vsel %vm1361, %v1262, 0
        %v1378 = vsel %vm1361, %v1267, 0
        %1380 = vmatprep.subr.mxu0 0.0
        %1381 = vmatpush1.xpose.msra.mxu0 %v1372
        %1382 = vmatprep.subr.mxu0 0.0
        %1383 = vmatpush1.xpose.msra.mxu0 %v1375
        %1384 = vmatprep.subr.mxu0 0.0
        %1385 = vmatpush1.xpose.msra.mxu0 %v1378
        %1386 = vmatprep.subr.mxu0 0.0
        %1387 = vmatpush1.xpose.msra.mxu0 0.0
        %1388 = vmatprep.subr.mxu0 0.0
        %1389 = vmatpush1.xpose.msra.mxu0 0.0
        %1390 = vmatprep.subr.mxu0 0.0
        %1391 = vmatpush1.xpose.msra.mxu0 0.0
        %1392 = vmatprep.subr.mxu0 0.0
        %1393 = vmatpush1.xpose.msra.mxu0 0.0
        %1394 = vmatprep.subr.mxu0 0.0
        %1395 = vmatpush1.xpose.msra.mxu0 0.0
        %1396 = vmatprep.subr.mxu0 0.0
        %1397 = vmatpush1.xpose.msra.mxu0 0.0
        %1398 = vmatprep.subr.mxu0 0.0
        %1399 = vmatpush1.xpose.msra.mxu0 0.0
        %1400 = vmatprep.subr.mxu0 0.0
        %1401 = vmatpush1.xpose.msra.mxu0 0.0
        %1402 = vmatprep.subr.mxu0 0.0
        %1403 = vmatpush1.xpose.msra.mxu0 0.0
        %1404 = vmatprep.subr.mxu0 0.0
        %1405 = vmatpush1.xpose.msra.mxu0 0.0
        %1406 = vmatprep.subr.mxu0 0.0
        %1407 = vmatpush1.xpose.msra.mxu0 0.0
        %1408 = vmatprep.subr.mxu0 0.0
        %1409 = vmatpush1.xpose.msra.mxu0 0.0
        %1410 = vmatprep.subr.mxu0 0.0
        %1411 = vmatpush1.xpose.msra.mxu0 0.0
        %1412 = vmatprep.subr.mxu0 0.0
        %1413 = vmatpush1.xpose.msra.mxu0 0.0
        %1414 = vmatprep.subr.mxu0 0.0
        %1415 = vmatpush1.xpose.msra.mxu0 0.0
        %1416 = vmatprep.subr.mxu0 0.0
        %1417 = vmatpush1.xpose.msra.mxu0 0.0
        %1418 = vmatprep.subr.mxu0 0.0
        %1419 = vmatpush1.xpose.msra.mxu0 0.0
        %1420 = vmatprep.subr.mxu0 0.0
        %1421 = vmatpush1.xpose.msra.mxu0 0.0
        %1422 = vmatprep.subr.mxu0 0.0
        %1423 = vmatpush1.xpose.msra.mxu0 0.0
        %1424 = vmatprep.subr.mxu0 0.0
        %1425 = vmatpush1.xpose.msra.mxu0 0.0
        %1426 = vmatprep.subr.mxu0 0.0
        %1427 = vmatpush1.xpose.msra.mxu0 0.0
        %1428 = vmatprep.subr.mxu0 0.0
        %1429 = vmatpush1.xpose.msra.mxu0 0.0
        %1430 = vmatprep.subr.mxu0 0.0
        %1431 = vmatpush1.xpose.msra.mxu0 0.0
        %1432 = vmatprep.subr.mxu0 0.0
        %1433 = vmatpush1.xpose.msra.mxu0 0.0
        %1434 = vmatprep.subr.mxu0 0.0
        %1435 = vmatpush1.xpose.msra.mxu0 0.0
        %1436 = vmatprep.subr.mxu0 0.0
        %1437 = vmatpush1.xpose.msra.mxu0 0.0
        %1438 = vmatprep.subr.mxu0 0.0
        %1439 = vmatpush1.xpose.msra.mxu0 0.0
        %1440 = vmatprep.subr.mxu0 0.0
        %1441 = vmatpush1.xpose.msra.mxu0 0.0
        %1442 = vmatprep.subr.mxu0 0.0
        %1443 = vmatpush1.xpose.msra.mxu0 0.0
        %1444 = vmatprep.mubr.f32.mxu0 0.0
        %1445 = vmatmul.mubr.f32.gmra.mrb[0].mxu0 %v1363
        %v1446 = vpop.f32.mrb[0].mxu0
        %v1447 = vadd.f32 0.0, %v1446
        %v1448 = vpop.f32.mrb[0].mxu0
        %1449 = vmatprep.mubr.f32.mxu0 0.0
        %1450 = vmatmul.mubr.f32.gmra.mrb[0].mxu0 %v1366
        %v1451 = vpop.f32.mrb[0].mxu0
        %v1452 = vadd.f32 0.0, %v1451
        %v1453 = vpop.f32.mrb[0].mxu0
        %1454 = vmatprep.mubr.f32.mxu0 0.0
        %1455 = vmatmul.mubr.f32.gmra.mrb[0].mxu0 %v1369
        %v1456 = vpop.f32.mrb[0].mxu0
        %v1457 = vadd.f32 0.0, %v1456
        %v1458 = vpop.f32.mrb[0].mxu0
        %1459 = vdwg.mxu0
        %v1460 = vmul.f32 %v1447, 0.35355338
        %v1461 = vmul.f32 %v1452, 0.35355338
        %v1462 = vmul.f32 %v1457, 0.35355338
        %v1463 = vsel %vm1017, 1, 0
        %vm1464 = vcmp.eq.s32.totalorder %v1463, 1
        %v1465 = vsel %vm1464, %v1460, -1e+30
        %v1466 = vsel %vm1464, %v1461, -1e+30
        %v1467 = vsel %vm1464, %v1462, -1e+30
        %vm1468 = vcmask 195584
        %v1469 = vsel %vm1468, %v1465, -inf
        %1470 = vmax.xlane.f32.xlu0 %v1469
        %v1471 = vpop.xlane.xlu0 %1470
        %v1472 = vsel %vm1468, %v1466, -inf
        %1473 = vmax.xlane.f32.xlu0 %v1472
        %v1474 = vpop.xlane.xlu0 %1473
        %v1475 = vsel %vm1468, %v1467, -inf
        %1476 = vmax.xlane.f32.xlu0 %v1475
        %v1477 = vpop.xlane.xlu0 %1476
        %v1478 = vsub.f32 %v1465, %v1471
        %v1479 = vsub.f32 %v1466, %v1474
        %v1480 = vsub.f32 %v1467, %v1477
        %v1481 = vmul.f32 %v1478, 1.442695
        %v1482 = vpow.pop %v1481
        %v1483 = vmul.f32 %v1479, 1.442695
        %v1484 = vpow.pop %v1483
        %v1485 = vmul.f32 %v1480, 1.442695
        %v1486 = vpow.pop %v1485
        %v1487 = vsel %vm1468, %v1482, 0.0
        %1488 = vadd.xlane.f32.xlu0 %v1487
        %v1489 = vpop.xlane.xlu0 %1488
        %v1490 = vsel %vm1468, %v1484, 0.0
        %1491 = vadd.xlane.f32.xlu0 %v1490
        %v1492 = vpop.xlane.xlu0 %1491
        %v1493 = vsel %vm1468, %v1486, 0.0
        %1494 = vadd.xlane.f32.xlu0 %v1493
        %v1495 = vpop.xlane.xlu0 %1494
        %v1496 = vrcp.pop %v1489
        %v1497 = vrcp.pop %v1492
        %v1498 = vrcp.pop %v1495
        %v1499 = vmul.f32 %v1482, %v1496
        %v1500 = vmul.f32 %v1484, %v1497
        %v1501 = vmul.f32 %v1486, %v1498
        %v1503 = vsel %vm1468, %v1499, 0
        %v1506 = vsel %vm1468, %v1500, 0
        %v1509 = vsel %vm1468, %v1501, 0
        %1511 = vmatprep.subr.mxu0 0.0
        %1512 = vmatpush1.msra.mxu0 %v1348
        %1513 = vmatprep.subr.mxu0 0.0
        %1514 = vmatpush1.msra.mxu0 %v1353
        %1515 = vmatprep.subr.mxu0 0.0
        %1516 = vmatpush1.msra.mxu0 %v1358
        %1517 = vmatprep.subr.mxu0 0.0
        %1518 = vmatpush1.msra.mxu0 0.0
        %1519 = vmatprep.subr.mxu0 0.0
        %1520 = vmatpush1.msra.mxu0 0.0
        %1521 = vmatprep.subr.mxu0 0.0
        %1522 = vmatpush1.msra.mxu0 0.0
        %1523 = vmatprep.subr.mxu0 0.0
        %1524 = vmatpush1.msra.mxu0 0.0
        %1525 = vmatprep.subr.mxu0 0.0
        %1526 = vmatpush1.msra.mxu0 0.0
        %1527 = vmatprep.subr.mxu0 0.0
        %1528 = vmatpush1.msra.mxu0 0.0
        %1529 = vmatprep.subr.mxu0 0.0
        %1530 = vmatpush1.msra.mxu0 0.0
        %1531 = vmatprep.subr.mxu0 0.0
        %1532 = vmatpush1.msra.mxu0 0.0
        %1533 = vmatprep.subr.mxu0 0.0
        %1534 = vmatpush1.msra.mxu0 0.0
        %1535 = vmatprep.subr.mxu0 0.0
        %1536 = vmatpush1.msra.mxu0 0.0
        %1537 = vmatprep.subr.mxu0 0.0
        %1538 = vmatpush1.msra.mxu0 0.0
        %1539 = vmatprep.subr.mxu0 0.0
        %1540 = vmatpush1.msra.mxu0 0.0
        %1541 = vmatprep.subr.mxu0 0.0
        %1542 = vmatpush1.msra.mxu0 0.0
        %1543 = vmatprep.subr.mxu0 0.0
        %1544 = vmatpush1.msra.mxu0 0.0
        %1545 = vmatprep.subr.mxu0 0.0
        %1546 = vmatpush1.msra.mxu0 0.0
        %1547 = vmatprep.subr.mxu0 0.0
        %1548 = vmatpush1.msra.mxu0 0.0
        %1549 = vmatprep.subr.mxu0 0.0
        %1550 = vmatpush1.msra.mxu0 0.0
        %1551 = vmatprep.subr.mxu0 0.0
        %1552 = vmatpush1.msra.mxu0 0.0
        %1553 = vmatprep.subr.mxu0 0.0
        %1554 = vmatpush1.msra.mxu0 0.0
        %1555 = vmatprep.subr.mxu0 0.0
        %1556 = vmatpush1.msra.mxu0 0.0
        %1557 = vmatprep.subr.mxu0 0.0
        %1558 = vmatpush1.msra.mxu0 0.0
        %1559 = vmatprep.subr.mxu0 0.0
        %1560 = vmatpush1.msra.mxu0 0.0
        %1561 = vmatprep.subr.mxu0 0.0
        %1562 = vmatpush1.msra.mxu0 0.0
        %1563 = vmatprep.subr.mxu0 0.0
        %1564 = vmatpush1.msra.mxu0 0.0
        %1565 = vmatprep.subr.mxu0 0.0
        %1566 = vmatpush1.msra.mxu0 0.0
        %1567 = vmatprep.subr.mxu0 0.0
        %1568 = vmatpush1.msra.mxu0 0.0
        %1569 = vmatprep.subr.mxu0 0.0
        %1570 = vmatpush1.msra.mxu0 0.0
        %1571 = vmatprep.subr.mxu0 0.0
        %1572 = vmatpush1.msra.mxu0 0.0
        %1573 = vmatprep.subr.mxu0 0.0
        %1574 = vmatpush1.msra.mxu0 0.0
        %1575 = vmatprep.mubr.f32.mxu0 0.0
        %1576 = vmatmul.mubr.f32.gmra.mrb[0].mxu0 %v1503
        %v1577 = vpop.f32.mrb[0].mxu0
        %v1578 = vadd.f32 0.0, %v1577
        %v1579 = vpop.f32.mrb[0].mxu0
        %1580 = vmatprep.mubr.f32.mxu0 0.0
        %1581 = vmatmul.mubr.f32.gmra.mrb[0].mxu0 %v1506
        %v1582 = vpop.f32.mrb[0].mxu0
        %v1583 = vadd.f32 0.0, %v1582
        %v1584 = vpop.f32.mrb[0].mxu0
        %1585 = vmatprep.mubr.f32.mxu0 0.0
        %1586 = vmatmul.mubr.f32.gmra.mrb[0].mxu0 %v1509
        %v1587 = vpop.f32.mrb[0].mxu0
        %v1588 = vadd.f32 0.0, %v1587
        %v1589 = vpop.f32.mrb[0].mxu0
        %1590 = vdwg.mxu0
        %v1591 = vld [vmem:[%s27] sm:$0xff]
        %s1592 = scalar_lea.vmem %s15, 32
        %v1593 = vld [vmem:[%s1592] sm:$0xff]
        %v1594 = vld [vmem:[%s1592 + $0x8] sm:$0xff]
        %v1595 = vld [vmem:[%s1592 + $0x10] sm:$0xff]
        %v1596 = vld [vmem:[%s1592 + $0x18] sm:$0xff]
        %s1597 = scalar_lea.vmem %s17, 1
        %v1598 = vld [vmem:[%s1597] sm:$0x1]
        %v1600 = vlaneseq
        %v1601 = vshrl.u32 %v1600, 7
        %v1602 = vsub.s32 0, %v1601
        %v1603 = vrot.slane %v1598, %v1602
        %1605 = vmatprep.subr.mxu0 0.0
        %1606 = vmatpush1.msra.mxu0 %v1593
        %1607 = vmatprep.subr.mxu0 0.0
        %1608 = vmatpush1.msra.mxu0 %v1594
        %1609 = vmatprep.subr.mxu0 0.0
        %1610 = vmatpush1.msra.mxu0 %v1595
        %1611 = vmatprep.subr.mxu0 0.0
        %1612 = vmatpush1.msra.mxu0 %v1596
        %1613 = vmatprep.subr.mxu0 0.0
        %1614 = vmatpush1.msra.mxu0 0.0
        %1615 = vmatprep.subr.mxu0 0.0
        %1616 = vmatpush1.msra.mxu0 0.0
        %1617 = vmatprep.subr.mxu0 0.0
        %1618 = vmatpush1.msra.mxu0 0.0
        %1619 = vmatprep.subr.mxu0 0.0
        %1620 = vmatpush1.msra.mxu0 0.0
        %1621 = vmatprep.subr.mxu0 0.0
        %1622 = vmatpush1.msra.mxu0 0.0
        %1623 = vmatprep.subr.mxu0 0.0
        %1624 = vmatpush1.msra.mxu0 0.0
        %1625 = vmatprep.subr.mxu0 0.0
        %1626 = vmatpush1.msra.mxu0 0.0
        %1627 = vmatprep.subr.mxu0 0.0
        %1628 = vmatpush1.msra.mxu0 0.0
        %1629 = vmatprep.subr.mxu0 0.0
        %1630 = vmatpush1.msra.mxu0 0.0
        %1631 = vmatprep.subr.mxu0 0.0
        %1632 = vmatpush1.msra.mxu0 0.0
        %1633 = vmatprep.subr.mxu0 0.0
        %1634 = vmatpush1.msra.mxu0 0.0
        %1635 = vmatprep.subr.mxu0 0.0
        %1636 = vmatpush1.msra.mxu0 0.0
        %1637 = vmatprep.subr.mxu0 0.0
        %1638 = vmatpush1.msra.mxu0 0.0
        %1639 = vmatprep.subr.mxu0 0.0
        %1640 = vmatpush1.msra.mxu0 0.0
        %1641 = vmatprep.subr.mxu0 0.0
        %1642 = vmatpush1.msra.mxu0 0.0
        %1643 = vmatprep.subr.mxu0 0.0
        %1644 = vmatpush1.msra.mxu0 0.0
        %1645 = vmatprep.subr.mxu0 0.0
        %1646 = vmatpush1.msra.mxu0 0.0
        %1647 = vmatprep.subr.mxu0 0.0
        %1648 = vmatpush1.msra.mxu0 0.0
        %1649 = vmatprep.subr.mxu0 0.0
        %1650 = vmatpush1.msra.mxu0 0.0
        %1651 = vmatprep.subr.mxu0 0.0
        %1652 = vmatpush1.msra.mxu0 0.0
        %1653 = vmatprep.subr.mxu0 0.0
        %1654 = vmatpush1.msra.mxu0 0.0
        %1655 = vmatprep.subr.mxu0 0.0
        %1656 = vmatpush1.msra.mxu0 0.0
        %1657 = vmatprep.subr.mxu0 0.0
        %1658 = vmatpush1.msra.mxu0 0.0
        %1659 = vmatprep.subr.mxu0 0.0
        %1660 = vmatpush1.msra.mxu0 0.0
        %1661 = vmatprep.subr.mxu0 0.0
        %1662 = vmatpush1.msra.mxu0 0.0
        %1663 = vmatprep.subr.mxu0 0.0
        %1664 = vmatpush1.msra.mxu0 0.0
        %1665 = vmatprep.subr.mxu0 0.0
        %1666 = vmatpush1.msra.mxu0 0.0
        %1667 = vmatprep.subr.mxu0 0.0
        %1668 = vmatpush1.msra.mxu0 0.0
        %1669 = vmatprep.mubr.f32.mxu0 0.0
        %1670 = vmatmul.mubr.f32.gmra.mrb[0].mxu0 %v1091
        %v1671 = vpop.f32.mrb[0].mxu0
        %v1672 = vadd.f32 %v1603, %v1671
        %v1673 = vpop.f32.mrb[0].mxu0
        %1674 = vmatprep.mubr.f32.mxu0 0.0
        %1675 = vmatmul.mubr.f32.gmra.mrb[0].mxu0 %v1094
        %v1676 = vpop.f32.mrb[0].mxu0
        %v1677 = vadd.f32 %v1603, %v1676
        %v1678 = vpop.f32.mrb[0].mxu0
        %1679 = vmatprep.mubr.f32.mxu0 0.0
        %1680 = vmatmul.mubr.f32.gmra.mrb[0].mxu0 %v1097
        %v1681 = vpop.f32.mrb[0].mxu0
        %v1682 = vadd.f32 %v1603, %v1681
        %v1683 = vpop.f32.mrb[0].mxu0
        %1684 = vdwg.mxu0
        %s1685 = scalar_lea.vmem %s19, 32
        %v1686 = vld [vmem:[%s1685] sm:$0xff]
        %v1687 = vld [vmem:[%s1685 + $0x8] sm:$0xff]
        %v1688 = vld [vmem:[%s1685 + $0x10] sm:$0xff]
        %v1689 = vld [vmem:[%s1685 + $0x18] sm:$0xff]
        %s1690 = scalar_lea.vmem %s21, 1
        %v1691 = vld [vmem:[%s1690] sm:$0x1]
        %v1693 = vlaneseq
        %v1694 = vshrl.u32 %v1693, 7
        %v1695 = vsub.s32 0, %v1694
        %v1696 = vrot.slane %v1691, %v1695
        %1698 = vmatprep.subr.mxu0 0.0
        %1699 = vmatpush1.msra.mxu0 %v1686
        %1700 = vmatprep.subr.mxu0 0.0
        %1701 = vmatpush1.msra.mxu0 %v1687
        %1702 = vmatprep.subr.mxu0 0.0
        %1703 = vmatpush1.msra.mxu0 %v1688
        %1704 = vmatprep.subr.mxu0 0.0
        %1705 = vmatpush1.msra.mxu0 %v1689
        %1706 = vmatprep.subr.mxu0 0.0
        %1707 = vmatpush1.msra.mxu0 0.0
        %1708 = vmatprep.subr.mxu0 0.0
        %1709 = vmatpush1.msra.mxu0 0.0
        %1710 = vmatprep.subr.mxu0 0.0
        %1711 = vmatpush1.msra.mxu0 0.0
        %1712 = vmatprep.subr.mxu0 0.0
        %1713 = vmatpush1.msra.mxu0 0.0
        %1714 = vmatprep.subr.mxu0 0.0
        %1715 = vmatpush1.msra.mxu0 0.0
        %1716 = vmatprep.subr.mxu0 0.0
        %1717 = vmatpush1.msra.mxu0 0.0
        %1718 = vmatprep.subr.mxu0 0.0
        %1719 = vmatpush1.msra.mxu0 0.0
        %1720 = vmatprep.subr.mxu0 0.0
        %1721 = vmatpush1.msra.mxu0 0.0
        %1722 = vmatprep.subr.mxu0 0.0
        %1723 = vmatpush1.msra.mxu0 0.0
        %1724 = vmatprep.subr.mxu0 0.0
        %1725 = vmatpush1.msra.mxu0 0.0
        %1726 = vmatprep.subr.mxu0 0.0
        %1727 = vmatpush1.msra.mxu0 0.0
        %1728 = vmatprep.subr.mxu0 0.0
        %1729 = vmatpush1.msra.mxu0 0.0
        %1730 = vmatprep.subr.mxu0 0.0
        %1731 = vmatpush1.msra.mxu0 0.0
        %1732 = vmatprep.subr.mxu0 0.0
        %1733 = vmatpush1.msra.mxu0 0.0
        %1734 = vmatprep.subr.mxu0 0.0
        %1735 = vmatpush1.msra.mxu0 0.0
        %1736 = vmatprep.subr.mxu0 0.0
        %1737 = vmatpush1.msra.mxu0 0.0
        %1738 = vmatprep.subr.mxu0 0.0
        %1739 = vmatpush1.msra.mxu0 0.0
        %1740 = vmatprep.subr.mxu0 0.0
        %1741 = vmatpush1.msra.mxu0 0.0
        %1742 = vmatprep.subr.mxu0 0.0
        %1743 = vmatpush1.msra.mxu0 0.0
        %1744 = vmatprep.subr.mxu0 0.0
        %1745 = vmatpush1.msra.mxu0 0.0
        %1746 = vmatprep.subr.mxu0 0.0
        %1747 = vmatpush1.msra.mxu0 0.0
        %1748 = vmatprep.subr.mxu0 0.0
        %1749 = vmatpush1.msra.mxu0 0.0
        %1750 = vmatprep.subr.mxu0 0.0
        %1751 = vmatpush1.msra.mxu0 0.0
        %1752 = vmatprep.subr.mxu0 0.0
        %1753 = vmatpush1.msra.mxu0 0.0
        %1754 = vmatprep.subr.mxu0 0.0
        %1755 = vmatpush1.msra.mxu0 0.0
        %1756 = vmatprep.subr.mxu0 0.0
        %1757 = vmatpush1.msra.mxu0 0.0
        %1758 = vmatprep.subr.mxu0 0.0
        %1759 = vmatpush1.msra.mxu0 0.0
        %1760 = vmatprep.subr.mxu0 0.0
        %1761 = vmatpush1.msra.mxu0 0.0
        %1762 = vmatprep.mubr.f32.mxu0 0.0
        %1763 = vmatmul.mubr.f32.gmra.mrb[0].mxu0 %v1091
        %v1764 = vpop.f32.mrb[0].mxu0
        %v1765 = vadd.f32 %v1696, %v1764
        %v1766 = vpop.f32.mrb[0].mxu0
        %1767 = vmatprep.mubr.f32.mxu0 0.0
        %1768 = vmatmul.mubr.f32.gmra.mrb[0].mxu0 %v1094
        %v1769 = vpop.f32.mrb[0].mxu0
        %v1770 = vadd.f32 %v1696, %v1769
        %v1771 = vpop.f32.mrb[0].mxu0
        %1772 = vmatprep.mubr.f32.mxu0 0.0
        %1773 = vmatmul.mubr.f32.gmra.mrb[0].mxu0 %v1097
        %v1774 = vpop.f32.mrb[0].mxu0
        %v1775 = vadd.f32 %v1696, %v1774
        %v1776 = vpop.f32.mrb[0].mxu0
        %1777 = vdwg.mxu0
        %s1778 = scalar_lea.vmem %s23, 32
        %v1779 = vld [vmem:[%s1778] sm:$0xff]
        %v1780 = vld [vmem:[%s1778 + $0x8] sm:$0xff]
        %v1781 = vld [vmem:[%s1778 + $0x10] sm:$0xff]
        %v1782 = vld [vmem:[%s1778 + $0x18] sm:$0xff]
        %s1783 = scalar_lea.vmem %s25, 1
        %v1784 = vld [vmem:[%s1783] sm:$0x1]
        %v1786 = vlaneseq
        %v1787 = vshrl.u32 %v1786, 7
        %v1788 = vsub.s32 0, %v1787
        %v1789 = vrot.slane %v1784, %v1788
        %1791 = vmatprep.subr.mxu0 0.0
        %1792 = vmatpush1.msra.mxu0 %v1779
        %1793 = vmatprep.subr.mxu0 0.0
        %1794 = vmatpush1.msra.mxu0 %v1780
        %1795 = vmatprep.subr.mxu0 0.0
        %1796 = vmatpush1.msra.mxu0 %v1781
        %1797 = vmatprep.subr.mxu0 0.0
        %1798 = vmatpush1.msra.mxu0 %v1782
        %1799 = vmatprep.subr.mxu0 0.0
        %1800 = vmatpush1.msra.mxu0 0.0
        %1801 = vmatprep.subr.mxu0 0.0
        %1802 = vmatpush1.msra.mxu0 0.0
        %1803 = vmatprep.subr.mxu0 0.0
        %1804 = vmatpush1.msra.mxu0 0.0
        %1805 = vmatprep.subr.mxu0 0.0
        %1806 = vmatpush1.msra.mxu0 0.0
        %1807 = vmatprep.subr.mxu0 0.0
        %1808 = vmatpush1.msra.mxu0 0.0
        %1809 = vmatprep.subr.mxu0 0.0
        %1810 = vmatpush1.msra.mxu0 0.0
        %1811 = vmatprep.subr.mxu0 0.0
        %1812 = vmatpush1.msra.mxu0 0.0
        %1813 = vmatprep.subr.mxu0 0.0
        %1814 = vmatpush1.msra.mxu0 0.0
        %1815 = vmatprep.subr.mxu0 0.0
        %1816 = vmatpush1.msra.mxu0 0.0
        %1817 = vmatprep.subr.mxu0 0.0
        %1818 = vmatpush1.msra.mxu0 0.0
        %1819 = vmatprep.subr.mxu0 0.0
        %1820 = vmatpush1.msra.mxu0 0.0
        %1821 = vmatprep.subr.mxu0 0.0
        %1822 = vmatpush1.msra.mxu0 0.0
        %1823 = vmatprep.subr.mxu0 0.0
        %1824 = vmatpush1.msra.mxu0 0.0
        %1825 = vmatprep.subr.mxu0 0.0
        %1826 = vmatpush1.msra.mxu0 0.0
        %1827 = vmatprep.subr.mxu0 0.0
        %1828 = vmatpush1.msra.mxu0 0.0
        %1829 = vmatprep.subr.mxu0 0.0
        %1830 = vmatpush1.msra.mxu0 0.0
        %1831 = vmatprep.subr.mxu0 0.0
        %1832 = vmatpush1.msra.mxu0 0.0
        %1833 = vmatprep.subr.mxu0 0.0
        %1834 = vmatpush1.msra.mxu0 0.0
        %1835 = vmatprep.subr.mxu0 0.0
        %1836 = vmatpush1.msra.mxu0 0.0
        %1837 = vmatprep.subr.mxu0 0.0
        %1838 = vmatpush1.msra.mxu0 0.0
        %1839 = vmatprep.subr.mxu0 0.0
        %1840 = vmatpush1.msra.mxu0 0.0
        %1841 = vmatprep.subr.mxu0 0.0
        %1842 = vmatpush1.msra.mxu0 0.0
        %1843 = vmatprep.subr.mxu0 0.0
        %1844 = vmatpush1.msra.mxu0 0.0
        %1845 = vmatprep.subr.mxu0 0.0
        %1846 = vmatpush1.msra.mxu0 0.0
        %1847 = vmatprep.subr.mxu0 0.0
        %1848 = vmatpush1.msra.mxu0 0.0
        %1849 = vmatprep.subr.mxu0 0.0
        %1850 = vmatpush1.msra.mxu0 0.0
        %1851 = vmatprep.subr.mxu0 0.0
        %1852 = vmatpush1.msra.mxu0 0.0
        %1853 = vmatprep.subr.mxu0 0.0
        %1854 = vmatpush1.msra.mxu0 0.0
        %1855 = vmatprep.mubr.f32.mxu0 0.0
        %1856 = vmatmul.mubr.f32.gmra.mrb[0].mxu0 %v1091
        %v1857 = vpop.f32.mrb[0].mxu0
        %v1858 = vadd.f32 %v1789, %v1857
        %v1859 = vpop.f32.mrb[0].mxu0
        %1860 = vmatprep.mubr.f32.mxu0 0.0
        %1861 = vmatmul.mubr.f32.gmra.mrb[0].mxu0 %v1094
        %v1862 = vpop.f32.mrb[0].mxu0
        %v1863 = vadd.f32 %v1789, %v1862
        %v1864 = vpop.f32.mrb[0].mxu0
        %1865 = vmatprep.mubr.f32.mxu0 0.0
        %1866 = vmatmul.mubr.f32.gmra.mrb[0].mxu0 %v1097
        %v1867 = vpop.f32.mrb[0].mxu0
        %v1868 = vadd.f32 %v1789, %v1867
        %v1869 = vpop.f32.mrb[0].mxu0
        %1870 = vdwg.mxu0
        %v1872 = vsel %vm1361, %v1672, 0
        %v1875 = vsel %vm1361, %v1677, 0
        %v1878 = vsel %vm1361, %v1682, 0
        %v1881 = vsel %vm1361, %v1765, 0
        %v1884 = vsel %vm1361, %v1770, 0
        %v1887 = vsel %vm1361, %v1775, 0
        %1889 = vmatprep.subr.mxu0 0.0
        %1890 = vmatpush1.xpose.msra.mxu0 %v1881
        %1891 = vmatprep.subr.mxu0 0.0
        %1892 = vmatpush1.xpose.msra.mxu0 %v1884
        %1893 = vmatprep.subr.mxu0 0.0
        %1894 = vmatpush1.xpose.msra.mxu0 %v1887
        %1895 = vmatprep.subr.mxu0 0.0
        %1896 = vmatpush1.xpose.msra.mxu0 0.0
        %1897 = vmatprep.subr.mxu0 0.0
        %1898 = vmatpush1.xpose.msra.mxu0 0.0
        %1899 = vmatprep.subr.mxu0 0.0
        %1900 = vmatpush1.xpose.msra.mxu0 0.0
        %1901 = vmatprep.subr.mxu0 0.0
        %1902 = vmatpush1.xpose.msra.mxu0 0.0
        %1903 = vmatprep.subr.mxu0 0.0
        %1904 = vmatpush1.xpose.msra.mxu0 0.0
        %1905 = vmatprep.subr.mxu0 0.0
        %1906 = vmatpush1.xpose.msra.mxu0 0.0
        %1907 = vmatprep.subr.mxu0 0.0
        %1908 = vmatpush1.xpose.msra.mxu0 0.0
        %1909 = vmatprep.subr.mxu0 0.0
        %1910 = vmatpush1.xpose.msra.mxu0 0.0
        %1911 = vmatprep.subr.mxu0 0.0
        %1912 = vmatpush1.xpose.msra.mxu0 0.0
        %1913 = vmatprep.subr.mxu0 0.0
        %1914 = vmatpush1.xpose.msra.mxu0 0.0
        %1915 = vmatprep.subr.mxu0 0.0
        %1916 = vmatpush1.xpose.msra.mxu0 0.0
        %1917 = vmatprep.subr.mxu0 0.0
        %1918 = vmatpush1.xpose.msra.mxu0 0.0
        %1919 = vmatprep.subr.mxu0 0.0
        %1920 = vmatpush1.xpose.msra.mxu0 0.0
        %1921 = vmatprep.subr.mxu0 0.0
        %1922 = vmatpush1.xpose.msra.mxu0 0.0
        %1923 = vmatprep.subr.mxu0 0.0
        %1924 = vmatpush1.xpose.msra.mxu0 0.0
        %1925 = vmatprep.subr.mxu0 0.0
        %1926 = vmatpush1.xpose.msra.mxu0 0.0
        %1927 = vmatprep.subr.mxu0 0.0
        %1928 = vmatpush1.xpose.msra.mxu0 0.0
        %1929 = vmatprep.subr.mxu0 0.0
        %1930 = vmatpush1.xpose.msra.mxu0 0.0
        %1931 = vmatprep.subr.mxu0 0.0
        %1932 = vmatpush1.xpose.msra.mxu0 0.0
        %1933 = vmatprep.subr.mxu0 0.0
        %1934 = vmatpush1.xpose.msra.mxu0 0.0
        %1935 = vmatprep.subr.mxu0 0.0
        %1936 = vmatpush1.xpose.msra.mxu0 0.0
        %1937 = vmatprep.subr.mxu0 0.0
        %1938 = vmatpush1.xpose.msra.mxu0 0.0
        %1939 = vmatprep.subr.mxu0 0.0
        %1940 = vmatpush1.xpose.msra.mxu0 0.0
        %1941 = vmatprep.subr.mxu0 0.0
        %1942 = vmatpush1.xpose.msra.mxu0 0.0
        %1943 = vmatprep.subr.mxu0 0.0
        %1944 = vmatpush1.xpose.msra.mxu0 0.0
        %1945 = vmatprep.subr.mxu0 0.0
        %1946 = vmatpush1.xpose.msra.mxu0 0.0
        %1947 = vmatprep.subr.mxu0 0.0
        %1948 = vmatpush1.xpose.msra.mxu0 0.0
        %1949 = vmatprep.subr.mxu0 0.0
        %1950 = vmatpush1.xpose.msra.mxu0 0.0
        %1951 = vmatprep.subr.mxu0 0.0
        %1952 = vmatpush1.xpose.msra.mxu0 0.0
        %1953 = vmatprep.mubr.f32.mxu0 0.0
        %1954 = vmatmul.mubr.f32.gmra.mrb[0].mxu0 %v1872
        %v1955 = vpop.f32.mrb[0].mxu0
        %v1956 = vadd.f32 0.0, %v1955
        %v1957 = vpop.f32.mrb[0].mxu0
        %1958 = vmatprep.mubr.f32.mxu0 0.0
        %1959 = vmatmul.mubr.f32.gmra.mrb[0].mxu0 %v1875
        %v1960 = vpop.f32.mrb[0].mxu0
        %v1961 = vadd.f32 0.0, %v1960
        %v1962 = vpop.f32.mrb[0].mxu0
        %1963 = vmatprep.mubr.f32.mxu0 0.0
        %1964 = vmatmul.mubr.f32.gmra.mrb[0].mxu0 %v1878
        %v1965 = vpop.f32.mrb[0].mxu0
        %v1966 = vadd.f32 0.0, %v1965
        %v1967 = vpop.f32.mrb[0].mxu0
        %1968 = vdwg.mxu0
        %v1969 = vmul.f32 %v1956, 0.35355338
        %v1970 = vmul.f32 %v1961, 0.35355338
        %v1971 = vmul.f32 %v1966, 0.35355338
        %v1972 = vsel %vm1464, %v1969, -1e+30
        %v1973 = vsel %vm1464, %v1970, -1e+30
        %v1974 = vsel %vm1464, %v1971, -1e+30
        %v1975 = vsel %vm1468, %v1972, -inf
        %1976 = vmax.xlane.f32.xlu0 %v1975
        %v1977 = vpop.xlane.xlu0 %1976
        %v1978 = vsel %vm1468, %v1973, -inf
        %1979 = vmax.xlane.f32.xlu0 %v1978
        %v1980 = vpop.xlane.xlu0 %1979
        %v1981 = vsel %vm1468, %v1974, -inf
        %1982 = vmax.xlane.f32.xlu0 %v1981
        %v1983 = vpop.xlane.xlu0 %1982
        %v1984 = vsub.f32 %v1972, %v1977
        %v1985 = vsub.f32 %v1973, %v1980
        %v1986 = vsub.f32 %v1974, %v1983
        %v1987 = vmul.f32 %v1984, 1.442695
        %v1988 = vpow.pop %v1987
        %v1989 = vmul.f32 %v1985, 1.442695
        %v1990 = vpow.pop %v1989
        %v1991 = vmul.f32 %v1986, 1.442695
        %v1992 = vpow.pop %v1991
        %v1993 = vsel %vm1468, %v1988, 0.0
        %1994 = vadd.xlane.f32.xlu0 %v1993
        %v1995 = vpop.xlane.xlu0 %1994
        %v1996 = vsel %vm1468, %v1990, 0.0
        %1997 = vadd.xlane.f32.xlu0 %v1996
        %v1998 = vpop.xlane.xlu0 %1997
        %v1999 = vsel %vm1468, %v1992, 0.0
        %2000 = vadd.xlane.f32.xlu0 %v1999
        %v2001 = vpop.xlane.xlu0 %2000
        %v2002 = vrcp.pop %v1995
        %v2003 = vrcp.pop %v1998
        %v2004 = vrcp.pop %v2001
        %v2005 = vmul.f32 %v1988, %v2002
        %v2006 = vmul.f32 %v1990, %v2003
        %v2007 = vmul.f32 %v1992, %v2004
        %v2009 = vsel %vm1468, %v2005, 0
        %v2012 = vsel %vm1468, %v2006, 0
        %v2015 = vsel %vm1468, %v2007, 0
        %2017 = vmatprep.subr.mxu0 0.0
        %2018 = vmatpush1.msra.mxu0 %v1858
        %2019 = vmatprep.subr.mxu0 0.0
        %2020 = vmatpush1.msra.mxu0 %v1863
        %2021 = vmatprep.subr.mxu0 0.0
        %2022 = vmatpush1.msra.mxu0 %v1868
        %2023 = vmatprep.subr.mxu0 0.0
        %2024 = vmatpush1.msra.mxu0 0.0
        %2025 = vmatprep.subr.mxu0 0.0
        %2026 = vmatpush1.msra.mxu0 0.0
        %2027 = vmatprep.subr.mxu0 0.0
        %2028 = vmatpush1.msra.mxu0 0.0
        %2029 = vmatprep.subr.mxu0 0.0
        %2030 = vmatpush1.msra.mxu0 0.0
        %2031 = vmatprep.subr.mxu0 0.0
        %2032 = vmatpush1.msra.mxu0 0.0
        %2033 = vmatprep.subr.mxu0 0.0
        %2034 = vmatpush1.msra.mxu0 0.0
        %2035 = vmatprep.subr.mxu0 0.0
        %2036 = vmatpush1.msra.mxu0 0.0
        %2037 = vmatprep.subr.mxu0 0.0
        %2038 = vmatpush1.msra.mxu0 0.0
        %2039 = vmatprep.subr.mxu0 0.0
        %2040 = vmatpush1.msra.mxu0 0.0
        %2041 = vmatprep.subr.mxu0 0.0
        %2042 = vmatpush1.msra.mxu0 0.0
        %2043 = vmatprep.subr.mxu0 0.0
        %2044 = vmatpush1.msra.mxu0 0.0
        %2045 = vmatprep.subr.mxu0 0.0
        %2046 = vmatpush1.msra.mxu0 0.0
        %2047 = vmatprep.subr.mxu0 0.0
        %2048 = vmatpush1.msra.mxu0 0.0
        %2049 = vmatprep.subr.mxu0 0.0
        %2050 = vmatpush1.msra.mxu0 0.0
        %2051 = vmatprep.subr.mxu0 0.0
        %2052 = vmatpush1.msra.mxu0 0.0
        %2053 = vmatprep.subr.mxu0 0.0
        %2054 = vmatpush1.msra.mxu0 0.0
        %2055 = vmatprep.subr.mxu0 0.0
        %2056 = vmatpush1.msra.mxu0 0.0
        %2057 = vmatprep.subr.mxu0 0.0
        %2058 = vmatpush1.msra.mxu0 0.0
        %2059 = vmatprep.subr.mxu0 0.0
        %2060 = vmatpush1.msra.mxu0 0.0
        %2061 = vmatprep.subr.mxu0 0.0
        %2062 = vmatpush1.msra.mxu0 0.0
        %2063 = vmatprep.subr.mxu0 0.0
        %2064 = vmatpush1.msra.mxu0 0.0
        %2065 = vmatprep.subr.mxu0 0.0
        %2066 = vmatpush1.msra.mxu0 0.0
        %2067 = vmatprep.subr.mxu0 0.0
        %2068 = vmatpush1.msra.mxu0 0.0
        %2069 = vmatprep.subr.mxu0 0.0
        %2070 = vmatpush1.msra.mxu0 0.0
        %2071 = vmatprep.subr.mxu0 0.0
        %2072 = vmatpush1.msra.mxu0 0.0
        %2073 = vmatprep.subr.mxu0 0.0
        %2074 = vmatpush1.msra.mxu0 0.0
        %2075 = vmatprep.subr.mxu0 0.0
        %2076 = vmatpush1.msra.mxu0 0.0
        %2077 = vmatprep.subr.mxu0 0.0
        %2078 = vmatpush1.msra.mxu0 0.0
        %2079 = vmatprep.subr.mxu0 0.0
        %2080 = vmatpush1.msra.mxu0 0.0
        %2081 = vmatprep.mubr.f32.mxu0 0.0
        %2082 = vmatmul.mubr.f32.gmra.mrb[0].mxu0 %v2009
        %v2083 = vpop.f32.mrb[0].mxu0
        %v2084 = vadd.f32 0.0, %v2083
        %v2085 = vpop.f32.mrb[0].mxu0
        %2086 = vmatprep.mubr.f32.mxu0 0.0
        %2087 = vmatmul.mubr.f32.gmra.mrb[0].mxu0 %v2012
        %v2088 = vpop.f32.mrb[0].mxu0
        %v2089 = vadd.f32 0.0, %v2088
        %v2090 = vpop.f32.mrb[0].mxu0
        %2091 = vmatprep.mubr.f32.mxu0 0.0
        %2092 = vmatmul.mubr.f32.gmra.mrb[0].mxu0 %v2015
        %v2093 = vpop.f32.mrb[0].mxu0
        %v2094 = vadd.f32 0.0, %v2093
        %v2095 = vpop.f32.mrb[0].mxu0
        %2096 = vdwg.mxu0
        %s2097 = scalar_lea.vmem %s27, 8
        %v2098 = vld [vmem:[%s2097] sm:$0xff]
        %v2100 = vsel %vm1361, %v2084, 0
        %v2103 = vsel %vm1361, %v2089, 0
        %v2106 = vsel %vm1361, %v2094, 0
        %2108 = vmatprep.subr.mxu0 0.0
        %2109 = vmatpush1.msra.mxu0 %v2098
        %2110 = vmatprep.subr.mxu0 0.0
        %2111 = vmatpush1.msra.mxu0 0.0
        %2112 = vmatprep.subr.mxu0 0.0
        %2113 = vmatpush1.msra.mxu0 0.0
        %2114 = vmatprep.subr.mxu0 0.0
        %2115 = vmatpush1.msra.mxu0 0.0
        %2116 = vmatprep.subr.mxu0 0.0
        %2117 = vmatpush1.msra.mxu0 0.0
        %2118 = vmatprep.subr.mxu0 0.0
        %2119 = vmatpush1.msra.mxu0 0.0
        %2120 = vmatprep.subr.mxu0 0.0
        %2121 = vmatpush1.msra.mxu0 0.0
        %2122 = vmatprep.subr.mxu0 0.0
        %2123 = vmatpush1.msra.mxu0 0.0
        %2124 = vmatprep.subr.mxu0 0.0
        %2125 = vmatpush1.msra.mxu0 0.0
        %2126 = vmatprep.subr.mxu0 0.0
        %2127 = vmatpush1.msra.mxu0 0.0
        %2128 = vmatprep.subr.mxu0 0.0
        %2129 = vmatpush1.msra.mxu0 0.0
        %2130 = vmatprep.subr.mxu0 0.0
        %2131 = vmatpush1.msra.mxu0 0.0
        %2132 = vmatprep.subr.mxu0 0.0
        %2133 = vmatpush1.msra.mxu0 0.0
        %2134 = vmatprep.subr.mxu0 0.0
        %2135 = vmatpush1.msra.mxu0 0.0
        %2136 = vmatprep.subr.mxu0 0.0
        %2137 = vmatpush1.msra.mxu0 0.0
        %2138 = vmatprep.subr.mxu0 0.0
        %2139 = vmatpush1.msra.mxu0 0.0
        %2140 = vmatprep.subr.mxu0 0.0
        %2141 = vmatpush1.msra.mxu0 0.0
        %2142 = vmatprep.subr.mxu0 0.0
        %2143 = vmatpush1.msra.mxu0 0.0
        %2144 = vmatprep.subr.mxu0 0.0
        %2145 = vmatpush1.msra.mxu0 0.0
        %2146 = vmatprep.subr.mxu0 0.0
        %2147 = vmatpush1.msra.mxu0 0.0
        %2148 = vmatprep.subr.mxu0 0.0
        %2149 = vmatpush1.msra.mxu0 0.0
        %2150 = vmatprep.subr.mxu0 0.0
        %2151 = vmatpush1.msra.mxu0 0.0
        %2152 = vmatprep.subr.mxu0 0.0
        %2153 = vmatpush1.msra.mxu0 0.0
        %2154 = vmatprep.subr.mxu0 0.0
        %2155 = vmatpush1.msra.mxu0 0.0
        %2156 = vmatprep.subr.mxu0 0.0
        %2157 = vmatpush1.msra.mxu0 0.0
        %2158 = vmatprep.subr.mxu0 0.0
        %2159 = vmatpush1.msra.mxu0 0.0
        %2160 = vmatprep.subr.mxu0 0.0
        %2161 = vmatpush1.msra.mxu0 0.0
        %2162 = vmatprep.subr.mxu0 0.0
        %2163 = vmatpush1.msra.mxu0 0.0
        %2164 = vmatprep.subr.mxu0 0.0
        %2165 = vmatpush1.msra.mxu0 0.0
        %2166 = vmatprep.subr.mxu0 0.0
        %2167 = vmatpush1.msra.mxu0 0.0
        %2168 = vmatprep.subr.mxu0 0.0
        %2169 = vmatpush1.msra.mxu0 0.0
        %2170 = vmatprep.subr.mxu0 0.0
        %2171 = vmatpush1.msra.mxu0 0.0
        %2172 = vmatprep.mubr.f32.mxu0 0.0
        %2173 = vmatmul.mubr.f32.gmra.mrb[0].mxu0 %v2100
        %v2174 = vpop.f32.mrb[0].mxu0
        %v2175 = vadd.f32 0.0, %v2174
        %v2176 = vpop.f32.mrb[0].mxu0
        %2177 = vmatprep.mubr.f32.mxu0 0.0
        %2178 = vmatmul.mubr.f32.gmra.mrb[0].mxu0 %v2103
        %v2179 = vpop.f32.mrb[0].mxu0
        %v2180 = vadd.f32 0.0, %v2179
        %v2181 = vpop.f32.mrb[0].mxu0
        %2182 = vmatprep.mubr.f32.mxu0 0.0
        %2183 = vmatmul.mubr.f32.gmra.mrb[0].mxu0 %v2106
        %v2184 = vpop.f32.mrb[0].mxu0
        %v2185 = vadd.f32 0.0, %v2184
        %v2186 = vpop.f32.mrb[0].mxu0
        %2187 = vdwg.mxu0
        %v2189 = vsel %vm1361, %v1578, 0
        %v2192 = vsel %vm1361, %v1583, 0
        %v2195 = vsel %vm1361, %v1588, 0
        %2197 = vmatprep.subr.mxu0 0.0
        %2198 = vmatpush1.msra.mxu0 %v1591
        %2199 = vmatprep.subr.mxu0 0.0
        %2200 = vmatpush1.msra.mxu0 0.0
        %2201 = vmatprep.subr.mxu0 0.0
        %2202 = vmatpush1.msra.mxu0 0.0
        %2203 = vmatprep.subr.mxu0 0.0
        %2204 = vmatpush1.msra.mxu0 0.0
        %2205 = vmatprep.subr.mxu0 0.0
        %2206 = vmatpush1.msra.mxu0 0.0
        %2207 = vmatprep.subr.mxu0 0.0
        %2208 = vmatpush1.msra.mxu0 0.0
        %2209 = vmatprep.subr.mxu0 0.0
        %2210 = vmatpush1.msra.mxu0 0.0
        %2211 = vmatprep.subr.mxu0 0.0
        %2212 = vmatpush1.msra.mxu0 0.0
        %2213 = vmatprep.subr.mxu0 0.0
        %2214 = vmatpush1.msra.mxu0 0.0
        %2215 = vmatprep.subr.mxu0 0.0
        %2216 = vmatpush1.msra.mxu0 0.0
        %2217 = vmatprep.subr.mxu0 0.0
        %2218 = vmatpush1.msra.mxu0 0.0
        %2219 = vmatprep.subr.mxu0 0.0
        %2220 = vmatpush1.msra.mxu0 0.0
        %2221 = vmatprep.subr.mxu0 0.0
        %2222 = vmatpush1.msra.mxu0 0.0
        %2223 = vmatprep.subr.mxu0 0.0
        %2224 = vmatpush1.msra.mxu0 0.0
        %2225 = vmatprep.subr.mxu0 0.0
        %2226 = vmatpush1.msra.mxu0 0.0
        %2227 = vmatprep.subr.mxu0 0.0
        %2228 = vmatpush1.msra.mxu0 0.0
        %2229 = vmatprep.subr.mxu0 0.0
        %2230 = vmatpush1.msra.mxu0 0.0
        %2231 = vmatprep.subr.mxu0 0.0
        %2232 = vmatpush1.msra.mxu0 0.0
        %2233 = vmatprep.subr.mxu0 0.0
        %2234 = vmatpush1.msra.mxu0 0.0
        %2235 = vmatprep.subr.mxu0 0.0
        %2236 = vmatpush1.msra.mxu0 0.0
        %2237 = vmatprep.subr.mxu0 0.0
        %2238 = vmatpush1.msra.mxu0 0.0
        %2239 = vmatprep.subr.mxu0 0.0
        %2240 = vmatpush1.msra.mxu0 0.0
        %2241 = vmatprep.subr.mxu0 0.0
        %2242 = vmatpush1.msra.mxu0 0.0
        %2243 = vmatprep.subr.mxu0 0.0
        %2244 = vmatpush1.msra.mxu0 0.0
        %2245 = vmatprep.subr.mxu0 0.0
        %2246 = vmatpush1.msra.mxu0 0.0
        %2247 = vmatprep.subr.mxu0 0.0
        %2248 = vmatpush1.msra.mxu0 0.0
        %2249 = vmatprep.subr.mxu0 0.0
        %2250 = vmatpush1.msra.mxu0 0.0
        %2251 = vmatprep.subr.mxu0 0.0
        %2252 = vmatpush1.msra.mxu0 0.0
        %2253 = vmatprep.subr.mxu0 0.0
        %2254 = vmatpush1.msra.mxu0 0.0
        %2255 = vmatprep.subr.mxu0 0.0
        %2256 = vmatpush1.msra.mxu0 0.0
        %2257 = vmatprep.subr.mxu0 0.0
        %2258 = vmatpush1.msra.mxu0 0.0
        %2259 = vmatprep.subr.mxu0 0.0
        %2260 = vmatpush1.msra.mxu0 0.0
        %2261 = vmatprep.mubr.f32.mxu0 0.0
        %2262 = vmatmul.mubr.f32.gmra.mrb[0].mxu0 %v2189
        %v2263 = vpop.f32.mrb[0].mxu0
        %v2264 = vadd.f32 %v2175, %v2263
        %v2265 = vpop.f32.mrb[0].mxu0
        %2266 = vmatprep.mubr.f32.mxu0 0.0
        %2267 = vmatmul.mubr.f32.gmra.mrb[0].mxu0 %v2192
        %v2268 = vpop.f32.mrb[0].mxu0
        %v2269 = vadd.f32 %v2180, %v2268
        %v2270 = vpop.f32.mrb[0].mxu0
        %2271 = vmatprep.mubr.f32.mxu0 0.0
        %2272 = vmatmul.mubr.f32.gmra.mrb[0].mxu0 %v2195
        %v2273 = vpop.f32.mrb[0].mxu0
        %v2274 = vadd.f32 %v2185, %v2273
        %v2275 = vpop.f32.mrb[0].mxu0
        %2276 = vdwg.mxu0
        %s2277 = scalar_lea.vmem %s15, 64
        %v2278 = vld [vmem:[%s2277] sm:$0xff]
        %v2279 = vld [vmem:[%s2277 + $0x8] sm:$0xff]
        %v2280 = vld [vmem:[%s2277 + $0x10] sm:$0xff]
        %v2281 = vld [vmem:[%s2277 + $0x18] sm:$0xff]
        %s2282 = scalar_lea.vmem %s17, 2
        %v2283 = vld [vmem:[%s2282] sm:$0x1]
        %v2285 = vlaneseq
        %v2286 = vshrl.u32 %v2285, 7
        %v2287 = vsub.s32 0, %v2286
        %v2288 = vrot.slane %v2283, %v2287
        %2290 = vmatprep.subr.mxu0 0.0
        %2291 = vmatpush1.msra.mxu0 %v2278
        %2292 = vmatprep.subr.mxu0 0.0
        %2293 = vmatpush1.msra.mxu0 %v2279
        %2294 = vmatprep.subr.mxu0 0.0
        %2295 = vmatpush1.msra.mxu0 %v2280
        %2296 = vmatprep.subr.mxu0 0.0
        %2297 = vmatpush1.msra.mxu0 %v2281
        %2298 = vmatprep.subr.mxu0 0.0
        %2299 = vmatpush1.msra.mxu0 0.0
        %2300 = vmatprep.subr.mxu0 0.0
        %2301 = vmatpush1.msra.mxu0 0.0
        %2302 = vmatprep.subr.mxu0 0.0
        %2303 = vmatpush1.msra.mxu0 0.0
        %2304 = vmatprep.subr.mxu0 0.0
        %2305 = vmatpush1.msra.mxu0 0.0
        %2306 = vmatprep.subr.mxu0 0.0
        %2307 = vmatpush1.msra.mxu0 0.0
        %2308 = vmatprep.subr.mxu0 0.0
        %2309 = vmatpush1.msra.mxu0 0.0
        %2310 = vmatprep.subr.mxu0 0.0
        %2311 = vmatpush1.msra.mxu0 0.0
        %2312 = vmatprep.subr.mxu0 0.0
        %2313 = vmatpush1.msra.mxu0 0.0
        %2314 = vmatprep.subr.mxu0 0.0
        %2315 = vmatpush1.msra.mxu0 0.0
        %2316 = vmatprep.subr.mxu0 0.0
        %2317 = vmatpush1.msra.mxu0 0.0
        %2318 = vmatprep.subr.mxu0 0.0
        %2319 = vmatpush1.msra.mxu0 0.0
        %2320 = vmatprep.subr.mxu0 0.0
        %2321 = vmatpush1.msra.mxu0 0.0
        %2322 = vmatprep.subr.mxu0 0.0
        %2323 = vmatpush1.msra.mxu0 0.0
        %2324 = vmatprep.subr.mxu0 0.0
        %2325 = vmatpush1.msra.mxu0 0.0
        %2326 = vmatprep.subr.mxu0 0.0
        %2327 = vmatpush1.msra.mxu0 0.0
        %2328 = vmatprep.subr.mxu0 0.0
        %2329 = vmatpush1.msra.mxu0 0.0
        %2330 = vmatprep.subr.mxu0 0.0
        %2331 = vmatpush1.msra.mxu0 0.0
        %2332 = vmatprep.subr.mxu0 0.0
        %2333 = vmatpush1.msra.mxu0 0.0
        %2334 = vmatprep.subr.mxu0 0.0
        %2335 = vmatpush1.msra.mxu0 0.0
        %2336 = vmatprep.subr.mxu0 0.0
        %2337 = vmatpush1.msra.mxu0 0.0
        %2338 = vmatprep.subr.mxu0 0.0
        %2339 = vmatpush1.msra.mxu0 0.0
        %2340 = vmatprep.subr.mxu0 0.0
        %2341 = vmatpush1.msra.mxu0 0.0
        %2342 = vmatprep.subr.mxu0 0.0
        %2343 = vmatpush1.msra.mxu0 0.0
        %2344 = vmatprep.subr.mxu0 0.0
        %2345 = vmatpush1.msra.mxu0 0.0
        %2346 = vmatprep.subr.mxu0 0.0
        %2347 = vmatpush1.msra.mxu0 0.0
        %2348 = vmatprep.subr.mxu0 0.0
        %2349 = vmatpush1.msra.mxu0 0.0
        %2350 = vmatprep.subr.mxu0 0.0
        %2351 = vmatpush1.msra.mxu0 0.0
        %2352 = vmatprep.subr.mxu0 0.0
        %2353 = vmatpush1.msra.mxu0 0.0
        %2354 = vmatprep.mubr.f32.mxu0 0.0
        %2355 = vmatmul.mubr.f32.gmra.mrb[0].mxu0 %v1091
        %v2356 = vpop.f32.mrb[0].mxu0
        %v2357 = vadd.f32 %v2288, %v2356
        %v2358 = vpop.f32.mrb[0].mxu0
        %2359 = vmatprep.mubr.f32.mxu0 0.0
        %2360 = vmatmul.mubr.f32.gmra.mrb[0].mxu0 %v1094
        %v2361 = vpop.f32.mrb[0].mxu0
        %v2362 = vadd.f32 %v2288, %v2361
        %v2363 = vpop.f32.mrb[0].mxu0
        %2364 = vmatprep.mubr.f32.mxu0 0.0
        %2365 = vmatmul.mubr.f32.gmra.mrb[0].mxu0 %v1097
        %v2366 = vpop.f32.mrb[0].mxu0
        %v2367 = vadd.f32 %v2288, %v2366
        %v2368 = vpop.f32.mrb[0].mxu0
        %2369 = vdwg.mxu0
        %s2370 = scalar_lea.vmem %s19, 64
        %v2371 = vld [vmem:[%s2370] sm:$0xff]
        %v2372 = vld [vmem:[%s2370 + $0x8] sm:$0xff]
        %v2373 = vld [vmem:[%s2370 + $0x10] sm:$0xff]
        %v2374 = vld [vmem:[%s2370 + $0x18] sm:$0xff]
        %s2375 = scalar_lea.vmem %s21, 2
        %v2376 = vld [vmem:[%s2375] sm:$0x1]
        %v2378 = vlaneseq
        %v2379 = vshrl.u32 %v2378, 7
        %v2380 = vsub.s32 0, %v2379
        %v2381 = vrot.slane %v2376, %v2380
        %2383 = vmatprep.subr.mxu0 0.0
        %2384 = vmatpush1.msra.mxu0 %v2371
        %2385 = vmatprep.subr.mxu0 0.0
        %2386 = vmatpush1.msra.mxu0 %v2372
        %2387 = vmatprep.subr.mxu0 0.0
        %2388 = vmatpush1.msra.mxu0 %v2373
        %2389 = vmatprep.subr.mxu0 0.0
        %2390 = vmatpush1.msra.mxu0 %v2374
        %2391 = vmatprep.subr.mxu0 0.0
        %2392 = vmatpush1.msra.mxu0 0.0
        %2393 = vmatprep.subr.mxu0 0.0
        %2394 = vmatpush1.msra.mxu0 0.0
        %2395 = vmatprep.subr.mxu0 0.0
        %2396 = vmatpush1.msra.mxu0 0.0
        %2397 = vmatprep.subr.mxu0 0.0
        %2398 = vmatpush1.msra.mxu0 0.0
        %2399 = vmatprep.subr.mxu0 0.0
        %2400 = vmatpush1.msra.mxu0 0.0
        %2401 = vmatprep.subr.mxu0 0.0
        %2402 = vmatpush1.msra.mxu0 0.0
        %2403 = vmatprep.subr.mxu0 0.0
        %2404 = vmatpush1.msra.mxu0 0.0
        %2405 = vmatprep.subr.mxu0 0.0
        %2406 = vmatpush1.msra.mxu0 0.0
        %2407 = vmatprep.subr.mxu0 0.0
        %2408 = vmatpush1.msra.mxu0 0.0
        %2409 = vmatprep.subr.mxu0 0.0
        %2410 = vmatpush1.msra.mxu0 0.0
        %2411 = vmatprep.subr.mxu0 0.0
        %2412 = vmatpush1.msra.mxu0 0.0
        %2413 = vmatprep.subr.mxu0 0.0
        %2414 = vmatpush1.msra.mxu0 0.0
        %2415 = vmatprep.subr.mxu0 0.0
        %2416 = vmatpush1.msra.mxu0 0.0
        %2417 = vmatprep.subr.mxu0 0.0
        %2418 = vmatpush1.msra.mxu0 0.0
        %2419 = vmatprep.subr.mxu0 0.0
        %2420 = vmatpush1.msra.mxu0 0.0
        %2421 = vmatprep.subr.mxu0 0.0
        %2422 = vmatpush1.msra.mxu0 0.0
        %2423 = vmatprep.subr.mxu0 0.0
        %2424 = vmatpush1.msra.mxu0 0.0
        %2425 = vmatprep.subr.mxu0 0.0
        %2426 = vmatpush1.msra.mxu0 0.0
        %2427 = vmatprep.subr.mxu0 0.0
        %2428 = vmatpush1.msra.mxu0 0.0
        %2429 = vmatprep.subr.mxu0 0.0
        %2430 = vmatpush1.msra.mxu0 0.0
        %2431 = vmatprep.subr.mxu0 0.0
        %2432 = vmatpush1.msra.mxu0 0.0
        %2433 = vmatprep.subr.mxu0 0.0
        %2434 = vmatpush1.msra.mxu0 0.0
        %2435 = vmatprep.subr.mxu0 0.0
        %2436 = vmatpush1.msra.mxu0 0.0
        %2437 = vmatprep.subr.mxu0 0.0
        %2438 = vmatpush1.msra.mxu0 0.0
        %2439 = vmatprep.subr.mxu0 0.0
        %2440 = vmatpush1.msra.mxu0 0.0
        %2441 = vmatprep.subr.mxu0 0.0
        %2442 = vmatpush1.msra.mxu0 0.0
        %2443 = vmatprep.subr.mxu0 0.0
        %2444 = vmatpush1.msra.mxu0 0.0
        %2445 = vmatprep.subr.mxu0 0.0
        %2446 = vmatpush1.msra.mxu0 0.0
        %2447 = vmatprep.mubr.f32.mxu0 0.0
        %2448 = vmatmul.mubr.f32.gmra.mrb[0].mxu0 %v1091
        %v2449 = vpop.f32.mrb[0].mxu0
        %v2450 = vadd.f32 %v2381, %v2449
        %v2451 = vpop.f32.mrb[0].mxu0
        %2452 = vmatprep.mubr.f32.mxu0 0.0
        %2453 = vmatmul.mubr.f32.gmra.mrb[0].mxu0 %v1094
        %v2454 = vpop.f32.mrb[0].mxu0
        %v2455 = vadd.f32 %v2381, %v2454
        %v2456 = vpop.f32.mrb[0].mxu0
        %2457 = vmatprep.mubr.f32.mxu0 0.0
        %2458 = vmatmul.mubr.f32.gmra.mrb[0].mxu0 %v1097
        %v2459 = vpop.f32.mrb[0].mxu0
        %v2460 = vadd.f32 %v2381, %v2459
        %v2461 = vpop.f32.mrb[0].mxu0
        %2462 = vdwg.mxu0
        %s2463 = scalar_lea.vmem %s23, 64
        %v2464 = vld [vmem:[%s2463] sm:$0xff]
        %v2465 = vld [vmem:[%s2463 + $0x8] sm:$0xff]
        %v2466 = vld [vmem:[%s2463 + $0x10] sm:$0xff]
        %v2467 = vld [vmem:[%s2463 + $0x18] sm:$0xff]
        %s2468 = scalar_lea.vmem %s25, 2
        %v2469 = vld [vmem:[%s2468] sm:$0x1]
        %v2471 = vlaneseq
        %v2472 = vshrl.u32 %v2471, 7
        %v2473 = vsub.s32 0, %v2472
        %v2474 = vrot.slane %v2469, %v2473
        %2476 = vmatprep.subr.mxu0 0.0
        %2477 = vmatpush1.msra.mxu0 %v2464
        %2478 = vmatprep.subr.mxu0 0.0
        %2479 = vmatpush1.msra.mxu0 %v2465
        %2480 = vmatprep.subr.mxu0 0.0
        %2481 = vmatpush1.msra.mxu0 %v2466
        %2482 = vmatprep.subr.mxu0 0.0
        %2483 = vmatpush1.msra.mxu0 %v2467
        %2484 = vmatprep.subr.mxu0 0.0
        %2485 = vmatpush1.msra.mxu0 0.0
        %2486 = vmatprep.subr.mxu0 0.0
        %2487 = vmatpush1.msra.mxu0 0.0
        %2488 = vmatprep.subr.mxu0 0.0
        %2489 = vmatpush1.msra.mxu0 0.0
        %2490 = vmatprep.subr.mxu0 0.0
        %2491 = vmatpush1.msra.mxu0 0.0
        %2492 = vmatprep.subr.mxu0 0.0
        %2493 = vmatpush1.msra.mxu0 0.0
        %2494 = vmatprep.subr.mxu0 0.0
        %2495 = vmatpush1.msra.mxu0 0.0
        %2496 = vmatprep.subr.mxu0 0.0
        %2497 = vmatpush1.msra.mxu0 0.0
        %2498 = vmatprep.subr.mxu0 0.0
        %2499 = vmatpush1.msra.mxu0 0.0
        %2500 = vmatprep.subr.mxu0 0.0
        %2501 = vmatpush1.msra.mxu0 0.0
        %2502 = vmatprep.subr.mxu0 0.0
        %2503 = vmatpush1.msra.mxu0 0.0
        %2504 = vmatprep.subr.mxu0 0.0
        %2505 = vmatpush1.msra.mxu0 0.0
        %2506 = vmatprep.subr.mxu0 0.0
        %2507 = vmatpush1.msra.mxu0 0.0
        %2508 = vmatprep.subr.mxu0 0.0
        %2509 = vmatpush1.msra.mxu0 0.0
        %2510 = vmatprep.subr.mxu0 0.0
        %2511 = vmatpush1.msra.mxu0 0.0
        %2512 = vmatprep.subr.mxu0 0.0
        %2513 = vmatpush1.msra.mxu0 0.0
        %2514 = vmatprep.subr.mxu0 0.0
        %2515 = vmatpush1.msra.mxu0 0.0
        %2516 = vmatprep.subr.mxu0 0.0
        %2517 = vmatpush1.msra.mxu0 0.0
        %2518 = vmatprep.subr.mxu0 0.0
        %2519 = vmatpush1.msra.mxu0 0.0
        %2520 = vmatprep.subr.mxu0 0.0
        %2521 = vmatpush1.msra.mxu0 0.0
        %2522 = vmatprep.subr.mxu0 0.0
        %2523 = vmatpush1.msra.mxu0 0.0
        %2524 = vmatprep.subr.mxu0 0.0
        %2525 = vmatpush1.msra.mxu0 0.0
        %2526 = vmatprep.subr.mxu0 0.0
        %2527 = vmatpush1.msra.mxu0 0.0
        %2528 = vmatprep.subr.mxu0 0.0
        %2529 = vmatpush1.msra.mxu0 0.0
        %2530 = vmatprep.subr.mxu0 0.0
        %2531 = vmatpush1.msra.mxu0 0.0
        %2532 = vmatprep.subr.mxu0 0.0
        %2533 = vmatpush1.msra.mxu0 0.0
        %2534 = vmatprep.subr.mxu0 0.0
        %2535 = vmatpush1.msra.mxu0 0.0
        %2536 = vmatprep.subr.mxu0 0.0
        %2537 = vmatpush1.msra.mxu0 0.0
        %2538 = vmatprep.subr.mxu0 0.0
        %2539 = vmatpush1.msra.mxu0 0.0
        %2540 = vmatprep.mubr.f32.mxu0 0.0
        %2541 = vmatmul.mubr.f32.gmra.mrb[0].mxu0 %v1091
        %v2542 = vpop.f32.mrb[0].mxu0
        %v2543 = vadd.f32 %v2474, %v2542
        %v2544 = vpop.f32.mrb[0].mxu0
        %2545 = vmatprep.mubr.f32.mxu0 0.0
        %2546 = vmatmul.mubr.f32.gmra.mrb[0].mxu0 %v1094
        %v2547 = vpop.f32.mrb[0].mxu0
        %v2548 = vadd.f32 %v2474, %v2547
        %v2549 = vpop.f32.mrb[0].mxu0
        %2550 = vmatprep.mubr.f32.mxu0 0.0
        %2551 = vmatmul.mubr.f32.gmra.mrb[0].mxu0 %v1097
        %v2552 = vpop.f32.mrb[0].mxu0
        %v2553 = vadd.f32 %v2474, %v2552
        %v2554 = vpop.f32.mrb[0].mxu0
        %2555 = vdwg.mxu0
        %v2557 = vsel %vm1361, %v2357, 0
        %v2560 = vsel %vm1361, %v2362, 0
        %v2563 = vsel %vm1361, %v2367, 0
        %v2566 = vsel %vm1361, %v2450, 0
        %v2569 = vsel %vm1361, %v2455, 0
        %v2572 = vsel %vm1361, %v2460, 0
        %2574 = vmatprep.subr.mxu0 0.0
        %2575 = vmatpush1.xpose.msra.mxu0 %v2566
        %2576 = vmatprep.subr.mxu0 0.0
        %2577 = vmatpush1.xpose.msra.mxu0 %v2569
        %2578 = vmatprep.subr.mxu0 0.0
        %2579 = vmatpush1.xpose.msra.mxu0 %v2572
        %2580 = vmatprep.subr.mxu0 0.0
        %2581 = vmatpush1.xpose.msra.mxu0 0.0
        %2582 = vmatprep.subr.mxu0 0.0
        %2583 = vmatpush1.xpose.msra.mxu0 0.0
        %2584 = vmatprep.subr.mxu0 0.0
        %2585 = vmatpush1.xpose.msra.mxu0 0.0
        %2586 = vmatprep.subr.mxu0 0.0
        %2587 = vmatpush1.xpose.msra.mxu0 0.0
        %2588 = vmatprep.subr.mxu0 0.0
        %2589 = vmatpush1.xpose.msra.mxu0 0.0
        %2590 = vmatprep.subr.mxu0 0.0
        %2591 = vmatpush1.xpose.msra.mxu0 0.0
        %2592 = vmatprep.subr.mxu0 0.0
        %2593 = vmatpush1.xpose.msra.mxu0 0.0
        %2594 = vmatprep.subr.mxu0 0.0
        %2595 = vmatpush1.xpose.msra.mxu0 0.0
        %2596 = vmatprep.subr.mxu0 0.0
        %2597 = vmatpush1.xpose.msra.mxu0 0.0
        %2598 = vmatprep.subr.mxu0 0.0
        %2599 = vmatpush1.xpose.msra.mxu0 0.0
        %2600 = vmatprep.subr.mxu0 0.0
        %2601 = vmatpush1.xpose.msra.mxu0 0.0
        %2602 = vmatprep.subr.mxu0 0.0
        %2603 = vmatpush1.xpose.msra.mxu0 0.0
        %2604 = vmatprep.subr.mxu0 0.0
        %2605 = vmatpush1.xpose.msra.mxu0 0.0
        %2606 = vmatprep.subr.mxu0 0.0
        %2607 = vmatpush1.xpose.msra.mxu0 0.0
        %2608 = vmatprep.subr.mxu0 0.0
        %2609 = vmatpush1.xpose.msra.mxu0 0.0
        %2610 = vmatprep.subr.mxu0 0.0
        %2611 = vmatpush1.xpose.msra.mxu0 0.0
        %2612 = vmatprep.subr.mxu0 0.0
        %2613 = vmatpush1.xpose.msra.mxu0 0.0
        %2614 = vmatprep.subr.mxu0 0.0
        %2615 = vmatpush1.xpose.msra.mxu0 0.0
        %2616 = vmatprep.subr.mxu0 0.0
        %2617 = vmatpush1.xpose.msra.mxu0 0.0
        %2618 = vmatprep.subr.mxu0 0.0
        %2619 = vmatpush1.xpose.msra.mxu0 0.0
        %2620 = vmatprep.subr.mxu0 0.0
        %2621 = vmatpush1.xpose.msra.mxu0 0.0
        %2622 = vmatprep.subr.mxu0 0.0
        %2623 = vmatpush1.xpose.msra.mxu0 0.0
        %2624 = vmatprep.subr.mxu0 0.0
        %2625 = vmatpush1.xpose.msra.mxu0 0.0
        %2626 = vmatprep.subr.mxu0 0.0
        %2627 = vmatpush1.xpose.msra.mxu0 0.0
        %2628 = vmatprep.subr.mxu0 0.0
        %2629 = vmatpush1.xpose.msra.mxu0 0.0
        %2630 = vmatprep.subr.mxu0 0.0
        %2631 = vmatpush1.xpose.msra.mxu0 0.0
        %2632 = vmatprep.subr.mxu0 0.0
        %2633 = vmatpush1.xpose.msra.mxu0 0.0
        %2634 = vmatprep.subr.mxu0 0.0
        %2635 = vmatpush1.xpose.msra.mxu0 0.0
        %2636 = vmatprep.subr.mxu0 0.0
        %2637 = vmatpush1.xpose.msra.mxu0 0.0
        %2638 = vmatprep.mubr.f32.mxu0 0.0
        %2639 = vmatmul.mubr.f32.gmra.mrb[0].mxu0 %v2557
        %v2640 = vpop.f32.mrb[0].mxu0
        %v2641 = vadd.f32 0.0, %v2640
        %v2642 = vpop.f32.mrb[0].mxu0
        %2643 = vmatprep.mubr.f32.mxu0 0.0
        %2644 = vmatmul.mubr.f32.gmra.mrb[0].mxu0 %v2560
        %v2645 = vpop.f32.mrb[0].mxu0
        %v2646 = vadd.f32 0.0, %v2645
        %v2647 = vpop.f32.mrb[0].mxu0
        %2648 = vmatprep.mubr.f32.mxu0 0.0
        %2649 = vmatmul.mubr.f32.gmra.mrb[0].mxu0 %v2563
        %v2650 = vpop.f32.mrb[0].mxu0
        %v2651 = vadd.f32 0.0, %v2650
        %v2652 = vpop.f32.mrb[0].mxu0
        %2653 = vdwg.mxu0
        %v2654 = vmul.f32 %v2641, 0.35355338
        %v2655 = vmul.f32 %v2646, 0.35355338
        %v2656 = vmul.f32 %v2651, 0.35355338
        %v2657 = vsel %vm1464, %v2654, -1e+30
        %v2658 = vsel %vm1464, %v2655, -1e+30
        %v2659 = vsel %vm1464, %v2656, -1e+30
        %v2660 = vsel %vm1468, %v2657, -inf
        %2661 = vmax.xlane.f32.xlu0 %v2660
        %v2662 = vpop.xlane.xlu0 %2661
        %v2663 = vsel %vm1468, %v2658, -inf
        %2664 = vmax.xlane.f32.xlu0 %v2663
        %v2665 = vpop.xlane.xlu0 %2664
        %v2666 = vsel %vm1468, %v2659, -inf
        %2667 = vmax.xlane.f32.xlu0 %v2666
        %v2668 = vpop.xlane.xlu0 %2667
        %v2669 = vsub.f32 %v2657, %v2662
        %v2670 = vsub.f32 %v2658, %v2665
        %v2671 = vsub.f32 %v2659, %v2668
        %v2672 = vmul.f32 %v2669, 1.442695
        %v2673 = vpow.pop %v2672
        %v2674 = vmul.f32 %v2670, 1.442695
        %v2675 = vpow.pop %v2674
        %v2676 = vmul.f32 %v2671, 1.442695
        %v2677 = vpow.pop %v2676
        %v2678 = vsel %vm1468, %v2673, 0.0
        %2679 = vadd.xlane.f32.xlu0 %v2678
        %v2680 = vpop.xlane.xlu0 %2679
        %v2681 = vsel %vm1468, %v2675, 0.0
        %2682 = vadd.xlane.f32.xlu0 %v2681
        %v2683 = vpop.xlane.xlu0 %2682
        %v2684 = vsel %vm1468, %v2677, 0.0
        %2685 = vadd.xlane.f32.xlu0 %v2684
        %v2686 = vpop.xlane.xlu0 %2685
        %v2687 = vrcp.pop %v2680
        %v2688 = vrcp.pop %v2683
        %v2689 = vrcp.pop %v2686
        %v2690 = vmul.f32 %v2673, %v2687
        %v2691 = vmul.f32 %v2675, %v2688
        %v2692 = vmul.f32 %v2677, %v2689
        %v2694 = vsel %vm1468, %v2690, 0
        %v2697 = vsel %vm1468, %v2691, 0
        %v2700 = vsel %vm1468, %v2692, 0
        %2702 = vmatprep.subr.mxu0 0.0
        %2703 = vmatpush1.msra.mxu0 %v2543
        %2704 = vmatprep.subr.mxu0 0.0
        %2705 = vmatpush1.msra.mxu0 %v2548
        %2706 = vmatprep.subr.mxu0 0.0
        %2707 = vmatpush1.msra.mxu0 %v2553
        %2708 = vmatprep.subr.mxu0 0.0
        %2709 = vmatpush1.msra.mxu0 0.0
        %2710 = vmatprep.subr.mxu0 0.0
        %2711 = vmatpush1.msra.mxu0 0.0
        %2712 = vmatprep.subr.mxu0 0.0
        %2713 = vmatpush1.msra.mxu0 0.0
        %2714 = vmatprep.subr.mxu0 0.0
        %2715 = vmatpush1.msra.mxu0 0.0
        %2716 = vmatprep.subr.mxu0 0.0
        %2717 = vmatpush1.msra.mxu0 0.0
        %2718 = vmatprep.subr.mxu0 0.0
        %2719 = vmatpush1.msra.mxu0 0.0
        %2720 = vmatprep.subr.mxu0 0.0
        %2721 = vmatpush1.msra.mxu0 0.0
        %2722 = vmatprep.subr.mxu0 0.0
        %2723 = vmatpush1.msra.mxu0 0.0
        %2724 = vmatprep.subr.mxu0 0.0
        %2725 = vmatpush1.msra.mxu0 0.0
        %2726 = vmatprep.subr.mxu0 0.0
        %2727 = vmatpush1.msra.mxu0 0.0
        %2728 = vmatprep.subr.mxu0 0.0
        %2729 = vmatpush1.msra.mxu0 0.0
        %2730 = vmatprep.subr.mxu0 0.0
        %2731 = vmatpush1.msra.mxu0 0.0
        %2732 = vmatprep.subr.mxu0 0.0
        %2733 = vmatpush1.msra.mxu0 0.0
        %2734 = vmatprep.subr.mxu0 0.0
        %2735 = vmatpush1.msra.mxu0 0.0
        %2736 = vmatprep.subr.mxu0 0.0
        %2737 = vmatpush1.msra.mxu0 0.0
        %2738 = vmatprep.subr.mxu0 0.0
        %2739 = vmatpush1.msra.mxu0 0.0
        %2740 = vmatprep.subr.mxu0 0.0
        %2741 = vmatpush1.msra.mxu0 0.0
        %2742 = vmatprep.subr.mxu0 0.0
        %2743 = vmatpush1.msra.mxu0 0.0
        %2744 = vmatprep.subr.mxu0 0.0
        %2745 = vmatpush1.msra.mxu0 0.0
        %2746 = vmatprep.subr.mxu0 0.0
        %2747 = vmatpush1.msra.mxu0 0.0
        %2748 = vmatprep.subr.mxu0 0.0
        %2749 = vmatpush1.msra.mxu0 0.0
        %2750 = vmatprep.subr.mxu0 0.0
        %2751 = vmatpush1.msra.mxu0 0.0
        %2752 = vmatprep.subr.mxu0 0.0
        %2753 = vmatpush1.msra.mxu0 0.0
        %2754 = vmatprep.subr.mxu0 0.0
        %2755 = vmatpush1.msra.mxu0 0.0
        %2756 = vmatprep.subr.mxu0 0.0
        %2757 = vmatpush1.msra.mxu0 0.0
        %2758 = vmatprep.subr.mxu0 0.0
        %2759 = vmatpush1.msra.mxu0 0.0
        %2760 = vmatprep.subr.mxu0 0.0
        %2761 = vmatpush1.msra.mxu0 0.0
        %2762 = vmatprep.subr.mxu0 0.0
        %2763 = vmatpush1.msra.mxu0 0.0
        %2764 = vmatprep.subr.mxu0 0.0
        %2765 = vmatpush1.msra.mxu0 0.0
        %2766 = vmatprep.mubr.f32.mxu0 0.0
        %2767 = vmatmul.mubr.f32.gmra.mrb[0].mxu0 %v2694
        %v2768 = vpop.f32.mrb[0].mxu0
        %v2769 = vadd.f32 0.0, %v2768
        %v2770 = vpop.f32.mrb[0].mxu0
        %2771 = vmatprep.mubr.f32.mxu0 0.0
        %2772 = vmatmul.mubr.f32.gmra.mrb[0].mxu0 %v2697
        %v2773 = vpop.f32.mrb[0].mxu0
        %v2774 = vadd.f32 0.0, %v2773
        %v2775 = vpop.f32.mrb[0].mxu0
        %2776 = vmatprep.mubr.f32.mxu0 0.0
        %2777 = vmatmul.mubr.f32.gmra.mrb[0].mxu0 %v2700
        %v2778 = vpop.f32.mrb[0].mxu0
        %v2779 = vadd.f32 0.0, %v2778
        %v2780 = vpop.f32.mrb[0].mxu0
        %2781 = vdwg.mxu0
        %s2782 = scalar_lea.vmem %s27, 16
        %v2783 = vld [vmem:[%s2782] sm:$0xff]
        %v2785 = vsel %vm1361, %v2769, 0
        %v2788 = vsel %vm1361, %v2774, 0
        %v2791 = vsel %vm1361, %v2779, 0
        %2793 = vmatprep.subr.mxu0 0.0
        %2794 = vmatpush1.msra.mxu0 %v2783
        %2795 = vmatprep.subr.mxu0 0.0
        %2796 = vmatpush1.msra.mxu0 0.0
        %2797 = vmatprep.subr.mxu0 0.0
        %2798 = vmatpush1.msra.mxu0 0.0
        %2799 = vmatprep.subr.mxu0 0.0
        %2800 = vmatpush1.msra.mxu0 0.0
        %2801 = vmatprep.subr.mxu0 0.0
        %2802 = vmatpush1.msra.mxu0 0.0
        %2803 = vmatprep.subr.mxu0 0.0
        %2804 = vmatpush1.msra.mxu0 0.0
        %2805 = vmatprep.subr.mxu0 0.0
        %2806 = vmatpush1.msra.mxu0 0.0
        %2807 = vmatprep.subr.mxu0 0.0
        %2808 = vmatpush1.msra.mxu0 0.0
        %2809 = vmatprep.subr.mxu0 0.0
        %2810 = vmatpush1.msra.mxu0 0.0
        %2811 = vmatprep.subr.mxu0 0.0
        %2812 = vmatpush1.msra.mxu0 0.0
        %2813 = vmatprep.subr.mxu0 0.0
        %2814 = vmatpush1.msra.mxu0 0.0
        %2815 = vmatprep.subr.mxu0 0.0
        %2816 = vmatpush1.msra.mxu0 0.0
        %2817 = vmatprep.subr.mxu0 0.0
        %2818 = vmatpush1.msra.mxu0 0.0
        %2819 = vmatprep.subr.mxu0 0.0
        %2820 = vmatpush1.msra.mxu0 0.0
        %2821 = vmatprep.subr.mxu0 0.0
        %2822 = vmatpush1.msra.mxu0 0.0
        %2823 = vmatprep.subr.mxu0 0.0
        %2824 = vmatpush1.msra.mxu0 0.0
        %2825 = vmatprep.subr.mxu0 0.0
        %2826 = vmatpush1.msra.mxu0 0.0
        %2827 = vmatprep.subr.mxu0 0.0
        %2828 = vmatpush1.msra.mxu0 0.0
        %2829 = vmatprep.subr.mxu0 0.0
        %2830 = vmatpush1.msra.mxu0 0.0
        %2831 = vmatprep.subr.mxu0 0.0
        %2832 = vmatpush1.msra.mxu0 0.0
        %2833 = vmatprep.subr.mxu0 0.0
        %2834 = vmatpush1.msra.mxu0 0.0
        %2835 = vmatprep.subr.mxu0 0.0
        %2836 = vmatpush1.msra.mxu0 0.0
        %2837 = vmatprep.subr.mxu0 0.0
        %2838 = vmatpush1.msra.mxu0 0.0
        %2839 = vmatprep.subr.mxu0 0.0
        %2840 = vmatpush1.msra.mxu0 0.0
        %2841 = vmatprep.subr.mxu0 0.0
        %2842 = vmatpush1.msra.mxu0 0.0
        %2843 = vmatprep.subr.mxu0 0.0
        %2844 = vmatpush1.msra.mxu0 0.0
        %2845 = vmatprep.subr.mxu0 0.0
        %2846 = vmatpush1.msra.mxu0 0.0
        %2847 = vmatprep.subr.mxu0 0.0
        %2848 = vmatpush1.msra.mxu0 0.0
        %2849 = vmatprep.subr.mxu0 0.0
        %2850 = vmatpush1.msra.mxu0 0.0
        %2851 = vmatprep.subr.mxu0 0.0
        %2852 = vmatpush1.msra.mxu0 0.0
        %2853 = vmatprep.subr.mxu0 0.0
        %2854 = vmatpush1.msra.mxu0 0.0
        %2855 = vmatprep.subr.mxu0 0.0
        %2856 = vmatpush1.msra.mxu0 0.0
        %2857 = vmatprep.mubr.f32.mxu0 0.0
        %2858 = vmatmul.mubr.f32.gmra.mrb[0].mxu0 %v2785
        %v2859 = vpop.f32.mrb[0].mxu0
        %v2860 = vadd.f32 0.0, %v2859
        %v2861 = vpop.f32.mrb[0].mxu0
        %2862 = vmatprep.mubr.f32.mxu0 0.0
        %2863 = vmatmul.mubr.f32.gmra.mrb[0].mxu0 %v2788
        %v2864 = vpop.f32.mrb[0].mxu0
        %v2865 = vadd.f32 0.0, %v2864
        %v2866 = vpop.f32.mrb[0].mxu0
        %2867 = vmatprep.mubr.f32.mxu0 0.0
        %2868 = vmatmul.mubr.f32.gmra.mrb[0].mxu0 %v2791
        %v2869 = vpop.f32.mrb[0].mxu0
        %v2870 = vadd.f32 0.0, %v2869
        %v2871 = vpop.f32.mrb[0].mxu0
        %2872 = vdwg.mxu0
        %v2873 = vadd.f32 %v2264, %v2860
        %v2874 = vadd.f32 %v2269, %v2865
        %v2875 = vadd.f32 %v2274, %v2870
        %s2876 = scalar_lea.vmem %s15, 96
        %v2877 = vld [vmem:[%s2876] sm:$0xff]
        %v2878 = vld [vmem:[%s2876 + $0x8] sm:$0xff]
        %v2879 = vld [vmem:[%s2876 + $0x10] sm:$0xff]
        %v2880 = vld [vmem:[%s2876 + $0x18] sm:$0xff]
        %s2881 = scalar_lea.vmem %s17, 3
        %v2882 = vld [vmem:[%s2881] sm:$0x1]
        %v2884 = vlaneseq
        %v2885 = vshrl.u32 %v2884, 7
        %v2886 = vsub.s32 0, %v2885
        %v2887 = vrot.slane %v2882, %v2886
        %2889 = vmatprep.subr.mxu0 0.0
        %2890 = vmatpush1.msra.mxu0 %v2877
        %2891 = vmatprep.subr.mxu0 0.0
        %2892 = vmatpush1.msra.mxu0 %v2878
        %2893 = vmatprep.subr.mxu0 0.0
        %2894 = vmatpush1.msra.mxu0 %v2879
        %2895 = vmatprep.subr.mxu0 0.0
        %2896 = vmatpush1.msra.mxu0 %v2880
        %2897 = vmatprep.subr.mxu0 0.0
        %2898 = vmatpush1.msra.mxu0 0.0
        %2899 = vmatprep.subr.mxu0 0.0
        %2900 = vmatpush1.msra.mxu0 0.0
        %2901 = vmatprep.subr.mxu0 0.0
        %2902 = vmatpush1.msra.mxu0 0.0
        %2903 = vmatprep.subr.mxu0 0.0
        %2904 = vmatpush1.msra.mxu0 0.0
        %2905 = vmatprep.subr.mxu0 0.0
        %2906 = vmatpush1.msra.mxu0 0.0
        %2907 = vmatprep.subr.mxu0 0.0
        %2908 = vmatpush1.msra.mxu0 0.0
        %2909 = vmatprep.subr.mxu0 0.0
        %2910 = vmatpush1.msra.mxu0 0.0
        %2911 = vmatprep.subr.mxu0 0.0
        %2912 = vmatpush1.msra.mxu0 0.0
        %2913 = vmatprep.subr.mxu0 0.0
        %2914 = vmatpush1.msra.mxu0 0.0
        %2915 = vmatprep.subr.mxu0 0.0
        %2916 = vmatpush1.msra.mxu0 0.0
        %2917 = vmatprep.subr.mxu0 0.0
        %2918 = vmatpush1.msra.mxu0 0.0
        %2919 = vmatprep.subr.mxu0 0.0
        %2920 = vmatpush1.msra.mxu0 0.0
        %2921 = vmatprep.subr.mxu0 0.0
        %2922 = vmatpush1.msra.mxu0 0.0
        %2923 = vmatprep.subr.mxu0 0.0
        %2924 = vmatpush1.msra.mxu0 0.0
        %2925 = vmatprep.subr.mxu0 0.0
        %2926 = vmatpush1.msra.mxu0 0.0
        %2927 = vmatprep.subr.mxu0 0.0
        %2928 = vmatpush1.msra.mxu0 0.0
        %2929 = vmatprep.subr.mxu0 0.0
        %2930 = vmatpush1.msra.mxu0 0.0
        %2931 = vmatprep.subr.mxu0 0.0
        %2932 = vmatpush1.msra.mxu0 0.0
        %2933 = vmatprep.subr.mxu0 0.0
        %2934 = vmatpush1.msra.mxu0 0.0
        %2935 = vmatprep.subr.mxu0 0.0
        %2936 = vmatpush1.msra.mxu0 0.0
        %2937 = vmatprep.subr.mxu0 0.0
        %2938 = vmatpush1.msra.mxu0 0.0
        %2939 = vmatprep.subr.mxu0 0.0
        %2940 = vmatpush1.msra.mxu0 0.0
        %2941 = vmatprep.subr.mxu0 0.0
        %2942 = vmatpush1.msra.mxu0 0.0
        %2943 = vmatprep.subr.mxu0 0.0
        %2944 = vmatpush1.msra.mxu0 0.0
        %2945 = vmatprep.subr.mxu0 0.0
        %2946 = vmatpush1.msra.mxu0 0.0
        %2947 = vmatprep.subr.mxu0 0.0
        %2948 = vmatpush1.msra.mxu0 0.0
        %2949 = vmatprep.subr.mxu0 0.0
        %2950 = vmatpush1.msra.mxu0 0.0
        %2951 = vmatprep.subr.mxu0 0.0
        %2952 = vmatpush1.msra.mxu0 0.0
        %2953 = vmatprep.mubr.f32.mxu0 0.0
        %2954 = vmatmul.mubr.f32.gmra.mrb[0].mxu0 %v1091
        %v2955 = vpop.f32.mrb[0].mxu0
        %v2956 = vadd.f32 %v2887, %v2955
        %v2957 = vpop.f32.mrb[0].mxu0
        %2958 = vmatprep.mubr.f32.mxu0 0.0
        %2959 = vmatmul.mubr.f32.gmra.mrb[0].mxu0 %v1094
        %v2960 = vpop.f32.mrb[0].mxu0
        %v2961 = vadd.f32 %v2887, %v2960
        %v2962 = vpop.f32.mrb[0].mxu0
        %2963 = vmatprep.mubr.f32.mxu0 0.0
        %2964 = vmatmul.mubr.f32.gmra.mrb[0].mxu0 %v1097
        %v2965 = vpop.f32.mrb[0].mxu0
        %v2966 = vadd.f32 %v2887, %v2965
        %v2967 = vpop.f32.mrb[0].mxu0
        %2968 = vdwg.mxu0
        %s2969 = scalar_lea.vmem %s19, 96
        %v2970 = vld [vmem:[%s2969] sm:$0xff]
        %v2971 = vld [vmem:[%s2969 + $0x8] sm:$0xff]
        %v2972 = vld [vmem:[%s2969 + $0x10] sm:$0xff]
        %v2973 = vld [vmem:[%s2969 + $0x18] sm:$0xff]
        %s2974 = scalar_lea.vmem %s21, 3
        %v2975 = vld [vmem:[%s2974] sm:$0x1]
        %v2977 = vlaneseq
        %v2978 = vshrl.u32 %v2977, 7
        %v2979 = vsub.s32 0, %v2978
        %v2980 = vrot.slane %v2975, %v2979
        %2982 = vmatprep.subr.mxu0 0.0
        %2983 = vmatpush1.msra.mxu0 %v2970
        %2984 = vmatprep.subr.mxu0 0.0
        %2985 = vmatpush1.msra.mxu0 %v2971
        %2986 = vmatprep.subr.mxu0 0.0
        %2987 = vmatpush1.msra.mxu0 %v2972
        %2988 = vmatprep.subr.mxu0 0.0
        %2989 = vmatpush1.msra.mxu0 %v2973
        %2990 = vmatprep.subr.mxu0 0.0
        %2991 = vmatpush1.msra.mxu0 0.0
        %2992 = vmatprep.subr.mxu0 0.0
        %2993 = vmatpush1.msra.mxu0 0.0
        %2994 = vmatprep.subr.mxu0 0.0
        %2995 = vmatpush1.msra.mxu0 0.0
        %2996 = vmatprep.subr.mxu0 0.0
        %2997 = vmatpush1.msra.mxu0 0.0
        %2998 = vmatprep.subr.mxu0 0.0
        %2999 = vmatpush1.msra.mxu0 0.0
        %3000 = vmatprep.subr.mxu0 0.0
        %3001 = vmatpush1.msra.mxu0 0.0
        %3002 = vmatprep.subr.mxu0 0.0
        %3003 = vmatpush1.msra.mxu0 0.0
        %3004 = vmatprep.subr.mxu0 0.0
        %3005 = vmatpush1.msra.mxu0 0.0
        %3006 = vmatprep.subr.mxu0 0.0
        %3007 = vmatpush1.msra.mxu0 0.0
        %3008 = vmatprep.subr.mxu0 0.0
        %3009 = vmatpush1.msra.mxu0 0.0
        %3010 = vmatprep.subr.mxu0 0.0
        %3011 = vmatpush1.msra.mxu0 0.0
        %3012 = vmatprep.subr.mxu0 0.0
        %3013 = vmatpush1.msra.mxu0 0.0
        %3014 = vmatprep.subr.mxu0 0.0
        %3015 = vmatpush1.msra.mxu0 0.0
        %3016 = vmatprep.subr.mxu0 0.0
        %3017 = vmatpush1.msra.mxu0 0.0
        %3018 = vmatprep.subr.mxu0 0.0
        %3019 = vmatpush1.msra.mxu0 0.0
        %3020 = vmatprep.subr.mxu0 0.0
        %3021 = vmatpush1.msra.mxu0 0.0
        %3022 = vmatprep.subr.mxu0 0.0
        %3023 = vmatpush1.msra.mxu0 0.0
        %3024 = vmatprep.subr.mxu0 0.0
        %3025 = vmatpush1.msra.mxu0 0.0
        %3026 = vmatprep.subr.mxu0 0.0
        %3027 = vmatpush1.msra.mxu0 0.0
        %3028 = vmatprep.subr.mxu0 0.0
        %3029 = vmatpush1.msra.mxu0 0.0
        %3030 = vmatprep.subr.mxu0 0.0
        %3031 = vmatpush1.msra.mxu0 0.0
        %3032 = vmatprep.subr.mxu0 0.0
        %3033 = vmatpush1.msra.mxu0 0.0
        %3034 = vmatprep.subr.mxu0 0.0
        %3035 = vmatpush1.msra.mxu0 0.0
        %3036 = vmatprep.subr.mxu0 0.0
        %3037 = vmatpush1.msra.mxu0 0.0
        %3038 = vmatprep.subr.mxu0 0.0
        %3039 = vmatpush1.msra.mxu0 0.0
        %3040 = vmatprep.subr.mxu0 0.0
        %3041 = vmatpush1.msra.mxu0 0.0
        %3042 = vmatprep.subr.mxu0 0.0
        %3043 = vmatpush1.msra.mxu0 0.0
        %3044 = vmatprep.subr.mxu0 0.0
        %3045 = vmatpush1.msra.mxu0 0.0
        %3046 = vmatprep.mubr.f32.mxu0 0.0
        %3047 = vmatmul.mubr.f32.gmra.mrb[0].mxu0 %v1091
        %v3048 = vpop.f32.mrb[0].mxu0
        %v3049 = vadd.f32 %v2980, %v3048
        %v3050 = vpop.f32.mrb[0].mxu0
        %3051 = vmatprep.mubr.f32.mxu0 0.0
        %3052 = vmatmul.mubr.f32.gmra.mrb[0].mxu0 %v1094
        %v3053 = vpop.f32.mrb[0].mxu0
        %v3054 = vadd.f32 %v2980, %v3053
        %v3055 = vpop.f32.mrb[0].mxu0
        %3056 = vmatprep.mubr.f32.mxu0 0.0
        %3057 = vmatmul.mubr.f32.gmra.mrb[0].mxu0 %v1097
        %v3058 = vpop.f32.mrb[0].mxu0
        %v3059 = vadd.f32 %v2980, %v3058
        %v3060 = vpop.f32.mrb[0].mxu0
        %3061 = vdwg.mxu0
        %s3062 = scalar_lea.vmem %s23, 96
        %v3063 = vld [vmem:[%s3062] sm:$0xff]
        %v3064 = vld [vmem:[%s3062 + $0x8] sm:$0xff]
        %v3065 = vld [vmem:[%s3062 + $0x10] sm:$0xff]
        %v3066 = vld [vmem:[%s3062 + $0x18] sm:$0xff]
        %s3067 = scalar_lea.vmem %s25, 3
        %v3068 = vld [vmem:[%s3067] sm:$0x1]
        %v3070 = vlaneseq
        %v3071 = vshrl.u32 %v3070, 7
        %v3072 = vsub.s32 0, %v3071
        %v3073 = vrot.slane %v3068, %v3072
        %3075 = vmatprep.subr.mxu0 0.0
        %3076 = vmatpush1.msra.mxu0 %v3063
        %3077 = vmatprep.subr.mxu0 0.0
        %3078 = vmatpush1.msra.mxu0 %v3064
        %3079 = vmatprep.subr.mxu0 0.0
        %3080 = vmatpush1.msra.mxu0 %v3065
        %3081 = vmatprep.subr.mxu0 0.0
        %3082 = vmatpush1.msra.mxu0 %v3066
        %3083 = vmatprep.subr.mxu0 0.0
        %3084 = vmatpush1.msra.mxu0 0.0
        %3085 = vmatprep.subr.mxu0 0.0
        %3086 = vmatpush1.msra.mxu0 0.0
        %3087 = vmatprep.subr.mxu0 0.0
        %3088 = vmatpush1.msra.mxu0 0.0
        %3089 = vmatprep.subr.mxu0 0.0
        %3090 = vmatpush1.msra.mxu0 0.0
        %3091 = vmatprep.subr.mxu0 0.0
        %3092 = vmatpush1.msra.mxu0 0.0
        %3093 = vmatprep.subr.mxu0 0.0
        %3094 = vmatpush1.msra.mxu0 0.0
        %3095 = vmatprep.subr.mxu0 0.0
        %3096 = vmatpush1.msra.mxu0 0.0
        %3097 = vmatprep.subr.mxu0 0.0
        %3098 = vmatpush1.msra.mxu0 0.0
        %3099 = vmatprep.subr.mxu0 0.0
        %3100 = vmatpush1.msra.mxu0 0.0
        %3101 = vmatprep.subr.mxu0 0.0
        %3102 = vmatpush1.msra.mxu0 0.0
        %3103 = vmatprep.subr.mxu0 0.0
        %3104 = vmatpush1.msra.mxu0 0.0
        %3105 = vmatprep.subr.mxu0 0.0
        %3106 = vmatpush1.msra.mxu0 0.0
        %3107 = vmatprep.subr.mxu0 0.0
        %3108 = vmatpush1.msra.mxu0 0.0
        %3109 = vmatprep.subr.mxu0 0.0
        %3110 = vmatpush1.msra.mxu0 0.0
        %3111 = vmatprep.subr.mxu0 0.0
        %3112 = vmatpush1.msra.mxu0 0.0
        %3113 = vmatprep.subr.mxu0 0.0
        %3114 = vmatpush1.msra.mxu0 0.0
        %3115 = vmatprep.subr.mxu0 0.0
        %3116 = vmatpush1.msra.mxu0 0.0
        %3117 = vmatprep.subr.mxu0 0.0
        %3118 = vmatpush1.msra.mxu0 0.0
        %3119 = vmatprep.subr.mxu0 0.0
        %3120 = vmatpush1.msra.mxu0 0.0
        %3121 = vmatprep.subr.mxu0 0.0
        %3122 = vmatpush1.msra.mxu0 0.0
        %3123 = vmatprep.subr.mxu0 0.0
        %3124 = vmatpush1.msra.mxu0 0.0
        %3125 = vmatprep.subr.mxu0 0.0
        %3126 = vmatpush1.msra.mxu0 0.0
        %3127 = vmatprep.subr.mxu0 0.0
        %3128 = vmatpush1.msra.mxu0 0.0
        %3129 = vmatprep.subr.mxu0 0.0
        %3130 = vmatpush1.msra.mxu0 0.0
        %3131 = vmatprep.subr.mxu0 0.0
        %3132 = vmatpush1.msra.mxu0 0.0
        %3133 = vmatprep.subr.mxu0 0.0
        %3134 = vmatpush1.msra.mxu0 0.0
        %3135 = vmatprep.subr.mxu0 0.0
        %3136 = vmatpush1.msra.mxu0 0.0
        %3137 = vmatprep.subr.mxu0 0.0
        %3138 = vmatpush1.msra.mxu0 0.0
        %3139 = vmatprep.mubr.f32.mxu0 0.0
        %3140 = vmatmul.mubr.f32.gmra.mrb[0].mxu0 %v1091
        %v3141 = vpop.f32.mrb[0].mxu0
        %v3142 = vadd.f32 %v3073, %v3141
        %v3143 = vpop.f32.mrb[0].mxu0
        %3144 = vmatprep.mubr.f32.mxu0 0.0
        %3145 = vmatmul.mubr.f32.gmra.mrb[0].mxu0 %v1094
        %v3146 = vpop.f32.mrb[0].mxu0
        %v3147 = vadd.f32 %v3073, %v3146
        %v3148 = vpop.f32.mrb[0].mxu0
        %3149 = vmatprep.mubr.f32.mxu0 0.0
        %3150 = vmatmul.mubr.f32.gmra.mrb[0].mxu0 %v1097
        %v3151 = vpop.f32.mrb[0].mxu0
        %v3152 = vadd.f32 %v3073, %v3151
        %v3153 = vpop.f32.mrb[0].mxu0
        %3154 = vdwg.mxu0
        %v3156 = vsel %vm1361, %v2956, 0
        %v3159 = vsel %vm1361, %v2961, 0
        %v3162 = vsel %vm1361, %v2966, 0
        %v3165 = vsel %vm1361, %v3049, 0
        %v3168 = vsel %vm1361, %v3054, 0
        %v3171 = vsel %vm1361, %v3059, 0
        %3173 = vmatprep.subr.mxu0 0.0
        %3174 = vmatpush1.xpose.msra.mxu0 %v3165
        %3175 = vmatprep.subr.mxu0 0.0
        %3176 = vmatpush1.xpose.msra.mxu0 %v3168
        %3177 = vmatprep.subr.mxu0 0.0
        %3178 = vmatpush1.xpose.msra.mxu0 %v3171
        %3179 = vmatprep.subr.mxu0 0.0
        %3180 = vmatpush1.xpose.msra.mxu0 0.0
        %3181 = vmatprep.subr.mxu0 0.0
        %3182 = vmatpush1.xpose.msra.mxu0 0.0
        %3183 = vmatprep.subr.mxu0 0.0
        %3184 = vmatpush1.xpose.msra.mxu0 0.0
        %3185 = vmatprep.subr.mxu0 0.0
        %3186 = vmatpush1.xpose.msra.mxu0 0.0
        %3187 = vmatprep.subr.mxu0 0.0
        %3188 = vmatpush1.xpose.msra.mxu0 0.0
        %3189 = vmatprep.subr.mxu0 0.0
        %3190 = vmatpush1.xpose.msra.mxu0 0.0
        %3191 = vmatprep.subr.mxu0 0.0
        %3192 = vmatpush1.xpose.msra.mxu0 0.0
        %3193 = vmatprep.subr.mxu0 0.0
        %3194 = vmatpush1.xpose.msra.mxu0 0.0
        %3195 = vmatprep.subr.mxu0 0.0
        %3196 = vmatpush1.xpose.msra.mxu0 0.0
        %3197 = vmatprep.subr.mxu0 0.0
        %3198 = vmatpush1.xpose.msra.mxu0 0.0
        %3199 = vmatprep.subr.mxu0 0.0
        %3200 = vmatpush1.xpose.msra.mxu0 0.0
        %3201 = vmatprep.subr.mxu0 0.0
        %3202 = vmatpush1.xpose.msra.mxu0 0.0
        %3203 = vmatprep.subr.mxu0 0.0
        %3204 = vmatpush1.xpose.msra.mxu0 0.0
        %3205 = vmatprep.subr.mxu0 0.0
        %3206 = vmatpush1.xpose.msra.mxu0 0.0
        %3207 = vmatprep.subr.mxu0 0.0
        %3208 = vmatpush1.xpose.msra.mxu0 0.0
        %3209 = vmatprep.subr.mxu0 0.0
        %3210 = vmatpush1.xpose.msra.mxu0 0.0
        %3211 = vmatprep.subr.mxu0 0.0
        %3212 = vmatpush1.xpose.msra.mxu0 0.0
        %3213 = vmatprep.subr.mxu0 0.0
        %3214 = vmatpush1.xpose.msra.mxu0 0.0
        %3215 = vmatprep.subr.mxu0 0.0
        %3216 = vmatpush1.xpose.msra.mxu0 0.0
        %3217 = vmatprep.subr.mxu0 0.0
        %3218 = vmatpush1.xpose.msra.mxu0 0.0
        %3219 = vmatprep.subr.mxu0 0.0
        %3220 = vmatpush1.xpose.msra.mxu0 0.0
        %3221 = vmatprep.subr.mxu0 0.0
        %3222 = vmatpush1.xpose.msra.mxu0 0.0
        %3223 = vmatprep.subr.mxu0 0.0
        %3224 = vmatpush1.xpose.msra.mxu0 0.0
        %3225 = vmatprep.subr.mxu0 0.0
        %3226 = vmatpush1.xpose.msra.mxu0 0.0
        %3227 = vmatprep.subr.mxu0 0.0
        %3228 = vmatpush1.xpose.msra.mxu0 0.0
        %3229 = vmatprep.subr.mxu0 0.0
        %3230 = vmatpush1.xpose.msra.mxu0 0.0
        %3231 = vmatprep.subr.mxu0 0.0
        %3232 = vmatpush1.xpose.msra.mxu0 0.0
        %3233 = vmatprep.subr.mxu0 0.0
        %3234 = vmatpush1.xpose.msra.mxu0 0.0
        %3235 = vmatprep.subr.mxu0 0.0
        %3236 = vmatpush1.xpose.msra.mxu0 0.0
        %3237 = vmatprep.mubr.f32.mxu0 0.0
        %3238 = vmatmul.mubr.f32.gmra.mrb[0].mxu0 %v3156
        %v3239 = vpop.f32.mrb[0].mxu0
        %v3240 = vadd.f32 0.0, %v3239
        %v3241 = vpop.f32.mrb[0].mxu0
        %3242 = vmatprep.mubr.f32.mxu0 0.0
        %3243 = vmatmul.mubr.f32.gmra.mrb[0].mxu0 %v3159
        %v3244 = vpop.f32.mrb[0].mxu0
        %v3245 = vadd.f32 0.0, %v3244
        %v3246 = vpop.f32.mrb[0].mxu0
        %3247 = vmatprep.mubr.f32.mxu0 0.0
        %3248 = vmatmul.mubr.f32.gmra.mrb[0].mxu0 %v3162
        %v3249 = vpop.f32.mrb[0].mxu0
        %v3250 = vadd.f32 0.0, %v3249
        %v3251 = vpop.f32.mrb[0].mxu0
        %3252 = vdwg.mxu0
        %v3253 = vmul.f32 %v3240, 0.35355338
        %v3254 = vmul.f32 %v3245, 0.35355338
        %v3255 = vmul.f32 %v3250, 0.35355338
        %v3256 = vsel %vm1464, %v3253, -1e+30
        %v3257 = vsel %vm1464, %v3254, -1e+30
        %v3258 = vsel %vm1464, %v3255, -1e+30
        %v3259 = vsel %vm1468, %v3256, -inf
        %3260 = vmax.xlane.f32.xlu0 %v3259
        %v3261 = vpop.xlane.xlu0 %3260
        %v3262 = vsel %vm1468, %v3257, -inf
        %3263 = vmax.xlane.f32.xlu0 %v3262
        %v3264 = vpop.xlane.xlu0 %3263
        %v3265 = vsel %vm1468, %v3258, -inf
        %3266 = vmax.xlane.f32.xlu0 %v3265
        %v3267 = vpop.xlane.xlu0 %3266
        %v3268 = vsub.f32 %v3256, %v3261
        %v3269 = vsub.f32 %v3257, %v3264
        %v3270 = vsub.f32 %v3258, %v3267
        %v3271 = vmul.f32 %v3268, 1.442695
        %v3272 = vpow.pop %v3271
        %v3273 = vmul.f32 %v3269, 1.442695
        %v3274 = vpow.pop %v3273
        %v3275 = vmul.f32 %v3270, 1.442695
        %v3276 = vpow.pop %v3275
        %v3277 = vsel %vm1468, %v3272, 0.0
        %3278 = vadd.xlane.f32.xlu0 %v3277
        %v3279 = vpop.xlane.xlu0 %3278
        %v3280 = vsel %vm1468, %v3274, 0.0
        %3281 = vadd.xlane.f32.xlu0 %v3280
        %v3282 = vpop.xlane.xlu0 %3281
        %v3283 = vsel %vm1468, %v3276, 0.0
        %3284 = vadd.xlane.f32.xlu0 %v3283
        %v3285 = vpop.xlane.xlu0 %3284
        %v3286 = vrcp.pop %v3279
        %v3287 = vrcp.pop %v3282
        %v3288 = vrcp.pop %v3285
        %v3289 = vmul.f32 %v3272, %v3286
        %v3290 = vmul.f32 %v3274, %v3287
        %v3291 = vmul.f32 %v3276, %v3288
        %v3293 = vsel %vm1468, %v3289, 0
        %v3296 = vsel %vm1468, %v3290, 0
        %v3299 = vsel %vm1468, %v3291, 0
        %3301 = vmatprep.subr.mxu0 0.0
        %3302 = vmatpush1.msra.mxu0 %v3142
        %3303 = vmatprep.subr.mxu0 0.0
        %3304 = vmatpush1.msra.mxu0 %v3147
        %3305 = vmatprep.subr.mxu0 0.0
        %3306 = vmatpush1.msra.mxu0 %v3152
        %3307 = vmatprep.subr.mxu0 0.0
        %3308 = vmatpush1.msra.mxu0 0.0
        %3309 = vmatprep.subr.mxu0 0.0
        %3310 = vmatpush1.msra.mxu0 0.0
        %3311 = vmatprep.subr.mxu0 0.0
        %3312 = vmatpush1.msra.mxu0 0.0
        %3313 = vmatprep.subr.mxu0 0.0
        %3314 = vmatpush1.msra.mxu0 0.0
        %3315 = vmatprep.subr.mxu0 0.0
        %3316 = vmatpush1.msra.mxu0 0.0
        %3317 = vmatprep.subr.mxu0 0.0
        %3318 = vmatpush1.msra.mxu0 0.0
        %3319 = vmatprep.subr.mxu0 0.0
        %3320 = vmatpush1.msra.mxu0 0.0
        %3321 = vmatprep.subr.mxu0 0.0
        %3322 = vmatpush1.msra.mxu0 0.0
        %3323 = vmatprep.subr.mxu0 0.0
        %3324 = vmatpush1.msra.mxu0 0.0
        %3325 = vmatprep.subr.mxu0 0.0
        %3326 = vmatpush1.msra.mxu0 0.0
        %3327 = vmatprep.subr.mxu0 0.0
        %3328 = vmatpush1.msra.mxu0 0.0
        %3329 = vmatprep.subr.mxu0 0.0
        %3330 = vmatpush1.msra.mxu0 0.0
        %3331 = vmatprep.subr.mxu0 0.0
        %3332 = vmatpush1.msra.mxu0 0.0
        %3333 = vmatprep.subr.mxu0 0.0
        %3334 = vmatpush1.msra.mxu0 0.0
        %3335 = vmatprep.subr.mxu0 0.0
        %3336 = vmatpush1.msra.mxu0 0.0
        %3337 = vmatprep.subr.mxu0 0.0
        %3338 = vmatpush1.msra.mxu0 0.0
        %3339 = vmatprep.subr.mxu0 0.0
        %3340 = vmatpush1.msra.mxu0 0.0
        %3341 = vmatprep.subr.mxu0 0.0
        %3342 = vmatpush1.msra.mxu0 0.0
        %3343 = vmatprep.subr.mxu0 0.0
        %3344 = vmatpush1.msra.mxu0 0.0
        %3345 = vmatprep.subr.mxu0 0.0
        %3346 = vmatpush1.msra.mxu0 0.0
        %3347 = vmatprep.subr.mxu0 0.0
        %3348 = vmatpush1.msra.mxu0 0.0
        %3349 = vmatprep.subr.mxu0 0.0
        %3350 = vmatpush1.msra.mxu0 0.0
        %3351 = vmatprep.subr.mxu0 0.0
        %3352 = vmatpush1.msra.mxu0 0.0
        %3353 = vmatprep.subr.mxu0 0.0
        %3354 = vmatpush1.msra.mxu0 0.0
        %3355 = vmatprep.subr.mxu0 0.0
        %3356 = vmatpush1.msra.mxu0 0.0
        %3357 = vmatprep.subr.mxu0 0.0
        %3358 = vmatpush1.msra.mxu0 0.0
        %3359 = vmatprep.subr.mxu0 0.0
        %3360 = vmatpush1.msra.mxu0 0.0
        %3361 = vmatprep.subr.mxu0 0.0
        %3362 = vmatpush1.msra.mxu0 0.0
        %3363 = vmatprep.subr.mxu0 0.0
        %3364 = vmatpush1.msra.mxu0 0.0
        %3365 = vmatprep.mubr.f32.mxu0 0.0
        %3366 = vmatmul.mubr.f32.gmra.mrb[0].mxu0 %v3293
        %v3367 = vpop.f32.mrb[0].mxu0
        %v3368 = vadd.f32 0.0, %v3367
        %v3369 = vpop.f32.mrb[0].mxu0
        %3370 = vmatprep.mubr.f32.mxu0 0.0
        %3371 = vmatmul.mubr.f32.gmra.mrb[0].mxu0 %v3296
        %v3372 = vpop.f32.mrb[0].mxu0
        %v3373 = vadd.f32 0.0, %v3372
        %v3374 = vpop.f32.mrb[0].mxu0
        %3375 = vmatprep.mubr.f32.mxu0 0.0
        %3376 = vmatmul.mubr.f32.gmra.mrb[0].mxu0 %v3299
        %v3377 = vpop.f32.mrb[0].mxu0
        %v3378 = vadd.f32 0.0, %v3377
        %v3379 = vpop.f32.mrb[0].mxu0
        %3380 = vdwg.mxu0
        %s3381 = scalar_lea.vmem %s27, 24
        %v3382 = vld [vmem:[%s3381] sm:$0xff]
        %v3384 = vsel %vm1361, %v3368, 0
        %v3387 = vsel %vm1361, %v3373, 0
        %v3390 = vsel %vm1361, %v3378, 0
        %3392 = vmatprep.subr.mxu0 0.0
        %3393 = vmatpush1.msra.mxu0 %v3382
        %3394 = vmatprep.subr.mxu0 0.0
        %3395 = vmatpush1.msra.mxu0 0.0
        %3396 = vmatprep.subr.mxu0 0.0
        %3397 = vmatpush1.msra.mxu0 0.0
        %3398 = vmatprep.subr.mxu0 0.0
        %3399 = vmatpush1.msra.mxu0 0.0
        %3400 = vmatprep.subr.mxu0 0.0
        %3401 = vmatpush1.msra.mxu0 0.0
        %3402 = vmatprep.subr.mxu0 0.0
        %3403 = vmatpush1.msra.mxu0 0.0
        %3404 = vmatprep.subr.mxu0 0.0
        %3405 = vmatpush1.msra.mxu0 0.0
        %3406 = vmatprep.subr.mxu0 0.0
        %3407 = vmatpush1.msra.mxu0 0.0
        %3408 = vmatprep.subr.mxu0 0.0
        %3409 = vmatpush1.msra.mxu0 0.0
        %3410 = vmatprep.subr.mxu0 0.0
        %3411 = vmatpush1.msra.mxu0 0.0
        %3412 = vmatprep.subr.mxu0 0.0
        %3413 = vmatpush1.msra.mxu0 0.0
        %3414 = vmatprep.subr.mxu0 0.0
        %3415 = vmatpush1.msra.mxu0 0.0
        %3416 = vmatprep.subr.mxu0 0.0
        %3417 = vmatpush1.msra.mxu0 0.0
        %3418 = vmatprep.subr.mxu0 0.0
        %3419 = vmatpush1.msra.mxu0 0.0
        %3420 = vmatprep.subr.mxu0 0.0
        %3421 = vmatpush1.msra.mxu0 0.0
        %3422 = vmatprep.subr.mxu0 0.0
        %3423 = vmatpush1.msra.mxu0 0.0
        %3424 = vmatprep.subr.mxu0 0.0
        %3425 = vmatpush1.msra.mxu0 0.0
        %3426 = vmatprep.subr.mxu0 0.0
        %3427 = vmatpush1.msra.mxu0 0.0
        %3428 = vmatprep.subr.mxu0 0.0
        %3429 = vmatpush1.msra.mxu0 0.0
        %3430 = vmatprep.subr.mxu0 0.0
        %3431 = vmatpush1.msra.mxu0 0.0
        %3432 = vmatprep.subr.mxu0 0.0
        %3433 = vmatpush1.msra.mxu0 0.0
        %3434 = vmatprep.subr.mxu0 0.0
        %3435 = vmatpush1.msra.mxu0 0.0
        %3436 = vmatprep.subr.mxu0 0.0
        %3437 = vmatpush1.msra.mxu0 0.0
        %3438 = vmatprep.subr.mxu0 0.0
        %3439 = vmatpush1.msra.mxu0 0.0
        %3440 = vmatprep.subr.mxu0 0.0
        %3441 = vmatpush1.msra.mxu0 0.0
        %3442 = vmatprep.subr.mxu0 0.0
        %3443 = vmatpush1.msra.mxu0 0.0
        %3444 = vmatprep.subr.mxu0 0.0
        %3445 = vmatpush1.msra.mxu0 0.0
        %3446 = vmatprep.subr.mxu0 0.0
        %3447 = vmatpush1.msra.mxu0 0.0
        %3448 = vmatprep.subr.mxu0 0.0
        %3449 = vmatpush1.msra.mxu0 0.0
        %3450 = vmatprep.subr.mxu0 0.0
        %3451 = vmatpush1.msra.mxu0 0.0
        %3452 = vmatprep.subr.mxu0 0.0
        %3453 = vmatpush1.msra.mxu0 0.0
        %3454 = vmatprep.subr.mxu0 0.0
        %3455 = vmatpush1.msra.mxu0 0.0
        %3456 = vmatprep.mubr.f32.mxu0 0.0
        %3457 = vmatmul.mubr.f32.gmra.mrb[0].mxu0 %v3384
        %v3458 = vpop.f32.mrb[0].mxu0
        %v3459 = vadd.f32 0.0, %v3458
        %v3460 = vpop.f32.mrb[0].mxu0
        %3461 = vmatprep.mubr.f32.mxu0 0.0
        %3462 = vmatmul.mubr.f32.gmra.mrb[0].mxu0 %v3387
        %v3463 = vpop.f32.mrb[0].mxu0
        %v3464 = vadd.f32 0.0, %v3463
        %v3465 = vpop.f32.mrb[0].mxu0
        %3466 = vmatprep.mubr.f32.mxu0 0.0
        %3467 = vmatmul.mubr.f32.gmra.mrb[0].mxu0 %v3390
        %v3468 = vpop.f32.mrb[0].mxu0
        %v3469 = vadd.f32 0.0, %v3468
        %v3470 = vpop.f32.mrb[0].mxu0
        %3471 = vdwg.mxu0
        %v3472 = vadd.f32 %v2873, %v3459
        %v3473 = vadd.f32 %v2874, %v3464
        %v3474 = vadd.f32 %v2875, %v3469
        %v3475 = vadd.f32 %v1013, %v3472
        %v3476 = vadd.f32 %v1009, %v3473
        %v3477 = vadd.f32 %v1014, %v3474
        %v3478 = vld [vmem:[%s29] sm:$0x1]
        %v3480 = vlaneseq
        %v3481 = vshrl.u32 %v3480, 7
        %v3482 = vsub.s32 0, %v3481
        %v3483 = vrot.slane %v3478, %v3482
        %v3485 = vadd.f32 %v3475, %v3483
        %v3486 = vadd.f32 %v3476, %v3483
        %v3487 = vadd.f32 %v3477, %v3483
        %v3488 = vld [vmem:[%s43] sm:$0xff]
        %v3489 = vld [vmem:[%s43 + $0x8] sm:$0xff]
        %v3490 = vld [vmem:[%s43 + $0x10] sm:$0xff]
        %v3491 = vld [vmem:[%s43 + $0x18] sm:$0xff]
        %v3492 = vld [vmem:[%s45] sm:$0x1]
        %v3494 = vlaneseq
        %v3495 = vshrl.u32 %v3494, 7
        %v3496 = vsub.s32 0, %v3495
        %v3497 = vrot.slane %v3492, %v3496
        %v3500 = vsel %vm1020, %v3485, 0
        %v3503 = vsel %vm1020, %v3486, 0
        %v3506 = vsel %vm1020, %v3487, 0
        %3508 = vmatprep.subr.mxu0 0.0
        %3509 = vmatpush1.msra.mxu0 %v3488
        %3510 = vmatprep.subr.mxu0 0.0
        %3511 = vmatpush1.msra.mxu0 %v3489
        %3512 = vmatprep.subr.mxu0 0.0
        %3513 = vmatpush1.msra.mxu0 %v3490
        %3514 = vmatprep.subr.mxu0 0.0
        %3515 = vmatpush1.msra.mxu0 %v3491
        %3516 = vmatprep.subr.mxu0 0.0
        %3517 = vmatpush1.msra.mxu0 0.0
        %3518 = vmatprep.subr.mxu0 0.0
        %3519 = vmatpush1.msra.mxu0 0.0
        %3520 = vmatprep.subr.mxu0 0.0
        %3521 = vmatpush1.msra.mxu0 0.0
        %3522 = vmatprep.subr.mxu0 0.0
        %3523 = vmatpush1.msra.mxu0 0.0
        %3524 = vmatprep.subr.mxu0 0.0
        %3525 = vmatpush1.msra.mxu0 0.0
        %3526 = vmatprep.subr.mxu0 0.0
        %3527 = vmatpush1.msra.mxu0 0.0
        %3528 = vmatprep.subr.mxu0 0.0
        %3529 = vmatpush1.msra.mxu0 0.0
        %3530 = vmatprep.subr.mxu0 0.0
        %3531 = vmatpush1.msra.mxu0 0.0
        %3532 = vmatprep.subr.mxu0 0.0
        %3533 = vmatpush1.msra.mxu0 0.0
        %3534 = vmatprep.subr.mxu0 0.0
        %3535 = vmatpush1.msra.mxu0 0.0
        %3536 = vmatprep.subr.mxu0 0.0
        %3537 = vmatpush1.msra.mxu0 0.0
        %3538 = vmatprep.subr.mxu0 0.0
        %3539 = vmatpush1.msra.mxu0 0.0
        %3540 = vmatprep.subr.mxu0 0.0
        %3541 = vmatpush1.msra.mxu0 0.0
        %3542 = vmatprep.subr.mxu0 0.0
        %3543 = vmatpush1.msra.mxu0 0.0
        %3544 = vmatprep.subr.mxu0 0.0
        %3545 = vmatpush1.msra.mxu0 0.0
        %3546 = vmatprep.subr.mxu0 0.0
        %3547 = vmatpush1.msra.mxu0 0.0
        %3548 = vmatprep.subr.mxu0 0.0
        %3549 = vmatpush1.msra.mxu0 0.0
        %3550 = vmatprep.subr.mxu0 0.0
        %3551 = vmatpush1.msra.mxu0 0.0
        %3552 = vmatprep.subr.mxu0 0.0
        %3553 = vmatpush1.msra.mxu0 0.0
        %3554 = vmatprep.subr.mxu0 0.0
        %3555 = vmatpush1.msra.mxu0 0.0
        %3556 = vmatprep.subr.mxu0 0.0
        %3557 = vmatpush1.msra.mxu0 0.0
        %3558 = vmatprep.subr.mxu0 0.0
        %3559 = vmatpush1.msra.mxu0 0.0
        %3560 = vmatprep.subr.mxu0 0.0
        %3561 = vmatpush1.msra.mxu0 0.0
        %3562 = vmatprep.subr.mxu0 0.0
        %3563 = vmatpush1.msra.mxu0 0.0
        %3564 = vmatprep.subr.mxu0 0.0
        %3565 = vmatpush1.msra.mxu0 0.0
        %3566 = vmatprep.subr.mxu0 0.0
        %3567 = vmatpush1.msra.mxu0 0.0
        %3568 = vmatprep.subr.mxu0 0.0
        %3569 = vmatpush1.msra.mxu0 0.0
        %3570 = vmatprep.subr.mxu0 0.0
        %3571 = vmatpush1.msra.mxu0 0.0
        %3572 = vmatprep.mubr.f32.mxu0 0.0
        %3573 = vmatmul.mubr.f32.gmra.mrb[0].mxu0 %v3500
        %v3574 = vpop.f32.mrb[0].mxu0
        %v3575 = vadd.f32 %v3497, %v3574
        %v3576 = vpop.f32.mrb[0].mxu0
        %3577 = vmatprep.mubr.f32.mxu0 0.0
        %3578 = vmatmul.mubr.f32.gmra.mrb[0].mxu0 %v3503
        %v3579 = vpop.f32.mrb[0].mxu0
        %v3580 = vadd.f32 %v3497, %v3579
        %v3581 = vpop.f32.mrb[0].mxu0
        %3582 = vmatprep.mubr.f32.mxu0 0.0
        %3583 = vmatmul.mubr.f32.gmra.mrb[0].mxu0 %v3506
        %v3584 = vpop.f32.mrb[0].mxu0
        %v3585 = vadd.f32 %v3497, %v3584
        %v3586 = vpop.f32.mrb[0].mxu0
        %3587 = vdwg.mxu0
        %v3588 = vmax.f32 %v3575, 0.0
        %v3589 = vmax.f32 %v3580, 0.0
        %v3590 = vmax.f32 %v3585, 0.0
        %v3591 = vld [vmem:[%s47] sm:$0xff]
        %v3592 = vld [vmem:[%s49] sm:$0x1]
        %v3594 = vlaneseq
        %v3595 = vshrl.u32 %v3594, 7
        %v3596 = vsub.s32 0, %v3595
        %v3597 = vrot.slane %v3592, %v3596
        %v3600 = vsel %vm1361, %v3588, 0
        %v3603 = vsel %vm1361, %v3589, 0
        %v3606 = vsel %vm1361, %v3590, 0
        %3608 = vmatprep.subr.mxu0 0.0
        %3609 = vmatpush1.msra.mxu0 %v3591
        %3610 = vmatprep.subr.mxu0 0.0
        %3611 = vmatpush1.msra.mxu0 0.0
        %3612 = vmatprep.subr.mxu0 0.0
        %3613 = vmatpush1.msra.mxu0 0.0
        %3614 = vmatprep.subr.mxu0 0.0
        %3615 = vmatpush1.msra.mxu0 0.0
        %3616 = vmatprep.subr.mxu0 0.0
        %3617 = vmatpush1.msra.mxu0 0.0
        %3618 = vmatprep.subr.mxu0 0.0
        %3619 = vmatpush1.msra.mxu0 0.0
        %3620 = vmatprep.subr.mxu0 0.0
        %3621 = vmatpush1.msra.mxu0 0.0
        %3622 = vmatprep.subr.mxu0 0.0
        %3623 = vmatpush1.msra.mxu0 0.0
        %3624 = vmatprep.subr.mxu0 0.0
        %3625 = vmatpush1.msra.mxu0 0.0
        %3626 = vmatprep.subr.mxu0 0.0
        %3627 = vmatpush1.msra.mxu0 0.0
        %3628 = vmatprep.subr.mxu0 0.0
        %3629 = vmatpush1.msra.mxu0 0.0
        %3630 = vmatprep.subr.mxu0 0.0
        %3631 = vmatpush1.msra.mxu0 0.0
        %3632 = vmatprep.subr.mxu0 0.0
        %3633 = vmatpush1.msra.mxu0 0.0
        %3634 = vmatprep.subr.mxu0 0.0
        %3635 = vmatpush1.msra.mxu0 0.0
        %3636 = vmatprep.subr.mxu0 0.0
        %3637 = vmatpush1.msra.mxu0 0.0
        %3638 = vmatprep.subr.mxu0 0.0
        %3639 = vmatpush1.msra.mxu0 0.0
        %3640 = vmatprep.subr.mxu0 0.0
        %3641 = vmatpush1.msra.mxu0 0.0
        %3642 = vmatprep.subr.mxu0 0.0
        %3643 = vmatpush1.msra.mxu0 0.0
        %3644 = vmatprep.subr.mxu0 0.0
        %3645 = vmatpush1.msra.mxu0 0.0
        %3646 = vmatprep.subr.mxu0 0.0
        %3647 = vmatpush1.msra.mxu0 0.0
        %3648 = vmatprep.subr.mxu0 0.0
        %3649 = vmatpush1.msra.mxu0 0.0
        %3650 = vmatprep.subr.mxu0 0.0
        %3651 = vmatpush1.msra.mxu0 0.0
        %3652 = vmatprep.subr.mxu0 0.0
        %3653 = vmatpush1.msra.mxu0 0.0
        %3654 = vmatprep.subr.mxu0 0.0
        %3655 = vmatpush1.msra.mxu0 0.0
        %3656 = vmatprep.subr.mxu0 0.0
        %3657 = vmatpush1.msra.mxu0 0.0
        %3658 = vmatprep.subr.mxu0 0.0
        %3659 = vmatpush1.msra.mxu0 0.0
        %3660 = vmatprep.subr.mxu0 0.0
        %3661 = vmatpush1.msra.mxu0 0.0
        %3662 = vmatprep.subr.mxu0 0.0
        %3663 = vmatpush1.msra.mxu0 0.0
        %3664 = vmatprep.subr.mxu0 0.0
        %3665 = vmatpush1.msra.mxu0 0.0
        %3666 = vmatprep.subr.mxu0 0.0
        %3667 = vmatpush1.msra.mxu0 0.0
        %3668 = vmatprep.subr.mxu0 0.0
        %3669 = vmatpush1.msra.mxu0 0.0
        %3670 = vmatprep.subr.mxu0 0.0
        %3671 = vmatpush1.msra.mxu0 0.0
        %3672 = vmatprep.mubr.f32.mxu0 0.0
        %3673 = vmatmul.mubr.f32.gmra.mrb[0].mxu0 %v3600
        %v3674 = vpop.f32.mrb[0].mxu0
        %v3675 = vadd.f32 %v3597, %v3674
        %v3676 = vpop.f32.mrb[0].mxu0
        %3677 = vmatprep.mubr.f32.mxu0 0.0
        %3678 = vmatmul.mubr.f32.gmra.mrb[0].mxu0 %v3603
        %v3679 = vpop.f32.mrb[0].mxu0
        %v3680 = vadd.f32 %v3597, %v3679
        %v3681 = vpop.f32.mrb[0].mxu0
        %3682 = vmatprep.mubr.f32.mxu0 0.0
        %3683 = vmatmul.mubr.f32.gmra.mrb[0].mxu0 %v3606
        %v3684 = vpop.f32.mrb[0].mxu0
        %v3685 = vadd.f32 %v3597, %v3684
        %v3686 = vpop.f32.mrb[0].mxu0
        %3687 = vdwg.mxu0
        %v3688 = vmul.f32 %v3675, 0.1
        %v3689 = vmul.f32 %v3680, 0.1
        %v3690 = vmul.f32 %v3685, 0.1
        %v3691 = vld [vmem:[%s31] sm:$0x1]
        %v3692 = vld [vmem:[%s33] sm:$0x1]
        %v3693 = vsel %vm1020, %v3485, 0.0
        %3694 = vadd.xlane.f32.xlu0 %v3693
        %v3695 = vpop.xlane.xlu0 %3694
        %v3696 = vsel %vm1020, %v3486, 0.0
        %3697 = vadd.xlane.f32.xlu0 %v3696
        %v3698 = vpop.xlane.xlu0 %3697
        %v3699 = vsel %vm1020, %v3487, 0.0
        %3700 = vadd.xlane.f32.xlu0 %v3699
        %v3701 = vpop.xlane.xlu0 %3700
        %v3702 = vmul.f32 %v3695, %v1030
        %v3703 = vmul.f32 %v3698, %v1030
        %v3704 = vmul.f32 %v3701, %v1030
        %v3705 = vsub.f32 %v3485, %v3702
        %v3706 = vsub.f32 %v3486, %v3703
        %v3707 = vsub.f32 %v3487, %v3704
        %v3708 = vmul.f32 %v3705, %v3705
        %v3709 = vmul.f32 %v3706, %v3706
        %v3710 = vmul.f32 %v3707, %v3707
        %v3711 = vsel %vm1020, %v3708, 0.0
        %3712 = vadd.xlane.f32.xlu0 %v3711
        %v3713 = vpop.xlane.xlu0 %3712
        %v3714 = vsel %vm1020, %v3709, 0.0
        %3715 = vadd.xlane.f32.xlu0 %v3714
        %v3716 = vpop.xlane.xlu0 %3715
        %v3717 = vsel %vm1020, %v3710, 0.0
        %3718 = vadd.xlane.f32.xlu0 %v3717
        %v3719 = vpop.xlane.xlu0 %3718
        %v3720 = vmul.f32 %v3713, %v1030
        %v3721 = vmul.f32 %v3716, %v1030
        %v3722 = vmul.f32 %v3719, %v1030
        %v3723 = vadd.f32 %v3720, 1e-06
        %v3724 = vadd.f32 %v3721, 1e-06
        %v3725 = vadd.f32 %v3722, 1e-06
        %v3726 = vrsqrt.pop %v3723
        %v3727 = vrsqrt.pop %v3724
        %v3728 = vrsqrt.pop %v3725
        %v3729 = vmul.f32 %v3705, %v3726
        %v3730 = vmul.f32 %v3706, %v3727
        %v3731 = vmul.f32 %v3707, %v3728
        %v3733 = vlaneseq
        %v3734 = vshrl.u32 %v3733, 7
        %v3735 = vsub.s32 0, %v3734
        %v3736 = vrot.slane %v3691, %v3735
        %v3738 = vmul.f32 %v3729, %v3736
        %v3739 = vmul.f32 %v3730, %v3736
        %v3740 = vmul.f32 %v3731, %v3736
        %v3742 = vlaneseq
        %v3743 = vshrl.u32 %v3742, 7
        %v3744 = vsub.s32 0, %v3743
        %v3745 = vrot.slane %v3692, %v3744
        %v3747 = vadd.f32 %v3738, %v3745
        %v3748 = vadd.f32 %v3739, %v3745
        %v3749 = vadd.f32 %v3740, %v3745
        %v3750 = vld [vmem:[%s35] sm:$0xff]
        %v3751 = vld [vmem:[%s35 + $0x8] sm:$0xff]
        %v3752 = vld [vmem:[%s35 + $0x10] sm:$0xff]
        %v3753 = vld [vmem:[%s35 + $0x18] sm:$0xff]
        %v3754 = vld [vmem:[%s37] sm:$0x1]
        %v3756 = vlaneseq
        %v3757 = vshrl.u32 %v3756, 7
        %v3758 = vsub.s32 0, %v3757
        %v3759 = vrot.slane %v3754, %v3758
        %v3762 = vsel %vm1020, %v3747, 0
        %v3765 = vsel %vm1020, %v3748, 0
        %v3768 = vsel %vm1020, %v3749, 0
        %3770 = vmatprep.subr.mxu0 0.0
        %3771 = vmatpush1.msra.mxu0 %v3750
        %3772 = vmatprep.subr.mxu0 0.0
        %3773 = vmatpush1.msra.mxu0 %v3751
        %3774 = vmatprep.subr.mxu0 0.0
        %3775 = vmatpush1.msra.mxu0 %v3752
        %3776 = vmatprep.subr.mxu0 0.0
        %3777 = vmatpush1.msra.mxu0 %v3753
        %3778 = vmatprep.subr.mxu0 0.0
        %3779 = vmatpush1.msra.mxu0 0.0
        %3780 = vmatprep.subr.mxu0 0.0
        %3781 = vmatpush1.msra.mxu0 0.0
        %3782 = vmatprep.subr.mxu0 0.0
        %3783 = vmatpush1.msra.mxu0 0.0
        %3784 = vmatprep.subr.mxu0 0.0
        %3785 = vmatpush1.msra.mxu0 0.0
        %3786 = vmatprep.subr.mxu0 0.0
        %3787 = vmatpush1.msra.mxu0 0.0
        %3788 = vmatprep.subr.mxu0 0.0
        %3789 = vmatpush1.msra.mxu0 0.0
        %3790 = vmatprep.subr.mxu0 0.0
        %3791 = vmatpush1.msra.mxu0 0.0
        %3792 = vmatprep.subr.mxu0 0.0
        %3793 = vmatpush1.msra.mxu0 0.0
        %3794 = vmatprep.subr.mxu0 0.0
        %3795 = vmatpush1.msra.mxu0 0.0
        %3796 = vmatprep.subr.mxu0 0.0
        %3797 = vmatpush1.msra.mxu0 0.0
        %3798 = vmatprep.subr.mxu0 0.0
        %3799 = vmatpush1.msra.mxu0 0.0
        %3800 = vmatprep.subr.mxu0 0.0
        %3801 = vmatpush1.msra.mxu0 0.0
        %3802 = vmatprep.subr.mxu0 0.0
        %3803 = vmatpush1.msra.mxu0 0.0
        %3804 = vmatprep.subr.mxu0 0.0
        %3805 = vmatpush1.msra.mxu0 0.0
        %3806 = vmatprep.subr.mxu0 0.0
        %3807 = vmatpush1.msra.mxu0 0.0
        %3808 = vmatprep.subr.mxu0 0.0
        %3809 = vmatpush1.msra.mxu0 0.0
        %3810 = vmatprep.subr.mxu0 0.0
        %3811 = vmatpush1.msra.mxu0 0.0
        %3812 = vmatprep.subr.mxu0 0.0
        %3813 = vmatpush1.msra.mxu0 0.0
        %3814 = vmatprep.subr.mxu0 0.0
        %3815 = vmatpush1.msra.mxu0 0.0
        %3816 = vmatprep.subr.mxu0 0.0
        %3817 = vmatpush1.msra.mxu0 0.0
        %3818 = vmatprep.subr.mxu0 0.0
        %3819 = vmatpush1.msra.mxu0 0.0
        %3820 = vmatprep.subr.mxu0 0.0
        %3821 = vmatpush1.msra.mxu0 0.0
        %3822 = vmatprep.subr.mxu0 0.0
        %3823 = vmatpush1.msra.mxu0 0.0
        %3824 = vmatprep.subr.mxu0 0.0
        %3825 = vmatpush1.msra.mxu0 0.0
        %3826 = vmatprep.subr.mxu0 0.0
        %3827 = vmatpush1.msra.mxu0 0.0
        %3828 = vmatprep.subr.mxu0 0.0
        %3829 = vmatpush1.msra.mxu0 0.0
        %3830 = vmatprep.subr.mxu0 0.0
        %3831 = vmatpush1.msra.mxu0 0.0
        %3832 = vmatprep.subr.mxu0 0.0
        %3833 = vmatpush1.msra.mxu0 0.0
        %3834 = vmatprep.mubr.f32.mxu0 0.0
        %3835 = vmatmul.mubr.f32.gmra.mrb[0].mxu0 %v3762
        %v3836 = vpop.f32.mrb[0].mxu0
        %v3837 = vadd.f32 %v3759, %v3836
        %v3838 = vpop.f32.mrb[0].mxu0
        %3839 = vmatprep.mubr.f32.mxu0 0.0
        %3840 = vmatmul.mubr.f32.gmra.mrb[0].mxu0 %v3765
        %v3841 = vpop.f32.mrb[0].mxu0
        %v3842 = vadd.f32 %v3759, %v3841
        %v3843 = vpop.f32.mrb[0].mxu0
        %3844 = vmatprep.mubr.f32.mxu0 0.0
        %3845 = vmatmul.mubr.f32.gmra.mrb[0].mxu0 %v3768
        %v3846 = vpop.f32.mrb[0].mxu0
        %v3847 = vadd.f32 %v3759, %v3846
        %v3848 = vpop.f32.mrb[0].mxu0
        %3849 = vdwg.mxu0
        %v3850 = vmul.f32 %v3837, 0.70710677
        %v3851 = vmul.f32 %v3842, 0.70710677
        %v3852 = vmul.f32 %v3847, 0.70710677
        %v3853 = vand.u32 2147483647, %v3850
        %v3854 = vand.u32 2147483647, %v3851
        %v3855 = vand.u32 2147483647, %v3852
        %v3856 = vmul.f32 %v3853, 0.3275911
        %v3857 = vmul.f32 %v3854, 0.3275911
        %v3858 = vmul.f32 %v3855, 0.3275911
        %v3859 = vadd.f32 %v3856, 1.0
        %v3860 = vadd.f32 %v3857, 1.0
        %v3861 = vadd.f32 %v3858, 1.0
        %v3862 = vrcp.pop %v3859
        %v3863 = vmul.f32 1.0, %v3862
        %v3864 = vrcp.pop %v3860
        %v3865 = vmul.f32 1.0, %v3864
        %v3866 = vrcp.pop %v3861
        %v3867 = vmul.f32 1.0, %v3866
        %v3868 = vmul.f32 %v3863, 1.0614054
        %v3869 = vmul.f32 %v3865, 1.0614054
        %v3870 = vmul.f32 %v3867, 1.0614054
        %v3871 = vadd.f32 %v3868, -1.4531521
        %v3872 = vadd.f32 %v3869, -1.4531521
        %v3873 = vadd.f32 %v3870, -1.4531521
        %v3874 = vmul.f32 %v3863, %v3871
        %v3875 = vmul.f32 %v3865, %v3872
        %v3876 = vmul.f32 %v3867, %v3873
        %v3877 = vadd.f32 %v3874, 1.4214138
        %v3878 = vadd.f32 %v3875, 1.4214138
        %v3879 = vadd.f32 %v3876, 1.4214138
        %v3880 = vmul.f32 %v3863, %v3877
        %v3881 = vmul.f32 %v3865, %v3878
        %v3882 = vmul.f32 %v3867, %v3879
        %v3883 = vadd.f32 %v3880, -0.28449672
        %v3884 = vadd.f32 %v3881, -0.28449672
        %v3885 = vadd.f32 %v3882, -0.28449672
        %v3886 = vmul.f32 %v3863, %v3883
        %v3887 = vmul.f32 %v3865, %v3884
        %v3888 = vmul.f32 %v3867, %v3885
        %v3889 = vadd.f32 %v3886, 0.2548296
        %v3890 = vadd.f32 %v3887, 0.2548296
        %v3891 = vadd.f32 %v3888, 0.2548296
        %v3892 = vmul.f32 %v3863, %v3889
        %v3893 = vmul.f32 %v3865, %v3890
        %v3894 = vmul.f32 %v3867, %v3891
        %v3895 = vsub.f32 0.0, %v3853
        %v3896 = vsub.f32 0.0, %v3854
        %v3897 = vsub.f32 0.0, %v3855
        %v3898 = vmul.f32 %v3895, %v3853
        %v3899 = vmul.f32 %v3896, %v3854
        %v3900 = vmul.f32 %v3897, %v3855
        %v3901 = vmul.f32 %v3898, 1.442695
        %v3902 = vpow.pop %v3901
        %v3903 = vmul.f32 %v3899, 1.442695
        %v3904 = vpow.pop %v3903
        %v3905 = vmul.f32 %v3900, 1.442695
        %v3906 = vpow.pop %v3905
        %v3907 = vmul.f32 %v3892, %v3902
        %v3908 = vmul.f32 %v3893, %v3904
        %v3909 = vmul.f32 %v3894, %v3906
        %v3910 = vsub.f32 1.0, %v3907
        %v3911 = vsub.f32 1.0, %v3908
        %v3912 = vsub.f32 1.0, %v3909
        %vm3913 = vcmp.ge.f32.partialorder %v3850, 0.0
        %vm3914 = vcmp.ge.f32.partialorder %v3851, 0.0
        %vm3915 = vcmp.ge.f32.partialorder %v3852, 0.0
        %v3916 = vsub.f32 0.0, %v3910
        %v3917 = vsub.f32 0.0, %v3911
        %v3918 = vsub.f32 0.0, %v3912
        %v3919 = vsel %vm3913, %v3910, %v3916
        %v3920 = vsel %vm3914, %v3911, %v3917
        %v3921 = vsel %vm3915, %v3912, %v3918
        %v3922 = vmul.f32 %v3837, 0.5
        %v3923 = vmul.f32 %v3842, 0.5
        %v3924 = vmul.f32 %v3847, 0.5
        %v3925 = vadd.f32 %v3919, 1.0
        %v3926 = vadd.f32 %v3920, 1.0
        %v3927 = vadd.f32 %v3921, 1.0
        %v3928 = vmul.f32 %v3922, %v3925
        %v3929 = vmul.f32 %v3923, %v3926
        %v3930 = vmul.f32 %v3924, %v3927
        %v3931 = vld [vmem:[%s39] sm:$0xff]
        %v3932 = vld [vmem:[%s39 + $0x8] sm:$0xff]
        %v3933 = vld [vmem:[%s39 + $0x10] sm:$0xff]
        %v3934 = vld [vmem:[%s39 + $0x18] sm:$0xff]
        %v3935 = vld [vmem:[%s39 + $0x20] sm:$0xff]
        %v3936 = vld [vmem:[%s39 + $0x28] sm:$0xff]
        %v3937 = vld [vmem:[%s39 + $0x30] sm:$0xff]
        %v3938 = vld [vmem:[%s39 + $0x38] sm:$0xff]
        %v3939 = vld [vmem:[%s39 + $0x40] sm:$0xff]
        %v3940 = vld [vmem:[%s39 + $0x48] sm:$0xff]
        %v3941 = vld [vmem:[%s39 + $0x50] sm:$0xff]
        %v3942 = vld [vmem:[%s39 + $0x58] sm:$0xff]
        %v3943 = vld [vmem:[%s39 + $0x60] sm:$0xff]
        %v3944 = vld [vmem:[%s39 + $0x68] sm:$0xff]
        %v3945 = vld [vmem:[%s39 + $0x70] sm:$0xff]
        %v3946 = vld [vmem:[%s39 + $0x78] sm:$0xff]
        %v3947 = vld [vmem:[%s41] sm:$0x1]
        %v3949 = vlaneseq
        %v3950 = vshrl.u32 %v3949, 7
        %v3951 = vsub.s32 0, %v3950
        %v3952 = vrot.slane %v3947, %v3951
        %3954 = vmatprep.subr.mxu0 0.0
        %3955 = vmatpush1.msra.mxu0 %v3931
        %3956 = vmatprep.subr.mxu0 0.0
        %3957 = vmatpush1.msra.mxu0 %v3932
        %3958 = vmatprep.subr.mxu0 0.0
        %3959 = vmatpush1.msra.mxu0 %v3933
        %3960 = vmatprep.subr.mxu0 0.0
        %3961 = vmatpush1.msra.mxu0 %v3934
        %3962 = vmatprep.subr.mxu0 0.0
        %3963 = vmatpush1.msra.mxu0 %v3935
        %3964 = vmatprep.subr.mxu0 0.0
        %3965 = vmatpush1.msra.mxu0 %v3936
        %3966 = vmatprep.subr.mxu0 0.0
        %3967 = vmatpush1.msra.mxu0 %v3937
        %3968 = vmatprep.subr.mxu0 0.0
        %3969 = vmatpush1.msra.mxu0 %v3938
        %3970 = vmatprep.subr.mxu0 0.0
        %3971 = vmatpush1.msra.mxu0 %v3939
        %3972 = vmatprep.subr.mxu0 0.0
        %3973 = vmatpush1.msra.mxu0 %v3940
        %3974 = vmatprep.subr.mxu0 0.0
        %3975 = vmatpush1.msra.mxu0 %v3941
        %3976 = vmatprep.subr.mxu0 0.0
        %3977 = vmatpush1.msra.mxu0 %v3942
        %3978 = vmatprep.subr.mxu0 0.0
        %3979 = vmatpush1.msra.mxu0 %v3943
        %3980 = vmatprep.subr.mxu0 0.0
        %3981 = vmatpush1.msra.mxu0 %v3944
        %3982 = vmatprep.subr.mxu0 0.0
        %3983 = vmatpush1.msra.mxu0 %v3945
        %3984 = vmatprep.subr.mxu0 0.0
        %3985 = vmatpush1.msra.mxu0 %v3946
        %3986 = vmatprep.subr.mxu0 0.0
        %3987 = vmatpush1.msra.mxu0 0.0
        %3988 = vmatprep.subr.mxu0 0.0
        %3989 = vmatpush1.msra.mxu0 0.0
        %3990 = vmatprep.subr.mxu0 0.0
        %3991 = vmatpush1.msra.mxu0 0.0
        %3992 = vmatprep.subr.mxu0 0.0
        %3993 = vmatpush1.msra.mxu0 0.0
        %3994 = vmatprep.subr.mxu0 0.0
        %3995 = vmatpush1.msra.mxu0 0.0
        %3996 = vmatprep.subr.mxu0 0.0
        %3997 = vmatpush1.msra.mxu0 0.0
        %3998 = vmatprep.subr.mxu0 0.0
        %3999 = vmatpush1.msra.mxu0 0.0
        %4000 = vmatprep.subr.mxu0 0.0
        %4001 = vmatpush1.msra.mxu0 0.0
        %4002 = vmatprep.subr.mxu0 0.0
        %4003 = vmatpush1.msra.mxu0 0.0
        %4004 = vmatprep.subr.mxu0 0.0
        %4005 = vmatpush1.msra.mxu0 0.0
        %4006 = vmatprep.subr.mxu0 0.0
        %4007 = vmatpush1.msra.mxu0 0.0
        %4008 = vmatprep.subr.mxu0 0.0
        %4009 = vmatpush1.msra.mxu0 0.0
        %4010 = vmatprep.subr.mxu0 0.0
        %4011 = vmatpush1.msra.mxu0 0.0
        %4012 = vmatprep.subr.mxu0 0.0
        %4013 = vmatpush1.msra.mxu0 0.0
        %4014 = vmatprep.subr.mxu0 0.0
        %4015 = vmatpush1.msra.mxu0 0.0
        %4016 = vmatprep.subr.mxu0 0.0
        %4017 = vmatpush1.msra.mxu0 0.0
        %4018 = vmatprep.mubr.f32.mxu0 0.0
        %4019 = vmatmul.mubr.f32.gmra.mrb[0].mxu0 %v3928
        %v4020 = vpop.f32.mrb[0].mxu0
        %v4021 = vadd.f32 %v3952, %v4020
        %v4022 = vpop.f32.mrb[0].mxu0
        %4023 = vmatprep.mubr.f32.mxu0 0.0
        %4024 = vmatmul.mubr.f32.gmra.mrb[0].mxu0 %v3929
        %v4025 = vpop.f32.mrb[0].mxu0
        %v4026 = vadd.f32 %v3952, %v4025
        %v4027 = vpop.f32.mrb[0].mxu0
        %4028 = vmatprep.mubr.f32.mxu0 0.0
        %4029 = vmatmul.mubr.f32.gmra.mrb[0].mxu0 %v3930
        %v4030 = vpop.f32.mrb[0].mxu0
        %v4031 = vadd.f32 %v3952, %v4030
        %v4032 = vpop.f32.mrb[0].mxu0
        %4033 = vdwg.mxu0
        %v4034 = vadd.f32 %v3485, %v4021
        %v4035 = vadd.f32 %v3486, %v4026
        %v4036 = vadd.f32 %v3487, %v4031
        %v4037 = vadd.f32 %v4034, %v3688
        %v4038 = vadd.f32 %v4035, %v3689
        %v4039 = vadd.f32 %v4036, %v3690
        %s4040 = scalar_lea.vmem %s11, 1
        %v4041 = vld [vmem:[%s4040] sm:$0x1]
        %s4042 = scalar_lea.vmem %s13, 1
        %v4043 = vld [vmem:[%s4042] sm:$0x1]
        %v4044 = vsel %vm1020, %v4037, 0.0
        %4045 = vadd.xlane.f32.xlu0 %v4044
        %v4046 = vpop.xlane.xlu0 %4045
        %v4047 = vsel %vm1020, %v4038, 0.0
        %4048 = vadd.xlane.f32.xlu0 %v4047
        %v4049 = vpop.xlane.xlu0 %4048
        %v4050 = vsel %vm1020, %v4039, 0.0
        %4051 = vadd.xlane.f32.xlu0 %v4050
        %v4052 = vpop.xlane.xlu0 %4051
        %v4053 = vmul.f32 %v4046, %v1030
        %v4054 = vmul.f32 %v4049, %v1030
        %v4055 = vmul.f32 %v4052, %v1030
        %v4056 = vsub.f32 %v4037, %v4053
        %v4057 = vsub.f32 %v4038, %v4054
        %v4058 = vsub.f32 %v4039, %v4055
        %v4059 = vmul.f32 %v4056, %v4056
        %v4060 = vmul.f32 %v4057, %v4057
        %v4061 = vmul.f32 %v4058, %v4058
        %v4062 = vsel %vm1020, %v4059, 0.0
        %4063 = vadd.xlane.f32.xlu0 %v4062
        %v4064 = vpop.xlane.xlu0 %4063
        %v4065 = vsel %vm1020, %v4060, 0.0
        %4066 = vadd.xlane.f32.xlu0 %v4065
        %v4067 = vpop.xlane.xlu0 %4066
        %v4068 = vsel %vm1020, %v4061, 0.0
        %4069 = vadd.xlane.f32.xlu0 %v4068
        %v4070 = vpop.xlane.xlu0 %4069
        %v4071 = vmul.f32 %v4064, %v1030
        %v4072 = vmul.f32 %v4067, %v1030
        %v4073 = vmul.f32 %v4070, %v1030
        %v4074 = vadd.f32 %v4071, 1e-06
        %v4075 = vadd.f32 %v4072, 1e-06
        %v4076 = vadd.f32 %v4073, 1e-06
        %v4077 = vrsqrt.pop %v4074
        %v4078 = vrsqrt.pop %v4075
        %v4079 = vrsqrt.pop %v4076
        %v4080 = vmul.f32 %v4056, %v4077
        %v4081 = vmul.f32 %v4057, %v4078
        %v4082 = vmul.f32 %v4058, %v4079
        %v4084 = vlaneseq
        %v4085 = vshrl.u32 %v4084, 7
        %v4086 = vsub.s32 0, %v4085
        %v4087 = vrot.slane %v4041, %v4086
        %v4089 = vmul.f32 %v4080, %v4087
        %v4090 = vmul.f32 %v4081, %v4087
        %v4091 = vmul.f32 %v4082, %v4087
        %v4093 = vlaneseq
        %v4094 = vshrl.u32 %v4093, 7
        %v4095 = vsub.s32 0, %v4094
        %v4096 = vrot.slane %v4043, %v4095
        %v4098 = vadd.f32 %v4089, %v4096
        %v4099 = vadd.f32 %v4090, %v4096
        %v4100 = vadd.f32 %v4091, %v4096
        %s4101 = scalar_lea.vmem %s15, 128
        %v4102 = vld [vmem:[%s4101] sm:$0xff]
        %v4103 = vld [vmem:[%s4101 + $0x8] sm:$0xff]
        %v4104 = vld [vmem:[%s4101 + $0x10] sm:$0xff]
        %v4105 = vld [vmem:[%s4101 + $0x18] sm:$0xff]
        %s4106 = scalar_lea.vmem %s17, 4
        %v4107 = vld [vmem:[%s4106] sm:$0x1]
        %v4109 = vlaneseq
        %v4110 = vshrl.u32 %v4109, 7
        %v4111 = vsub.s32 0, %v4110
        %v4112 = vrot.slane %v4107, %v4111
        %v4115 = vsel %vm1020, %v4098, 0
        %v4118 = vsel %vm1020, %v4099, 0
        %v4121 = vsel %vm1020, %v4100, 0
        %4123 = vmatprep.subr.mxu0 0.0
        %4124 = vmatpush1.msra.mxu0 %v4102
        %4125 = vmatprep.subr.mxu0 0.0
        %4126 = vmatpush1.msra.mxu0 %v4103
        %4127 = vmatprep.subr.mxu0 0.0
        %4128 = vmatpush1.msra.mxu0 %v4104
        %4129 = vmatprep.subr.mxu0 0.0
        %4130 = vmatpush1.msra.mxu0 %v4105
        %4131 = vmatprep.subr.mxu0 0.0
        %4132 = vmatpush1.msra.mxu0 0.0
        %4133 = vmatprep.subr.mxu0 0.0
        %4134 = vmatpush1.msra.mxu0 0.0
        %4135 = vmatprep.subr.mxu0 0.0
        %4136 = vmatpush1.msra.mxu0 0.0
        %4137 = vmatprep.subr.mxu0 0.0
        %4138 = vmatpush1.msra.mxu0 0.0
        %4139 = vmatprep.subr.mxu0 0.0
        %4140 = vmatpush1.msra.mxu0 0.0
        %4141 = vmatprep.subr.mxu0 0.0
        %4142 = vmatpush1.msra.mxu0 0.0
        %4143 = vmatprep.subr.mxu0 0.0
        %4144 = vmatpush1.msra.mxu0 0.0
        %4145 = vmatprep.subr.mxu0 0.0
        %4146 = vmatpush1.msra.mxu0 0.0
        %4147 = vmatprep.subr.mxu0 0.0
        %4148 = vmatpush1.msra.mxu0 0.0
        %4149 = vmatprep.subr.mxu0 0.0
        %4150 = vmatpush1.msra.mxu0 0.0
        %4151 = vmatprep.subr.mxu0 0.0
        %4152 = vmatpush1.msra.mxu0 0.0
        %4153 = vmatprep.subr.mxu0 0.0
        %4154 = vmatpush1.msra.mxu0 0.0
        %4155 = vmatprep.subr.mxu0 0.0
        %4156 = vmatpush1.msra.mxu0 0.0
        %4157 = vmatprep.subr.mxu0 0.0
        %4158 = vmatpush1.msra.mxu0 0.0
        %4159 = vmatprep.subr.mxu0 0.0
        %4160 = vmatpush1.msra.mxu0 0.0
        %4161 = vmatprep.subr.mxu0 0.0
        %4162 = vmatpush1.msra.mxu0 0.0
        %4163 = vmatprep.subr.mxu0 0.0
        %4164 = vmatpush1.msra.mxu0 0.0
        %4165 = vmatprep.subr.mxu0 0.0
        %4166 = vmatpush1.msra.mxu0 0.0
        %4167 = vmatprep.subr.mxu0 0.0
        %4168 = vmatpush1.msra.mxu0 0.0
        %4169 = vmatprep.subr.mxu0 0.0
        %4170 = vmatpush1.msra.mxu0 0.0
        %4171 = vmatprep.subr.mxu0 0.0
        %4172 = vmatpush1.msra.mxu0 0.0
        %4173 = vmatprep.subr.mxu0 0.0
        %4174 = vmatpush1.msra.mxu0 0.0
        %4175 = vmatprep.subr.mxu0 0.0
        %4176 = vmatpush1.msra.mxu0 0.0
        %4177 = vmatprep.subr.mxu0 0.0
        %4178 = vmatpush1.msra.mxu0 0.0
        %4179 = vmatprep.subr.mxu0 0.0
        %4180 = vmatpush1.msra.mxu0 0.0
        %4181 = vmatprep.subr.mxu0 0.0
        %4182 = vmatpush1.msra.mxu0 0.0
        %4183 = vmatprep.subr.mxu0 0.0
        %4184 = vmatpush1.msra.mxu0 0.0
        %4185 = vmatprep.subr.mxu0 0.0
        %4186 = vmatpush1.msra.mxu0 0.0
        %4187 = vmatprep.mubr.f32.mxu0 0.0
        %4188 = vmatmul.mubr.f32.gmra.mrb[0].mxu0 %v4115
        %v4189 = vpop.f32.mrb[0].mxu0
        %v4190 = vadd.f32 %v4112, %v4189
        %v4191 = vpop.f32.mrb[0].mxu0
        %4192 = vmatprep.mubr.f32.mxu0 0.0
        %4193 = vmatmul.mubr.f32.gmra.mrb[0].mxu0 %v4118
        %v4194 = vpop.f32.mrb[0].mxu0
        %v4195 = vadd.f32 %v4112, %v4194
        %v4196 = vpop.f32.mrb[0].mxu0
        %4197 = vmatprep.mubr.f32.mxu0 0.0
        %4198 = vmatmul.mubr.f32.gmra.mrb[0].mxu0 %v4121
        %v4199 = vpop.f32.mrb[0].mxu0
        %v4200 = vadd.f32 %v4112, %v4199
        %v4201 = vpop.f32.mrb[0].mxu0
        %4202 = vdwg.mxu0
        %s4203 = scalar_lea.vmem %s19, 128
        %v4204 = vld [vmem:[%s4203] sm:$0xff]
        %v4205 = vld [vmem:[%s4203 + $0x8] sm:$0xff]
        %v4206 = vld [vmem:[%s4203 + $0x10] sm:$0xff]
        %v4207 = vld [vmem:[%s4203 + $0x18] sm:$0xff]
        %s4208 = scalar_lea.vmem %s21, 4
        %v4209 = vld [vmem:[%s4208] sm:$0x1]
        %v4211 = vlaneseq
        %v4212 = vshrl.u32 %v4211, 7
        %v4213 = vsub.s32 0, %v4212
        %v4214 = vrot.slane %v4209, %v4213
        %4216 = vmatprep.subr.mxu0 0.0
        %4217 = vmatpush1.msra.mxu0 %v4204
        %4218 = vmatprep.subr.mxu0 0.0
        %4219 = vmatpush1.msra.mxu0 %v4205
        %4220 = vmatprep.subr.mxu0 0.0
        %4221 = vmatpush1.msra.mxu0 %v4206
        %4222 = vmatprep.subr.mxu0 0.0
        %4223 = vmatpush1.msra.mxu0 %v4207
        %4224 = vmatprep.subr.mxu0 0.0
        %4225 = vmatpush1.msra.mxu0 0.0
        %4226 = vmatprep.subr.mxu0 0.0
        %4227 = vmatpush1.msra.mxu0 0.0
        %4228 = vmatprep.subr.mxu0 0.0
        %4229 = vmatpush1.msra.mxu0 0.0
        %4230 = vmatprep.subr.mxu0 0.0
        %4231 = vmatpush1.msra.mxu0 0.0
        %4232 = vmatprep.subr.mxu0 0.0
        %4233 = vmatpush1.msra.mxu0 0.0
        %4234 = vmatprep.subr.mxu0 0.0
        %4235 = vmatpush1.msra.mxu0 0.0
        %4236 = vmatprep.subr.mxu0 0.0
        %4237 = vmatpush1.msra.mxu0 0.0
        %4238 = vmatprep.subr.mxu0 0.0
        %4239 = vmatpush1.msra.mxu0 0.0
        %4240 = vmatprep.subr.mxu0 0.0
        %4241 = vmatpush1.msra.mxu0 0.0
        %4242 = vmatprep.subr.mxu0 0.0
        %4243 = vmatpush1.msra.mxu0 0.0
        %4244 = vmatprep.subr.mxu0 0.0
        %4245 = vmatpush1.msra.mxu0 0.0
        %4246 = vmatprep.subr.mxu0 0.0
        %4247 = vmatpush1.msra.mxu0 0.0
        %4248 = vmatprep.subr.mxu0 0.0
        %4249 = vmatpush1.msra.mxu0 0.0
        %4250 = vmatprep.subr.mxu0 0.0
        %4251 = vmatpush1.msra.mxu0 0.0
        %4252 = vmatprep.subr.mxu0 0.0
        %4253 = vmatpush1.msra.mxu0 0.0
        %4254 = vmatprep.subr.mxu0 0.0
        %4255 = vmatpush1.msra.mxu0 0.0
        %4256 = vmatprep.subr.mxu0 0.0
        %4257 = vmatpush1.msra.mxu0 0.0
        %4258 = vmatprep.subr.mxu0 0.0
        %4259 = vmatpush1.msra.mxu0 0.0
        %4260 = vmatprep.subr.mxu0 0.0
        %4261 = vmatpush1.msra.mxu0 0.0
        %4262 = vmatprep.subr.mxu0 0.0
        %4263 = vmatpush1.msra.mxu0 0.0
        %4264 = vmatprep.subr.mxu0 0.0
        %4265 = vmatpush1.msra.mxu0 0.0
        %4266 = vmatprep.subr.mxu0 0.0
        %4267 = vmatpush1.msra.mxu0 0.0
        %4268 = vmatprep.subr.mxu0 0.0
        %4269 = vmatpush1.msra.mxu0 0.0
        %4270 = vmatprep.subr.mxu0 0.0
        %4271 = vmatpush1.msra.mxu0 0.0
        %4272 = vmatprep.subr.mxu0 0.0
        %4273 = vmatpush1.msra.mxu0 0.0
        %4274 = vmatprep.subr.mxu0 0.0
        %4275 = vmatpush1.msra.mxu0 0.0
        %4276 = vmatprep.subr.mxu0 0.0
        %4277 = vmatpush1.msra.mxu0 0.0
        %4278 = vmatprep.subr.mxu0 0.0
        %4279 = vmatpush1.msra.mxu0 0.0
        %4280 = vmatprep.mubr.f32.mxu0 0.0
        %4281 = vmatmul.mubr.f32.gmra.mrb[0].mxu0 %v4115
        %v4282 = vpop.f32.mrb[0].mxu0
        %v4283 = vadd.f32 %v4214, %v4282
        %v4284 = vpop.f32.mrb[0].mxu0
        %4285 = vmatprep.mubr.f32.mxu0 0.0
        %4286 = vmatmul.mubr.f32.gmra.mrb[0].mxu0 %v4118
        %v4287 = vpop.f32.mrb[0].mxu0
        %v4288 = vadd.f32 %v4214, %v4287
        %v4289 = vpop.f32.mrb[0].mxu0
        %4290 = vmatprep.mubr.f32.mxu0 0.0
        %4291 = vmatmul.mubr.f32.gmra.mrb[0].mxu0 %v4121
        %v4292 = vpop.f32.mrb[0].mxu0
        %v4293 = vadd.f32 %v4214, %v4292
        %v4294 = vpop.f32.mrb[0].mxu0
        %4295 = vdwg.mxu0
        %s4296 = scalar_lea.vmem %s23, 128
        %v4297 = vld [vmem:[%s4296] sm:$0xff]
        %v4298 = vld [vmem:[%s4296 + $0x8] sm:$0xff]
        %v4299 = vld [vmem:[%s4296 + $0x10] sm:$0xff]
        %v4300 = vld [vmem:[%s4296 + $0x18] sm:$0xff]
        %s4301 = scalar_lea.vmem %s25, 4
        %v4302 = vld [vmem:[%s4301] sm:$0x1]
        %v4304 = vlaneseq
        %v4305 = vshrl.u32 %v4304, 7
        %v4306 = vsub.s32 0, %v4305
        %v4307 = vrot.slane %v4302, %v4306
        %4309 = vmatprep.subr.mxu0 0.0
        %4310 = vmatpush1.msra.mxu0 %v4297
        %4311 = vmatprep.subr.mxu0 0.0
        %4312 = vmatpush1.msra.mxu0 %v4298
        %4313 = vmatprep.subr.mxu0 0.0
        %4314 = vmatpush1.msra.mxu0 %v4299
        %4315 = vmatprep.subr.mxu0 0.0
        %4316 = vmatpush1.msra.mxu0 %v4300
        %4317 = vmatprep.subr.mxu0 0.0
        %4318 = vmatpush1.msra.mxu0 0.0
        %4319 = vmatprep.subr.mxu0 0.0
        %4320 = vmatpush1.msra.mxu0 0.0
        %4321 = vmatprep.subr.mxu0 0.0
        %4322 = vmatpush1.msra.mxu0 0.0
        %4323 = vmatprep.subr.mxu0 0.0
        %4324 = vmatpush1.msra.mxu0 0.0
        %4325 = vmatprep.subr.mxu0 0.0
        %4326 = vmatpush1.msra.mxu0 0.0
        %4327 = vmatprep.subr.mxu0 0.0
        %4328 = vmatpush1.msra.mxu0 0.0
        %4329 = vmatprep.subr.mxu0 0.0
        %4330 = vmatpush1.msra.mxu0 0.0
        %4331 = vmatprep.subr.mxu0 0.0
        %4332 = vmatpush1.msra.mxu0 0.0
        %4333 = vmatprep.subr.mxu0 0.0
        %4334 = vmatpush1.msra.mxu0 0.0
        %4335 = vmatprep.subr.mxu0 0.0
        %4336 = vmatpush1.msra.mxu0 0.0
        %4337 = vmatprep.subr.mxu0 0.0
        %4338 = vmatpush1.msra.mxu0 0.0
        %4339 = vmatprep.subr.mxu0 0.0
        %4340 = vmatpush1.msra.mxu0 0.0
        %4341 = vmatprep.subr.mxu0 0.0
        %4342 = vmatpush1.msra.mxu0 0.0
        %4343 = vmatprep.subr.mxu0 0.0
        %4344 = vmatpush1.msra.mxu0 0.0
        %4345 = vmatprep.subr.mxu0 0.0
        %4346 = vmatpush1.msra.mxu0 0.0
        %4347 = vmatprep.subr.mxu0 0.0
        %4348 = vmatpush1.msra.mxu0 0.0
        %4349 = vmatprep.subr.mxu0 0.0
        %4350 = vmatpush1.msra.mxu0 0.0
        %4351 = vmatprep.subr.mxu0 0.0
        %4352 = vmatpush1.msra.mxu0 0.0
        %4353 = vmatprep.subr.mxu0 0.0
        %4354 = vmatpush1.msra.mxu0 0.0
        %4355 = vmatprep.subr.mxu0 0.0
        %4356 = vmatpush1.msra.mxu0 0.0
        %4357 = vmatprep.subr.mxu0 0.0
        %4358 = vmatpush1.msra.mxu0 0.0
        %4359 = vmatprep.subr.mxu0 0.0
        %4360 = vmatpush1.msra.mxu0 0.0
        %4361 = vmatprep.subr.mxu0 0.0
        %4362 = vmatpush1.msra.mxu0 0.0
        %4363 = vmatprep.subr.mxu0 0.0
        %4364 = vmatpush1.msra.mxu0 0.0
        %4365 = vmatprep.subr.mxu0 0.0
        %4366 = vmatpush1.msra.mxu0 0.0
        %4367 = vmatprep.subr.mxu0 0.0
        %4368 = vmatpush1.msra.mxu0 0.0
        %4369 = vmatprep.subr.mxu0 0.0
        %4370 = vmatpush1.msra.mxu0 0.0
        %4371 = vmatprep.subr.mxu0 0.0
        %4372 = vmatpush1.msra.mxu0 0.0
        %4373 = vmatprep.mubr.f32.mxu0 0.0
        %4374 = vmatmul.mubr.f32.gmra.mrb[0].mxu0 %v4115
        %v4375 = vpop.f32.mrb[0].mxu0
        %v4376 = vadd.f32 %v4307, %v4375
        %v4377 = vpop.f32.mrb[0].mxu0
        %4378 = vmatprep.mubr.f32.mxu0 0.0
        %4379 = vmatmul.mubr.f32.gmra.mrb[0].mxu0 %v4118
        %v4380 = vpop.f32.mrb[0].mxu0
        %v4381 = vadd.f32 %v4307, %v4380
        %v4382 = vpop.f32.mrb[0].mxu0
        %4383 = vmatprep.mubr.f32.mxu0 0.0
        %4384 = vmatmul.mubr.f32.gmra.mrb[0].mxu0 %v4121
        %v4385 = vpop.f32.mrb[0].mxu0
        %v4386 = vadd.f32 %v4307, %v4385
        %v4387 = vpop.f32.mrb[0].mxu0
        %4388 = vdwg.mxu0
        %v4390 = vsel %vm1361, %v4190, 0
        %v4393 = vsel %vm1361, %v4195, 0
        %v4396 = vsel %vm1361, %v4200, 0
        %v4399 = vsel %vm1361, %v4283, 0
        %v4402 = vsel %vm1361, %v4288, 0
        %v4405 = vsel %vm1361, %v4293, 0
        %4407 = vmatprep.subr.mxu0 0.0
        %4408 = vmatpush1.xpose.msra.mxu0 %v4399
        %4409 = vmatprep.subr.mxu0 0.0
        %4410 = vmatpush1.xpose.msra.mxu0 %v4402
        %4411 = vmatprep.subr.mxu0 0.0
        %4412 = vmatpush1.xpose.msra.mxu0 %v4405
        %4413 = vmatprep.subr.mxu0 0.0
        %4414 = vmatpush1.xpose.msra.mxu0 0.0
        %4415 = vmatprep.subr.mxu0 0.0
        %4416 = vmatpush1.xpose.msra.mxu0 0.0
        %4417 = vmatprep.subr.mxu0 0.0
        %4418 = vmatpush1.xpose.msra.mxu0 0.0
        %4419 = vmatprep.subr.mxu0 0.0
        %4420 = vmatpush1.xpose.msra.mxu0 0.0
        %4421 = vmatprep.subr.mxu0 0.0
        %4422 = vmatpush1.xpose.msra.mxu0 0.0
        %4423 = vmatprep.subr.mxu0 0.0
        %4424 = vmatpush1.xpose.msra.mxu0 0.0
        %4425 = vmatprep.subr.mxu0 0.0
        %4426 = vmatpush1.xpose.msra.mxu0 0.0
        %4427 = vmatprep.subr.mxu0 0.0
        %4428 = vmatpush1.xpose.msra.mxu0 0.0
        %4429 = vmatprep.subr.mxu0 0.0
        %4430 = vmatpush1.xpose.msra.mxu0 0.0
        %4431 = vmatprep.subr.mxu0 0.0
        %4432 = vmatpush1.xpose.msra.mxu0 0.0
        %4433 = vmatprep.subr.mxu0 0.0
        %4434 = vmatpush1.xpose.msra.mxu0 0.0
        %4435 = vmatprep.subr.mxu0 0.0
        %4436 = vmatpush1.xpose.msra.mxu0 0.0
        %4437 = vmatprep.subr.mxu0 0.0
        %4438 = vmatpush1.xpose.msra.mxu0 0.0
        %4439 = vmatprep.subr.mxu0 0.0
        %4440 = vmatpush1.xpose.msra.mxu0 0.0
        %4441 = vmatprep.subr.mxu0 0.0
        %4442 = vmatpush1.xpose.msra.mxu0 0.0
        %4443 = vmatprep.subr.mxu0 0.0
        %4444 = vmatpush1.xpose.msra.mxu0 0.0
        %4445 = vmatprep.subr.mxu0 0.0
        %4446 = vmatpush1.xpose.msra.mxu0 0.0
        %4447 = vmatprep.subr.mxu0 0.0
        %4448 = vmatpush1.xpose.msra.mxu0 0.0
        %4449 = vmatprep.subr.mxu0 0.0
        %4450 = vmatpush1.xpose.msra.mxu0 0.0
        %4451 = vmatprep.subr.mxu0 0.0
        %4452 = vmatpush1.xpose.msra.mxu0 0.0
        %4453 = vmatprep.subr.mxu0 0.0
        %4454 = vmatpush1.xpose.msra.mxu0 0.0
        %4455 = vmatprep.subr.mxu0 0.0
        %4456 = vmatpush1.xpose.msra.mxu0 0.0
        %4457 = vmatprep.subr.mxu0 0.0
        %4458 = vmatpush1.xpose.msra.mxu0 0.0
        %4459 = vmatprep.subr.mxu0 0.0
        %4460 = vmatpush1.xpose.msra.mxu0 0.0
        %4461 = vmatprep.subr.mxu0 0.0
        %4462 = vmatpush1.xpose.msra.mxu0 0.0
        %4463 = vmatprep.subr.mxu0 0.0
        %4464 = vmatpush1.xpose.msra.mxu0 0.0
        %4465 = vmatprep.subr.mxu0 0.0
        %4466 = vmatpush1.xpose.msra.mxu0 0.0
        %4467 = vmatprep.subr.mxu0 0.0
        %4468 = vmatpush1.xpose.msra.mxu0 0.0
        %4469 = vmatprep.subr.mxu0 0.0
        %4470 = vmatpush1.xpose.msra.mxu0 0.0
        %4471 = vmatprep.mubr.f32.mxu0 0.0
        %4472 = vmatmul.mubr.f32.gmra.mrb[0].mxu0 %v4390
        %v4473 = vpop.f32.mrb[0].mxu0
        %v4474 = vadd.f32 0.0, %v4473
        %v4475 = vpop.f32.mrb[0].mxu0
        %4476 = vmatprep.mubr.f32.mxu0 0.0
        %4477 = vmatmul.mubr.f32.gmra.mrb[0].mxu0 %v4393
        %v4478 = vpop.f32.mrb[0].mxu0
        %v4479 = vadd.f32 0.0, %v4478
        %v4480 = vpop.f32.mrb[0].mxu0
        %4481 = vmatprep.mubr.f32.mxu0 0.0
        %4482 = vmatmul.mubr.f32.gmra.mrb[0].mxu0 %v4396
        %v4483 = vpop.f32.mrb[0].mxu0
        %v4484 = vadd.f32 0.0, %v4483
        %v4485 = vpop.f32.mrb[0].mxu0
        %4486 = vdwg.mxu0
        %v4487 = vmul.f32 %v4474, 0.35355338
        %v4488 = vmul.f32 %v4479, 0.35355338
        %v4489 = vmul.f32 %v4484, 0.35355338
        %v4490 = vsel %vm1464, %v4487, -1e+30
        %v4491 = vsel %vm1464, %v4488, -1e+30
        %v4492 = vsel %vm1464, %v4489, -1e+30
        %v4493 = vsel %vm1468, %v4490, -inf
        %4494 = vmax.xlane.f32.xlu0 %v4493
        %v4495 = vpop.xlane.xlu0 %4494
        %v4496 = vsel %vm1468, %v4491, -inf
        %4497 = vmax.xlane.f32.xlu0 %v4496
        %v4498 = vpop.xlane.xlu0 %4497
        %v4499 = vsel %vm1468, %v4492, -inf
        %4500 = vmax.xlane.f32.xlu0 %v4499
        %v4501 = vpop.xlane.xlu0 %4500
        %v4502 = vsub.f32 %v4490, %v4495
        %v4503 = vsub.f32 %v4491, %v4498
        %v4504 = vsub.f32 %v4492, %v4501
        %v4505 = vmul.f32 %v4502, 1.442695
        %v4506 = vpow.pop %v4505
        %v4507 = vmul.f32 %v4503, 1.442695
        %v4508 = vpow.pop %v4507
        %v4509 = vmul.f32 %v4504, 1.442695
        %v4510 = vpow.pop %v4509
        %v4511 = vsel %vm1468, %v4506, 0.0
        %4512 = vadd.xlane.f32.xlu0 %v4511
        %v4513 = vpop.xlane.xlu0 %4512
        %v4514 = vsel %vm1468, %v4508, 0.0
        %4515 = vadd.xlane.f32.xlu0 %v4514
        %v4516 = vpop.xlane.xlu0 %4515
        %v4517 = vsel %vm1468, %v4510, 0.0
        %4518 = vadd.xlane.f32.xlu0 %v4517
        %v4519 = vpop.xlane.xlu0 %4518
        %v4520 = vrcp.pop %v4513
        %v4521 = vrcp.pop %v4516
        %v4522 = vrcp.pop %v4519
        %v4523 = vmul.f32 %v4506, %v4520
        %v4524 = vmul.f32 %v4508, %v4521
        %v4525 = vmul.f32 %v4510, %v4522
        %v4527 = vsel %vm1468, %v4523, 0
        %v4530 = vsel %vm1468, %v4524, 0
        %v4533 = vsel %vm1468, %v4525, 0
        %4535 = vmatprep.subr.mxu0 0.0
        %4536 = vmatpush1.msra.mxu0 %v4376
        %4537 = vmatprep.subr.mxu0 0.0
        %4538 = vmatpush1.msra.mxu0 %v4381
        %4539 = vmatprep.subr.mxu0 0.0
        %4540 = vmatpush1.msra.mxu0 %v4386
        %4541 = vmatprep.subr.mxu0 0.0
        %4542 = vmatpush1.msra.mxu0 0.0
        %4543 = vmatprep.subr.mxu0 0.0
        %4544 = vmatpush1.msra.mxu0 0.0
        %4545 = vmatprep.subr.mxu0 0.0
        %4546 = vmatpush1.msra.mxu0 0.0
        %4547 = vmatprep.subr.mxu0 0.0
        %4548 = vmatpush1.msra.mxu0 0.0
        %4549 = vmatprep.subr.mxu0 0.0
        %4550 = vmatpush1.msra.mxu0 0.0
        %4551 = vmatprep.subr.mxu0 0.0
        %4552 = vmatpush1.msra.mxu0 0.0
        %4553 = vmatprep.subr.mxu0 0.0
        %4554 = vmatpush1.msra.mxu0 0.0
        %4555 = vmatprep.subr.mxu0 0.0
        %4556 = vmatpush1.msra.mxu0 0.0
        %4557 = vmatprep.subr.mxu0 0.0
        %4558 = vmatpush1.msra.mxu0 0.0
        %4559 = vmatprep.subr.mxu0 0.0
        %4560 = vmatpush1.msra.mxu0 0.0
        %4561 = vmatprep.subr.mxu0 0.0
        %4562 = vmatpush1.msra.mxu0 0.0
        %4563 = vmatprep.subr.mxu0 0.0
        %4564 = vmatpush1.msra.mxu0 0.0
        %4565 = vmatprep.subr.mxu0 0.0
        %4566 = vmatpush1.msra.mxu0 0.0
        %4567 = vmatprep.subr.mxu0 0.0
        %4568 = vmatpush1.msra.mxu0 0.0
        %4569 = vmatprep.subr.mxu0 0.0
        %4570 = vmatpush1.msra.mxu0 0.0
        %4571 = vmatprep.subr.mxu0 0.0
        %4572 = vmatpush1.msra.mxu0 0.0
        %4573 = vmatprep.subr.mxu0 0.0
        %4574 = vmatpush1.msra.mxu0 0.0
        %4575 = vmatprep.subr.mxu0 0.0
        %4576 = vmatpush1.msra.mxu0 0.0
        %4577 = vmatprep.subr.mxu0 0.0
        %4578 = vmatpush1.msra.mxu0 0.0
        %4579 = vmatprep.subr.mxu0 0.0
        %4580 = vmatpush1.msra.mxu0 0.0
        %4581 = vmatprep.subr.mxu0 0.0
        %4582 = vmatpush1.msra.mxu0 0.0
        %4583 = vmatprep.subr.mxu0 0.0
        %4584 = vmatpush1.msra.mxu0 0.0
        %4585 = vmatprep.subr.mxu0 0.0
        %4586 = vmatpush1.msra.mxu0 0.0
        %4587 = vmatprep.subr.mxu0 0.0
        %4588 = vmatpush1.msra.mxu0 0.0
        %4589 = vmatprep.subr.mxu0 0.0
        %4590 = vmatpush1.msra.mxu0 0.0
        %4591 = vmatprep.subr.mxu0 0.0
        %4592 = vmatpush1.msra.mxu0 0.0
        %4593 = vmatprep.subr.mxu0 0.0
        %4594 = vmatpush1.msra.mxu0 0.0
        %4595 = vmatprep.subr.mxu0 0.0
        %4596 = vmatpush1.msra.mxu0 0.0
        %4597 = vmatprep.subr.mxu0 0.0
        %4598 = vmatpush1.msra.mxu0 0.0
        %4599 = vmatprep.mubr.f32.mxu0 0.0
        %4600 = vmatmul.mubr.f32.gmra.mrb[0].mxu0 %v4527
        %v4601 = vpop.f32.mrb[0].mxu0
        %v4602 = vadd.f32 0.0, %v4601
        %v4603 = vpop.f32.mrb[0].mxu0
        %4604 = vmatprep.mubr.f32.mxu0 0.0
        %4605 = vmatmul.mubr.f32.gmra.mrb[0].mxu0 %v4530
        %v4606 = vpop.f32.mrb[0].mxu0
        %v4607 = vadd.f32 0.0, %v4606
        %v4608 = vpop.f32.mrb[0].mxu0
        %4609 = vmatprep.mubr.f32.mxu0 0.0
        %4610 = vmatmul.mubr.f32.gmra.mrb[0].mxu0 %v4533
        %v4611 = vpop.f32.mrb[0].mxu0
        %v4612 = vadd.f32 0.0, %v4611
        %v4613 = vpop.f32.mrb[0].mxu0
        %4614 = vdwg.mxu0
        %s4615 = scalar_lea.vmem %s27, 32
        %v4616 = vld [vmem:[%s4615] sm:$0xff]
        %s4617 = scalar_lea.vmem %s15, 160
        %v4618 = vld [vmem:[%s4617] sm:$0xff]
        %v4619 = vld [vmem:[%s4617 + $0x8] sm:$0xff]
        %v4620 = vld [vmem:[%s4617 + $0x10] sm:$0xff]
        %v4621 = vld [vmem:[%s4617 + $0x18] sm:$0xff]
        %s4622 = scalar_lea.vmem %s17, 5
        %v4623 = vld [vmem:[%s4622] sm:$0x1]
        %v4625 = vlaneseq
        %v4626 = vshrl.u32 %v4625, 7
        %v4627 = vsub.s32 0, %v4626
        %v4628 = vrot.slane %v4623, %v4627
        %4630 = vmatprep.subr.mxu0 0.0
        %4631 = vmatpush1.msra.mxu0 %v4618
        %4632 = vmatprep.subr.mxu0 0.0
        %4633 = vmatpush1.msra.mxu0 %v4619
        %4634 = vmatprep.subr.mxu0 0.0
        %4635 = vmatpush1.msra.mxu0 %v4620
        %4636 = vmatprep.subr.mxu0 0.0
        %4637 = vmatpush1.msra.mxu0 %v4621
        %4638 = vmatprep.subr.mxu0 0.0
        %4639 = vmatpush1.msra.mxu0 0.0
        %4640 = vmatprep.subr.mxu0 0.0
        %4641 = vmatpush1.msra.mxu0 0.0
        %4642 = vmatprep.subr.mxu0 0.0
        %4643 = vmatpush1.msra.mxu0 0.0
        %4644 = vmatprep.subr.mxu0 0.0
        %4645 = vmatpush1.msra.mxu0 0.0
        %4646 = vmatprep.subr.mxu0 0.0
        %4647 = vmatpush1.msra.mxu0 0.0
        %4648 = vmatprep.subr.mxu0 0.0
        %4649 = vmatpush1.msra.mxu0 0.0
        %4650 = vmatprep.subr.mxu0 0.0
        %4651 = vmatpush1.msra.mxu0 0.0
        %4652 = vmatprep.subr.mxu0 0.0
        %4653 = vmatpush1.msra.mxu0 0.0
        %4654 = vmatprep.subr.mxu0 0.0
        %4655 = vmatpush1.msra.mxu0 0.0
        %4656 = vmatprep.subr.mxu0 0.0
        %4657 = vmatpush1.msra.mxu0 0.0
        %4658 = vmatprep.subr.mxu0 0.0
        %4659 = vmatpush1.msra.mxu0 0.0
        %4660 = vmatprep.subr.mxu0 0.0
        %4661 = vmatpush1.msra.mxu0 0.0
        %4662 = vmatprep.subr.mxu0 0.0
        %4663 = vmatpush1.msra.mxu0 0.0
        %4664 = vmatprep.subr.mxu0 0.0
        %4665 = vmatpush1.msra.mxu0 0.0
        %4666 = vmatprep.subr.mxu0 0.0
        %4667 = vmatpush1.msra.mxu0 0.0
        %4668 = vmatprep.subr.mxu0 0.0
        %4669 = vmatpush1.msra.mxu0 0.0
        %4670 = vmatprep.subr.mxu0 0.0
        %4671 = vmatpush1.msra.mxu0 0.0
        %4672 = vmatprep.subr.mxu0 0.0
        %4673 = vmatpush1.msra.mxu0 0.0
        %4674 = vmatprep.subr.mxu0 0.0
        %4675 = vmatpush1.msra.mxu0 0.0
        %4676 = vmatprep.subr.mxu0 0.0
        %4677 = vmatpush1.msra.mxu0 0.0
        %4678 = vmatprep.subr.mxu0 0.0
        %4679 = vmatpush1.msra.mxu0 0.0
        %4680 = vmatprep.subr.mxu0 0.0
        %4681 = vmatpush1.msra.mxu0 0.0
        %4682 = vmatprep.subr.mxu0 0.0
        %4683 = vmatpush1.msra.mxu0 0.0
        %4684 = vmatprep.subr.mxu0 0.0
        %4685 = vmatpush1.msra.mxu0 0.0
        %4686 = vmatprep.subr.mxu0 0.0
        %4687 = vmatpush1.msra.mxu0 0.0
        %4688 = vmatprep.subr.mxu0 0.0
        %4689 = vmatpush1.msra.mxu0 0.0
        %4690 = vmatprep.subr.mxu0 0.0
        %4691 = vmatpush1.msra.mxu0 0.0
        %4692 = vmatprep.subr.mxu0 0.0
        %4693 = vmatpush1.msra.mxu0 0.0
        %4694 = vmatprep.mubr.f32.mxu0 0.0
        %4695 = vmatmul.mubr.f32.gmra.mrb[0].mxu0 %v4115
        %v4696 = vpop.f32.mrb[0].mxu0
        %v4697 = vadd.f32 %v4628, %v4696
        %v4698 = vpop.f32.mrb[0].mxu0
        %4699 = vmatprep.mubr.f32.mxu0 0.0
        %4700 = vmatmul.mubr.f32.gmra.mrb[0].mxu0 %v4118
        %v4701 = vpop.f32.mrb[0].mxu0
        %v4702 = vadd.f32 %v4628, %v4701
        %v4703 = vpop.f32.mrb[0].mxu0
        %4704 = vmatprep.mubr.f32.mxu0 0.0
        %4705 = vmatmul.mubr.f32.gmra.mrb[0].mxu0 %v4121
        %v4706 = vpop.f32.mrb[0].mxu0
        %v4707 = vadd.f32 %v4628, %v4706
        %v4708 = vpop.f32.mrb[0].mxu0
        %4709 = vdwg.mxu0
        %s4710 = scalar_lea.vmem %s19, 160
        %v4711 = vld [vmem:[%s4710] sm:$0xff]
        %v4712 = vld [vmem:[%s4710 + $0x8] sm:$0xff]
        %v4713 = vld [vmem:[%s4710 + $0x10] sm:$0xff]
        %v4714 = vld [vmem:[%s4710 + $0x18] sm:$0xff]
        %s4715 = scalar_lea.vmem %s21, 5
        %v4716 = vld [vmem:[%s4715] sm:$0x1]
        %v4718 = vlaneseq
        %v4719 = vshrl.u32 %v4718, 7
        %v4720 = vsub.s32 0, %v4719
        %v4721 = vrot.slane %v4716, %v4720
        %4723 = vmatprep.subr.mxu0 0.0
        %4724 = vmatpush1.msra.mxu0 %v4711
        %4725 = vmatprep.subr.mxu0 0.0
        %4726 = vmatpush1.msra.mxu0 %v4712
        %4727 = vmatprep.subr.mxu0 0.0
        %4728 = vmatpush1.msra.mxu0 %v4713
        %4729 = vmatprep.subr.mxu0 0.0
        %4730 = vmatpush1.msra.mxu0 %v4714
        %4731 = vmatprep.subr.mxu0 0.0
        %4732 = vmatpush1.msra.mxu0 0.0
        %4733 = vmatprep.subr.mxu0 0.0
        %4734 = vmatpush1.msra.mxu0 0.0
        %4735 = vmatprep.subr.mxu0 0.0
        %4736 = vmatpush1.msra.mxu0 0.0
        %4737 = vmatprep.subr.mxu0 0.0
        %4738 = vmatpush1.msra.mxu0 0.0
        %4739 = vmatprep.subr.mxu0 0.0
        %4740 = vmatpush1.msra.mxu0 0.0
        %4741 = vmatprep.subr.mxu0 0.0
        %4742 = vmatpush1.msra.mxu0 0.0
        %4743 = vmatprep.subr.mxu0 0.0
        %4744 = vmatpush1.msra.mxu0 0.0
        %4745 = vmatprep.subr.mxu0 0.0
        %4746 = vmatpush1.msra.mxu0 0.0
        %4747 = vmatprep.subr.mxu0 0.0
        %4748 = vmatpush1.msra.mxu0 0.0
        %4749 = vmatprep.subr.mxu0 0.0
        %4750 = vmatpush1.msra.mxu0 0.0
        %4751 = vmatprep.subr.mxu0 0.0
        %4752 = vmatpush1.msra.mxu0 0.0
        %4753 = vmatprep.subr.mxu0 0.0
        %4754 = vmatpush1.msra.mxu0 0.0
        %4755 = vmatprep.subr.mxu0 0.0
        %4756 = vmatpush1.msra.mxu0 0.0
        %4757 = vmatprep.subr.mxu0 0.0
        %4758 = vmatpush1.msra.mxu0 0.0
        %4759 = vmatprep.subr.mxu0 0.0
        %4760 = vmatpush1.msra.mxu0 0.0
        %4761 = vmatprep.subr.mxu0 0.0
        %4762 = vmatpush1.msra.mxu0 0.0
        %4763 = vmatprep.subr.mxu0 0.0
        %4764 = vmatpush1.msra.mxu0 0.0
        %4765 = vmatprep.subr.mxu0 0.0
        %4766 = vmatpush1.msra.mxu0 0.0
        %4767 = vmatprep.subr.mxu0 0.0
        %4768 = vmatpush1.msra.mxu0 0.0
        %4769 = vmatprep.subr.mxu0 0.0
        %4770 = vmatpush1.msra.mxu0 0.0
        %4771 = vmatprep.subr.mxu0 0.0
        %4772 = vmatpush1.msra.mxu0 0.0
        %4773 = vmatprep.subr.mxu0 0.0
        %4774 = vmatpush1.msra.mxu0 0.0
        %4775 = vmatprep.subr.mxu0 0.0
        %4776 = vmatpush1.msra.mxu0 0.0
        %4777 = vmatprep.subr.mxu0 0.0
        %4778 = vmatpush1.msra.mxu0 0.0
        %4779 = vmatprep.subr.mxu0 0.0
        %4780 = vmatpush1.msra.mxu0 0.0
        %4781 = vmatprep.subr.mxu0 0.0
        %4782 = vmatpush1.msra.mxu0 0.0
        %4783 = vmatprep.subr.mxu0 0.0
        %4784 = vmatpush1.msra.mxu0 0.0
        %4785 = vmatprep.subr.mxu0 0.0
        %4786 = vmatpush1.msra.mxu0 0.0
        %4787 = vmatprep.mubr.f32.mxu0 0.0
        %4788 = vmatmul.mubr.f32.gmra.mrb[0].mxu0 %v4115
        %v4789 = vpop.f32.mrb[0].mxu0
        %v4790 = vadd.f32 %v4721, %v4789
        %v4791 = vpop.f32.mrb[0].mxu0
        %4792 = vmatprep.mubr.f32.mxu0 0.0
        %4793 = vmatmul.mubr.f32.gmra.mrb[0].mxu0 %v4118
        %v4794 = vpop.f32.mrb[0].mxu0
        %v4795 = vadd.f32 %v4721, %v4794
        %v4796 = vpop.f32.mrb[0].mxu0
        %4797 = vmatprep.mubr.f32.mxu0 0.0
        %4798 = vmatmul.mubr.f32.gmra.mrb[0].mxu0 %v4121
        %v4799 = vpop.f32.mrb[0].mxu0
        %v4800 = vadd.f32 %v4721, %v4799
        %v4801 = vpop.f32.mrb[0].mxu0
        %4802 = vdwg.mxu0
        %s4803 = scalar_lea.vmem %s23, 160
        %v4804 = vld [vmem:[%s4803] sm:$0xff]
        %v4805 = vld [vmem:[%s4803 + $0x8] sm:$0xff]
        %v4806 = vld [vmem:[%s4803 + $0x10] sm:$0xff]
        %v4807 = vld [vmem:[%s4803 + $0x18] sm:$0xff]
        %s4808 = scalar_lea.vmem %s25, 5
        %v4809 = vld [vmem:[%s4808] sm:$0x1]
        %v4811 = vlaneseq
        %v4812 = vshrl.u32 %v4811, 7
        %v4813 = vsub.s32 0, %v4812
        %v4814 = vrot.slane %v4809, %v4813
        %4816 = vmatprep.subr.mxu0 0.0
        %4817 = vmatpush1.msra.mxu0 %v4804
        %4818 = vmatprep.subr.mxu0 0.0
        %4819 = vmatpush1.msra.mxu0 %v4805
        %4820 = vmatprep.subr.mxu0 0.0
        %4821 = vmatpush1.msra.mxu0 %v4806
        %4822 = vmatprep.subr.mxu0 0.0
        %4823 = vmatpush1.msra.mxu0 %v4807
        %4824 = vmatprep.subr.mxu0 0.0
        %4825 = vmatpush1.msra.mxu0 0.0
        %4826 = vmatprep.subr.mxu0 0.0
        %4827 = vmatpush1.msra.mxu0 0.0
        %4828 = vmatprep.subr.mxu0 0.0
        %4829 = vmatpush1.msra.mxu0 0.0
        %4830 = vmatprep.subr.mxu0 0.0
        %4831 = vmatpush1.msra.mxu0 0.0
        %4832 = vmatprep.subr.mxu0 0.0
        %4833 = vmatpush1.msra.mxu0 0.0
        %4834 = vmatprep.subr.mxu0 0.0
        %4835 = vmatpush1.msra.mxu0 0.0
        %4836 = vmatprep.subr.mxu0 0.0
        %4837 = vmatpush1.msra.mxu0 0.0
        %4838 = vmatprep.subr.mxu0 0.0
        %4839 = vmatpush1.msra.mxu0 0.0
        %4840 = vmatprep.subr.mxu0 0.0
        %4841 = vmatpush1.msra.mxu0 0.0
        %4842 = vmatprep.subr.mxu0 0.0
        %4843 = vmatpush1.msra.mxu0 0.0
        %4844 = vmatprep.subr.mxu0 0.0
        %4845 = vmatpush1.msra.mxu0 0.0
        %4846 = vmatprep.subr.mxu0 0.0
        %4847 = vmatpush1.msra.mxu0 0.0
        %4848 = vmatprep.subr.mxu0 0.0
        %4849 = vmatpush1.msra.mxu0 0.0
        %4850 = vmatprep.subr.mxu0 0.0
        %4851 = vmatpush1.msra.mxu0 0.0
        %4852 = vmatprep.subr.mxu0 0.0
        %4853 = vmatpush1.msra.mxu0 0.0
        %4854 = vmatprep.subr.mxu0 0.0
        %4855 = vmatpush1.msra.mxu0 0.0
        %4856 = vmatprep.subr.mxu0 0.0
        %4857 = vmatpush1.msra.mxu0 0.0
        %4858 = vmatprep.subr.mxu0 0.0
        %4859 = vmatpush1.msra.mxu0 0.0
        %4860 = vmatprep.subr.mxu0 0.0
        %4861 = vmatpush1.msra.mxu0 0.0
        %4862 = vmatprep.subr.mxu0 0.0
        %4863 = vmatpush1.msra.mxu0 0.0
        %4864 = vmatprep.subr.mxu0 0.0
        %4865 = vmatpush1.msra.mxu0 0.0
        %4866 = vmatprep.subr.mxu0 0.0
        %4867 = vmatpush1.msra.mxu0 0.0
        %4868 = vmatprep.subr.mxu0 0.0
        %4869 = vmatpush1.msra.mxu0 0.0
        %4870 = vmatprep.subr.mxu0 0.0
        %4871 = vmatpush1.msra.mxu0 0.0
        %4872 = vmatprep.subr.mxu0 0.0
        %4873 = vmatpush1.msra.mxu0 0.0
        %4874 = vmatprep.subr.mxu0 0.0
        %4875 = vmatpush1.msra.mxu0 0.0
        %4876 = vmatprep.subr.mxu0 0.0
        %4877 = vmatpush1.msra.mxu0 0.0
        %4878 = vmatprep.subr.mxu0 0.0
        %4879 = vmatpush1.msra.mxu0 0.0
        %4880 = vmatprep.mubr.f32.mxu0 0.0
        %4881 = vmatmul.mubr.f32.gmra.mrb[0].mxu0 %v4115
        %v4882 = vpop.f32.mrb[0].mxu0
        %v4883 = vadd.f32 %v4814, %v4882
        %v4884 = vpop.f32.mrb[0].mxu0
        %4885 = vmatprep.mubr.f32.mxu0 0.0
        %4886 = vmatmul.mubr.f32.gmra.mrb[0].mxu0 %v4118
        %v4887 = vpop.f32.mrb[0].mxu0
        %v4888 = vadd.f32 %v4814, %v4887
        %v4889 = vpop.f32.mrb[0].mxu0
        %4890 = vmatprep.mubr.f32.mxu0 0.0
        %4891 = vmatmul.mubr.f32.gmra.mrb[0].mxu0 %v4121
        %v4892 = vpop.f32.mrb[0].mxu0
        %v4893 = vadd.f32 %v4814, %v4892
        %v4894 = vpop.f32.mrb[0].mxu0
        %4895 = vdwg.mxu0
        %v4897 = vsel %vm1361, %v4697, 0
        %v4900 = vsel %vm1361, %v4702, 0
        %v4903 = vsel %vm1361, %v4707, 0
        %v4906 = vsel %vm1361, %v4790, 0
        %v4909 = vsel %vm1361, %v4795, 0
        %v4912 = vsel %vm1361, %v4800, 0
        %4914 = vmatprep.subr.mxu0 0.0
        %4915 = vmatpush1.xpose.msra.mxu0 %v4906
        %4916 = vmatprep.subr.mxu0 0.0
        %4917 = vmatpush1.xpose.msra.mxu0 %v4909
        %4918 = vmatprep.subr.mxu0 0.0
        %4919 = vmatpush1.xpose.msra.mxu0 %v4912
        %4920 = vmatprep.subr.mxu0 0.0
        %4921 = vmatpush1.xpose.msra.mxu0 0.0
        %4922 = vmatprep.subr.mxu0 0.0
        %4923 = vmatpush1.xpose.msra.mxu0 0.0
        %4924 = vmatprep.subr.mxu0 0.0
        %4925 = vmatpush1.xpose.msra.mxu0 0.0
        %4926 = vmatprep.subr.mxu0 0.0
        %4927 = vmatpush1.xpose.msra.mxu0 0.0
        %4928 = vmatprep.subr.mxu0 0.0
        %4929 = vmatpush1.xpose.msra.mxu0 0.0
        %4930 = vmatprep.subr.mxu0 0.0
        %4931 = vmatpush1.xpose.msra.mxu0 0.0
        %4932 = vmatprep.subr.mxu0 0.0
        %4933 = vmatpush1.xpose.msra.mxu0 0.0
        %4934 = vmatprep.subr.mxu0 0.0
        %4935 = vmatpush1.xpose.msra.mxu0 0.0
        %4936 = vmatprep.subr.mxu0 0.0
        %4937 = vmatpush1.xpose.msra.mxu0 0.0
        %4938 = vmatprep.subr.mxu0 0.0
        %4939 = vmatpush1.xpose.msra.mxu0 0.0
        %4940 = vmatprep.subr.mxu0 0.0
        %4941 = vmatpush1.xpose.msra.mxu0 0.0
        %4942 = vmatprep.subr.mxu0 0.0
        %4943 = vmatpush1.xpose.msra.mxu0 0.0
        %4944 = vmatprep.subr.mxu0 0.0
        %4945 = vmatpush1.xpose.msra.mxu0 0.0
        %4946 = vmatprep.subr.mxu0 0.0
        %4947 = vmatpush1.xpose.msra.mxu0 0.0
        %4948 = vmatprep.subr.mxu0 0.0
        %4949 = vmatpush1.xpose.msra.mxu0 0.0
        %4950 = vmatprep.subr.mxu0 0.0
        %4951 = vmatpush1.xpose.msra.mxu0 0.0
        %4952 = vmatprep.subr.mxu0 0.0
        %4953 = vmatpush1.xpose.msra.mxu0 0.0
        %4954 = vmatprep.subr.mxu0 0.0
        %4955 = vmatpush1.xpose.msra.mxu0 0.0
        %4956 = vmatprep.subr.mxu0 0.0
        %4957 = vmatpush1.xpose.msra.mxu0 0.0
        %4958 = vmatprep.subr.mxu0 0.0
        %4959 = vmatpush1.xpose.msra.mxu0 0.0
        %4960 = vmatprep.subr.mxu0 0.0
        %4961 = vmatpush1.xpose.msra.mxu0 0.0
        %4962 = vmatprep.subr.mxu0 0.0
        %4963 = vmatpush1.xpose.msra.mxu0 0.0
        %4964 = vmatprep.subr.mxu0 0.0
        %4965 = vmatpush1.xpose.msra.mxu0 0.0
        %4966 = vmatprep.subr.mxu0 0.0
        %4967 = vmatpush1.xpose.msra.mxu0 0.0
        %4968 = vmatprep.subr.mxu0 0.0
        %4969 = vmatpush1.xpose.msra.mxu0 0.0
        %4970 = vmatprep.subr.mxu0 0.0
        %4971 = vmatpush1.xpose.msra.mxu0 0.0
        %4972 = vmatprep.subr.mxu0 0.0
        %4973 = vmatpush1.xpose.msra.mxu0 0.0
        %4974 = vmatprep.subr.mxu0 0.0
        %4975 = vmatpush1.xpose.msra.mxu0 0.0
        %4976 = vmatprep.subr.mxu0 0.0
        %4977 = vmatpush1.xpose.msra.mxu0 0.0
        %4978 = vmatprep.mubr.f32.mxu0 0.0
        %4979 = vmatmul.mubr.f32.gmra.mrb[0].mxu0 %v4897
        %v4980 = vpop.f32.mrb[0].mxu0
        %v4981 = vadd.f32 0.0, %v4980
        %v4982 = vpop.f32.mrb[0].mxu0
        %4983 = vmatprep.mubr.f32.mxu0 0.0
        %4984 = vmatmul.mubr.f32.gmra.mrb[0].mxu0 %v4900
        %v4985 = vpop.f32.mrb[0].mxu0
        %v4986 = vadd.f32 0.0, %v4985
        %v4987 = vpop.f32.mrb[0].mxu0
        %4988 = vmatprep.mubr.f32.mxu0 0.0
        %4989 = vmatmul.mubr.f32.gmra.mrb[0].mxu0 %v4903
        %v4990 = vpop.f32.mrb[0].mxu0
        %v4991 = vadd.f32 0.0, %v4990
        %v4992 = vpop.f32.mrb[0].mxu0
        %4993 = vdwg.mxu0
        %v4994 = vmul.f32 %v4981, 0.35355338
        %v4995 = vmul.f32 %v4986, 0.35355338
        %v4996 = vmul.f32 %v4991, 0.35355338
        %v4997 = vsel %vm1464, %v4994, -1e+30
        %v4998 = vsel %vm1464, %v4995, -1e+30
        %v4999 = vsel %vm1464, %v4996, -1e+30
        %v5000 = vsel %vm1468, %v4997, -inf
        %5001 = vmax.xlane.f32.xlu0 %v5000
        %v5002 = vpop.xlane.xlu0 %5001
        %v5003 = vsel %vm1468, %v4998, -inf
        %5004 = vmax.xlane.f32.xlu0 %v5003
        %v5005 = vpop.xlane.xlu0 %5004
        %v5006 = vsel %vm1468, %v4999, -inf
        %5007 = vmax.xlane.f32.xlu0 %v5006
        %v5008 = vpop.xlane.xlu0 %5007
        %v5009 = vsub.f32 %v4997, %v5002
        %v5010 = vsub.f32 %v4998, %v5005
        %v5011 = vsub.f32 %v4999, %v5008
        %v5012 = vmul.f32 %v5009, 1.442695
        %v5013 = vpow.pop %v5012
        %v5014 = vmul.f32 %v5010, 1.442695
        %v5015 = vpow.pop %v5014
        %v5016 = vmul.f32 %v5011, 1.442695
        %v5017 = vpow.pop %v5016
        %v5018 = vsel %vm1468, %v5013, 0.0
        %5019 = vadd.xlane.f32.xlu0 %v5018
        %v5020 = vpop.xlane.xlu0 %5019
        %v5021 = vsel %vm1468, %v5015, 0.0
        %5022 = vadd.xlane.f32.xlu0 %v5021
        %v5023 = vpop.xlane.xlu0 %5022
        %v5024 = vsel %vm1468, %v5017, 0.0
        %5025 = vadd.xlane.f32.xlu0 %v5024
        %v5026 = vpop.xlane.xlu0 %5025
        %v5027 = vrcp.pop %v5020
        %v5028 = vrcp.pop %v5023
        %v5029 = vrcp.pop %v5026
        %v5030 = vmul.f32 %v5013, %v5027
        %v5031 = vmul.f32 %v5015, %v5028
        %v5032 = vmul.f32 %v5017, %v5029
        %v5034 = vsel %vm1468, %v5030, 0
        %v5037 = vsel %vm1468, %v5031, 0
        %v5040 = vsel %vm1468, %v5032, 0
        %5042 = vmatprep.subr.mxu0 0.0
        %5043 = vmatpush1.msra.mxu0 %v4883
        %5044 = vmatprep.subr.mxu0 0.0
        %5045 = vmatpush1.msra.mxu0 %v4888
        %5046 = vmatprep.subr.mxu0 0.0
        %5047 = vmatpush1.msra.mxu0 %v4893
        %5048 = vmatprep.subr.mxu0 0.0
        %5049 = vmatpush1.msra.mxu0 0.0
        %5050 = vmatprep.subr.mxu0 0.0
        %5051 = vmatpush1.msra.mxu0 0.0
        %5052 = vmatprep.subr.mxu0 0.0
        %5053 = vmatpush1.msra.mxu0 0.0
        %5054 = vmatprep.subr.mxu0 0.0
        %5055 = vmatpush1.msra.mxu0 0.0
        %5056 = vmatprep.subr.mxu0 0.0
        %5057 = vmatpush1.msra.mxu0 0.0
        %5058 = vmatprep.subr.mxu0 0.0
        %5059 = vmatpush1.msra.mxu0 0.0
        %5060 = vmatprep.subr.mxu0 0.0
        %5061 = vmatpush1.msra.mxu0 0.0
        %5062 = vmatprep.subr.mxu0 0.0
        %5063 = vmatpush1.msra.mxu0 0.0
        %5064 = vmatprep.subr.mxu0 0.0
        %5065 = vmatpush1.msra.mxu0 0.0
        %5066 = vmatprep.subr.mxu0 0.0
        %5067 = vmatpush1.msra.mxu0 0.0
        %5068 = vmatprep.subr.mxu0 0.0
        %5069 = vmatpush1.msra.mxu0 0.0
        %5070 = vmatprep.subr.mxu0 0.0
        %5071 = vmatpush1.msra.mxu0 0.0
        %5072 = vmatprep.subr.mxu0 0.0
        %5073 = vmatpush1.msra.mxu0 0.0
        %5074 = vmatprep.subr.mxu0 0.0
        %5075 = vmatpush1.msra.mxu0 0.0
        %5076 = vmatprep.subr.mxu0 0.0
        %5077 = vmatpush1.msra.mxu0 0.0
        %5078 = vmatprep.subr.mxu0 0.0
        %5079 = vmatpush1.msra.mxu0 0.0
        %5080 = vmatprep.subr.mxu0 0.0
        %5081 = vmatpush1.msra.mxu0 0.0
        %5082 = vmatprep.subr.mxu0 0.0
        %5083 = vmatpush1.msra.mxu0 0.0
        %5084 = vmatprep.subr.mxu0 0.0
        %5085 = vmatpush1.msra.mxu0 0.0
        %5086 = vmatprep.subr.mxu0 0.0
        %5087 = vmatpush1.msra.mxu0 0.0
        %5088 = vmatprep.subr.mxu0 0.0
        %5089 = vmatpush1.msra.mxu0 0.0
        %5090 = vmatprep.subr.mxu0 0.0
        %5091 = vmatpush1.msra.mxu0 0.0
        %5092 = vmatprep.subr.mxu0 0.0
        %5093 = vmatpush1.msra.mxu0 0.0
        %5094 = vmatprep.subr.mxu0 0.0
        %5095 = vmatpush1.msra.mxu0 0.0
        %5096 = vmatprep.subr.mxu0 0.0
        %5097 = vmatpush1.msra.mxu0 0.0
        %5098 = vmatprep.subr.mxu0 0.0
        %5099 = vmatpush1.msra.mxu0 0.0
        %5100 = vmatprep.subr.mxu0 0.0
        %5101 = vmatpush1.msra.mxu0 0.0
        %5102 = vmatprep.subr.mxu0 0.0
        %5103 = vmatpush1.msra.mxu0 0.0
        %5104 = vmatprep.subr.mxu0 0.0
        %5105 = vmatpush1.msra.mxu0 0.0
        %5106 = vmatprep.mubr.f32.mxu0 0.0
        %5107 = vmatmul.mubr.f32.gmra.mrb[0].mxu0 %v5034
        %v5108 = vpop.f32.mrb[0].mxu0
        %v5109 = vadd.f32 0.0, %v5108
        %v5110 = vpop.f32.mrb[0].mxu0
        %5111 = vmatprep.mubr.f32.mxu0 0.0
        %5112 = vmatmul.mubr.f32.gmra.mrb[0].mxu0 %v5037
        %v5113 = vpop.f32.mrb[0].mxu0
        %v5114 = vadd.f32 0.0, %v5113
        %v5115 = vpop.f32.mrb[0].mxu0
        %5116 = vmatprep.mubr.f32.mxu0 0.0
        %5117 = vmatmul.mubr.f32.gmra.mrb[0].mxu0 %v5040
        %v5118 = vpop.f32.mrb[0].mxu0
        %v5119 = vadd.f32 0.0, %v5118
        %v5120 = vpop.f32.mrb[0].mxu0
        %5121 = vdwg.mxu0
        %s5122 = scalar_lea.vmem %s27, 40
        %v5123 = vld [vmem:[%s5122] sm:$0xff]
        %v5125 = vsel %vm1361, %v5109, 0
        %v5128 = vsel %vm1361, %v5114, 0
        %v5131 = vsel %vm1361, %v5119, 0
        %5133 = vmatprep.subr.mxu0 0.0
        %5134 = vmatpush1.msra.mxu0 %v5123
        %5135 = vmatprep.subr.mxu0 0.0
        %5136 = vmatpush1.msra.mxu0 0.0
        %5137 = vmatprep.subr.mxu0 0.0
        %5138 = vmatpush1.msra.mxu0 0.0
        %5139 = vmatprep.subr.mxu0 0.0
        %5140 = vmatpush1.msra.mxu0 0.0
        %5141 = vmatprep.subr.mxu0 0.0
        %5142 = vmatpush1.msra.mxu0 0.0
        %5143 = vmatprep.subr.mxu0 0.0
        %5144 = vmatpush1.msra.mxu0 0.0
        %5145 = vmatprep.subr.mxu0 0.0
        %5146 = vmatpush1.msra.mxu0 0.0
        %5147 = vmatprep.subr.mxu0 0.0
        %5148 = vmatpush1.msra.mxu0 0.0
        %5149 = vmatprep.subr.mxu0 0.0
        %5150 = vmatpush1.msra.mxu0 0.0
        %5151 = vmatprep.subr.mxu0 0.0
        %5152 = vmatpush1.msra.mxu0 0.0
        %5153 = vmatprep.subr.mxu0 0.0
        %5154 = vmatpush1.msra.mxu0 0.0
        %5155 = vmatprep.subr.mxu0 0.0
        %5156 = vmatpush1.msra.mxu0 0.0
        %5157 = vmatprep.subr.mxu0 0.0
        %5158 = vmatpush1.msra.mxu0 0.0
        %5159 = vmatprep.subr.mxu0 0.0
        %5160 = vmatpush1.msra.mxu0 0.0
        %5161 = vmatprep.subr.mxu0 0.0
        %5162 = vmatpush1.msra.mxu0 0.0
        %5163 = vmatprep.subr.mxu0 0.0
        %5164 = vmatpush1.msra.mxu0 0.0
        %5165 = vmatprep.subr.mxu0 0.0
        %5166 = vmatpush1.msra.mxu0 0.0
        %5167 = vmatprep.subr.mxu0 0.0
        %5168 = vmatpush1.msra.mxu0 0.0
        %5169 = vmatprep.subr.mxu0 0.0
        %5170 = vmatpush1.msra.mxu0 0.0
        %5171 = vmatprep.subr.mxu0 0.0
        %5172 = vmatpush1.msra.mxu0 0.0
        %5173 = vmatprep.subr.mxu0 0.0
        %5174 = vmatpush1.msra.mxu0 0.0
        %5175 = vmatprep.subr.mxu0 0.0
        %5176 = vmatpush1.msra.mxu0 0.0
        %5177 = vmatprep.subr.mxu0 0.0
        %5178 = vmatpush1.msra.mxu0 0.0
        %5179 = vmatprep.subr.mxu0 0.0
        %5180 = vmatpush1.msra.mxu0 0.0
        %5181 = vmatprep.subr.mxu0 0.0
        %5182 = vmatpush1.msra.mxu0 0.0
        %5183 = vmatprep.subr.mxu0 0.0
        %5184 = vmatpush1.msra.mxu0 0.0
        %5185 = vmatprep.subr.mxu0 0.0
        %5186 = vmatpush1.msra.mxu0 0.0
        %5187 = vmatprep.subr.mxu0 0.0
        %5188 = vmatpush1.msra.mxu0 0.0
        %5189 = vmatprep.subr.mxu0 0.0
        %5190 = vmatpush1.msra.mxu0 0.0
        %5191 = vmatprep.subr.mxu0 0.0
        %5192 = vmatpush1.msra.mxu0 0.0
        %5193 = vmatprep.subr.mxu0 0.0
        %5194 = vmatpush1.msra.mxu0 0.0
        %5195 = vmatprep.subr.mxu0 0.0
        %5196 = vmatpush1.msra.mxu0 0.0
        %5197 = vmatprep.mubr.f32.mxu0 0.0
        %5198 = vmatmul.mubr.f32.gmra.mrb[0].mxu0 %v5125
        %v5199 = vpop.f32.mrb[0].mxu0
        %v5200 = vadd.f32 0.0, %v5199
        %v5201 = vpop.f32.mrb[0].mxu0
        %5202 = vmatprep.mubr.f32.mxu0 0.0
        %5203 = vmatmul.mubr.f32.gmra.mrb[0].mxu0 %v5128
        %v5204 = vpop.f32.mrb[0].mxu0
        %v5205 = vadd.f32 0.0, %v5204
        %v5206 = vpop.f32.mrb[0].mxu0
        %5207 = vmatprep.mubr.f32.mxu0 0.0
        %5208 = vmatmul.mubr.f32.gmra.mrb[0].mxu0 %v5131
        %v5209 = vpop.f32.mrb[0].mxu0
        %v5210 = vadd.f32 0.0, %v5209
        %v5211 = vpop.f32.mrb[0].mxu0
        %5212 = vdwg.mxu0
        %v5214 = vsel %vm1361, %v4602, 0
        %v5217 = vsel %vm1361, %v4607, 0
        %v5220 = vsel %vm1361, %v4612, 0
        %5222 = vmatprep.subr.mxu0 0.0
        %5223 = vmatpush1.msra.mxu0 %v4616
        %5224 = vmatprep.subr.mxu0 0.0
        %5225 = vmatpush1.msra.mxu0 0.0
        %5226 = vmatprep.subr.mxu0 0.0
        %5227 = vmatpush1.msra.mxu0 0.0
        %5228 = vmatprep.subr.mxu0 0.0
        %5229 = vmatpush1.msra.mxu0 0.0
        %5230 = vmatprep.subr.mxu0 0.0
        %5231 = vmatpush1.msra.mxu0 0.0
        %5232 = vmatprep.subr.mxu0 0.0
        %5233 = vmatpush1.msra.mxu0 0.0
        %5234 = vmatprep.subr.mxu0 0.0
        %5235 = vmatpush1.msra.mxu0 0.0
        %5236 = vmatprep.subr.mxu0 0.0
        %5237 = vmatpush1.msra.mxu0 0.0
        %5238 = vmatprep.subr.mxu0 0.0
        %5239 = vmatpush1.msra.mxu0 0.0
        %5240 = vmatprep.subr.mxu0 0.0
        %5241 = vmatpush1.msra.mxu0 0.0
        %5242 = vmatprep.subr.mxu0 0.0
        %5243 = vmatpush1.msra.mxu0 0.0
        %5244 = vmatprep.subr.mxu0 0.0
        %5245 = vmatpush1.msra.mxu0 0.0
        %5246 = vmatprep.subr.mxu0 0.0
        %5247 = vmatpush1.msra.mxu0 0.0
        %5248 = vmatprep.subr.mxu0 0.0
        %5249 = vmatpush1.msra.mxu0 0.0
        %5250 = vmatprep.subr.mxu0 0.0
        %5251 = vmatpush1.msra.mxu0 0.0
        %5252 = vmatprep.subr.mxu0 0.0
        %5253 = vmatpush1.msra.mxu0 0.0
        %5254 = vmatprep.subr.mxu0 0.0
        %5255 = vmatpush1.msra.mxu0 0.0
        %5256 = vmatprep.subr.mxu0 0.0
        %5257 = vmatpush1.msra.mxu0 0.0
        %5258 = vmatprep.subr.mxu0 0.0
        %5259 = vmatpush1.msra.mxu0 0.0
        %5260 = vmatprep.subr.mxu0 0.0
        %5261 = vmatpush1.msra.mxu0 0.0
        %5262 = vmatprep.subr.mxu0 0.0
        %5263 = vmatpush1.msra.mxu0 0.0
        %5264 = vmatprep.subr.mxu0 0.0
        %5265 = vmatpush1.msra.mxu0 0.0
        %5266 = vmatprep.subr.mxu0 0.0
        %5267 = vmatpush1.msra.mxu0 0.0
        %5268 = vmatprep.subr.mxu0 0.0
        %5269 = vmatpush1.msra.mxu0 0.0
        %5270 = vmatprep.subr.mxu0 0.0
        %5271 = vmatpush1.msra.mxu0 0.0
        %5272 = vmatprep.subr.mxu0 0.0
        %5273 = vmatpush1.msra.mxu0 0.0
        %5274 = vmatprep.subr.mxu0 0.0
        %5275 = vmatpush1.msra.mxu0 0.0
        %5276 = vmatprep.subr.mxu0 0.0
        %5277 = vmatpush1.msra.mxu0 0.0
        %5278 = vmatprep.subr.mxu0 0.0
        %5279 = vmatpush1.msra.mxu0 0.0
        %5280 = vmatprep.subr.mxu0 0.0
        %5281 = vmatpush1.msra.mxu0 0.0
        %5282 = vmatprep.subr.mxu0 0.0
        %5283 = vmatpush1.msra.mxu0 0.0
        %5284 = vmatprep.subr.mxu0 0.0
        %5285 = vmatpush1.msra.mxu0 0.0
        %5286 = vmatprep.mubr.f32.mxu0 0.0
        %5287 = vmatmul.mubr.f32.gmra.mrb[0].mxu0 %v5214
        %v5288 = vpop.f32.mrb[0].mxu0
        %v5289 = vadd.f32 %v5200, %v5288
        %v5290 = vpop.f32.mrb[0].mxu0
        %5291 = vmatprep.mubr.f32.mxu0 0.0
        %5292 = vmatmul.mubr.f32.gmra.mrb[0].mxu0 %v5217
        %v5293 = vpop.f32.mrb[0].mxu0
        %v5294 = vadd.f32 %v5205, %v5293
        %v5295 = vpop.f32.mrb[0].mxu0
        %5296 = vmatprep.mubr.f32.mxu0 0.0
        %5297 = vmatmul.mubr.f32.gmra.mrb[0].mxu0 %v5220
        %v5298 = vpop.f32.mrb[0].mxu0
        %v5299 = vadd.f32 %v5210, %v5298
        %v5300 = vpop.f32.mrb[0].mxu0
        %5301 = vdwg.mxu0
        %s5302 = scalar_lea.vmem %s15, 192
        %v5303 = vld [vmem:[%s5302] sm:$0xff]
        %v5304 = vld [vmem:[%s5302 + $0x8] sm:$0xff]
        %v5305 = vld [vmem:[%s5302 + $0x10] sm:$0xff]
        %v5306 = vld [vmem:[%s5302 + $0x18] sm:$0xff]
        %s5307 = scalar_lea.vmem %s17, 6
        %v5308 = vld [vmem:[%s5307] sm:$0x1]
        %v5310 = vlaneseq
        %v5311 = vshrl.u32 %v5310, 7
        %v5312 = vsub.s32 0, %v5311
        %v5313 = vrot.slane %v5308, %v5312
        %5315 = vmatprep.subr.mxu0 0.0
        %5316 = vmatpush1.msra.mxu0 %v5303
        %5317 = vmatprep.subr.mxu0 0.0
        %5318 = vmatpush1.msra.mxu0 %v5304
        %5319 = vmatprep.subr.mxu0 0.0
        %5320 = vmatpush1.msra.mxu0 %v5305
        %5321 = vmatprep.subr.mxu0 0.0
        %5322 = vmatpush1.msra.mxu0 %v5306
        %5323 = vmatprep.subr.mxu0 0.0
        %5324 = vmatpush1.msra.mxu0 0.0
        %5325 = vmatprep.subr.mxu0 0.0
        %5326 = vmatpush1.msra.mxu0 0.0
        %5327 = vmatprep.subr.mxu0 0.0
        %5328 = vmatpush1.msra.mxu0 0.0
        %5329 = vmatprep.subr.mxu0 0.0
        %5330 = vmatpush1.msra.mxu0 0.0
        %5331 = vmatprep.subr.mxu0 0.0
        %5332 = vmatpush1.msra.mxu0 0.0
        %5333 = vmatprep.subr.mxu0 0.0
        %5334 = vmatpush1.msra.mxu0 0.0
        %5335 = vmatprep.subr.mxu0 0.0
        %5336 = vmatpush1.msra.mxu0 0.0
        %5337 = vmatprep.subr.mxu0 0.0
        %5338 = vmatpush1.msra.mxu0 0.0
        %5339 = vmatprep.subr.mxu0 0.0
        %5340 = vmatpush1.msra.mxu0 0.0
        %5341 = vmatprep.subr.mxu0 0.0
        %5342 = vmatpush1.msra.mxu0 0.0
        %5343 = vmatprep.subr.mxu0 0.0
        %5344 = vmatpush1.msra.mxu0 0.0
        %5345 = vmatprep.subr.mxu0 0.0
        %5346 = vmatpush1.msra.mxu0 0.0
        %5347 = vmatprep.subr.mxu0 0.0
        %5348 = vmatpush1.msra.mxu0 0.0
        %5349 = vmatprep.subr.mxu0 0.0
        %5350 = vmatpush1.msra.mxu0 0.0
        %5351 = vmatprep.subr.mxu0 0.0
        %5352 = vmatpush1.msra.mxu0 0.0
        %5353 = vmatprep.subr.mxu0 0.0
        %5354 = vmatpush1.msra.mxu0 0.0
        %5355 = vmatprep.subr.mxu0 0.0
        %5356 = vmatpush1.msra.mxu0 0.0
        %5357 = vmatprep.subr.mxu0 0.0
        %5358 = vmatpush1.msra.mxu0 0.0
        %5359 = vmatprep.subr.mxu0 0.0
        %5360 = vmatpush1.msra.mxu0 0.0
        %5361 = vmatprep.subr.mxu0 0.0
        %5362 = vmatpush1.msra.mxu0 0.0
        %5363 = vmatprep.subr.mxu0 0.0
        %5364 = vmatpush1.msra.mxu0 0.0
        %5365 = vmatprep.subr.mxu0 0.0
        %5366 = vmatpush1.msra.mxu0 0.0
        %5367 = vmatprep.subr.mxu0 0.0
        %5368 = vmatpush1.msra.mxu0 0.0
        %5369 = vmatprep.subr.mxu0 0.0
        %5370 = vmatpush1.msra.mxu0 0.0
        %5371 = vmatprep.subr.mxu0 0.0
        %5372 = vmatpush1.msra.mxu0 0.0
        %5373 = vmatprep.subr.mxu0 0.0
        %5374 = vmatpush1.msra.mxu0 0.0
        %5375 = vmatprep.subr.mxu0 0.0
        %5376 = vmatpush1.msra.mxu0 0.0
        %5377 = vmatprep.subr.mxu0 0.0
        %5378 = vmatpush1.msra.mxu0 0.0
        %5379 = vmatprep.mubr.f32.mxu0 0.0
        %5380 = vmatmul.mubr.f32.gmra.mrb[0].mxu0 %v4115
        %v5381 = vpop.f32.mrb[0].mxu0
        %v5382 = vadd.f32 %v5313, %v5381
        %v5383 = vpop.f32.mrb[0].mxu0
        %5384 = vmatprep.mubr.f32.mxu0 0.0
        %5385 = vmatmul.mubr.f32.gmra.mrb[0].mxu0 %v4118
        %v5386 = vpop.f32.mrb[0].mxu0
        %v5387 = vadd.f32 %v5313, %v5386
        %v5388 = vpop.f32.mrb[0].mxu0
        %5389 = vmatprep.mubr.f32.mxu0 0.0
        %5390 = vmatmul.mubr.f32.gmra.mrb[0].mxu0 %v4121
        %v5391 = vpop.f32.mrb[0].mxu0
        %v5392 = vadd.f32 %v5313, %v5391
        %v5393 = vpop.f32.mrb[0].mxu0
        %5394 = vdwg.mxu0
        %s5395 = scalar_lea.vmem %s19, 192
        %v5396 = vld [vmem:[%s5395] sm:$0xff]
        %v5397 = vld [vmem:[%s5395 + $0x8] sm:$0xff]
        %v5398 = vld [vmem:[%s5395 + $0x10] sm:$0xff]
        %v5399 = vld [vmem:[%s5395 + $0x18] sm:$0xff]
        %s5400 = scalar_lea.vmem %s21, 6
        %v5401 = vld [vmem:[%s5400] sm:$0x1]
        %v5403 = vlaneseq
        %v5404 = vshrl.u32 %v5403, 7
        %v5405 = vsub.s32 0, %v5404
        %v5406 = vrot.slane %v5401, %v5405
        %5408 = vmatprep.subr.mxu0 0.0
        %5409 = vmatpush1.msra.mxu0 %v5396
        %5410 = vmatprep.subr.mxu0 0.0
        %5411 = vmatpush1.msra.mxu0 %v5397
        %5412 = vmatprep.subr.mxu0 0.0
        %5413 = vmatpush1.msra.mxu0 %v5398
        %5414 = vmatprep.subr.mxu0 0.0
        %5415 = vmatpush1.msra.mxu0 %v5399
        %5416 = vmatprep.subr.mxu0 0.0
        %5417 = vmatpush1.msra.mxu0 0.0
        %5418 = vmatprep.subr.mxu0 0.0
        %5419 = vmatpush1.msra.mxu0 0.0
        %5420 = vmatprep.subr.mxu0 0.0
        %5421 = vmatpush1.msra.mxu0 0.0
        %5422 = vmatprep.subr.mxu0 0.0
        %5423 = vmatpush1.msra.mxu0 0.0
        %5424 = vmatprep.subr.mxu0 0.0
        %5425 = vmatpush1.msra.mxu0 0.0
        %5426 = vmatprep.subr.mxu0 0.0
        %5427 = vmatpush1.msra.mxu0 0.0
        %5428 = vmatprep.subr.mxu0 0.0
        %5429 = vmatpush1.msra.mxu0 0.0
        %5430 = vmatprep.subr.mxu0 0.0
        %5431 = vmatpush1.msra.mxu0 0.0
        %5432 = vmatprep.subr.mxu0 0.0
        %5433 = vmatpush1.msra.mxu0 0.0
        %5434 = vmatprep.subr.mxu0 0.0
        %5435 = vmatpush1.msra.mxu0 0.0
        %5436 = vmatprep.subr.mxu0 0.0
        %5437 = vmatpush1.msra.mxu0 0.0
        %5438 = vmatprep.subr.mxu0 0.0
        %5439 = vmatpush1.msra.mxu0 0.0
        %5440 = vmatprep.subr.mxu0 0.0
        %5441 = vmatpush1.msra.mxu0 0.0
        %5442 = vmatprep.subr.mxu0 0.0
        %5443 = vmatpush1.msra.mxu0 0.0
        %5444 = vmatprep.subr.mxu0 0.0
        %5445 = vmatpush1.msra.mxu0 0.0
        %5446 = vmatprep.subr.mxu0 0.0
        %5447 = vmatpush1.msra.mxu0 0.0
        %5448 = vmatprep.subr.mxu0 0.0
        %5449 = vmatpush1.msra.mxu0 0.0
        %5450 = vmatprep.subr.mxu0 0.0
        %5451 = vmatpush1.msra.mxu0 0.0
        %5452 = vmatprep.subr.mxu0 0.0
        %5453 = vmatpush1.msra.mxu0 0.0
        %5454 = vmatprep.subr.mxu0 0.0
        %5455 = vmatpush1.msra.mxu0 0.0
        %5456 = vmatprep.subr.mxu0 0.0
        %5457 = vmatpush1.msra.mxu0 0.0
        %5458 = vmatprep.subr.mxu0 0.0
        %5459 = vmatpush1.msra.mxu0 0.0
        %5460 = vmatprep.subr.mxu0 0.0
        %5461 = vmatpush1.msra.mxu0 0.0
        %5462 = vmatprep.subr.mxu0 0.0
        %5463 = vmatpush1.msra.mxu0 0.0
        %5464 = vmatprep.subr.mxu0 0.0
        %5465 = vmatpush1.msra.mxu0 0.0
        %5466 = vmatprep.subr.mxu0 0.0
        %5467 = vmatpush1.msra.mxu0 0.0
        %5468 = vmatprep.subr.mxu0 0.0
        %5469 = vmatpush1.msra.mxu0 0.0
        %5470 = vmatprep.subr.mxu0 0.0
        %5471 = vmatpush1.msra.mxu0 0.0
        %5472 = vmatprep.mubr.f32.mxu0 0.0
        %5473 = vmatmul.mubr.f32.gmra.mrb[0].mxu0 %v4115
        %v5474 = vpop.f32.mrb[0].mxu0
        %v5475 = vadd.f32 %v5406, %v5474
        %v5476 = vpop.f32.mrb[0].mxu0
        %5477 = vmatprep.mubr.f32.mxu0 0.0
        %5478 = vmatmul.mubr.f32.gmra.mrb[0].mxu0 %v4118
        %v5479 = vpop.f32.mrb[0].mxu0
        %v5480 = vadd.f32 %v5406, %v5479
        %v5481 = vpop.f32.mrb[0].mxu0
        %5482 = vmatprep.mubr.f32.mxu0 0.0
        %5483 = vmatmul.mubr.f32.gmra.mrb[0].mxu0 %v4121
        %v5484 = vpop.f32.mrb[0].mxu0
        %v5485 = vadd.f32 %v5406, %v5484
        %v5486 = vpop.f32.mrb[0].mxu0
        %5487 = vdwg.mxu0
        %s5488 = scalar_lea.vmem %s23, 192
        %v5489 = vld [vmem:[%s5488] sm:$0xff]
        %v5490 = vld [vmem:[%s5488 + $0x8] sm:$0xff]
        %v5491 = vld [vmem:[%s5488 + $0x10] sm:$0xff]
        %v5492 = vld [vmem:[%s5488 + $0x18] sm:$0xff]
        %s5493 = scalar_lea.vmem %s25, 6
        %v5494 = vld [vmem:[%s5493] sm:$0x1]
        %v5496 = vlaneseq
        %v5497 = vshrl.u32 %v5496, 7
        %v5498 = vsub.s32 0, %v5497
        %v5499 = vrot.slane %v5494, %v5498
        %5501 = vmatprep.subr.mxu0 0.0
        %5502 = vmatpush1.msra.mxu0 %v5489
        %5503 = vmatprep.subr.mxu0 0.0
        %5504 = vmatpush1.msra.mxu0 %v5490
        %5505 = vmatprep.subr.mxu0 0.0
        %5506 = vmatpush1.msra.mxu0 %v5491
        %5507 = vmatprep.subr.mxu0 0.0
        %5508 = vmatpush1.msra.mxu0 %v5492
        %5509 = vmatprep.subr.mxu0 0.0
        %5510 = vmatpush1.msra.mxu0 0.0
        %5511 = vmatprep.subr.mxu0 0.0
        %5512 = vmatpush1.msra.mxu0 0.0
        %5513 = vmatprep.subr.mxu0 0.0
        %5514 = vmatpush1.msra.mxu0 0.0
        %5515 = vmatprep.subr.mxu0 0.0
        %5516 = vmatpush1.msra.mxu0 0.0
        %5517 = vmatprep.subr.mxu0 0.0
        %5518 = vmatpush1.msra.mxu0 0.0
        %5519 = vmatprep.subr.mxu0 0.0
        %5520 = vmatpush1.msra.mxu0 0.0
        %5521 = vmatprep.subr.mxu0 0.0
        %5522 = vmatpush1.msra.mxu0 0.0
        %5523 = vmatprep.subr.mxu0 0.0
        %5524 = vmatpush1.msra.mxu0 0.0
        %5525 = vmatprep.subr.mxu0 0.0
        %5526 = vmatpush1.msra.mxu0 0.0
        %5527 = vmatprep.subr.mxu0 0.0
        %5528 = vmatpush1.msra.mxu0 0.0
        %5529 = vmatprep.subr.mxu0 0.0
        %5530 = vmatpush1.msra.mxu0 0.0
        %5531 = vmatprep.subr.mxu0 0.0
        %5532 = vmatpush1.msra.mxu0 0.0
        %5533 = vmatprep.subr.mxu0 0.0
        %5534 = vmatpush1.msra.mxu0 0.0
        %5535 = vmatprep.subr.mxu0 0.0
        %5536 = vmatpush1.msra.mxu0 0.0
        %5537 = vmatprep.subr.mxu0 0.0
        %5538 = vmatpush1.msra.mxu0 0.0
        %5539 = vmatprep.subr.mxu0 0.0
        %5540 = vmatpush1.msra.mxu0 0.0
        %5541 = vmatprep.subr.mxu0 0.0
        %5542 = vmatpush1.msra.mxu0 0.0
        %5543 = vmatprep.subr.mxu0 0.0
        %5544 = vmatpush1.msra.mxu0 0.0
        %5545 = vmatprep.subr.mxu0 0.0
        %5546 = vmatpush1.msra.mxu0 0.0
        %5547 = vmatprep.subr.mxu0 0.0
        %5548 = vmatpush1.msra.mxu0 0.0
        %5549 = vmatprep.subr.mxu0 0.0
        %5550 = vmatpush1.msra.mxu0 0.0
        %5551 = vmatprep.subr.mxu0 0.0
        %5552 = vmatpush1.msra.mxu0 0.0
        %5553 = vmatprep.subr.mxu0 0.0
        %5554 = vmatpush1.msra.mxu0 0.0
        %5555 = vmatprep.subr.mxu0 0.0
        %5556 = vmatpush1.msra.mxu0 0.0
        %5557 = vmatprep.subr.mxu0 0.0
        %5558 = vmatpush1.msra.mxu0 0.0
        %5559 = vmatprep.subr.mxu0 0.0
        %5560 = vmatpush1.msra.mxu0 0.0
        %5561 = vmatprep.subr.mxu0 0.0
        %5562 = vmatpush1.msra.mxu0 0.0
        %5563 = vmatprep.subr.mxu0 0.0
        %5564 = vmatpush1.msra.mxu0 0.0
        %5565 = vmatprep.mubr.f32.mxu0 0.0
        %5566 = vmatmul.mubr.f32.gmra.mrb[0].mxu0 %v4115
        %v5567 = vpop.f32.mrb[0].mxu0
        %v5568 = vadd.f32 %v5499, %v5567
        %v5569 = vpop.f32.mrb[0].mxu0
        %5570 = vmatprep.mubr.f32.mxu0 0.0
        %5571 = vmatmul.mubr.f32.gmra.mrb[0].mxu0 %v4118
        %v5572 = vpop.f32.mrb[0].mxu0
        %v5573 = vadd.f32 %v5499, %v5572
        %v5574 = vpop.f32.mrb[0].mxu0
        %5575 = vmatprep.mubr.f32.mxu0 0.0
        %5576 = vmatmul.mubr.f32.gmra.mrb[0].mxu0 %v4121
        %v5577 = vpop.f32.mrb[0].mxu0
        %v5578 = vadd.f32 %v5499, %v5577
        %v5579 = vpop.f32.mrb[0].mxu0
        %5580 = vdwg.mxu0
        %v5582 = vsel %vm1361, %v5382, 0
        %v5585 = vsel %vm1361, %v5387, 0
        %v5588 = vsel %vm1361, %v5392, 0
        %v5591 = vsel %vm1361, %v5475, 0
        %v5594 = vsel %vm1361, %v5480, 0
        %v5597 = vsel %vm1361, %v5485, 0
        %5599 = vmatprep.subr.mxu0 0.0
        %5600 = vmatpush1.xpose.msra.mxu0 %v5591
        %5601 = vmatprep.subr.mxu0 0.0
        %5602 = vmatpush1.xpose.msra.mxu0 %v5594
        %5603 = vmatprep.subr.mxu0 0.0
        %5604 = vmatpush1.xpose.msra.mxu0 %v5597
        %5605 = vmatprep.subr.mxu0 0.0
        %5606 = vmatpush1.xpose.msra.mxu0 0.0
        %5607 = vmatprep.subr.mxu0 0.0
        %5608 = vmatpush1.xpose.msra.mxu0 0.0
        %5609 = vmatprep.subr.mxu0 0.0
        %5610 = vmatpush1.xpose.msra.mxu0 0.0
        %5611 = vmatprep.subr.mxu0 0.0
        %5612 = vmatpush1.xpose.msra.mxu0 0.0
        %5613 = vmatprep.subr.mxu0 0.0
        %5614 = vmatpush1.xpose.msra.mxu0 0.0
        %5615 = vmatprep.subr.mxu0 0.0
        %5616 = vmatpush1.xpose.msra.mxu0 0.0
        %5617 = vmatprep.subr.mxu0 0.0
        %5618 = vmatpush1.xpose.msra.mxu0 0.0
        %5619 = vmatprep.subr.mxu0 0.0
        %5620 = vmatpush1.xpose.msra.mxu0 0.0
        %5621 = vmatprep.subr.mxu0 0.0
        %5622 = vmatpush1.xpose.msra.mxu0 0.0
        %5623 = vmatprep.subr.mxu0 0.0
        %5624 = vmatpush1.xpose.msra.mxu0 0.0
        %5625 = vmatprep.subr.mxu0 0.0
        %5626 = vmatpush1.xpose.msra.mxu0 0.0
        %5627 = vmatprep.subr.mxu0 0.0
        %5628 = vmatpush1.xpose.msra.mxu0 0.0
        %5629 = vmatprep.subr.mxu0 0.0
        %5630 = vmatpush1.xpose.msra.mxu0 0.0
        %5631 = vmatprep.subr.mxu0 0.0
        %5632 = vmatpush1.xpose.msra.mxu0 0.0
        %5633 = vmatprep.subr.mxu0 0.0
        %5634 = vmatpush1.xpose.msra.mxu0 0.0
        %5635 = vmatprep.subr.mxu0 0.0
        %5636 = vmatpush1.xpose.msra.mxu0 0.0
        %5637 = vmatprep.subr.mxu0 0.0
        %5638 = vmatpush1.xpose.msra.mxu0 0.0
        %5639 = vmatprep.subr.mxu0 0.0
        %5640 = vmatpush1.xpose.msra.mxu0 0.0
        %5641 = vmatprep.subr.mxu0 0.0
        %5642 = vmatpush1.xpose.msra.mxu0 0.0
        %5643 = vmatprep.subr.mxu0 0.0
        %5644 = vmatpush1.xpose.msra.mxu0 0.0
        %5645 = vmatprep.subr.mxu0 0.0
        %5646 = vmatpush1.xpose.msra.mxu0 0.0
        %5647 = vmatprep.subr.mxu0 0.0
        %5648 = vmatpush1.xpose.msra.mxu0 0.0
        %5649 = vmatprep.subr.mxu0 0.0
        %5650 = vmatpush1.xpose.msra.mxu0 0.0
        %5651 = vmatprep.subr.mxu0 0.0
        %5652 = vmatpush1.xpose.msra.mxu0 0.0
        %5653 = vmatprep.subr.mxu0 0.0
        %5654 = vmatpush1.xpose.msra.mxu0 0.0
        %5655 = vmatprep.subr.mxu0 0.0
        %5656 = vmatpush1.xpose.msra.mxu0 0.0
        %5657 = vmatprep.subr.mxu0 0.0
        %5658 = vmatpush1.xpose.msra.mxu0 0.0
        %5659 = vmatprep.subr.mxu0 0.0
        %5660 = vmatpush1.xpose.msra.mxu0 0.0
        %5661 = vmatprep.subr.mxu0 0.0
        %5662 = vmatpush1.xpose.msra.mxu0 0.0
        %5663 = vmatprep.mubr.f32.mxu0 0.0
        %5664 = vmatmul.mubr.f32.gmra.mrb[0].mxu0 %v5582
        %v5665 = vpop.f32.mrb[0].mxu0
        %v5666 = vadd.f32 0.0, %v5665
        %v5667 = vpop.f32.mrb[0].mxu0
        %5668 = vmatprep.mubr.f32.mxu0 0.0
        %5669 = vmatmul.mubr.f32.gmra.mrb[0].mxu0 %v5585
        %v5670 = vpop.f32.mrb[0].mxu0
        %v5671 = vadd.f32 0.0, %v5670
        %v5672 = vpop.f32.mrb[0].mxu0
        %5673 = vmatprep.mubr.f32.mxu0 0.0
        %5674 = vmatmul.mubr.f32.gmra.mrb[0].mxu0 %v5588
        %v5675 = vpop.f32.mrb[0].mxu0
        %v5676 = vadd.f32 0.0, %v5675
        %v5677 = vpop.f32.mrb[0].mxu0
        %5678 = vdwg.mxu0
        %v5679 = vmul.f32 %v5666, 0.35355338
        %v5680 = vmul.f32 %v5671, 0.35355338
        %v5681 = vmul.f32 %v5676, 0.35355338
        %v5682 = vsel %vm1464, %v5679, -1e+30
        %v5683 = vsel %vm1464, %v5680, -1e+30
        %v5684 = vsel %vm1464, %v5681, -1e+30
        %v5685 = vsel %vm1468, %v5682, -inf
        %5686 = vmax.xlane.f32.xlu0 %v5685
        %v5687 = vpop.xlane.xlu0 %5686
        %v5688 = vsel %vm1468, %v5683, -inf
        %5689 = vmax.xlane.f32.xlu0 %v5688
        %v5690 = vpop.xlane.xlu0 %5689
        %v5691 = vsel %vm1468, %v5684, -inf
        %5692 = vmax.xlane.f32.xlu0 %v5691
        %v5693 = vpop.xlane.xlu0 %5692
        %v5694 = vsub.f32 %v5682, %v5687
        %v5695 = vsub.f32 %v5683, %v5690
        %v5696 = vsub.f32 %v5684, %v5693
        %v5697 = vmul.f32 %v5694, 1.442695
        %v5698 = vpow.pop %v5697
        %v5699 = vmul.f32 %v5695, 1.442695
        %v5700 = vpow.pop %v5699
        %v5701 = vmul.f32 %v5696, 1.442695
        %v5702 = vpow.pop %v5701
        %v5703 = vsel %vm1468, %v5698, 0.0
        %5704 = vadd.xlane.f32.xlu0 %v5703
        %v5705 = vpop.xlane.xlu0 %5704
        %v5706 = vsel %vm1468, %v5700, 0.0
        %5707 = vadd.xlane.f32.xlu0 %v5706
        %v5708 = vpop.xlane.xlu0 %5707
        %v5709 = vsel %vm1468, %v5702, 0.0
        %5710 = vadd.xlane.f32.xlu0 %v5709
        %v5711 = vpop.xlane.xlu0 %5710
        %v5712 = vrcp.pop %v5705
        %v5713 = vrcp.pop %v5708
        %v5714 = vrcp.pop %v5711
        %v5715 = vmul.f32 %v5698, %v5712
        %v5716 = vmul.f32 %v5700, %v5713
        %v5717 = vmul.f32 %v5702, %v5714
        %v5719 = vsel %vm1468, %v5715, 0
        %v5722 = vsel %vm1468, %v5716, 0
        %v5725 = vsel %vm1468, %v5717, 0
        %5727 = vmatprep.subr.mxu0 0.0
        %5728 = vmatpush1.msra.mxu0 %v5568
        %5729 = vmatprep.subr.mxu0 0.0
        %5730 = vmatpush1.msra.mxu0 %v5573
        %5731 = vmatprep.subr.mxu0 0.0
        %5732 = vmatpush1.msra.mxu0 %v5578
        %5733 = vmatprep.subr.mxu0 0.0
        %5734 = vmatpush1.msra.mxu0 0.0
        %5735 = vmatprep.subr.mxu0 0.0
        %5736 = vmatpush1.msra.mxu0 0.0
        %5737 = vmatprep.subr.mxu0 0.0
        %5738 = vmatpush1.msra.mxu0 0.0
        %5739 = vmatprep.subr.mxu0 0.0
        %5740 = vmatpush1.msra.mxu0 0.0
        %5741 = vmatprep.subr.mxu0 0.0
        %5742 = vmatpush1.msra.mxu0 0.0
        %5743 = vmatprep.subr.mxu0 0.0
        %5744 = vmatpush1.msra.mxu0 0.0
        %5745 = vmatprep.subr.mxu0 0.0
        %5746 = vmatpush1.msra.mxu0 0.0
        %5747 = vmatprep.subr.mxu0 0.0
        %5748 = vmatpush1.msra.mxu0 0.0
        %5749 = vmatprep.subr.mxu0 0.0
        %5750 = vmatpush1.msra.mxu0 0.0
        %5751 = vmatprep.subr.mxu0 0.0
        %5752 = vmatpush1.msra.mxu0 0.0
        %5753 = vmatprep.subr.mxu0 0.0
        %5754 = vmatpush1.msra.mxu0 0.0
        %5755 = vmatprep.subr.mxu0 0.0
        %5756 = vmatpush1.msra.mxu0 0.0
        %5757 = vmatprep.subr.mxu0 0.0
        %5758 = vmatpush1.msra.mxu0 0.0
        %5759 = vmatprep.subr.mxu0 0.0
        %5760 = vmatpush1.msra.mxu0 0.0
        %5761 = vmatprep.subr.mxu0 0.0
        %5762 = vmatpush1.msra.mxu0 0.0
        %5763 = vmatprep.subr.mxu0 0.0
        %5764 = vmatpush1.msra.mxu0 0.0
        %5765 = vmatprep.subr.mxu0 0.0
        %5766 = vmatpush1.msra.mxu0 0.0
        %5767 = vmatprep.subr.mxu0 0.0
        %5768 = vmatpush1.msra.mxu0 0.0
        %5769 = vmatprep.subr.mxu0 0.0
        %5770 = vmatpush1.msra.mxu0 0.0
        %5771 = vmatprep.subr.mxu0 0.0
        %5772 = vmatpush1.msra.mxu0 0.0
        %5773 = vmatprep.subr.mxu0 0.0
        %5774 = vmatpush1.msra.mxu0 0.0
        %5775 = vmatprep.subr.mxu0 0.0
        %5776 = vmatpush1.msra.mxu0 0.0
        %5777 = vmatprep.subr.mxu0 0.0
        %5778 = vmatpush1.msra.mxu0 0.0
        %5779 = vmatprep.subr.mxu0 0.0
        %5780 = vmatpush1.msra.mxu0 0.0
        %5781 = vmatprep.subr.mxu0 0.0
        %5782 = vmatpush1.msra.mxu0 0.0
        %5783 = vmatprep.subr.mxu0 0.0
        %5784 = vmatpush1.msra.mxu0 0.0
        %5785 = vmatprep.subr.mxu0 0.0
        %5786 = vmatpush1.msra.mxu0 0.0
        %5787 = vmatprep.subr.mxu0 0.0
        %5788 = vmatpush1.msra.mxu0 0.0
        %5789 = vmatprep.subr.mxu0 0.0
        %5790 = vmatpush1.msra.mxu0 0.0
        %5791 = vmatprep.mubr.f32.mxu0 0.0
        %5792 = vmatmul.mubr.f32.gmra.mrb[0].mxu0 %v5719
        %v5793 = vpop.f32.mrb[0].mxu0
        %v5794 = vadd.f32 0.0, %v5793
        %v5795 = vpop.f32.mrb[0].mxu0
        %5796 = vmatprep.mubr.f32.mxu0 0.0
        %5797 = vmatmul.mubr.f32.gmra.mrb[0].mxu0 %v5722
        %v5798 = vpop.f32.mrb[0].mxu0
        %v5799 = vadd.f32 0.0, %v5798
        %v5800 = vpop.f32.mrb[0].mxu0
        %5801 = vmatprep.mubr.f32.mxu0 0.0
        %5802 = vmatmul.mubr.f32.gmra.mrb[0].mxu0 %v5725
        %v5803 = vpop.f32.mrb[0].mxu0
        %v5804 = vadd.f32 0.0, %v5803
        %v5805 = vpop.f32.mrb[0].mxu0
        %5806 = vdwg.mxu0
        %s5807 = scalar_lea.vmem %s27, 48
        %v5808 = vld [vmem:[%s5807] sm:$0xff]
        %v5810 = vsel %vm1361, %v5794, 0
        %v5813 = vsel %vm1361, %v5799, 0
        %v5816 = vsel %vm1361, %v5804, 0
        %5818 = vmatprep.subr.mxu0 0.0
        %5819 = vmatpush1.msra.mxu0 %v5808
        %5820 = vmatprep.subr.mxu0 0.0
        %5821 = vmatpush1.msra.mxu0 0.0
        %5822 = vmatprep.subr.mxu0 0.0
        %5823 = vmatpush1.msra.mxu0 0.0
        %5824 = vmatprep.subr.mxu0 0.0
        %5825 = vmatpush1.msra.mxu0 0.0
        %5826 = vmatprep.subr.mxu0 0.0
        %5827 = vmatpush1.msra.mxu0 0.0
        %5828 = vmatprep.subr.mxu0 0.0
        %5829 = vmatpush1.msra.mxu0 0.0
        %5830 = vmatprep.subr.mxu0 0.0
        %5831 = vmatpush1.msra.mxu0 0.0
        %5832 = vmatprep.subr.mxu0 0.0
        %5833 = vmatpush1.msra.mxu0 0.0
        %5834 = vmatprep.subr.mxu0 0.0
        %5835 = vmatpush1.msra.mxu0 0.0
        %5836 = vmatprep.subr.mxu0 0.0
        %5837 = vmatpush1.msra.mxu0 0.0
        %5838 = vmatprep.subr.mxu0 0.0
        %5839 = vmatpush1.msra.mxu0 0.0
        %5840 = vmatprep.subr.mxu0 0.0
        %5841 = vmatpush1.msra.mxu0 0.0
        %5842 = vmatprep.subr.mxu0 0.0
        %5843 = vmatpush1.msra.mxu0 0.0
        %5844 = vmatprep.subr.mxu0 0.0
        %5845 = vmatpush1.msra.mxu0 0.0
        %5846 = vmatprep.subr.mxu0 0.0
        %5847 = vmatpush1.msra.mxu0 0.0
        %5848 = vmatprep.subr.mxu0 0.0
        %5849 = vmatpush1.msra.mxu0 0.0
        %5850 = vmatprep.subr.mxu0 0.0
        %5851 = vmatpush1.msra.mxu0 0.0
        %5852 = vmatprep.subr.mxu0 0.0
        %5853 = vmatpush1.msra.mxu0 0.0
        %5854 = vmatprep.subr.mxu0 0.0
        %5855 = vmatpush1.msra.mxu0 0.0
        %5856 = vmatprep.subr.mxu0 0.0
        %5857 = vmatpush1.msra.mxu0 0.0
        %5858 = vmatprep.subr.mxu0 0.0
        %5859 = vmatpush1.msra.mxu0 0.0
        %5860 = vmatprep.subr.mxu0 0.0
        %5861 = vmatpush1.msra.mxu0 0.0
        %5862 = vmatprep.subr.mxu0 0.0
        %5863 = vmatpush1.msra.mxu0 0.0
        %5864 = vmatprep.subr.mxu0 0.0
        %5865 = vmatpush1.msra.mxu0 0.0
        %5866 = vmatprep.subr.mxu0 0.0
        %5867 = vmatpush1.msra.mxu0 0.0
        %5868 = vmatprep.subr.mxu0 0.0
        %5869 = vmatpush1.msra.mxu0 0.0
        %5870 = vmatprep.subr.mxu0 0.0
        %5871 = vmatpush1.msra.mxu0 0.0
        %5872 = vmatprep.subr.mxu0 0.0
        %5873 = vmatpush1.msra.mxu0 0.0
        %5874 = vmatprep.subr.mxu0 0.0
        %5875 = vmatpush1.msra.mxu0 0.0
        %5876 = vmatprep.subr.mxu0 0.0
        %5877 = vmatpush1.msra.mxu0 0.0
        %5878 = vmatprep.subr.mxu0 0.0
        %5879 = vmatpush1.msra.mxu0 0.0
        %5880 = vmatprep.subr.mxu0 0.0
        %5881 = vmatpush1.msra.mxu0 0.0
        %5882 = vmatprep.mubr.f32.mxu0 0.0
        %5883 = vmatmul.mubr.f32.gmra.mrb[0].mxu0 %v5810
        %v5884 = vpop.f32.mrb[0].mxu0
        %v5885 = vadd.f32 0.0, %v5884
        %v5886 = vpop.f32.mrb[0].mxu0
        %5887 = vmatprep.mubr.f32.mxu0 0.0
        %5888 = vmatmul.mubr.f32.gmra.mrb[0].mxu0 %v5813
        %v5889 = vpop.f32.mrb[0].mxu0
        %v5890 = vadd.f32 0.0, %v5889
        %v5891 = vpop.f32.mrb[0].mxu0
        %5892 = vmatprep.mubr.f32.mxu0 0.0
        %5893 = vmatmul.mubr.f32.gmra.mrb[0].mxu0 %v5816
        %v5894 = vpop.f32.mrb[0].mxu0
        %v5895 = vadd.f32 0.0, %v5894
        %v5896 = vpop.f32.mrb[0].mxu0
        %5897 = vdwg.mxu0
        %v5898 = vadd.f32 %v5289, %v5885
        %v5899 = vadd.f32 %v5294, %v5890
        %v5900 = vadd.f32 %v5299, %v5895
        %s5901 = scalar_lea.vmem %s15, 224
        %v5902 = vld [vmem:[%s5901] sm:$0xff]
        %v5903 = vld [vmem:[%s5901 + $0x8] sm:$0xff]
        %v5904 = vld [vmem:[%s5901 + $0x10] sm:$0xff]
        %v5905 = vld [vmem:[%s5901 + $0x18] sm:$0xff]
        %s5906 = scalar_lea.vmem %s17, 7
        %v5907 = vld [vmem:[%s5906] sm:$0x1]
        %v5909 = vlaneseq
        %v5910 = vshrl.u32 %v5909, 7
        %v5911 = vsub.s32 0, %v5910
        %v5912 = vrot.slane %v5907, %v5911
        %5914 = vmatprep.subr.mxu0 0.0
        %5915 = vmatpush1.msra.mxu0 %v5902
        %5916 = vmatprep.subr.mxu0 0.0
        %5917 = vmatpush1.msra.mxu0 %v5903
        %5918 = vmatprep.subr.mxu0 0.0
        %5919 = vmatpush1.msra.mxu0 %v5904
        %5920 = vmatprep.subr.mxu0 0.0
        %5921 = vmatpush1.msra.mxu0 %v5905
        %5922 = vmatprep.subr.mxu0 0.0
        %5923 = vmatpush1.msra.mxu0 0.0
        %5924 = vmatprep.subr.mxu0 0.0
        %5925 = vmatpush1.msra.mxu0 0.0
        %5926 = vmatprep.subr.mxu0 0.0
        %5927 = vmatpush1.msra.mxu0 0.0
        %5928 = vmatprep.subr.mxu0 0.0
        %5929 = vmatpush1.msra.mxu0 0.0
        %5930 = vmatprep.subr.mxu0 0.0
        %5931 = vmatpush1.msra.mxu0 0.0
        %5932 = vmatprep.subr.mxu0 0.0
        %5933 = vmatpush1.msra.mxu0 0.0
        %5934 = vmatprep.subr.mxu0 0.0
        %5935 = vmatpush1.msra.mxu0 0.0
        %5936 = vmatprep.subr.mxu0 0.0
        %5937 = vmatpush1.msra.mxu0 0.0
        %5938 = vmatprep.subr.mxu0 0.0
        %5939 = vmatpush1.msra.mxu0 0.0
        %5940 = vmatprep.subr.mxu0 0.0
        %5941 = vmatpush1.msra.mxu0 0.0
        %5942 = vmatprep.subr.mxu0 0.0
        %5943 = vmatpush1.msra.mxu0 0.0
        %5944 = vmatprep.subr.mxu0 0.0
        %5945 = vmatpush1.msra.mxu0 0.0
        %5946 = vmatprep.subr.mxu0 0.0
        %5947 = vmatpush1.msra.mxu0 0.0
        %5948 = vmatprep.subr.mxu0 0.0
        %5949 = vmatpush1.msra.mxu0 0.0
        %5950 = vmatprep.subr.mxu0 0.0
        %5951 = vmatpush1.msra.mxu0 0.0
        %5952 = vmatprep.subr.mxu0 0.0
        %5953 = vmatpush1.msra.mxu0 0.0
        %5954 = vmatprep.subr.mxu0 0.0
        %5955 = vmatpush1.msra.mxu0 0.0
        %5956 = vmatprep.subr.mxu0 0.0
        %5957 = vmatpush1.msra.mxu0 0.0
        %5958 = vmatprep.subr.mxu0 0.0
        %5959 = vmatpush1.msra.mxu0 0.0
        %5960 = vmatprep.subr.mxu0 0.0
        %5961 = vmatpush1.msra.mxu0 0.0
        %5962 = vmatprep.subr.mxu0 0.0
        %5963 = vmatpush1.msra.mxu0 0.0
        %5964 = vmatprep.subr.mxu0 0.0
        %5965 = vmatpush1.msra.mxu0 0.0
        %5966 = vmatprep.subr.mxu0 0.0
        %5967 = vmatpush1.msra.mxu0 0.0
        %5968 = vmatprep.subr.mxu0 0.0
        %5969 = vmatpush1.msra.mxu0 0.0
        %5970 = vmatprep.subr.mxu0 0.0
        %5971 = vmatpush1.msra.mxu0 0.0
        %5972 = vmatprep.subr.mxu0 0.0
        %5973 = vmatpush1.msra.mxu0 0.0
        %5974 = vmatprep.subr.mxu0 0.0
        %5975 = vmatpush1.msra.mxu0 0.0
        %5976 = vmatprep.subr.mxu0 0.0
        %5977 = vmatpush1.msra.mxu0 0.0
        %5978 = vmatprep.mubr.f32.mxu0 0.0
        %5979 = vmatmul.mubr.f32.gmra.mrb[0].mxu0 %v4115
        %v5980 = vpop.f32.mrb[0].mxu0
        %v5981 = vadd.f32 %v5912, %v5980
        %v5982 = vpop.f32.mrb[0].mxu0
        %5983 = vmatprep.mubr.f32.mxu0 0.0
        %5984 = vmatmul.mubr.f32.gmra.mrb[0].mxu0 %v4118
        %v5985 = vpop.f32.mrb[0].mxu0
        %v5986 = vadd.f32 %v5912, %v5985
        %v5987 = vpop.f32.mrb[0].mxu0
        %5988 = vmatprep.mubr.f32.mxu0 0.0
        %5989 = vmatmul.mubr.f32.gmra.mrb[0].mxu0 %v4121
        %v5990 = vpop.f32.mrb[0].mxu0
        %v5991 = vadd.f32 %v5912, %v5990
        %v5992 = vpop.f32.mrb[0].mxu0
        %5993 = vdwg.mxu0
        %s5994 = scalar_lea.vmem %s19, 224
        %v5995 = vld [vmem:[%s5994] sm:$0xff]
        %v5996 = vld [vmem:[%s5994 + $0x8] sm:$0xff]
        %v5997 = vld [vmem:[%s5994 + $0x10] sm:$0xff]
        %v5998 = vld [vmem:[%s5994 + $0x18] sm:$0xff]
        %s5999 = scalar_lea.vmem %s21, 7
        %v6000 = vld [vmem:[%s5999] sm:$0x1]
        %v6002 = vlaneseq
        %v6003 = vshrl.u32 %v6002, 7
        %v6004 = vsub.s32 0, %v6003
        %v6005 = vrot.slane %v6000, %v6004
        %6007 = vmatprep.subr.mxu0 0.0
        %6008 = vmatpush1.msra.mxu0 %v5995
        %6009 = vmatprep.subr.mxu0 0.0
        %6010 = vmatpush1.msra.mxu0 %v5996
        %6011 = vmatprep.subr.mxu0 0.0
        %6012 = vmatpush1.msra.mxu0 %v5997
        %6013 = vmatprep.subr.mxu0 0.0
        %6014 = vmatpush1.msra.mxu0 %v5998
        %6015 = vmatprep.subr.mxu0 0.0
        %6016 = vmatpush1.msra.mxu0 0.0
        %6017 = vmatprep.subr.mxu0 0.0
        %6018 = vmatpush1.msra.mxu0 0.0
        %6019 = vmatprep.subr.mxu0 0.0
        %6020 = vmatpush1.msra.mxu0 0.0
        %6021 = vmatprep.subr.mxu0 0.0
        %6022 = vmatpush1.msra.mxu0 0.0
        %6023 = vmatprep.subr.mxu0 0.0
        %6024 = vmatpush1.msra.mxu0 0.0
        %6025 = vmatprep.subr.mxu0 0.0
        %6026 = vmatpush1.msra.mxu0 0.0
        %6027 = vmatprep.subr.mxu0 0.0
        %6028 = vmatpush1.msra.mxu0 0.0
        %6029 = vmatprep.subr.mxu0 0.0
        %6030 = vmatpush1.msra.mxu0 0.0
        %6031 = vmatprep.subr.mxu0 0.0
        %6032 = vmatpush1.msra.mxu0 0.0
        %6033 = vmatprep.subr.mxu0 0.0
        %6034 = vmatpush1.msra.mxu0 0.0
        %6035 = vmatprep.subr.mxu0 0.0
        %6036 = vmatpush1.msra.mxu0 0.0
        %6037 = vmatprep.subr.mxu0 0.0
        %6038 = vmatpush1.msra.mxu0 0.0
        %6039 = vmatprep.subr.mxu0 0.0
        %6040 = vmatpush1.msra.mxu0 0.0
        %6041 = vmatprep.subr.mxu0 0.0
        %6042 = vmatpush1.msra.mxu0 0.0
        %6043 = vmatprep.subr.mxu0 0.0
        %6044 = vmatpush1.msra.mxu0 0.0
        %6045 = vmatprep.subr.mxu0 0.0
        %6046 = vmatpush1.msra.mxu0 0.0
        %6047 = vmatprep.subr.mxu0 0.0
        %6048 = vmatpush1.msra.mxu0 0.0
        %6049 = vmatprep.subr.mxu0 0.0
        %6050 = vmatpush1.msra.mxu0 0.0
        %6051 = vmatprep.subr.mxu0 0.0
        %6052 = vmatpush1.msra.mxu0 0.0
        %6053 = vmatprep.subr.mxu0 0.0
        %6054 = vmatpush1.msra.mxu0 0.0
        %6055 = vmatprep.subr.mxu0 0.0
        %6056 = vmatpush1.msra.mxu0 0.0
        %6057 = vmatprep.subr.mxu0 0.0
        %6058 = vmatpush1.msra.mxu0 0.0
        %6059 = vmatprep.subr.mxu0 0.0
        %6060 = vmatpush1.msra.mxu0 0.0
        %6061 = vmatprep.subr.mxu0 0.0
        %6062 = vmatpush1.msra.mxu0 0.0
        %6063 = vmatprep.subr.mxu0 0.0
        %6064 = vmatpush1.msra.mxu0 0.0
        %6065 = vmatprep.subr.mxu0 0.0
        %6066 = vmatpush1.msra.mxu0 0.0
        %6067 = vmatprep.subr.mxu0 0.0
        %6068 = vmatpush1.msra.mxu0 0.0
        %6069 = vmatprep.subr.mxu0 0.0
        %6070 = vmatpush1.msra.mxu0 0.0
        %6071 = vmatprep.mubr.f32.mxu0 0.0
        %6072 = vmatmul.mubr.f32.gmra.mrb[0].mxu0 %v4115
        %v6073 = vpop.f32.mrb[0].mxu0
        %v6074 = vadd.f32 %v6005, %v6073
        %v6075 = vpop.f32.mrb[0].mxu0
        %6076 = vmatprep.mubr.f32.mxu0 0.0
        %6077 = vmatmul.mubr.f32.gmra.mrb[0].mxu0 %v4118
        %v6078 = vpop.f32.mrb[0].mxu0
        %v6079 = vadd.f32 %v6005, %v6078
        %v6080 = vpop.f32.mrb[0].mxu0
        %6081 = vmatprep.mubr.f32.mxu0 0.0
        %6082 = vmatmul.mubr.f32.gmra.mrb[0].mxu0 %v4121
        %v6083 = vpop.f32.mrb[0].mxu0
        %v6084 = vadd.f32 %v6005, %v6083
        %v6085 = vpop.f32.mrb[0].mxu0
        %6086 = vdwg.mxu0
        %s6087 = scalar_lea.vmem %s23, 224
        %v6088 = vld [vmem:[%s6087] sm:$0xff]
        %v6089 = vld [vmem:[%s6087 + $0x8] sm:$0xff]
        %v6090 = vld [vmem:[%s6087 + $0x10] sm:$0xff]
        %v6091 = vld [vmem:[%s6087 + $0x18] sm:$0xff]
        %s6092 = scalar_lea.vmem %s25, 7
        %v6093 = vld [vmem:[%s6092] sm:$0x1]
        %v6095 = vlaneseq
        %v6096 = vshrl.u32 %v6095, 7
        %v6097 = vsub.s32 0, %v6096
        %v6098 = vrot.slane %v6093, %v6097
        %6100 = vmatprep.subr.mxu0 0.0
        %6101 = vmatpush1.msra.mxu0 %v6088
        %6102 = vmatprep.subr.mxu0 0.0
        %6103 = vmatpush1.msra.mxu0 %v6089
        %6104 = vmatprep.subr.mxu0 0.0
        %6105 = vmatpush1.msra.mxu0 %v6090
        %6106 = vmatprep.subr.mxu0 0.0
        %6107 = vmatpush1.msra.mxu0 %v6091
        %6108 = vmatprep.subr.mxu0 0.0
        %6109 = vmatpush1.msra.mxu0 0.0
        %6110 = vmatprep.subr.mxu0 0.0
        %6111 = vmatpush1.msra.mxu0 0.0
        %6112 = vmatprep.subr.mxu0 0.0
        %6113 = vmatpush1.msra.mxu0 0.0
        %6114 = vmatprep.subr.mxu0 0.0
        %6115 = vmatpush1.msra.mxu0 0.0
        %6116 = vmatprep.subr.mxu0 0.0
        %6117 = vmatpush1.msra.mxu0 0.0
        %6118 = vmatprep.subr.mxu0 0.0
        %6119 = vmatpush1.msra.mxu0 0.0
        %6120 = vmatprep.subr.mxu0 0.0
        %6121 = vmatpush1.msra.mxu0 0.0
        %6122 = vmatprep.subr.mxu0 0.0
        %6123 = vmatpush1.msra.mxu0 0.0
        %6124 = vmatprep.subr.mxu0 0.0
        %6125 = vmatpush1.msra.mxu0 0.0
        %6126 = vmatprep.subr.mxu0 0.0
        %6127 = vmatpush1.msra.mxu0 0.0
        %6128 = vmatprep.subr.mxu0 0.0
        %6129 = vmatpush1.msra.mxu0 0.0
        %6130 = vmatprep.subr.mxu0 0.0
        %6131 = vmatpush1.msra.mxu0 0.0
        %6132 = vmatprep.subr.mxu0 0.0
        %6133 = vmatpush1.msra.mxu0 0.0
        %6134 = vmatprep.subr.mxu0 0.0
        %6135 = vmatpush1.msra.mxu0 0.0
        %6136 = vmatprep.subr.mxu0 0.0
        %6137 = vmatpush1.msra.mxu0 0.0
        %6138 = vmatprep.subr.mxu0 0.0
        %6139 = vmatpush1.msra.mxu0 0.0
        %6140 = vmatprep.subr.mxu0 0.0
        %6141 = vmatpush1.msra.mxu0 0.0
        %6142 = vmatprep.subr.mxu0 0.0
        %6143 = vmatpush1.msra.mxu0 0.0
        %6144 = vmatprep.subr.mxu0 0.0
        %6145 = vmatpush1.msra.mxu0 0.0
        %6146 = vmatprep.subr.mxu0 0.0
        %6147 = vmatpush1.msra.mxu0 0.0
        %6148 = vmatprep.subr.mxu0 0.0
        %6149 = vmatpush1.msra.mxu0 0.0
        %6150 = vmatprep.subr.mxu0 0.0
        %6151 = vmatpush1.msra.mxu0 0.0
        %6152 = vmatprep.subr.mxu0 0.0
        %6153 = vmatpush1.msra.mxu0 0.0
        %6154 = vmatprep.subr.mxu0 0.0
        %6155 = vmatpush1.msra.mxu0 0.0
        %6156 = vmatprep.subr.mxu0 0.0
        %6157 = vmatpush1.msra.mxu0 0.0
        %6158 = vmatprep.subr.mxu0 0.0
        %6159 = vmatpush1.msra.mxu0 0.0
        %6160 = vmatprep.subr.mxu0 0.0
        %6161 = vmatpush1.msra.mxu0 0.0
        %6162 = vmatprep.subr.mxu0 0.0
        %6163 = vmatpush1.msra.mxu0 0.0
        %6164 = vmatprep.mubr.f32.mxu0 0.0
        %6165 = vmatmul.mubr.f32.gmra.mrb[0].mxu0 %v4115
        %v6166 = vpop.f32.mrb[0].mxu0
        %v6167 = vadd.f32 %v6098, %v6166
        %v6168 = vpop.f32.mrb[0].mxu0
        %6169 = vmatprep.mubr.f32.mxu0 0.0
        %6170 = vmatmul.mubr.f32.gmra.mrb[0].mxu0 %v4118
        %v6171 = vpop.f32.mrb[0].mxu0
        %v6172 = vadd.f32 %v6098, %v6171
        %v6173 = vpop.f32.mrb[0].mxu0
        %6174 = vmatprep.mubr.f32.mxu0 0.0
        %6175 = vmatmul.mubr.f32.gmra.mrb[0].mxu0 %v4121
        %v6176 = vpop.f32.mrb[0].mxu0
        %v6177 = vadd.f32 %v6098, %v6176
        %v6178 = vpop.f32.mrb[0].mxu0
        %6179 = vdwg.mxu0
        %v6181 = vsel %vm1361, %v5981, 0
        %v6184 = vsel %vm1361, %v5986, 0
        %v6187 = vsel %vm1361, %v5991, 0
        %v6190 = vsel %vm1361, %v6074, 0
        %v6193 = vsel %vm1361, %v6079, 0
        %v6196 = vsel %vm1361, %v6084, 0
        %6198 = vmatprep.subr.mxu0 0.0
        %6199 = vmatpush1.xpose.msra.mxu0 %v6190
        %6200 = vmatprep.subr.mxu0 0.0
        %6201 = vmatpush1.xpose.msra.mxu0 %v6193
        %6202 = vmatprep.subr.mxu0 0.0
        %6203 = vmatpush1.xpose.msra.mxu0 %v6196
        %6204 = vmatprep.subr.mxu0 0.0
        %6205 = vmatpush1.xpose.msra.mxu0 0.0
        %6206 = vmatprep.subr.mxu0 0.0
        %6207 = vmatpush1.xpose.msra.mxu0 0.0
        %6208 = vmatprep.subr.mxu0 0.0
        %6209 = vmatpush1.xpose.msra.mxu0 0.0
        %6210 = vmatprep.subr.mxu0 0.0
        %6211 = vmatpush1.xpose.msra.mxu0 0.0
        %6212 = vmatprep.subr.mxu0 0.0
        %6213 = vmatpush1.xpose.msra.mxu0 0.0
        %6214 = vmatprep.subr.mxu0 0.0
        %6215 = vmatpush1.xpose.msra.mxu0 0.0
        %6216 = vmatprep.subr.mxu0 0.0
        %6217 = vmatpush1.xpose.msra.mxu0 0.0
        %6218 = vmatprep.subr.mxu0 0.0
        %6219 = vmatpush1.xpose.msra.mxu0 0.0
        %6220 = vmatprep.subr.mxu0 0.0
        %6221 = vmatpush1.xpose.msra.mxu0 0.0
        %6222 = vmatprep.subr.mxu0 0.0
        %6223 = vmatpush1.xpose.msra.mxu0 0.0
        %6224 = vmatprep.subr.mxu0 0.0
        %6225 = vmatpush1.xpose.msra.mxu0 0.0
        %6226 = vmatprep.subr.mxu0 0.0
        %6227 = vmatpush1.xpose.msra.mxu0 0.0
        %6228 = vmatprep.subr.mxu0 0.0
        %6229 = vmatpush1.xpose.msra.mxu0 0.0
        %6230 = vmatprep.subr.mxu0 0.0
        %6231 = vmatpush1.xpose.msra.mxu0 0.0
        %6232 = vmatprep.subr.mxu0 0.0
        %6233 = vmatpush1.xpose.msra.mxu0 0.0
        %6234 = vmatprep.subr.mxu0 0.0
        %6235 = vmatpush1.xpose.msra.mxu0 0.0
        %6236 = vmatprep.subr.mxu0 0.0
        %6237 = vmatpush1.xpose.msra.mxu0 0.0
        %6238 = vmatprep.subr.mxu0 0.0
        %6239 = vmatpush1.xpose.msra.mxu0 0.0
        %6240 = vmatprep.subr.mxu0 0.0
        %6241 = vmatpush1.xpose.msra.mxu0 0.0
        %6242 = vmatprep.subr.mxu0 0.0
        %6243 = vmatpush1.xpose.msra.mxu0 0.0
        %6244 = vmatprep.subr.mxu0 0.0
        %6245 = vmatpush1.xpose.msra.mxu0 0.0
        %6246 = vmatprep.subr.mxu0 0.0
        %6247 = vmatpush1.xpose.msra.mxu0 0.0
        %6248 = vmatprep.subr.mxu0 0.0
        %6249 = vmatpush1.xpose.msra.mxu0 0.0
        %6250 = vmatprep.subr.mxu0 0.0
        %6251 = vmatpush1.xpose.msra.mxu0 0.0
        %6252 = vmatprep.subr.mxu0 0.0
        %6253 = vmatpush1.xpose.msra.mxu0 0.0
        %6254 = vmatprep.subr.mxu0 0.0
        %6255 = vmatpush1.xpose.msra.mxu0 0.0
        %6256 = vmatprep.subr.mxu0 0.0
        %6257 = vmatpush1.xpose.msra.mxu0 0.0
        %6258 = vmatprep.subr.mxu0 0.0
        %6259 = vmatpush1.xpose.msra.mxu0 0.0
        %6260 = vmatprep.subr.mxu0 0.0
        %6261 = vmatpush1.xpose.msra.mxu0 0.0
        %6262 = vmatprep.mubr.f32.mxu0 0.0
        %6263 = vmatmul.mubr.f32.gmra.mrb[0].mxu0 %v6181
        %v6264 = vpop.f32.mrb[0].mxu0
        %v6265 = vadd.f32 0.0, %v6264
        %v6266 = vpop.f32.mrb[0].mxu0
        %6267 = vmatprep.mubr.f32.mxu0 0.0
        %6268 = vmatmul.mubr.f32.gmra.mrb[0].mxu0 %v6184
        %v6269 = vpop.f32.mrb[0].mxu0
        %v6270 = vadd.f32 0.0, %v6269
        %v6271 = vpop.f32.mrb[0].mxu0
        %6272 = vmatprep.mubr.f32.mxu0 0.0
        %6273 = vmatmul.mubr.f32.gmra.mrb[0].mxu0 %v6187
        %v6274 = vpop.f32.mrb[0].mxu0
        %v6275 = vadd.f32 0.0, %v6274
        %v6276 = vpop.f32.mrb[0].mxu0
        %6277 = vdwg.mxu0
        %v6278 = vmul.f32 %v6265, 0.35355338
        %v6279 = vmul.f32 %v6270, 0.35355338
        %v6280 = vmul.f32 %v6275, 0.35355338
        %v6281 = vsel %vm1464, %v6278, -1e+30
        %v6282 = vsel %vm1464, %v6279, -1e+30
        %v6283 = vsel %vm1464, %v6280, -1e+30
        %v6284 = vsel %vm1468, %v6281, -inf
        %6285 = vmax.xlane.f32.xlu0 %v6284
        %v6286 = vpop.xlane.xlu0 %6285
        %v6287 = vsel %vm1468, %v6282, -inf
        %6288 = vmax.xlane.f32.xlu0 %v6287
        %v6289 = vpop.xlane.xlu0 %6288
        %v6290 = vsel %vm1468, %v6283, -inf
        %6291 = vmax.xlane.f32.xlu0 %v6290
        %v6292 = vpop.xlane.xlu0 %6291
        %v6293 = vsub.f32 %v6281, %v6286
        %v6294 = vsub.f32 %v6282, %v6289
        %v6295 = vsub.f32 %v6283, %v6292
        %v6296 = vmul.f32 %v6293, 1.442695
        %v6297 = vpow.pop %v6296
        %v6298 = vmul.f32 %v6294, 1.442695
        %v6299 = vpow.pop %v6298
        %v6300 = vmul.f32 %v6295, 1.442695
        %v6301 = vpow.pop %v6300
        %v6302 = vsel %vm1468, %v6297, 0.0
        %6303 = vadd.xlane.f32.xlu0 %v6302
        %v6304 = vpop.xlane.xlu0 %6303
        %v6305 = vsel %vm1468, %v6299, 0.0
        %6306 = vadd.xlane.f32.xlu0 %v6305
        %v6307 = vpop.xlane.xlu0 %6306
        %v6308 = vsel %vm1468, %v6301, 0.0
        %6309 = vadd.xlane.f32.xlu0 %v6308
        %v6310 = vpop.xlane.xlu0 %6309
        %v6311 = vrcp.pop %v6304
        %v6312 = vrcp.pop %v6307
        %v6313 = vrcp.pop %v6310
        %v6314 = vmul.f32 %v6297, %v6311
        %v6315 = vmul.f32 %v6299, %v6312
        %v6316 = vmul.f32 %v6301, %v6313
        %v6318 = vsel %vm1468, %v6314, 0
        %v6321 = vsel %vm1468, %v6315, 0
        %v6324 = vsel %vm1468, %v6316, 0
        %6326 = vmatprep.subr.mxu0 0.0
        %6327 = vmatpush1.msra.mxu0 %v6167
        %6328 = vmatprep.subr.mxu0 0.0
        %6329 = vmatpush1.msra.mxu0 %v6172
        %6330 = vmatprep.subr.mxu0 0.0
        %6331 = vmatpush1.msra.mxu0 %v6177
        %6332 = vmatprep.subr.mxu0 0.0
        %6333 = vmatpush1.msra.mxu0 0.0
        %6334 = vmatprep.subr.mxu0 0.0
        %6335 = vmatpush1.msra.mxu0 0.0
        %6336 = vmatprep.subr.mxu0 0.0
        %6337 = vmatpush1.msra.mxu0 0.0
        %6338 = vmatprep.subr.mxu0 0.0
        %6339 = vmatpush1.msra.mxu0 0.0
        %6340 = vmatprep.subr.mxu0 0.0
        %6341 = vmatpush1.msra.mxu0 0.0
        %6342 = vmatprep.subr.mxu0 0.0
        %6343 = vmatpush1.msra.mxu0 0.0
        %6344 = vmatprep.subr.mxu0 0.0
        %6345 = vmatpush1.msra.mxu0 0.0
        %6346 = vmatprep.subr.mxu0 0.0
        %6347 = vmatpush1.msra.mxu0 0.0
        %6348 = vmatprep.subr.mxu0 0.0
        %6349 = vmatpush1.msra.mxu0 0.0
        %6350 = vmatprep.subr.mxu0 0.0
        %6351 = vmatpush1.msra.mxu0 0.0
        %6352 = vmatprep.subr.mxu0 0.0
        %6353 = vmatpush1.msra.mxu0 0.0
        %6354 = vmatprep.subr.mxu0 0.0
        %6355 = vmatpush1.msra.mxu0 0.0
        %6356 = vmatprep.subr.mxu0 0.0
        %6357 = vmatpush1.msra.mxu0 0.0
        %6358 = vmatprep.subr.mxu0 0.0
        %6359 = vmatpush1.msra.mxu0 0.0
        %6360 = vmatprep.subr.mxu0 0.0
        %6361 = vmatpush1.msra.mxu0 0.0
        %6362 = vmatprep.subr.mxu0 0.0
        %6363 = vmatpush1.msra.mxu0 0.0
        %6364 = vmatprep.subr.mxu0 0.0
        %6365 = vmatpush1.msra.mxu0 0.0
        %6366 = vmatprep.subr.mxu0 0.0
        %6367 = vmatpush1.msra.mxu0 0.0
        %6368 = vmatprep.subr.mxu0 0.0
        %6369 = vmatpush1.msra.mxu0 0.0
        %6370 = vmatprep.subr.mxu0 0.0
        %6371 = vmatpush1.msra.mxu0 0.0
        %6372 = vmatprep.subr.mxu0 0.0
        %6373 = vmatpush1.msra.mxu0 0.0
        %6374 = vmatprep.subr.mxu0 0.0
        %6375 = vmatpush1.msra.mxu0 0.0
        %6376 = vmatprep.subr.mxu0 0.0
        %6377 = vmatpush1.msra.mxu0 0.0
        %6378 = vmatprep.subr.mxu0 0.0
        %6379 = vmatpush1.msra.mxu0 0.0
        %6380 = vmatprep.subr.mxu0 0.0
        %6381 = vmatpush1.msra.mxu0 0.0
        %6382 = vmatprep.subr.mxu0 0.0
        %6383 = vmatpush1.msra.mxu0 0.0
        %6384 = vmatprep.subr.mxu0 0.0
        %6385 = vmatpush1.msra.mxu0 0.0
        %6386 = vmatprep.subr.mxu0 0.0
        %6387 = vmatpush1.msra.mxu0 0.0
        %6388 = vmatprep.subr.mxu0 0.0
        %6389 = vmatpush1.msra.mxu0 0.0
        %6390 = vmatprep.mubr.f32.mxu0 0.0
        %6391 = vmatmul.mubr.f32.gmra.mrb[0].mxu0 %v6318
        %v6392 = vpop.f32.mrb[0].mxu0
        %v6393 = vadd.f32 0.0, %v6392
        %v6394 = vpop.f32.mrb[0].mxu0
        %6395 = vmatprep.mubr.f32.mxu0 0.0
        %6396 = vmatmul.mubr.f32.gmra.mrb[0].mxu0 %v6321
        %v6397 = vpop.f32.mrb[0].mxu0
        %v6398 = vadd.f32 0.0, %v6397
        %v6399 = vpop.f32.mrb[0].mxu0
        %6400 = vmatprep.mubr.f32.mxu0 0.0
        %6401 = vmatmul.mubr.f32.gmra.mrb[0].mxu0 %v6324
        %v6402 = vpop.f32.mrb[0].mxu0
        %v6403 = vadd.f32 0.0, %v6402
        %v6404 = vpop.f32.mrb[0].mxu0
        %6405 = vdwg.mxu0
        %s6406 = scalar_lea.vmem %s27, 56
        %v6407 = vld [vmem:[%s6406] sm:$0xff]
        %v6409 = vsel %vm1361, %v6393, 0
        %v6412 = vsel %vm1361, %v6398, 0
        %v6415 = vsel %vm1361, %v6403, 0
        %6417 = vmatprep.subr.mxu0 0.0
        %6418 = vmatpush1.msra.mxu0 %v6407
        %6419 = vmatprep.subr.mxu0 0.0
        %6420 = vmatpush1.msra.mxu0 0.0
        %6421 = vmatprep.subr.mxu0 0.0
        %6422 = vmatpush1.msra.mxu0 0.0
        %6423 = vmatprep.subr.mxu0 0.0
        %6424 = vmatpush1.msra.mxu0 0.0
        %6425 = vmatprep.subr.mxu0 0.0
        %6426 = vmatpush1.msra.mxu0 0.0
        %6427 = vmatprep.subr.mxu0 0.0
        %6428 = vmatpush1.msra.mxu0 0.0
        %6429 = vmatprep.subr.mxu0 0.0
        %6430 = vmatpush1.msra.mxu0 0.0
        %6431 = vmatprep.subr.mxu0 0.0
        %6432 = vmatpush1.msra.mxu0 0.0
        %6433 = vmatprep.subr.mxu0 0.0
        %6434 = vmatpush1.msra.mxu0 0.0
        %6435 = vmatprep.subr.mxu0 0.0
        %6436 = vmatpush1.msra.mxu0 0.0
        %6437 = vmatprep.subr.mxu0 0.0
        %6438 = vmatpush1.msra.mxu0 0.0
        %6439 = vmatprep.subr.mxu0 0.0
        %6440 = vmatpush1.msra.mxu0 0.0
        %6441 = vmatprep.subr.mxu0 0.0
        %6442 = vmatpush1.msra.mxu0 0.0
        %6443 = vmatprep.subr.mxu0 0.0
        %6444 = vmatpush1.msra.mxu0 0.0
        %6445 = vmatprep.subr.mxu0 0.0
        %6446 = vmatpush1.msra.mxu0 0.0
        %6447 = vmatprep.subr.mxu0 0.0
        %6448 = vmatpush1.msra.mxu0 0.0
        %6449 = vmatprep.subr.mxu0 0.0
        %6450 = vmatpush1.msra.mxu0 0.0
        %6451 = vmatprep.subr.mxu0 0.0
        %6452 = vmatpush1.msra.mxu0 0.0
        %6453 = vmatprep.subr.mxu0 0.0
        %6454 = vmatpush1.msra.mxu0 0.0
        %6455 = vmatprep.subr.mxu0 0.0
        %6456 = vmatpush1.msra.mxu0 0.0
        %6457 = vmatprep.subr.mxu0 0.0
        %6458 = vmatpush1.msra.mxu0 0.0
        %6459 = vmatprep.subr.mxu0 0.0
        %6460 = vmatpush1.msra.mxu0 0.0
        %6461 = vmatprep.subr.mxu0 0.0
        %6462 = vmatpush1.msra.mxu0 0.0
        %6463 = vmatprep.subr.mxu0 0.0
        %6464 = vmatpush1.msra.mxu0 0.0
        %6465 = vmatprep.subr.mxu0 0.0
        %6466 = vmatpush1.msra.mxu0 0.0
        %6467 = vmatprep.subr.mxu0 0.0
        %6468 = vmatpush1.msra.mxu0 0.0
        %6469 = vmatprep.subr.mxu0 0.0
        %6470 = vmatpush1.msra.mxu0 0.0
        %6471 = vmatprep.subr.mxu0 0.0
        %6472 = vmatpush1.msra.mxu0 0.0
        %6473 = vmatprep.subr.mxu0 0.0
        %6474 = vmatpush1.msra.mxu0 0.0
        %6475 = vmatprep.subr.mxu0 0.0
        %6476 = vmatpush1.msra.mxu0 0.0
        %6477 = vmatprep.subr.mxu0 0.0
        %6478 = vmatpush1.msra.mxu0 0.0
        %6479 = vmatprep.subr.mxu0 0.0
        %6480 = vmatpush1.msra.mxu0 0.0
        %6481 = vmatprep.mubr.f32.mxu0 0.0
        %6482 = vmatmul.mubr.f32.gmra.mrb[0].mxu0 %v6409
        %v6483 = vpop.f32.mrb[0].mxu0
        %v6484 = vadd.f32 0.0, %v6483
        %v6485 = vpop.f32.mrb[0].mxu0
        %6486 = vmatprep.mubr.f32.mxu0 0.0
        %6487 = vmatmul.mubr.f32.gmra.mrb[0].mxu0 %v6412
        %v6488 = vpop.f32.mrb[0].mxu0
        %v6489 = vadd.f32 0.0, %v6488
        %v6490 = vpop.f32.mrb[0].mxu0
        %6491 = vmatprep.mubr.f32.mxu0 0.0
        %6492 = vmatmul.mubr.f32.gmra.mrb[0].mxu0 %v6415
        %v6493 = vpop.f32.mrb[0].mxu0
        %v6494 = vadd.f32 0.0, %v6493
        %v6495 = vpop.f32.mrb[0].mxu0
        %6496 = vdwg.mxu0
        %v6497 = vadd.f32 %v5898, %v6484
        %v6498 = vadd.f32 %v5899, %v6489
        %v6499 = vadd.f32 %v5900, %v6494
        %v6500 = vadd.f32 %v4037, %v6497
        %v6501 = vadd.f32 %v4038, %v6498
        %v6502 = vadd.f32 %v4039, %v6499
        %s6503 = scalar_lea.vmem %s29, 1
        %v6504 = vld [vmem:[%s6503] sm:$0x1]
        %v6506 = vlaneseq
        %v6507 = vshrl.u32 %v6506, 7
        %v6508 = vsub.s32 0, %v6507
        %v6509 = vrot.slane %v6504, %v6508
        %v6511 = vadd.f32 %v6500, %v6509
        %v6512 = vadd.f32 %v6501, %v6509
        %v6513 = vadd.f32 %v6502, %v6509
        %s6514 = scalar_lea.vmem %s43, 32
        %v6515 = vld [vmem:[%s6514] sm:$0xff]
        %v6516 = vld [vmem:[%s6514 + $0x8] sm:$0xff]
        %v6517 = vld [vmem:[%s6514 + $0x10] sm:$0xff]
        %v6518 = vld [vmem:[%s6514 + $0x18] sm:$0xff]
        %s6519 = scalar_lea.vmem %s45, 1
        %v6520 = vld [vmem:[%s6519] sm:$0x1]
        %v6522 = vlaneseq
        %v6523 = vshrl.u32 %v6522, 7
        %v6524 = vsub.s32 0, %v6523
        %v6525 = vrot.slane %v6520, %v6524
        %v6528 = vsel %vm1020, %v6511, 0
        %v6531 = vsel %vm1020, %v6512, 0
        %v6534 = vsel %vm1020, %v6513, 0
        %6536 = vmatprep.subr.mxu0 0.0
        %6537 = vmatpush1.msra.mxu0 %v6515
        %6538 = vmatprep.subr.mxu0 0.0
        %6539 = vmatpush1.msra.mxu0 %v6516
        %6540 = vmatprep.subr.mxu0 0.0
        %6541 = vmatpush1.msra.mxu0 %v6517
        %6542 = vmatprep.subr.mxu0 0.0
        %6543 = vmatpush1.msra.mxu0 %v6518
        %6544 = vmatprep.subr.mxu0 0.0
        %6545 = vmatpush1.msra.mxu0 0.0
        %6546 = vmatprep.subr.mxu0 0.0
        %6547 = vmatpush1.msra.mxu0 0.0
        %6548 = vmatprep.subr.mxu0 0.0
        %6549 = vmatpush1.msra.mxu0 0.0
        %6550 = vmatprep.subr.mxu0 0.0
        %6551 = vmatpush1.msra.mxu0 0.0
        %6552 = vmatprep.subr.mxu0 0.0
        %6553 = vmatpush1.msra.mxu0 0.0
        %6554 = vmatprep.subr.mxu0 0.0
        %6555 = vmatpush1.msra.mxu0 0.0
        %6556 = vmatprep.subr.mxu0 0.0
        %6557 = vmatpush1.msra.mxu0 0.0
        %6558 = vmatprep.subr.mxu0 0.0
        %6559 = vmatpush1.msra.mxu0 0.0
        %6560 = vmatprep.subr.mxu0 0.0
        %6561 = vmatpush1.msra.mxu0 0.0
        %6562 = vmatprep.subr.mxu0 0.0
        %6563 = vmatpush1.msra.mxu0 0.0
        %6564 = vmatprep.subr.mxu0 0.0
        %6565 = vmatpush1.msra.mxu0 0.0
        %6566 = vmatprep.subr.mxu0 0.0
        %6567 = vmatpush1.msra.mxu0 0.0
        %6568 = vmatprep.subr.mxu0 0.0
        %6569 = vmatpush1.msra.mxu0 0.0
        %6570 = vmatprep.subr.mxu0 0.0
        %6571 = vmatpush1.msra.mxu0 0.0
        %6572 = vmatprep.subr.mxu0 0.0
        %6573 = vmatpush1.msra.mxu0 0.0
        %6574 = vmatprep.subr.mxu0 0.0
        %6575 = vmatpush1.msra.mxu0 0.0
        %6576 = vmatprep.subr.mxu0 0.0
        %6577 = vmatpush1.msra.mxu0 0.0
        %6578 = vmatprep.subr.mxu0 0.0
        %6579 = vmatpush1.msra.mxu0 0.0
        %6580 = vmatprep.subr.mxu0 0.0
        %6581 = vmatpush1.msra.mxu0 0.0
        %6582 = vmatprep.subr.mxu0 0.0
        %6583 = vmatpush1.msra.mxu0 0.0
        %6584 = vmatprep.subr.mxu0 0.0
        %6585 = vmatpush1.msra.mxu0 0.0
        %6586 = vmatprep.subr.mxu0 0.0
        %6587 = vmatpush1.msra.mxu0 0.0
        %6588 = vmatprep.subr.mxu0 0.0
        %6589 = vmatpush1.msra.mxu0 0.0
        %6590 = vmatprep.subr.mxu0 0.0
        %6591 = vmatpush1.msra.mxu0 0.0
        %6592 = vmatprep.subr.mxu0 0.0
        %6593 = vmatpush1.msra.mxu0 0.0
        %6594 = vmatprep.subr.mxu0 0.0
        %6595 = vmatpush1.msra.mxu0 0.0
        %6596 = vmatprep.subr.mxu0 0.0
        %6597 = vmatpush1.msra.mxu0 0.0
        %6598 = vmatprep.subr.mxu0 0.0
        %6599 = vmatpush1.msra.mxu0 0.0
        %6600 = vmatprep.mubr.f32.mxu0 0.0
        %6601 = vmatmul.mubr.f32.gmra.mrb[0].mxu0 %v6528
        %v6602 = vpop.f32.mrb[0].mxu0
        %v6603 = vadd.f32 %v6525, %v6602
        %v6604 = vpop.f32.mrb[0].mxu0
        %6605 = vmatprep.mubr.f32.mxu0 0.0
        %6606 = vmatmul.mubr.f32.gmra.mrb[0].mxu0 %v6531
        %v6607 = vpop.f32.mrb[0].mxu0
        %v6608 = vadd.f32 %v6525, %v6607
        %v6609 = vpop.f32.mrb[0].mxu0
        %6610 = vmatprep.mubr.f32.mxu0 0.0
        %6611 = vmatmul.mubr.f32.gmra.mrb[0].mxu0 %v6534
        %v6612 = vpop.f32.mrb[0].mxu0
        %v6613 = vadd.f32 %v6525, %v6612
        %v6614 = vpop.f32.mrb[0].mxu0
        %6615 = vdwg.mxu0
        %v6616 = vmax.f32 %v6603, 0.0
        %v6617 = vmax.f32 %v6608, 0.0
        %v6618 = vmax.f32 %v6613, 0.0
        %s6619 = scalar_lea.vmem %s47, 8
        %v6620 = vld [vmem:[%s6619] sm:$0xff]
        %s6621 = scalar_lea.vmem %s49, 1
        %v6622 = vld [vmem:[%s6621] sm:$0x1]
        %v6624 = vlaneseq
        %v6625 = vshrl.u32 %v6624, 7
        %v6626 = vsub.s32 0, %v6625
        %v6627 = vrot.slane %v6622, %v6626
        %v6630 = vsel %vm1361, %v6616, 0
        %v6633 = vsel %vm1361, %v6617, 0
        %v6636 = vsel %vm1361, %v6618, 0
        %6638 = vmatprep.subr.mxu0 0.0
        %6639 = vmatpush1.msra.mxu0 %v6620
        %6640 = vmatprep.subr.mxu0 0.0
        %6641 = vmatpush1.msra.mxu0 0.0
        %6642 = vmatprep.subr.mxu0 0.0
        %6643 = vmatpush1.msra.mxu0 0.0
        %6644 = vmatprep.subr.mxu0 0.0
        %6645 = vmatpush1.msra.mxu0 0.0
        %6646 = vmatprep.subr.mxu0 0.0
        %6647 = vmatpush1.msra.mxu0 0.0
        %6648 = vmatprep.subr.mxu0 0.0
        %6649 = vmatpush1.msra.mxu0 0.0
        %6650 = vmatprep.subr.mxu0 0.0
        %6651 = vmatpush1.msra.mxu0 0.0
        %6652 = vmatprep.subr.mxu0 0.0
        %6653 = vmatpush1.msra.mxu0 0.0
        %6654 = vmatprep.subr.mxu0 0.0
        %6655 = vmatpush1.msra.mxu0 0.0
        %6656 = vmatprep.subr.mxu0 0.0
        %6657 = vmatpush1.msra.mxu0 0.0
        %6658 = vmatprep.subr.mxu0 0.0
        %6659 = vmatpush1.msra.mxu0 0.0
        %6660 = vmatprep.subr.mxu0 0.0
        %6661 = vmatpush1.msra.mxu0 0.0
        %6662 = vmatprep.subr.mxu0 0.0
        %6663 = vmatpush1.msra.mxu0 0.0
        %6664 = vmatprep.subr.mxu0 0.0
        %6665 = vmatpush1.msra.mxu0 0.0
        %6666 = vmatprep.subr.mxu0 0.0
        %6667 = vmatpush1.msra.mxu0 0.0
        %6668 = vmatprep.subr.mxu0 0.0
        %6669 = vmatpush1.msra.mxu0 0.0
        %6670 = vmatprep.subr.mxu0 0.0
        %6671 = vmatpush1.msra.mxu0 0.0
        %6672 = vmatprep.subr.mxu0 0.0
        %6673 = vmatpush1.msra.mxu0 0.0
        %6674 = vmatprep.subr.mxu0 0.0
        %6675 = vmatpush1.msra.mxu0 0.0
        %6676 = vmatprep.subr.mxu0 0.0
        %6677 = vmatpush1.msra.mxu0 0.0
        %6678 = vmatprep.subr.mxu0 0.0
        %6679 = vmatpush1.msra.mxu0 0.0
        %6680 = vmatprep.subr.mxu0 0.0
        %6681 = vmatpush1.msra.mxu0 0.0
        %6682 = vmatprep.subr.mxu0 0.0
        %6683 = vmatpush1.msra.mxu0 0.0
        %6684 = vmatprep.subr.mxu0 0.0
        %6685 = vmatpush1.msra.mxu0 0.0
        %6686 = vmatprep.subr.mxu0 0.0
        %6687 = vmatpush1.msra.mxu0 0.0
        %6688 = vmatprep.subr.mxu0 0.0
        %6689 = vmatpush1.msra.mxu0 0.0
        %6690 = vmatprep.subr.mxu0 0.0
        %6691 = vmatpush1.msra.mxu0 0.0
        %6692 = vmatprep.subr.mxu0 0.0
        %6693 = vmatpush1.msra.mxu0 0.0
        %6694 = vmatprep.subr.mxu0 0.0
        %6695 = vmatpush1.msra.mxu0 0.0
        %6696 = vmatprep.subr.mxu0 0.0
        %6697 = vmatpush1.msra.mxu0 0.0
        %6698 = vmatprep.subr.mxu0 0.0
        %6699 = vmatpush1.msra.mxu0 0.0
        %6700 = vmatprep.subr.mxu0 0.0
        %6701 = vmatpush1.msra.mxu0 0.0
        %6702 = vmatprep.mubr.f32.mxu0 0.0
        %6703 = vmatmul.mubr.f32.gmra.mrb[0].mxu0 %v6630
        %v6704 = vpop.f32.mrb[0].mxu0
        %v6705 = vadd.f32 %v6627, %v6704
        %v6706 = vpop.f32.mrb[0].mxu0
        %6707 = vmatprep.mubr.f32.mxu0 0.0
        %6708 = vmatmul.mubr.f32.gmra.mrb[0].mxu0 %v6633
        %v6709 = vpop.f32.mrb[0].mxu0
        %v6710 = vpop.f32.mrb[0].mxu0
        %6711 = vmatprep.mubr.f32.mxu0 0.0
        %6712 = vmatmul.mubr.f32.gmra.mrb[0].mxu0 %v6636
        %v6713 = vpop.f32.mrb[0].mxu0
        %v6714 = vpop.f32.mrb[0].mxu0
        %6715 = vdwg.mxu0
        %v6716 = vmul.f32 %v6705, 0.1
        %s6717 = scalar_lea.vmem %s31, 1
        %v6718 = vld [vmem:[%s6717] sm:$0x1]
        %s6719 = scalar_lea.vmem %s33, 1
        %v6720 = vld [vmem:[%s6719] sm:$0x1]
        %v6721 = vsel %vm1020, %v6511, 0.0
        %6722 = vadd.xlane.f32.xlu0 %v6721
        %v6723 = vpop.xlane.xlu0 %6722
        %v6724 = vsel %vm1020, %v6512, 0.0
        %6725 = vadd.xlane.f32.xlu0 %v6724
        %v6726 = vpop.xlane.xlu0 %6725
        %v6727 = vsel %vm1020, %v6513, 0.0
        %6728 = vadd.xlane.f32.xlu0 %v6727
        %v6729 = vpop.xlane.xlu0 %6728
        %v6730 = vmul.f32 %v6723, %v1030
        %v6731 = vmul.f32 %v6726, %v1030
        %v6732 = vmul.f32 %v6729, %v1030
        %v6733 = vsub.f32 %v6511, %v6730
        %v6734 = vsub.f32 %v6512, %v6731
        %v6735 = vsub.f32 %v6513, %v6732
        %v6736 = vmul.f32 %v6733, %v6733
        %v6737 = vmul.f32 %v6734, %v6734
        %v6738 = vmul.f32 %v6735, %v6735
        %v6739 = vsel %vm1020, %v6736, 0.0
        %6740 = vadd.xlane.f32.xlu0 %v6739
        %v6741 = vpop.xlane.xlu0 %6740
        %v6742 = vsel %vm1020, %v6737, 0.0
        %6743 = vadd.xlane.f32.xlu0 %v6742
        %v6744 = vpop.xlane.xlu0 %6743
        %v6745 = vsel %vm1020, %v6738, 0.0
        %6746 = vadd.xlane.f32.xlu0 %v6745
        %v6747 = vpop.xlane.xlu0 %6746
        %v6748 = vmul.f32 %v6741, %v1030
        %v6749 = vmul.f32 %v6744, %v1030
        %v6750 = vmul.f32 %v6747, %v1030
        %v6751 = vadd.f32 %v6748, 1e-06
        %v6752 = vadd.f32 %v6749, 1e-06
        %v6753 = vadd.f32 %v6750, 1e-06
        %v6754 = vrsqrt.pop %v6751
        %v6755 = vrsqrt.pop %v6752
        %v6756 = vrsqrt.pop %v6753
        %v6757 = vmul.f32 %v6733, %v6754
        %v6758 = vmul.f32 %v6734, %v6755
        %v6759 = vmul.f32 %v6735, %v6756
        %v6761 = vlaneseq
        %v6762 = vshrl.u32 %v6761, 7
        %v6763 = vsub.s32 0, %v6762
        %v6764 = vrot.slane %v6718, %v6763
        %v6766 = vmul.f32 %v6757, %v6764
        %v6767 = vmul.f32 %v6758, %v6764
        %v6768 = vmul.f32 %v6759, %v6764
        %v6770 = vlaneseq
        %v6771 = vshrl.u32 %v6770, 7
        %v6772 = vsub.s32 0, %v6771
        %v6773 = vrot.slane %v6720, %v6772
        %v6775 = vadd.f32 %v6766, %v6773
        %v6776 = vadd.f32 %v6767, %v6773
        %v6777 = vadd.f32 %v6768, %v6773
        %s6778 = scalar_lea.vmem %s35, 32
        %v6779 = vld [vmem:[%s6778] sm:$0xff]
        %v6780 = vld [vmem:[%s6778 + $0x8] sm:$0xff]
        %v6781 = vld [vmem:[%s6778 + $0x10] sm:$0xff]
        %v6782 = vld [vmem:[%s6778 + $0x18] sm:$0xff]
        %s6783 = scalar_lea.vmem %s37, 1
        %v6784 = vld [vmem:[%s6783] sm:$0x1]
        %v6786 = vlaneseq
        %v6787 = vshrl.u32 %v6786, 7
        %v6788 = vsub.s32 0, %v6787
        %v6789 = vrot.slane %v6784, %v6788
        %v6792 = vsel %vm1020, %v6775, 0
        %v6795 = vsel %vm1020, %v6776, 0
        %v6798 = vsel %vm1020, %v6777, 0
        %6800 = vmatprep.subr.mxu0 0.0
        %6801 = vmatpush1.msra.mxu0 %v6779
        %6802 = vmatprep.subr.mxu0 0.0
        %6803 = vmatpush1.msra.mxu0 %v6780
        %6804 = vmatprep.subr.mxu0 0.0
        %6805 = vmatpush1.msra.mxu0 %v6781
        %6806 = vmatprep.subr.mxu0 0.0
        %6807 = vmatpush1.msra.mxu0 %v6782
        %6808 = vmatprep.subr.mxu0 0.0
        %6809 = vmatpush1.msra.mxu0 0.0
        %6810 = vmatprep.subr.mxu0 0.0
        %6811 = vmatpush1.msra.mxu0 0.0
        %6812 = vmatprep.subr.mxu0 0.0
        %6813 = vmatpush1.msra.mxu0 0.0
        %6814 = vmatprep.subr.mxu0 0.0
        %6815 = vmatpush1.msra.mxu0 0.0
        %6816 = vmatprep.subr.mxu0 0.0
        %6817 = vmatpush1.msra.mxu0 0.0
        %6818 = vmatprep.subr.mxu0 0.0
        %6819 = vmatpush1.msra.mxu0 0.0
        %6820 = vmatprep.subr.mxu0 0.0
        %6821 = vmatpush1.msra.mxu0 0.0
        %6822 = vmatprep.subr.mxu0 0.0
        %6823 = vmatpush1.msra.mxu0 0.0
        %6824 = vmatprep.subr.mxu0 0.0
        %6825 = vmatpush1.msra.mxu0 0.0
        %6826 = vmatprep.subr.mxu0 0.0
        %6827 = vmatpush1.msra.mxu0 0.0
        %6828 = vmatprep.subr.mxu0 0.0
        %6829 = vmatpush1.msra.mxu0 0.0
        %6830 = vmatprep.subr.mxu0 0.0
        %6831 = vmatpush1.msra.mxu0 0.0
        %6832 = vmatprep.subr.mxu0 0.0
        %6833 = vmatpush1.msra.mxu0 0.0
        %6834 = vmatprep.subr.mxu0 0.0
        %6835 = vmatpush1.msra.mxu0 0.0
        %6836 = vmatprep.subr.mxu0 0.0
        %6837 = vmatpush1.msra.mxu0 0.0
        %6838 = vmatprep.subr.mxu0 0.0
        %6839 = vmatpush1.msra.mxu0 0.0
        %6840 = vmatprep.subr.mxu0 0.0
        %6841 = vmatpush1.msra.mxu0 0.0
        %6842 = vmatprep.subr.mxu0 0.0
        %6843 = vmatpush1.msra.mxu0 0.0
        %6844 = vmatprep.subr.mxu0 0.0
        %6845 = vmatpush1.msra.mxu0 0.0
        %6846 = vmatprep.subr.mxu0 0.0
        %6847 = vmatpush1.msra.mxu0 0.0
        %6848 = vmatprep.subr.mxu0 0.0
        %6849 = vmatpush1.msra.mxu0 0.0
        %6850 = vmatprep.subr.mxu0 0.0
        %6851 = vmatpush1.msra.mxu0 0.0
        %6852 = vmatprep.subr.mxu0 0.0
        %6853 = vmatpush1.msra.mxu0 0.0
        %6854 = vmatprep.subr.mxu0 0.0
        %6855 = vmatpush1.msra.mxu0 0.0
        %6856 = vmatprep.subr.mxu0 0.0
        %6857 = vmatpush1.msra.mxu0 0.0
        %6858 = vmatprep.subr.mxu0 0.0
        %6859 = vmatpush1.msra.mxu0 0.0
        %6860 = vmatprep.subr.mxu0 0.0
        %6861 = vmatpush1.msra.mxu0 0.0
        %6862 = vmatprep.subr.mxu0 0.0
        %6863 = vmatpush1.msra.mxu0 0.0
        %6864 = vmatprep.mubr.f32.mxu0 0.0
        %6865 = vmatmul.mubr.f32.gmra.mrb[0].mxu0 %v6792
        %v6866 = vpop.f32.mrb[0].mxu0
        %v6867 = vadd.f32 %v6789, %v6866
        %v6868 = vpop.f32.mrb[0].mxu0
        %6869 = vmatprep.mubr.f32.mxu0 0.0
        %6870 = vmatmul.mubr.f32.gmra.mrb[0].mxu0 %v6795
        %v6871 = vpop.f32.mrb[0].mxu0
        %v6872 = vadd.f32 %v6789, %v6871
        %v6873 = vpop.f32.mrb[0].mxu0
        %6874 = vmatprep.mubr.f32.mxu0 0.0
        %6875 = vmatmul.mubr.f32.gmra.mrb[0].mxu0 %v6798
        %v6876 = vpop.f32.mrb[0].mxu0
        %v6877 = vadd.f32 %v6789, %v6876
        %v6878 = vpop.f32.mrb[0].mxu0
        %6879 = vdwg.mxu0
        %v6880 = vmul.f32 %v6867, 0.70710677
        %v6881 = vmul.f32 %v6872, 0.70710677
        %v6882 = vmul.f32 %v6877, 0.70710677
        %v6883 = vand.u32 2147483647, %v6880
        %v6884 = vand.u32 2147483647, %v6881
        %v6885 = vand.u32 2147483647, %v6882
        %v6886 = vmul.f32 %v6883, 0.3275911
        %v6887 = vmul.f32 %v6884, 0.3275911
        %v6888 = vmul.f32 %v6885, 0.3275911
        %v6889 = vadd.f32 %v6886, 1.0
        %v6890 = vadd.f32 %v6887, 1.0
        %v6891 = vadd.f32 %v6888, 1.0
        %v6892 = vrcp.pop %v6889
        %v6893 = vmul.f32 1.0, %v6892
        %v6894 = vrcp.pop %v6890
        %v6895 = vmul.f32 1.0, %v6894
        %v6896 = vrcp.pop %v6891
        %v6897 = vmul.f32 1.0, %v6896
        %v6898 = vmul.f32 %v6893, 1.0614054
        %v6899 = vmul.f32 %v6895, 1.0614054
        %v6900 = vmul.f32 %v6897, 1.0614054
        %v6901 = vadd.f32 %v6898, -1.4531521
        %v6902 = vadd.f32 %v6899, -1.4531521
        %v6903 = vadd.f32 %v6900, -1.4531521
        %v6904 = vmul.f32 %v6893, %v6901
        %v6905 = vmul.f32 %v6895, %v6902
        %v6906 = vmul.f32 %v6897, %v6903
        %v6907 = vadd.f32 %v6904, 1.4214138
        %v6908 = vadd.f32 %v6905, 1.4214138
        %v6909 = vadd.f32 %v6906, 1.4214138
        %v6910 = vmul.f32 %v6893, %v6907
        %v6911 = vmul.f32 %v6895, %v6908
        %v6912 = vmul.f32 %v6897, %v6909
        %v6913 = vadd.f32 %v6910, -0.28449672
        %v6914 = vadd.f32 %v6911, -0.28449672
        %v6915 = vadd.f32 %v6912, -0.28449672
        %v6916 = vmul.f32 %v6893, %v6913
        %v6917 = vmul.f32 %v6895, %v6914
        %v6918 = vmul.f32 %v6897, %v6915
        %v6919 = vadd.f32 %v6916, 0.2548296
        %v6920 = vadd.f32 %v6917, 0.2548296
        %v6921 = vadd.f32 %v6918, 0.2548296
        %v6922 = vmul.f32 %v6893, %v6919
        %v6923 = vmul.f32 %v6895, %v6920
        %v6924 = vmul.f32 %v6897, %v6921
        %v6925 = vsub.f32 0.0, %v6883
        %v6926 = vsub.f32 0.0, %v6884
        %v6927 = vsub.f32 0.0, %v6885
        %v6928 = vmul.f32 %v6925, %v6883
        %v6929 = vmul.f32 %v6926, %v6884
        %v6930 = vmul.f32 %v6927, %v6885
        %v6931 = vmul.f32 %v6928, 1.442695
        %v6932 = vpow.pop %v6931
        %v6933 = vmul.f32 %v6929, 1.442695
        %v6934 = vpow.pop %v6933
        %v6935 = vmul.f32 %v6930, 1.442695
        %v6936 = vpow.pop %v6935
        %v6937 = vmul.f32 %v6922, %v6932
        %v6938 = vmul.f32 %v6923, %v6934
        %v6939 = vmul.f32 %v6924, %v6936
        %v6940 = vsub.f32 1.0, %v6937
        %v6941 = vsub.f32 1.0, %v6938
        %v6942 = vsub.f32 1.0, %v6939
        %vm6943 = vcmp.ge.f32.partialorder %v6880, 0.0
        %vm6944 = vcmp.ge.f32.partialorder %v6881, 0.0
        %vm6945 = vcmp.ge.f32.partialorder %v6882, 0.0
        %v6946 = vsub.f32 0.0, %v6940
        %v6947 = vsub.f32 0.0, %v6941
        %v6948 = vsub.f32 0.0, %v6942
        %v6949 = vsel %vm6943, %v6940, %v6946
        %v6950 = vsel %vm6944, %v6941, %v6947
        %v6951 = vsel %vm6945, %v6942, %v6948
        %v6952 = vmul.f32 %v6867, 0.5
        %v6953 = vmul.f32 %v6872, 0.5
        %v6954 = vmul.f32 %v6877, 0.5
        %v6955 = vadd.f32 %v6949, 1.0
        %v6956 = vadd.f32 %v6950, 1.0
        %v6957 = vadd.f32 %v6951, 1.0
        %v6958 = vmul.f32 %v6952, %v6955
        %v6959 = vmul.f32 %v6953, %v6956
        %v6960 = vmul.f32 %v6954, %v6957
        %s6961 = scalar_lea.vmem %s39, 128
        %v6962 = vld [vmem:[%s6961] sm:$0xff]
        %v6963 = vld [vmem:[%s6961 + $0x8] sm:$0xff]
        %v6964 = vld [vmem:[%s6961 + $0x10] sm:$0xff]
        %v6965 = vld [vmem:[%s6961 + $0x18] sm:$0xff]
        %v6966 = vld [vmem:[%s6961 + $0x20] sm:$0xff]
        %v6967 = vld [vmem:[%s6961 + $0x28] sm:$0xff]
        %v6968 = vld [vmem:[%s6961 + $0x30] sm:$0xff]
        %v6969 = vld [vmem:[%s6961 + $0x38] sm:$0xff]
        %v6970 = vld [vmem:[%s6961 + $0x40] sm:$0xff]
        %v6971 = vld [vmem:[%s6961 + $0x48] sm:$0xff]
        %v6972 = vld [vmem:[%s6961 + $0x50] sm:$0xff]
        %v6973 = vld [vmem:[%s6961 + $0x58] sm:$0xff]
        %v6974 = vld [vmem:[%s6961 + $0x60] sm:$0xff]
        %v6975 = vld [vmem:[%s6961 + $0x68] sm:$0xff]
        %v6976 = vld [vmem:[%s6961 + $0x70] sm:$0xff]
        %v6977 = vld [vmem:[%s6961 + $0x78] sm:$0xff]
        %s6978 = scalar_lea.vmem %s41, 1
        %v6979 = vld [vmem:[%s6978] sm:$0x1]
        %v6981 = vlaneseq
        %v6982 = vshrl.u32 %v6981, 7
        %v6983 = vsub.s32 0, %v6982
        %v6984 = vrot.slane %v6979, %v6983
        %6986 = vmatprep.subr.mxu0 0.0
        %6987 = vmatpush1.msra.mxu0 %v6962
        %6988 = vmatprep.subr.mxu0 0.0
        %6989 = vmatpush1.msra.mxu0 %v6963
        %6990 = vmatprep.subr.mxu0 0.0
        %6991 = vmatpush1.msra.mxu0 %v6964
        %6992 = vmatprep.subr.mxu0 0.0
        %6993 = vmatpush1.msra.mxu0 %v6965
        %6994 = vmatprep.subr.mxu0 0.0
        %6995 = vmatpush1.msra.mxu0 %v6966
        %6996 = vmatprep.subr.mxu0 0.0
        %6997 = vmatpush1.msra.mxu0 %v6967
        %6998 = vmatprep.subr.mxu0 0.0
        %6999 = vmatpush1.msra.mxu0 %v6968
        %7000 = vmatprep.subr.mxu0 0.0
        %7001 = vmatpush1.msra.mxu0 %v6969
        %7002 = vmatprep.subr.mxu0 0.0
        %7003 = vmatpush1.msra.mxu0 %v6970
        %7004 = vmatprep.subr.mxu0 0.0
        %7005 = vmatpush1.msra.mxu0 %v6971
        %7006 = vmatprep.subr.mxu0 0.0
        %7007 = vmatpush1.msra.mxu0 %v6972
        %7008 = vmatprep.subr.mxu0 0.0
        %7009 = vmatpush1.msra.mxu0 %v6973
        %7010 = vmatprep.subr.mxu0 0.0
        %7011 = vmatpush1.msra.mxu0 %v6974
        %7012 = vmatprep.subr.mxu0 0.0
        %7013 = vmatpush1.msra.mxu0 %v6975
        %7014 = vmatprep.subr.mxu0 0.0
        %7015 = vmatpush1.msra.mxu0 %v6976
        %7016 = vmatprep.subr.mxu0 0.0
        %7017 = vmatpush1.msra.mxu0 %v6977
        %7018 = vmatprep.subr.mxu0 0.0
        %7019 = vmatpush1.msra.mxu0 0.0
        %7020 = vmatprep.subr.mxu0 0.0
        %7021 = vmatpush1.msra.mxu0 0.0
        %7022 = vmatprep.subr.mxu0 0.0
        %7023 = vmatpush1.msra.mxu0 0.0
        %7024 = vmatprep.subr.mxu0 0.0
        %7025 = vmatpush1.msra.mxu0 0.0
        %7026 = vmatprep.subr.mxu0 0.0
        %7027 = vmatpush1.msra.mxu0 0.0
        %7028 = vmatprep.subr.mxu0 0.0
        %7029 = vmatpush1.msra.mxu0 0.0
        %7030 = vmatprep.subr.mxu0 0.0
        %7031 = vmatpush1.msra.mxu0 0.0
        %7032 = vmatprep.subr.mxu0 0.0
        %7033 = vmatpush1.msra.mxu0 0.0
        %7034 = vmatprep.subr.mxu0 0.0
        %7035 = vmatpush1.msra.mxu0 0.0
        %7036 = vmatprep.subr.mxu0 0.0
        %7037 = vmatpush1.msra.mxu0 0.0
        %7038 = vmatprep.subr.mxu0 0.0
        %7039 = vmatpush1.msra.mxu0 0.0
        %7040 = vmatprep.subr.mxu0 0.0
        %7041 = vmatpush1.msra.mxu0 0.0
        %7042 = vmatprep.subr.mxu0 0.0
        %7043 = vmatpush1.msra.mxu0 0.0
        %7044 = vmatprep.subr.mxu0 0.0
        %7045 = vmatpush1.msra.mxu0 0.0
        %7046 = vmatprep.subr.mxu0 0.0
        %7047 = vmatpush1.msra.mxu0 0.0
        %7048 = vmatprep.subr.mxu0 0.0
        %7049 = vmatpush1.msra.mxu0 0.0
        %7050 = vmatprep.mubr.f32.mxu0 0.0
        %7051 = vmatmul.mubr.f32.gmra.mrb[0].mxu0 %v6958
        %v7052 = vpop.f32.mrb[0].mxu0
        %v7053 = vadd.f32 %v6984, %v7052
        %v7054 = vpop.f32.mrb[0].mxu0
        %7055 = vmatprep.mubr.f32.mxu0 0.0
        %7056 = vmatmul.mubr.f32.gmra.mrb[0].mxu0 %v6959
        %v7057 = vpop.f32.mrb[0].mxu0
        %v7058 = vpop.f32.mrb[0].mxu0
        %7059 = vmatprep.mubr.f32.mxu0 0.0
        %7060 = vmatmul.mubr.f32.gmra.mrb[0].mxu0 %v6960
        %v7061 = vpop.f32.mrb[0].mxu0
        %v7062 = vpop.f32.mrb[0].mxu0
        %7063 = vdwg.mxu0
        %v7064 = vadd.f32 %v6511, %v7053
        %v7065 = vadd.f32 %v7064, %v6716
        %v7066 = vld [vmem:[%s51] sm:$0x1]
        %v7067 = vld [vmem:[%s53] sm:$0x1]
        %vm7068 = vcmask 253952
        %v7069 = vsel %vm7068, %v7065, 0.0
        %7070 = vadd.xlane.f32.xlu0 %v7069
        %v7071 = vpop.xlane.xlu0 %7070
        %v7072 = vmul.f32 %v7071, %v1030
        %v7073 = vsub.f32 %v7065, %v7072
        %v7074 = vmul.f32 %v7073, %v7073
        %v7075 = vsel %vm7068, %v7074, 0.0
        %7076 = vadd.xlane.f32.xlu0 %v7075
        %v7077 = vpop.xlane.xlu0 %7076
        %v7078 = vmul.f32 %v7077, %v1030
        %v7079 = vadd.f32 %v7078, 1e-06
        %v7080 = vrsqrt.pop %v7079
        %v7081 = vmul.f32 %v7073, %v7080
        %v7082 = vmul.f32 %v7081, %v7066
        %v7083 = vadd.f32 %v7082, %v7067
        %v7084 = vmul.f32 %v7083, %v7083
        %v7085 = vsel %vm7068, %v7084, 0.0
        %7086 = vadd.xlane.f32.xlu0 %v7085
        %v7087 = vpop.xlane.xlu0 %7086
        %v7088 = vmax.f32 %v7087, 1e-24
        %v7089 = vrsqrt.pop %v7088
        %v7090 = vmul.f32 %v7083, %v7089
        %v7091 = vld [vmem:[%s55] sm:$0xff]
        %v7092 = vld [vmem:[%s55 + $0x8] sm:$0xff]
        %v7093 = vld [vmem:[%s55 + $0x10] sm:$0xff]
        %v7094 = vld [vmem:[%s55 + $0x18] sm:$0xff]
        %v7096 = vsel %vm1020, %v7090, 0
        %7098 = vmatprep.subr.mxu0 0.0
        %7099 = vmatpush1.msra.mxu0 %v7091
        %7100 = vmatprep.subr.mxu0 0.0
        %7101 = vmatpush1.msra.mxu0 %v7092
        %7102 = vmatprep.subr.mxu0 0.0
        %7103 = vmatpush1.msra.mxu0 %v7093
        %7104 = vmatprep.subr.mxu0 0.0
        %7105 = vmatpush1.msra.mxu0 %v7094
        %7106 = vmatprep.subr.mxu0 0.0
        %7107 = vmatpush1.msra.mxu0 0.0
        %7108 = vmatprep.subr.mxu0 0.0
        %7109 = vmatpush1.msra.mxu0 0.0
        %7110 = vmatprep.subr.mxu0 0.0
        %7111 = vmatpush1.msra.mxu0 0.0
        %7112 = vmatprep.subr.mxu0 0.0
        %7113 = vmatpush1.msra.mxu0 0.0
        %7114 = vmatprep.subr.mxu0 0.0
        %7115 = vmatpush1.msra.mxu0 0.0
        %7116 = vmatprep.subr.mxu0 0.0
        %7117 = vmatpush1.msra.mxu0 0.0
        %7118 = vmatprep.subr.mxu0 0.0
        %7119 = vmatpush1.msra.mxu0 0.0
        %7120 = vmatprep.subr.mxu0 0.0
        %7121 = vmatpush1.msra.mxu0 0.0
        %7122 = vmatprep.subr.mxu0 0.0
        %7123 = vmatpush1.msra.mxu0 0.0
        %7124 = vmatprep.subr.mxu0 0.0
        %7125 = vmatpush1.msra.mxu0 0.0
        %7126 = vmatprep.subr.mxu0 0.0
        %7127 = vmatpush1.msra.mxu0 0.0
        %7128 = vmatprep.subr.mxu0 0.0
        %7129 = vmatpush1.msra.mxu0 0.0
        %7130 = vmatprep.subr.mxu0 0.0
        %7131 = vmatpush1.msra.mxu0 0.0
        %7132 = vmatprep.subr.mxu0 0.0
        %7133 = vmatpush1.msra.mxu0 0.0
        %7134 = vmatprep.subr.mxu0 0.0
        %7135 = vmatpush1.msra.mxu0 0.0
        %7136 = vmatprep.subr.mxu0 0.0
        %7137 = vmatpush1.msra.mxu0 0.0
        %7138 = vmatprep.subr.mxu0 0.0
        %7139 = vmatpush1.msra.mxu0 0.0
        %7140 = vmatprep.subr.mxu0 0.0
        %7141 = vmatpush1.msra.mxu0 0.0
        %7142 = vmatprep.subr.mxu0 0.0
        %7143 = vmatpush1.msra.mxu0 0.0
        %7144 = vmatprep.subr.mxu0 0.0
        %7145 = vmatpush1.msra.mxu0 0.0
        %7146 = vmatprep.subr.mxu0 0.0
        %7147 = vmatpush1.msra.mxu0 0.0
        %7148 = vmatprep.subr.mxu0 0.0
        %7149 = vmatpush1.msra.mxu0 0.0
        %7150 = vmatprep.subr.mxu0 0.0
        %7151 = vmatpush1.msra.mxu0 0.0
        %7152 = vmatprep.subr.mxu0 0.0
        %7153 = vmatpush1.msra.mxu0 0.0
        %7154 = vmatprep.subr.mxu0 0.0
        %7155 = vmatpush1.msra.mxu0 0.0
        %7156 = vmatprep.subr.mxu0 0.0
        %7157 = vmatpush1.msra.mxu0 0.0
        %7158 = vmatprep.subr.mxu0 0.0
        %7159 = vmatpush1.msra.mxu0 0.0
        %7160 = vmatprep.subr.mxu0 0.0
        %7161 = vmatpush1.msra.mxu0 0.0
        %7162 = vmatprep.mubr.f32.mxu0 0.0
        %7163 = vmatmul.mubr.f32.gmra.mrb[0].mxu0 %v7096
        %v7164 = vpop.f32.mrb[0].mxu0
        %v7165 = vadd.f32 0.0, %v7164
        %v7166 = vpop.f32.mrb[0].mxu0
        %7167 = vdwg.mxu0
        %v7168 = vld [vmem:[#allocation2] sm:$0x1]
        %s7169 = vtos %v7168
        %v7170 = vstv %s7169
        %v7171 = vmul.f32 %v7170, %v7165
        %vm7172 = vcmask 73728
        %7173 = vst.msk [vmem:[%s896] sm:$0x1] %vm7172, %v7171
        %s7174 = sand.u32 %s697, 1
        %s7175 = scalar_lea.sflag [#allocation4], %s7174
        %s7176 = sand.u32 %s697, 1
        %s7177 = scalar_lea.vmem [#allocation3], %s7176
        // Predicated region
        $region137: #{ranpac_forward.1} parent=135 // pred_check
          %p7178 = pneg %p707
        $region138: #{ranpac_forward.1} parent=135 // pred_check_branch
          %7180 = sbr.rel (%p7178) target = $region140
        $region139: #{ranpac_forward.1} parent=135 // pred_region
          %s7182 = ssub.s32 16, 16
          %7183 = vsyncadd %s7175, %s7182
          %s7184 = smul.addr %s75, 16
          %s7185 = scalar_lea.hbm %s59, %s7184
          %s7187 = sshll.u32 %s7177, 4
          %s7188 = int_to_ptr.vmem [resolvable:$true] %s7187
          %7190 = dma.vmem_to_hbm [thread:$0]  %s7188, 16, %s7185, %s7175
        $region140: #{ranpac_forward.1} parent=135 // pred_fallthru
          _
      $region136: #{ranpac_forward.1} parent=5 // pred_fallthru
        _
      %p7191 = scmp.le.s32.totalorder 2, %s70
      // Predicated region
      $region141: #{ranpac_forward.1} parent=5 // pred_check
        %p7192 = pneg %p7191
      $region142: #{ranpac_forward.1} parent=5 // pred_check_branch
        %7194 = sbr.rel (%p7192) target = $region144
      $region143: #{ranpac_forward.1} parent=5 // pred_region
        %s7195 = ssub.s32 %s70, 2
        // Predicated region
        $region145: #{ranpac_forward.1} parent=143 // pred_check
          %p7196 = pneg %p713
        $region146: #{ranpac_forward.1} parent=143 // pred_check_branch
          %7198 = sbr.rel (%p7196) target = $region148
        $region147: #{ranpac_forward.1} parent=143 // pred_region
          %s7199 = sand.u32 %s698, 1
          %s7200 = scalar_lea.sflag [#allocation4], %s7199
          %s7201 = sand.u32 %s698, 1
          %s7202 = scalar_lea.vmem [#allocation3], %s7201
          %7203 = dma.done %s7200, 16
        $region148: #{ranpac_forward.1} parent=143 // pred_fallthru
          _
      $region144: #{ranpac_forward.1} parent=5 // pred_fallthru
        _
    $region6: #{ranpac_forward.1} parent=1 // loop_footer
      %s74 = sadd.s32 1, %s70
    $region7: #{ranpac_forward.1} parent=1 // loop_footer_branch
      %69 = sbr.rel target = $region3
    $region8: #{ranpac_forward.1} parent=1 // loop_exit
      _
    %7204 = vsyncpa [#allocation4], 1
    %s7205 = scalar_lea.sflag [#allocation4], 1
    %7206 = vsyncpa %s7205, 1

</llo_original>
